<compile_context>
chip_gen: v6e
topology: v6e:2x2x1
jax: 0.10.0
libtpu: 0.0.40
codegen_flags: <defaults>
</compile_context>

<pallas_src>
import numpy as np
import jax
import jax.numpy as jnp
from jax.experimental import pallas as pl
from jax.experimental.pallas import tpu as pltpu


def _round_up(x, m):
    return ((x + m - 1) // m) * m


def make_lstm_kernel(num_layers, H_pad, T_CHUNK, B_pad):
    G = 4 * H_pad
    n_deep = num_layers - 1

    def kernel(g0_ref, len_ref, *rest):
        n_w = 1 + 3 * n_deep
        w_refs = rest[:n_w]
        out_ref, hfin_ref, h_scr, c_scr = rest[n_w:]

        w0hh_ref = w_refs[0]                                   # (H_pad, G) bf16
        wih_refs = [w_refs[1 + 3 * i] for i in range(n_deep)]  # (H_pad, G) bf16
        whh_refs = [w_refs[2 + 3 * i] for i in range(n_deep)]  # (H_pad, G) bf16
        b_refs = [w_refs[3 + 3 * i] for i in range(n_deep)]    # (1, G) f32

        chunk = pl.program_id(0)

        @pl.when(chunk == 0)
        def _():
            h_scr[...] = jnp.zeros_like(h_scr)
            c_scr[...] = jnp.zeros_like(c_scr)

        len_vec = len_ref[...]                                 # (B_pad, 1) int32

        # Hoist deep-layer bias broadcasts out of the unrolled time loop
        # (JAX does not CSE broadcast_in_dim; without this we'd emit T_CHUNK*(L-1) of them).
        b_bcast = [jnp.broadcast_to(b_refs[i][...], (B_pad, G)) for i in range(n_deep)]

        def gate_math(gates, c_prev):
            # Each slice is a whole number of 128-lane vregs (H_pad % 128 == 0): pure VPU/EUP.
            i_g = jax.nn.sigmoid(gates[:, 0:H_pad])
            f_g = jax.nn.sigmoid(gates[:, H_pad:2 * H_pad])
            g_g = jnp.tanh(gates[:, 2 * H_pad:3 * H_pad])
            o_g = jax.nn.sigmoid(gates[:, 3 * H_pad:4 * H_pad])
            c_new = f_g * c_prev + i_g * g_g
            h_new = o_g * jnp.tanh(c_new)
            return h_new, c_new

        # Fully-unrolled static inner time loop (T_CHUNK is small & static).
        for ts in range(T_CHUNK):
            t = chunk * T_CHUNK + ts
            mask = len_vec > t                                 # (B_pad, 1) bool, reused by all layers

            # ---- layer 0: input projection precomputed outside; weight ref read at use ----
            h_prev = h_scr[0]
            c_prev = c_scr[0]
            gates = g0_ref[ts] + jnp.dot(h_prev.astype(jnp.bfloat16), w0hh_ref[...],
                                         preferred_element_type=jnp.float32)
            h_new, c_new = gate_math(gates, c_prev)
            h_cur = jnp.where(mask, h_new, h_prev)             # freeze state for finished rows
            c_cur = jnp.where(mask, c_new, c_prev)
            h_scr[0] = h_cur
            c_scr[0] = c_cur
            x = h_cur

            # ---- layers > 0: two dots (x@W_ih + h@W_hh) into one f32 accumulator ----
            for l in range(1, num_layers):
                h_prev = h_scr[l]
                c_prev = c_scr[l]
                gates = (jnp.dot(x.astype(jnp.bfloat16), wih_refs[l - 1][...],
                                 preferred_element_type=jnp.float32)
                         + jnp.dot(h_prev.astype(jnp.bfloat16), whh_refs[l - 1][...],
                                   preferred_element_type=jnp.float32)
                         + b_bcast[l - 1])
                h_new, c_new = gate_math(gates, c_prev)
                h_cur = jnp.where(mask, h_new, h_prev)
                c_cur = jnp.where(mask, c_new, c_prev)
                h_scr[l] = h_cur
                c_scr[l] = c_cur
                x = h_cur

            # Lane-dense store (H_pad % 128 == 0); pad_packed_sequence pads with 0.
            out_ref[ts] = jnp.where(mask, x, 0.0)

        # Only write the final per-layer hidden state on the last grid step.
        @pl.when(chunk == pl.num_programs(0) - 1)
        def _():
            hfin_ref[...] = h_scr[...]

    return kernel


def _vmem_limit_bytes():
    # Size the VMEM request from actual hardware: ~100 MiB on 128-MiB parts (v5e/v6e),
    # ~48 MiB on v7x (64 MiB per TensorCore), leaving headroom for internal scratch.
    cap = 128 * 1024 * 1024
    try:
        cap = int(getattr(pltpu.get_tpu_info(), "vmem_capacity_bytes", cap))
    except Exception:
        pass
    return int(min(cap - 16 * 1024 * 1024, 100 * 1024 * 1024))


def lstm_forward_pallas(x_tm, lengths_np, layer_weights, T_CHUNK=8):
    """x_tm: (T_total, B, E) f32 time-major input. Returns (out_tm_pad, h_fin_pad, H_pad)."""
    T_total, B, E = x_tm.shape
    num_layers = len(layer_weights)
    H = layer_weights[0][1].shape[0]
    H_pad = _round_up(H, 128)
    G = 4 * H_pad
    T_pad = _round_up(T_total, T_CHUNK)
    # Pad batch to a full f32 sublane tile (>=8). At larger batches prefer a multiple of 16
    # (bf16 MXU-LHS sublane packing); padded rows have length 0 so they stay exactly 0.
    B_pad = _round_up(max(B, 8), 8)

    def pad_gate_cols(w):
        # (..., 4H) -> (..., 4*H_pad): pad each of the i,f,g,o blocks to H_pad with zeros.
        lead = w.shape[:-1]
        w4 = w.reshape(lead + (4, H))
        w4 = jnp.pad(w4, [(0, 0)] * len(lead) + [(0, 0), (0, H_pad - H)])
        return w4.reshape(lead + (G,))

    # ---- hoist layer-0 input projection: one (T_pad*B_pad, E) x (E, 4*H_pad) matmul ----
    w_ih0, w_hh0, b0 = layer_weights[0]
    w_ih0_p = pad_gate_cols(w_ih0)                                       # (E, G)
    b0_p = pad_gate_cols(b0)                                             # (1, G)
    x_pad = jnp.pad(x_tm, ((0, T_pad - T_total), (0, B_pad - B), (0, 0)))
    g0 = (x_pad.reshape(T_pad * B_pad, E) @ w_ih0_p + b0_p).reshape(T_pad, B_pad, G)
    g0 = g0.astype(jnp.float32)
    # TODO(synk): at large B*T store g0 / the output slab as bfloat16 to halve HBM traffic.

    lengths_dev = jnp.zeros((B_pad, 1), jnp.int32).at[:B, 0].set(
        jnp.asarray(lengths_np, dtype=jnp.int32))

    # ---- padded recurrent weights (zero padding keeps padded lanes exactly 0) ----
    flat_w = []
    w0_hh_p = jnp.pad(pad_gate_cols(w_hh0), ((0, H_pad - H), (0, 0))).astype(jnp.bfloat16)
    flat_w.append(w0_hh_p)
    for l in range(1, num_layers):
        w_ih, w_hh, b = layer_weights[l]
        w_ih_p = jnp.pad(pad_gate_cols(w_ih),
                         ((0, H_pad - w_ih.shape[0]), (0, 0))).astype(jnp.bfloat16)
        w_hh_p = jnp.pad(pad_gate_cols(w_hh), ((0, H_pad - H), (0, 0))).astype(jnp.bfloat16)
        b_p = pad_gate_cols(b).astype(jnp.float32)
        flat_w.extend([w_ih_p, w_hh_p, b_p])

    in_specs = [
        pl.BlockSpec((T_CHUNK, B_pad, G), lambda c: (c, 0, 0)),   # layer-0 gate slab per chunk
        pl.BlockSpec((B_pad, 1), lambda c: (0, 0)),               # lengths (full array block)
    ]
    # Weight blocks have constant index_maps (loaded once, never re-DMA'd).
    # TODO(synk): on v7x at production H use pipeline_mode=pl.Buffered(1) on these specs to
    # halve weight VMEM, and split B across the two TensorCores (leading parallel grid axis).
    for w in flat_w:
        in_specs.append(pl.BlockSpec(w.shape, lambda c, n=w.ndim: (0,) * n))

    out_specs = [
        pl.BlockSpec((T_CHUNK, B_pad, H_pad), lambda c: (c, 0, 0)),       # top-layer hidden per chunk
        pl.BlockSpec((num_layers, B_pad, H_pad), lambda c: (0, 0, 0)),    # final h (VMEM-resident)
    ]
    out_shape = [
        jax.ShapeDtypeStruct((T_pad, B_pad, H_pad), jnp.float32),
        jax.ShapeDtypeStruct((num_layers, B_pad, H_pad), jnp.float32),
    ]

    grid_spec = pltpu.PrefetchScalarGridSpec(
        num_scalar_prefetch=0,
        grid=(T_pad // T_CHUNK,),
        in_specs=in_specs,
        out_specs=out_specs,
        scratch_shapes=[pltpu.VMEM((num_layers, B_pad, H_pad), jnp.float32),
                        pltpu.VMEM((num_layers, B_pad, H_pad), jnp.float32)],
    )

    call = pl.pallas_call(
        make_lstm_kernel(num_layers, H_pad, T_CHUNK, B_pad),
        out_shape=out_shape,
        grid_spec=grid_spec,
        compiler_params=pltpu.CompilerParams(
            dimension_semantics=("arbitrary",),        # time recurrence is sequential
            vmem_limit_bytes=_vmem_limit_bytes(),
        ),
    )
    out_tm_pad, h_fin_pad = call(g0, lengths_dev, *flat_w)
    return out_tm_pad, h_fin_pad, H_pad


def text_rnn_decoder_forward(params, encoder_feature, seqs, lengths):
    """Mirrors TextRNNDecoder.forward -> (packed output.data, padded outputs, h)."""
    emb = jnp.take(params["embedding"], seqs, axis=0)                 # (B, T, E) glue gather
    if encoder_feature is not None:
        x = jnp.concatenate([encoder_feature[:, None, :], emb], axis=1)
    else:
        x = emb
    B, T_total, _ = x.shape
    x_tm = jnp.transpose(x, (1, 0, 2)).astype(jnp.float32)            # (T_total, B, E)

    lengths_np = np.asarray(lengths, dtype=np.int32)

    H = params["lstm"][0][1].shape[0]
    out_tm_pad, h_fin_pad, _ = lstm_forward_pallas(x_tm, lengths_np, params["lstm"])

    outputs = jnp.transpose(out_tm_pad[:T_total, :B, :H], (1, 0, 2))  # (B, T_total, H)
    h_fin = h_fin_pad[:, :B, :H]                                      # (num_layers, B, H)
    max_len = int(lengths_np.max())
    outputs = outputs[:, :max_len, :]                                 # pad_packed_sequence

    # pack_padded_sequence data (enforce_sorted: lengths sorted descending):
    # time-major concat of the first batch_sizes[t] rows at each step t.
    batch_sizes = [int((lengths_np > t).sum()) for t in range(max_len)]
    packed_data = jnp.concatenate(
        [outputs[:bs, t, :] for t, bs in enumerate(batch_sizes)], axis=0)
    return packed_data, outputs, h_fin


def init_params(key, vocab_size, embedding_dim, hidden_size, num_layers):
    keys = jax.random.split(key, 1 + 3 * num_layers)
    emb = jax.random.normal(keys[0], (vocab_size, embedding_dim), jnp.float32)
    k = 1.0 / np.sqrt(hidden_size)
    lstm = []
    in_dim = embedding_dim
    for l in range(num_layers):
        w_ih = jax.random.uniform(keys[1 + 3 * l], (in_dim, 4 * hidden_size),
                                  jnp.float32, -k, k)
        w_hh = jax.random.uniform(keys[2 + 3 * l], (hidden_size, 4 * hidden_size),
                                  jnp.float32, -k, k)
        b = jax.random.uniform(keys[3 + 3 * l], (1, 4 * hidden_size),
                               jnp.float32, -k, k)   # combined b_ih + b_hh
        lstm.append((w_ih, w_hh, b))
        in_dim = hidden_size
    # TODO(synk): nn.Dropout(p=0.1) is defined in __init__ but never applied in forward.
    return {"embedding": emb, "lstm": lstm}


def reference_forward(params, encoder_feature, seqs, lengths):
    """Pure-JAX reference of the masked multi-layer LSTM (for verification)."""
    emb = jnp.take(params["embedding"], seqs, axis=0)
    x = jnp.concatenate([encoder_feature[:, None, :], emb], axis=1).astype(jnp.float32)
    B, T, _ = x.shape
    num_layers = len(params["lstm"])
    H = params["lstm"][0][1].shape[0]
    lengths_np = np.asarray(lengths)
    h = [jnp.zeros((B, H), jnp.float32) for _ in range(num_layers)]
    c = [jnp.zeros((B, H), jnp.float32) for _ in range(num_layers)]
    outs = []
    for t in range(T):
        mask = jnp.asarray(lengths_np > t).reshape(B, 1)
        inp = x[:, t, :]
        for l, (w_ih, w_hh, b) in enumerate(params["lstm"]):
            gates = inp @ w_ih + h[l] @ w_hh + b
            i_g = jax.nn.sigmoid(gates[:, :H])
            f_g = jax.nn.sigmoid(gates[:, H:2 * H])
            g_g = jnp.tanh(gates[:, 2 * H:3 * H])
            o_g = jax.nn.sigmoid(gates[:, 3 * H:])
            c_new = f_g * c[l] + i_g * g_g
            h_new = o_g * jnp.tanh(c_new)
            h[l] = jnp.where(mask, h_new, h[l])
            c[l] = jnp.where(mask, c_new, c[l])
            inp = h[l]
        outs.append(jnp.where(mask, h[-1], 0.0))
    outputs = jnp.stack(outs, axis=1)[:, :int(lengths_np.max())]
    return outputs, jnp.stack(h, axis=0)


if __name__ == "__main__":
    vocab_size, embedding_dim, hidden_size, num_layers = 50, 16, 32, 2
    B, T = 2, 8

    key = jax.random.PRNGKey(0)
    kp, kf, ks = jax.random.split(key, 3)
    params = init_params(kp, vocab_size, embedding_dim, hidden_size, num_layers)

    encoder_feature = jax.random.normal(kf, (B, embedding_dim), jnp.float32)
    seqs = jax.random.randint(ks, (B, T), 0, vocab_size)
    lengths = [9, 7]   # sorted descending (enforce_sorted), max == T + 1 (encoder token)

    packed_data, outputs, h = text_rnn_decoder_forward(params, encoder_feature, seqs, lengths)
    jax.block_until_ready((packed_data, outputs, h))

    ref_outputs, ref_h = reference_forward(params, encoder_feature, seqs, lengths)
    # Kernel uses bf16 MXU operands (f32 accumulate / f32 elementwise) -> loose tolerances.
    np.testing.assert_allclose(np.asarray(outputs), np.asarray(ref_outputs),
                               atol=2e-2, rtol=5e-2)
    np.testing.assert_allclose(np.asarray(h), np.asarray(ref_h),
                               atol=2e-2, rtol=5e-2)
    assert packed_data.shape == (sum(lengths), hidden_size)
    assert outputs.shape == (B, max(lengths), hidden_size)
    assert h.shape == (num_layers, B, hidden_size)

    print("KERNEL_OK")
</pallas_src>

<mosaic_0001>
module attributes {stable_mosaic.version = 11 : i64} {
  func.func @kernel(%arg0: i32, %arg1: memref<8x8x512xf32, #tpu.memory_space<vmem>>, %arg2: memref<8x1xi32, #tpu.memory_space<vmem>>, %arg3: memref<128x512xbf16, #tpu.memory_space<vmem>>, %arg4: memref<128x512xbf16, #tpu.memory_space<vmem>>, %arg5: memref<128x512xbf16, #tpu.memory_space<vmem>>, %arg6: memref<1x512xf32, #tpu.memory_space<vmem>>, %arg7: memref<8x8x128xf32, #tpu.memory_space<vmem>>, %arg8: memref<2x8x128xf32, #tpu.memory_space<vmem>>, %arg9: memref<2x8x128xf32, #tpu.memory_space<vmem>>, %arg10: memref<2x8x128xf32, #tpu.memory_space<vmem>>) attributes {dimension_semantics = [#tpu.dimension_semantics<arbitrary>], iteration_bounds = array<i64: 2>, scalar_prefetch = 0 : i64, scratch_operands = 2 : i64, tpu.core_type = #tpu.core_type<tc>, window_params = [{transform_indices = @transform_0, window_bounds = array<i64: 8, 8, 512>}, {pipeline_mode = #tpu.pipeline_mode<synchronous>, transform_indices = @transform_1, window_bounds = array<i64: 8, 1>}, {pipeline_mode = #tpu.pipeline_mode<synchronous>, transform_indices = @transform_2, window_bounds = array<i64: 128, 512>}, {pipeline_mode = #tpu.pipeline_mode<synchronous>, transform_indices = @transform_3, window_bounds = array<i64: 128, 512>}, {pipeline_mode = #tpu.pipeline_mode<synchronous>, transform_indices = @transform_4, window_bounds = array<i64: 128, 512>}, {pipeline_mode = #tpu.pipeline_mode<synchronous>, transform_indices = @transform_5, window_bounds = array<i64: 1, 512>}, {transform_indices = @transform_6, window_bounds = array<i64: 8, 8, 128>}, {pipeline_mode = #tpu.pipeline_mode<synchronous>, transform_indices = @transform_7, window_bounds = array<i64: 2, 8, 128>}]} {
    %c0_i32 = arith.constant 0 : i32
    %0 = arith.cmpi eq, %arg0, %c0_i32 : i32
    %1 = arith.extui %0 : i1 to i32
    %c0_i32_0 = arith.constant 0 : i32
    %2 = arith.cmpi ne, %1, %c0_i32_0 : i32
    scf.if %2 {
      %cst_374 = arith.constant 0.000000e+00 : f32
      %866 = vector.broadcast %cst_374 : f32 to vector<2x8x128xf32>
      %c0_375 = arith.constant 0 : index
      %c0_376 = arith.constant 0 : index
      %c0_377 = arith.constant 0 : index
      %867 = vector.load %arg9[%c0_375, %c0_376, %c0_377] : memref<2x8x128xf32, #tpu.memory_space<vmem>>, vector<2x8x128xf32>
      tpu.vector_store %arg9[%c0_375, %c0_376, %c0_377], %866 {strides = array<i32>} : memref<2x8x128xf32, #tpu.memory_space<vmem>>, vector<2x8x128xf32>,
      %cst_378 = arith.constant 0.000000e+00 : f32
      %868 = vector.broadcast %cst_378 : f32 to vector<2x8x128xf32>
      %c0_379 = arith.constant 0 : index
      %c0_380 = arith.constant 0 : index
      %c0_381 = arith.constant 0 : index
      %869 = vector.load %arg10[%c0_379, %c0_380, %c0_381] : memref<2x8x128xf32, #tpu.memory_space<vmem>>, vector<2x8x128xf32>
      tpu.vector_store %arg10[%c0_379, %c0_380, %c0_381], %868 {strides = array<i32>} : memref<2x8x128xf32, #tpu.memory_space<vmem>>, vector<2x8x128xf32>,
    } else {
    }
    %c0 = arith.constant 0 : index
    %c0_1 = arith.constant 0 : index
    %3 = vector.load %arg2[%c0, %c0_1] : memref<8x1xi32, #tpu.memory_space<vmem>>, vector<8x1xi32>
    %c0_2 = arith.constant 0 : index
    %c0_3 = arith.constant 0 : index
    %4 = vector.load %arg6[%c0_2, %c0_3] : memref<1x512xf32, #tpu.memory_space<vmem>>, vector<1x512xf32>
    %5 = vector.shape_cast %4 : vector<1x512xf32> to vector<1x512xf32>
    %6 = vector.broadcast %5 : vector<1x512xf32> to vector<8x512xf32>
    %c8_i32 = arith.constant 8 : i32
    %7 = arith.muli %arg0, %c8_i32 : i32
    %c0_i32_4 = arith.constant 0 : i32
    %8 = arith.addi %7, %c0_i32_4 : i32
    %9 = vector.broadcast %8 : i32 to vector<8x1xi32>
    %10 = arith.cmpi sgt, %3, %9 : vector<8x1xi32>
    %c0_5 = arith.constant 0 : index
    %c0_6 = arith.constant 0 : index
    %c0_7 = arith.constant 0 : index
    %11 = vector.load %arg9[%c0_5, %c0_6, %c0_7] : memref<2x8x128xf32, #tpu.memory_space<vmem>>, vector<1x8x128xf32>
    %12 = vector.shape_cast %11 : vector<1x8x128xf32> to vector<8x128xf32>
    %c0_8 = arith.constant 0 : index
    %c0_9 = arith.constant 0 : index
    %c0_10 = arith.constant 0 : index
    %13 = vector.load %arg10[%c0_8, %c0_9, %c0_10] : memref<2x8x128xf32, #tpu.memory_space<vmem>>, vector<1x8x128xf32>
    %14 = vector.shape_cast %13 : vector<1x8x128xf32> to vector<8x128xf32>
    %c0_11 = arith.constant 0 : index
    %c0_12 = arith.constant 0 : index
    %c0_13 = arith.constant 0 : index
    %15 = vector.load %arg1[%c0_11, %c0_12, %c0_13] : memref<8x8x512xf32, #tpu.memory_space<vmem>>, vector<1x8x512xf32>
    %16 = vector.shape_cast %15 : vector<1x8x512xf32> to vector<8x512xf32>
    %17 = arith.truncf %12 : vector<8x128xf32> to vector<8x128xbf16>
    %c0_14 = arith.constant 0 : index
    %c0_15 = arith.constant 0 : index
    %18 = vector.load %arg3[%c0_14, %c0_15] : memref<128x512xbf16, #tpu.memory_space<vmem>>, vector<128x512xbf16>
    %cst = arith.constant dense<0.000000e+00> : vector<8x512xf32>
    %19 = tpu.matmul %17, %18, %cst {dimension_numbers = #tpu.dot_dimension_numbers<[1], [0], [0], [1], [0, 0, 1, 1], [], []>} : vector<8x128xbf16>, vector<128x512xbf16>, vector<8x512xf32> -> vector<8x512xf32>
    %20 = arith.addf %16, %19 : vector<8x512xf32>
    %21 = vector.extract_strided_slice %20 {offsets = [0, 0], sizes = [8, 128], strides = [1, 1]} : vector<8x512xf32> to vector<8x128xf32>
    %22 = arith.negf %21 : vector<8x128xf32>
    %23 = math.exp %22 : vector<8x128xf32>
    %cst_16 = arith.constant 1.000000e+00 : f32
    %24 = vector.broadcast %cst_16 : f32 to vector<8x128xf32>
    %25 = arith.addf %24, %23 : vector<8x128xf32>
    %26 = arith.divf %24, %25 : vector<8x128xf32>
    %27 = vector.extract_strided_slice %20 {offsets = [0, 128], sizes = [8, 128], strides = [1, 1]} : vector<8x512xf32> to vector<8x128xf32>
    %28 = arith.negf %27 : vector<8x128xf32>
    %29 = math.exp %28 : vector<8x128xf32>
    %cst_17 = arith.constant 1.000000e+00 : f32
    %30 = vector.broadcast %cst_17 : f32 to vector<8x128xf32>
    %31 = arith.addf %30, %29 : vector<8x128xf32>
    %32 = arith.divf %30, %31 : vector<8x128xf32>
    %33 = vector.extract_strided_slice %20 {offsets = [0, 256], sizes = [8, 128], strides = [1, 1]} : vector<8x512xf32> to vector<8x128xf32>
    %34 = math.tanh %33 : vector<8x128xf32>
    %35 = vector.extract_strided_slice %20 {offsets = [0, 384], sizes = [8, 128], strides = [1, 1]} : vector<8x512xf32> to vector<8x128xf32>
    %36 = arith.negf %35 : vector<8x128xf32>
    %37 = math.exp %36 : vector<8x128xf32>
    %cst_18 = arith.constant 1.000000e+00 : f32
    %38 = vector.broadcast %cst_18 : f32 to vector<8x128xf32>
    %39 = arith.addf %38, %37 : vector<8x128xf32>
    %40 = arith.divf %38, %39 : vector<8x128xf32>
    %41 = arith.mulf %32, %14 : vector<8x128xf32>
    %42 = arith.mulf %26, %34 : vector<8x128xf32>
    %43 = arith.addf %41, %42 : vector<8x128xf32>
    %44 = math.tanh %43 : vector<8x128xf32>
    %45 = arith.mulf %40, %44 : vector<8x128xf32>
    %46 = vector.shape_cast %10 : vector<8x1xi1> to vector<8x1xi1>
    %47 = vector.broadcast %46 : vector<8x1xi1> to vector<8x128xi1>
    %48 = arith.select %47, %45, %12 : vector<8x128xi1>, vector<8x128xf32>
    %49 = vector.shape_cast %10 : vector<8x1xi1> to vector<8x1xi1>
    %50 = vector.broadcast %49 : vector<8x1xi1> to vector<8x128xi1>
    %51 = arith.select %50, %43, %14 : vector<8x128xi1>, vector<8x128xf32>
    %c0_19 = arith.constant 0 : index
    %c0_20 = arith.constant 0 : index
    %c0_21 = arith.constant 0 : index
    %52 = vector.load %arg9[%c0_19, %c0_20, %c0_21] : memref<2x8x128xf32, #tpu.memory_space<vmem>>, vector<1x8x128xf32>
    %53 = vector.shape_cast %52 : vector<1x8x128xf32> to vector<8x128xf32>
    %54 = vector.shape_cast %48 : vector<8x128xf32> to vector<1x8x128xf32>
    tpu.vector_store %arg9[%c0_19, %c0_20, %c0_21], %54 {strides = array<i32>} : memref<2x8x128xf32, #tpu.memory_space<vmem>>, vector<1x8x128xf32>,
    %c0_22 = arith.constant 0 : index
    %c0_23 = arith.constant 0 : index
    %c0_24 = arith.constant 0 : index
    %55 = vector.load %arg10[%c0_22, %c0_23, %c0_24] : memref<2x8x128xf32, #tpu.memory_space<vmem>>, vector<1x8x128xf32>
    %56 = vector.shape_cast %55 : vector<1x8x128xf32> to vector<8x128xf32>
    %57 = vector.shape_cast %51 : vector<8x128xf32> to vector<1x8x128xf32>
    tpu.vector_store %arg10[%c0_22, %c0_23, %c0_24], %57 {strides = array<i32>} : memref<2x8x128xf32, #tpu.memory_space<vmem>>, vector<1x8x128xf32>,
    %c1 = arith.constant 1 : index
    %c0_25 = arith.constant 0 : index
    %c0_26 = arith.constant 0 : index
    %58 = vector.load %arg9[%c1, %c0_25, %c0_26] : memref<2x8x128xf32, #tpu.memory_space<vmem>>, vector<1x8x128xf32>
    %59 = vector.shape_cast %58 : vector<1x8x128xf32> to vector<8x128xf32>
    %c1_27 = arith.constant 1 : index
    %c0_28 = arith.constant 0 : index
    %c0_29 = arith.constant 0 : index
    %60 = vector.load %arg10[%c1_27, %c0_28, %c0_29] : memref<2x8x128xf32, #tpu.memory_space<vmem>>, vector<1x8x128xf32>
    %61 = vector.shape_cast %60 : vector<1x8x128xf32> to vector<8x128xf32>
    %62 = arith.truncf %48 : vector<8x128xf32> to vector<8x128xbf16>
    %c0_30 = arith.constant 0 : index
    %c0_31 = arith.constant 0 : index
    %63 = vector.load %arg4[%c0_30, %c0_31] : memref<128x512xbf16, #tpu.memory_space<vmem>>, vector<128x512xbf16>
    %cst_32 = arith.constant dense<0.000000e+00> : vector<8x512xf32>
    %64 = tpu.matmul %62, %63, %cst_32 {dimension_numbers = #tpu.dot_dimension_numbers<[1], [0], [0], [1], [0, 0, 1, 1], [], []>} : vector<8x128xbf16>, vector<128x512xbf16>, vector<8x512xf32> -> vector<8x512xf32>
    %65 = arith.truncf %59 : vector<8x128xf32> to vector<8x128xbf16>
    %c0_33 = arith.constant 0 : index
    %c0_34 = arith.constant 0 : index
    %66 = vector.load %arg5[%c0_33, %c0_34] : memref<128x512xbf16, #tpu.memory_space<vmem>>, vector<128x512xbf16>
    %cst_35 = arith.constant dense<0.000000e+00> : vector<8x512xf32>
    %67 = tpu.matmul %65, %66, %cst_35 {dimension_numbers = #tpu.dot_dimension_numbers<[1], [0], [0], [1], [0, 0, 1, 1], [], []>} : vector<8x128xbf16>, vector<128x512xbf16>, vector<8x512xf32> -> vector<8x512xf32>
    %68 = arith.addf %64, %67 : vector<8x512xf32>
    %69 = arith.addf %68, %6 : vector<8x512xf32>
    %70 = vector.extract_strided_slice %69 {offsets = [0, 0], sizes = [8, 128], strides = [1, 1]} : vector<8x512xf32> to vector<8x128xf32>
    %71 = arith.negf %70 : vector<8x128xf32>
    %72 = math.exp %71 : vector<8x128xf32>
    %cst_36 = arith.constant 1.000000e+00 : f32
    %73 = vector.broadcast %cst_36 : f32 to vector<8x128xf32>
    %74 = arith.addf %73, %72 : vector<8x128xf32>
    %75 = arith.divf %73, %74 : vector<8x128xf32>
    %76 = vector.extract_strided_slice %69 {offsets = [0, 128], sizes = [8, 128], strides = [1, 1]} : vector<8x512xf32> to vector<8x128xf32>
    %77 = arith.negf %76 : vector<8x128xf32>
    %78 = math.exp %77 : vector<8x128xf32>
    %cst_37 = arith.constant 1.000000e+00 : f32
    %79 = vector.broadcast %cst_37 : f32 to vector<8x128xf32>
    %80 = arith.addf %79, %78 : vector<8x128xf32>
    %81 = arith.divf %79, %80 : vector<8x128xf32>
    %82 = vector.extract_strided_slice %69 {offsets = [0, 256], sizes = [8, 128], strides = [1, 1]} : vector<8x512xf32> to vector<8x128xf32>
    %83 = math.tanh %82 : vector<8x128xf32>
    %84 = vector.extract_strided_slice %69 {offsets = [0, 384], sizes = [8, 128], strides = [1, 1]} : vector<8x512xf32> to vector<8x128xf32>
    %85 = arith.negf %84 : vector<8x128xf32>
    %86 = math.exp %85 : vector<8x128xf32>
    %cst_38 = arith.constant 1.000000e+00 : f32
    %87 = vector.broadcast %cst_38 : f32 to vector<8x128xf32>
    %88 = arith.addf %87, %86 : vector<8x128xf32>
    %89 = arith.divf %87, %88 : vector<8x128xf32>
    %90 = arith.mulf %81, %61 : vector<8x128xf32>
    %91 = arith.mulf %75, %83 : vector<8x128xf32>
    %92 = arith.addf %90, %91 : vector<8x128xf32>
    %93 = math.tanh %92 : vector<8x128xf32>
    %94 = arith.mulf %89, %93 : vector<8x128xf32>
    %95 = vector.shape_cast %10 : vector<8x1xi1> to vector<8x1xi1>
    %96 = vector.broadcast %95 : vector<8x1xi1> to vector<8x128xi1>
    %97 = arith.select %96, %94, %59 : vector<8x128xi1>, vector<8x128xf32>
    %98 = vector.shape_cast %10 : vector<8x1xi1> to vector<8x1xi1>
    %99 = vector.broadcast %98 : vector<8x1xi1> to vector<8x128xi1>
    %100 = arith.select %99, %92, %61 : vector<8x128xi1>, vector<8x128xf32>
    %c1_39 = arith.constant 1 : index
    %c0_40 = arith.constant 0 : index
    %c0_41 = arith.constant 0 : index
    %101 = vector.load %arg9[%c1_39, %c0_40, %c0_41] : memref<2x8x128xf32, #tpu.memory_space<vmem>>, vector<1x8x128xf32>
    %102 = vector.shape_cast %101 : vector<1x8x128xf32> to vector<8x128xf32>
    %103 = vector.shape_cast %97 : vector<8x128xf32> to vector<1x8x128xf32>
    tpu.vector_store %arg9[%c1_39, %c0_40, %c0_41], %103 {strides = array<i32>} : memref<2x8x128xf32, #tpu.memory_space<vmem>>, vector<1x8x128xf32>,
    %c1_42 = arith.constant 1 : index
    %c0_43 = arith.constant 0 : index
    %c0_44 = arith.constant 0 : index
    %104 = vector.load %arg10[%c1_42, %c0_43, %c0_44] : memref<2x8x128xf32, #tpu.memory_space<vmem>>, vector<1x8x128xf32>
    %105 = vector.shape_cast %104 : vector<1x8x128xf32> to vector<8x128xf32>
    %106 = vector.shape_cast %100 : vector<8x128xf32> to vector<1x8x128xf32>
    tpu.vector_store %arg10[%c1_42, %c0_43, %c0_44], %106 {strides = array<i32>} : memref<2x8x128xf32, #tpu.memory_space<vmem>>, vector<1x8x128xf32>,
    %cst_45 = arith.constant 0.000000e+00 : f32
    %107 = vector.shape_cast %10 : vector<8x1xi1> to vector<8x1xi1>
    %108 = vector.broadcast %107 : vector<8x1xi1> to vector<8x128xi1>
    %109 = vector.broadcast %cst_45 : f32 to vector<8x128xf32>
    %110 = arith.select %108, %97, %109 : vector<8x128xi1>, vector<8x128xf32>
    %c0_46 = arith.constant 0 : index
    %c0_47 = arith.constant 0 : index
    %c0_48 = arith.constant 0 : index
    %111 = vector.load %arg7[%c0_46, %c0_47, %c0_48] : memref<8x8x128xf32, #tpu.memory_space<vmem>>, vector<1x8x128xf32>
    %112 = vector.shape_cast %111 : vector<1x8x128xf32> to vector<8x128xf32>
    %113 = vector.shape_cast %110 : vector<8x128xf32> to vector<1x8x128xf32>
    tpu.vector_store %arg7[%c0_46, %c0_47, %c0_48], %113 {strides = array<i32>} : memref<8x8x128xf32, #tpu.memory_space<vmem>>, vector<1x8x128xf32>,
    %c8_i32_49 = arith.constant 8 : i32
    %114 = arith.muli %arg0, %c8_i32_49 : i32
    %c1_i32 = arith.constant 1 : i32
    %115 = arith.addi %114, %c1_i32 : i32
    %116 = vector.broadcast %115 : i32 to vector<8x1xi32>
    %117 = arith.cmpi sgt, %3, %116 : vector<8x1xi32>
    %c0_50 = arith.constant 0 : index
    %c0_51 = arith.constant 0 : index
    %c0_52 = arith.constant 0 : index
    %118 = vector.load %arg9[%c0_50, %c0_51, %c0_52] : memref<2x8x128xf32, #tpu.memory_space<vmem>>, vector<1x8x128xf32>
    %119 = vector.shape_cast %118 : vector<1x8x128xf32> to vector<8x128xf32>
    %c0_53 = arith.constant 0 : index
    %c0_54 = arith.constant 0 : index
    %c0_55 = arith.constant 0 : index
    %120 = vector.load %arg10[%c0_53, %c0_54, %c0_55] : memref<2x8x128xf32, #tpu.memory_space<vmem>>, vector<1x8x128xf32>
    %121 = vector.shape_cast %120 : vector<1x8x128xf32> to vector<8x128xf32>
    %c1_56 = arith.constant 1 : index
    %c0_57 = arith.constant 0 : index
    %c0_58 = arith.constant 0 : index
    %122 = vector.load %arg1[%c1_56, %c0_57, %c0_58] : memref<8x8x512xf32, #tpu.memory_space<vmem>>, vector<1x8x512xf32>
    %123 = vector.shape_cast %122 : vector<1x8x512xf32> to vector<8x512xf32>
    %124 = arith.truncf %119 : vector<8x128xf32> to vector<8x128xbf16>
    %c0_59 = arith.constant 0 : index
    %c0_60 = arith.constant 0 : index
    %125 = vector.load %arg3[%c0_59, %c0_60] : memref<128x512xbf16, #tpu.memory_space<vmem>>, vector<128x512xbf16>
    %cst_61 = arith.constant dense<0.000000e+00> : vector<8x512xf32>
    %126 = tpu.matmul %124, %125, %cst_61 {dimension_numbers = #tpu.dot_dimension_numbers<[1], [0], [0], [1], [0, 0, 1, 1], [], []>} : vector<8x128xbf16>, vector<128x512xbf16>, vector<8x512xf32> -> vector<8x512xf32>
    %127 = arith.addf %123, %126 : vector<8x512xf32>
    %128 = vector.extract_strided_slice %127 {offsets = [0, 0], sizes = [8, 128], strides = [1, 1]} : vector<8x512xf32> to vector<8x128xf32>
    %129 = arith.negf %128 : vector<8x128xf32>
    %130 = math.exp %129 : vector<8x128xf32>
    %cst_62 = arith.constant 1.000000e+00 : f32
    %131 = vector.broadcast %cst_62 : f32 to vector<8x128xf32>
    %132 = arith.addf %131, %130 : vector<8x128xf32>
    %133 = arith.divf %131, %132 : vector<8x128xf32>
    %134 = vector.extract_strided_slice %127 {offsets = [0, 128], sizes = [8, 128], strides = [1, 1]} : vector<8x512xf32> to vector<8x128xf32>
    %135 = arith.negf %134 : vector<8x128xf32>
    %136 = math.exp %135 : vector<8x128xf32>
    %cst_63 = arith.constant 1.000000e+00 : f32
    %137 = vector.broadcast %cst_63 : f32 to vector<8x128xf32>
    %138 = arith.addf %137, %136 : vector<8x128xf32>
    %139 = arith.divf %137, %138 : vector<8x128xf32>
    %140 = vector.extract_strided_slice %127 {offsets = [0, 256], sizes = [8, 128], strides = [1, 1]} : vector<8x512xf32> to vector<8x128xf32>
    %141 = math.tanh %140 : vector<8x128xf32>
    %142 = vector.extract_strided_slice %127 {offsets = [0, 384], sizes = [8, 128], strides = [1, 1]} : vector<8x512xf32> to vector<8x128xf32>
    %143 = arith.negf %142 : vector<8x128xf32>
    %144 = math.exp %143 : vector<8x128xf32>
    %cst_64 = arith.constant 1.000000e+00 : f32
    %145 = vector.broadcast %cst_64 : f32 to vector<8x128xf32>
    %146 = arith.addf %145, %144 : vector<8x128xf32>
    %147 = arith.divf %145, %146 : vector<8x128xf32>
    %148 = arith.mulf %139, %121 : vector<8x128xf32>
    %149 = arith.mulf %133, %141 : vector<8x128xf32>
    %150 = arith.addf %148, %149 : vector<8x128xf32>
    %151 = math.tanh %150 : vector<8x128xf32>
    %152 = arith.mulf %147, %151 : vector<8x128xf32>
    %153 = vector.shape_cast %117 : vector<8x1xi1> to vector<8x1xi1>
    %154 = vector.broadcast %153 : vector<8x1xi1> to vector<8x128xi1>
    %155 = arith.select %154, %152, %119 : vector<8x128xi1>, vector<8x128xf32>
    %156 = vector.shape_cast %117 : vector<8x1xi1> to vector<8x1xi1>
    %157 = vector.broadcast %156 : vector<8x1xi1> to vector<8x128xi1>
    %158 = arith.select %157, %150, %121 : vector<8x128xi1>, vector<8x128xf32>
    %c0_65 = arith.constant 0 : index
    %c0_66 = arith.constant 0 : index
    %c0_67 = arith.constant 0 : index
    %159 = vector.load %arg9[%c0_65, %c0_66, %c0_67] : memref<2x8x128xf32, #tpu.memory_space<vmem>>, vector<1x8x128xf32>
    %160 = vector.shape_cast %159 : vector<1x8x128xf32> to vector<8x128xf32>
    %161 = vector.shape_cast %155 : vector<8x128xf32> to vector<1x8x128xf32>
    tpu.vector_store %arg9[%c0_65, %c0_66, %c0_67], %161 {strides = array<i32>} : memref<2x8x128xf32, #tpu.memory_space<vmem>>, vector<1x8x128xf32>,
    %c0_68 = arith.constant 0 : index
    %c0_69 = arith.constant 0 : index
    %c0_70 = arith.constant 0 : index
    %162 = vector.load %arg10[%c0_68, %c0_69, %c0_70] : memref<2x8x128xf32, #tpu.memory_space<vmem>>, vector<1x8x128xf32>
    %163 = vector.shape_cast %162 : vector<1x8x128xf32> to vector<8x128xf32>
    %164 = vector.shape_cast %158 : vector<8x128xf32> to vector<1x8x128xf32>
    tpu.vector_store %arg10[%c0_68, %c0_69, %c0_70], %164 {strides = array<i32>} : memref<2x8x128xf32, #tpu.memory_space<vmem>>, vector<1x8x128xf32>,
    %c1_71 = arith.constant 1 : index
    %c0_72 = arith.constant 0 : index
    %c0_73 = arith.constant 0 : index
    %165 = vector.load %arg9[%c1_71, %c0_72, %c0_73] : memref<2x8x128xf32, #tpu.memory_space<vmem>>, vector<1x8x128xf32>
    %166 = vector.shape_cast %165 : vector<1x8x128xf32> to vector<8x128xf32>
    %c1_74 = arith.constant 1 : index
    %c0_75 = arith.constant 0 : index
    %c0_76 = arith.constant 0 : index
    %167 = vector.load %arg10[%c1_74, %c0_75, %c0_76] : memref<2x8x128xf32, #tpu.memory_space<vmem>>, vector<1x8x128xf32>
    %168 = vector.shape_cast %167 : vector<1x8x128xf32> to vector<8x128xf32>
    %169 = arith.truncf %155 : vector<8x128xf32> to vector<8x128xbf16>
    %c0_77 = arith.constant 0 : index
    %c0_78 = arith.constant 0 : index
    %170 = vector.load %arg4[%c0_77, %c0_78] : memref<128x512xbf16, #tpu.memory_space<vmem>>, vector<128x512xbf16>
    %cst_79 = arith.constant dense<0.000000e+00> : vector<8x512xf32>
    %171 = tpu.matmul %169, %170, %cst_79 {dimension_numbers = #tpu.dot_dimension_numbers<[1], [0], [0], [1], [0, 0, 1, 1], [], []>} : vector<8x128xbf16>, vector<128x512xbf16>, vector<8x512xf32> -> vector<8x512xf32>
    %172 = arith.truncf %166 : vector<8x128xf32> to vector<8x128xbf16>
    %c0_80 = arith.constant 0 : index
    %c0_81 = arith.constant 0 : index
    %173 = vector.load %arg5[%c0_80, %c0_81] : memref<128x512xbf16, #tpu.memory_space<vmem>>, vector<128x512xbf16>
    %cst_82 = arith.constant dense<0.000000e+00> : vector<8x512xf32>
    %174 = tpu.matmul %172, %173, %cst_82 {dimension_numbers = #tpu.dot_dimension_numbers<[1], [0], [0], [1], [0, 0, 1, 1], [], []>} : vector<8x128xbf16>, vector<128x512xbf16>, vector<8x512xf32> -> vector<8x512xf32>
    %175 = arith.addf %171, %174 : vector<8x512xf32>
    %176 = arith.addf %175, %6 : vector<8x512xf32>
    %177 = vector.extract_strided_slice %176 {offsets = [0, 0], sizes = [8, 128], strides = [1, 1]} : vector<8x512xf32> to vector<8x128xf32>
    %178 = arith.negf %177 : vector<8x128xf32>
    %179 = math.exp %178 : vector<8x128xf32>
    %cst_83 = arith.constant 1.000000e+00 : f32
    %180 = vector.broadcast %cst_83 : f32 to vector<8x128xf32>
    %181 = arith.addf %180, %179 : vector<8x128xf32>
    %182 = arith.divf %180, %181 : vector<8x128xf32>
    %183 = vector.extract_strided_slice %176 {offsets = [0, 128], sizes = [8, 128], strides = [1, 1]} : vector<8x512xf32> to vector<8x128xf32>
    %184 = arith.negf %183 : vector<8x128xf32>
    %185 = math.exp %184 : vector<8x128xf32>
    %cst_84 = arith.constant 1.000000e+00 : f32
    %186 = vector.broadcast %cst_84 : f32 to vector<8x128xf32>
    %187 = arith.addf %186, %185 : vector<8x128xf32>
    %188 = arith.divf %186, %187 : vector<8x128xf32>
    %189 = vector.extract_strided_slice %176 {offsets = [0, 256], sizes = [8, 128], strides = [1, 1]} : vector<8x512xf32> to vector<8x128xf32>
    %190 = math.tanh %189 : vector<8x128xf32>
    %191 = vector.extract_strided_slice %176 {offsets = [0, 384], sizes = [8, 128], strides = [1, 1]} : vector<8x512xf32> to vector<8x128xf32>
    %192 = arith.negf %191 : vector<8x128xf32>
    %193 = math.exp %192 : vector<8x128xf32>
    %cst_85 = arith.constant 1.000000e+00 : f32
    %194 = vector.broadcast %cst_85 : f32 to vector<8x128xf32>
    %195 = arith.addf %194, %193 : vector<8x128xf32>
    %196 = arith.divf %194, %195 : vector<8x128xf32>
    %197 = arith.mulf %188, %168 : vector<8x128xf32>
    %198 = arith.mulf %182, %190 : vector<8x128xf32>
    %199 = arith.addf %197, %198 : vector<8x128xf32>
    %200 = math.tanh %199 : vector<8x128xf32>
    %201 = arith.mulf %196, %200 : vector<8x128xf32>
    %202 = vector.shape_cast %117 : vector<8x1xi1> to vector<8x1xi1>
    %203 = vector.broadcast %202 : vector<8x1xi1> to vector<8x128xi1>
    %204 = arith.select %203, %201, %166 : vector<8x128xi1>, vector<8x128xf32>
    %205 = vector.shape_cast %117 : vector<8x1xi1> to vector<8x1xi1>
    %206 = vector.broadcast %205 : vector<8x1xi1> to vector<8x128xi1>
    %207 = arith.select %206, %199, %168 : vector<8x128xi1>, vector<8x128xf32>
    %c1_86 = arith.constant 1 : index
    %c0_87 = arith.constant 0 : index
    %c0_88 = arith.constant 0 : index
    %208 = vector.load %arg9[%c1_86, %c0_87, %c0_88] : memref<2x8x128xf32, #tpu.memory_space<vmem>>, vector<1x8x128xf32>
    %209 = vector.shape_cast %208 : vector<1x8x128xf32> to vector<8x128xf32>
    %210 = vector.shape_cast %204 : vector<8x128xf32> to vector<1x8x128xf32>
    tpu.vector_store %arg9[%c1_86, %c0_87, %c0_88], %210 {strides = array<i32>} : memref<2x8x128xf32, #tpu.memory_space<vmem>>, vector<1x8x128xf32>,
    %c1_89 = arith.constant 1 : index
    %c0_90 = arith.constant 0 : index
    %c0_91 = arith.constant 0 : index
    %211 = vector.load %arg10[%c1_89, %c0_90, %c0_91] : memref<2x8x128xf32, #tpu.memory_space<vmem>>, vector<1x8x128xf32>
    %212 = vector.shape_cast %211 : vector<1x8x128xf32> to vector<8x128xf32>
    %213 = vector.shape_cast %207 : vector<8x128xf32> to vector<1x8x128xf32>
    tpu.vector_store %arg10[%c1_89, %c0_90, %c0_91], %213 {strides = array<i32>} : memref<2x8x128xf32, #tpu.memory_space<vmem>>, vector<1x8x128xf32>,
    %cst_92 = arith.constant 0.000000e+00 : f32
    %214 = vector.shape_cast %117 : vector<8x1xi1> to vector<8x1xi1>
    %215 = vector.broadcast %214 : vector<8x1xi1> to vector<8x128xi1>
    %216 = vector.broadcast %cst_92 : f32 to vector<8x128xf32>
    %217 = arith.select %215, %204, %216 : vector<8x128xi1>, vector<8x128xf32>
    %c1_93 = arith.constant 1 : index
    %c0_94 = arith.constant 0 : index
    %c0_95 = arith.constant 0 : index
    %218 = vector.load %arg7[%c1_93, %c0_94, %c0_95] : memref<8x8x128xf32, #tpu.memory_space<vmem>>, vector<1x8x128xf32>
    %219 = vector.shape_cast %218 : vector<1x8x128xf32> to vector<8x128xf32>
    %220 = vector.shape_cast %217 : vector<8x128xf32> to vector<1x8x128xf32>
    tpu.vector_store %arg7[%c1_93, %c0_94, %c0_95], %220 {strides = array<i32>} : memref<8x8x128xf32, #tpu.memory_space<vmem>>, vector<1x8x128xf32>,
    %c8_i32_96 = arith.constant 8 : i32
    %221 = arith.muli %arg0, %c8_i32_96 : i32
    %c2_i32 = arith.constant 2 : i32
    %222 = arith.addi %221, %c2_i32 : i32
    %223 = vector.broadcast %222 : i32 to vector<8x1xi32>
    %224 = arith.cmpi sgt, %3, %223 : vector<8x1xi32>
    %c0_97 = arith.constant 0 : index
    %c0_98 = arith.constant 0 : index
    %c0_99 = arith.constant 0 : index
    %225 = vector.load %arg9[%c0_97, %c0_98, %c0_99] : memref<2x8x128xf32, #tpu.memory_space<vmem>>, vector<1x8x128xf32>
    %226 = vector.shape_cast %225 : vector<1x8x128xf32> to vector<8x128xf32>
    %c0_100 = arith.constant 0 : index
    %c0_101 = arith.constant 0 : index
    %c0_102 = arith.constant 0 : index
    %227 = vector.load %arg10[%c0_100, %c0_101, %c0_102] : memref<2x8x128xf32, #tpu.memory_space<vmem>>, vector<1x8x128xf32>
    %228 = vector.shape_cast %227 : vector<1x8x128xf32> to vector<8x128xf32>
    %c2 = arith.constant 2 : index
    %c0_103 = arith.constant 0 : index
    %c0_104 = arith.constant 0 : index
    %229 = vector.load %arg1[%c2, %c0_103, %c0_104] : memref<8x8x512xf32, #tpu.memory_space<vmem>>, vector<1x8x512xf32>
    %230 = vector.shape_cast %229 : vector<1x8x512xf32> to vector<8x512xf32>
    %231 = arith.truncf %226 : vector<8x128xf32> to vector<8x128xbf16>
    %c0_105 = arith.constant 0 : index
    %c0_106 = arith.constant 0 : index
    %232 = vector.load %arg3[%c0_105, %c0_106] : memref<128x512xbf16, #tpu.memory_space<vmem>>, vector<128x512xbf16>
    %cst_107 = arith.constant dense<0.000000e+00> : vector<8x512xf32>
    %233 = tpu.matmul %231, %232, %cst_107 {dimension_numbers = #tpu.dot_dimension_numbers<[1], [0], [0], [1], [0, 0, 1, 1], [], []>} : vector<8x128xbf16>, vector<128x512xbf16>, vector<8x512xf32> -> vector<8x512xf32>
    %234 = arith.addf %230, %233 : vector<8x512xf32>
    %235 = vector.extract_strided_slice %234 {offsets = [0, 0], sizes = [8, 128], strides = [1, 1]} : vector<8x512xf32> to vector<8x128xf32>
    %236 = arith.negf %235 : vector<8x128xf32>
    %237 = math.exp %236 : vector<8x128xf32>
    %cst_108 = arith.constant 1.000000e+00 : f32
    %238 = vector.broadcast %cst_108 : f32 to vector<8x128xf32>
    %239 = arith.addf %238, %237 : vector<8x128xf32>
    %240 = arith.divf %238, %239 : vector<8x128xf32>
    %241 = vector.extract_strided_slice %234 {offsets = [0, 128], sizes = [8, 128], strides = [1, 1]} : vector<8x512xf32> to vector<8x128xf32>
    %242 = arith.negf %241 : vector<8x128xf32>
    %243 = math.exp %242 : vector<8x128xf32>
    %cst_109 = arith.constant 1.000000e+00 : f32
    %244 = vector.broadcast %cst_109 : f32 to vector<8x128xf32>
    %245 = arith.addf %244, %243 : vector<8x128xf32>
    %246 = arith.divf %244, %245 : vector<8x128xf32>
    %247 = vector.extract_strided_slice %234 {offsets = [0, 256], sizes = [8, 128], strides = [1, 1]} : vector<8x512xf32> to vector<8x128xf32>
    %248 = math.tanh %247 : vector<8x128xf32>
    %249 = vector.extract_strided_slice %234 {offsets = [0, 384], sizes = [8, 128], strides = [1, 1]} : vector<8x512xf32> to vector<8x128xf32>
    %250 = arith.negf %249 : vector<8x128xf32>
    %251 = math.exp %250 : vector<8x128xf32>
    %cst_110 = arith.constant 1.000000e+00 : f32
    %252 = vector.broadcast %cst_110 : f32 to vector<8x128xf32>
    %253 = arith.addf %252, %251 : vector<8x128xf32>
    %254 = arith.divf %252, %253 : vector<8x128xf32>
    %255 = arith.mulf %246, %228 : vector<8x128xf32>
    %256 = arith.mulf %240, %248 : vector<8x128xf32>
    %257 = arith.addf %255, %256 : vector<8x128xf32>
    %258 = math.tanh %257 : vector<8x128xf32>
    %259 = arith.mulf %254, %258 : vector<8x128xf32>
    %260 = vector.shape_cast %224 : vector<8x1xi1> to vector<8x1xi1>
    %261 = vector.broadcast %260 : vector<8x1xi1> to vector<8x128xi1>
    %262 = arith.select %261, %259, %226 : vector<8x128xi1>, vector<8x128xf32>
    %263 = vector.shape_cast %224 : vector<8x1xi1> to vector<8x1xi1>
    %264 = vector.broadcast %263 : vector<8x1xi1> to vector<8x128xi1>
    %265 = arith.select %264, %257, %228 : vector<8x128xi1>, vector<8x128xf32>
    %c0_111 = arith.constant 0 : index
    %c0_112 = arith.constant 0 : index
    %c0_113 = arith.constant 0 : index
    %266 = vector.load %arg9[%c0_111, %c0_112, %c0_113] : memref<2x8x128xf32, #tpu.memory_space<vmem>>, vector<1x8x128xf32>
    %267 = vector.shape_cast %266 : vector<1x8x128xf32> to vector<8x128xf32>
    %268 = vector.shape_cast %262 : vector<8x128xf32> to vector<1x8x128xf32>
    tpu.vector_store %arg9[%c0_111, %c0_112, %c0_113], %268 {strides = array<i32>} : memref<2x8x128xf32, #tpu.memory_space<vmem>>, vector<1x8x128xf32>,
    %c0_114 = arith.constant 0 : index
    %c0_115 = arith.constant 0 : index
    %c0_116 = arith.constant 0 : index
    %269 = vector.load %arg10[%c0_114, %c0_115, %c0_116] : memref<2x8x128xf32, #tpu.memory_space<vmem>>, vector<1x8x128xf32>
    %270 = vector.shape_cast %269 : vector<1x8x128xf32> to vector<8x128xf32>
    %271 = vector.shape_cast %265 : vector<8x128xf32> to vector<1x8x128xf32>
    tpu.vector_store %arg10[%c0_114, %c0_115, %c0_116], %271 {strides = array<i32>} : memref<2x8x128xf32, #tpu.memory_space<vmem>>, vector<1x8x128xf32>,
    %c1_117 = arith.constant 1 : index
    %c0_118 = arith.constant 0 : index
    %c0_119 = arith.constant 0 : index
    %272 = vector.load %arg9[%c1_117, %c0_118, %c0_119] : memref<2x8x128xf32, #tpu.memory_space<vmem>>, vector<1x8x128xf32>
    %273 = vector.shape_cast %272 : vector<1x8x128xf32> to vector<8x128xf32>
    %c1_120 = arith.constant 1 : index
    %c0_121 = arith.constant 0 : index
    %c0_122 = arith.constant 0 : index
    %274 = vector.load %arg10[%c1_120, %c0_121, %c0_122] : memref<2x8x128xf32, #tpu.memory_space<vmem>>, vector<1x8x128xf32>
    %275 = vector.shape_cast %274 : vector<1x8x128xf32> to vector<8x128xf32>
    %276 = arith.truncf %262 : vector<8x128xf32> to vector<8x128xbf16>
    %c0_123 = arith.constant 0 : index
    %c0_124 = arith.constant 0 : index
    %277 = vector.load %arg4[%c0_123, %c0_124] : memref<128x512xbf16, #tpu.memory_space<vmem>>, vector<128x512xbf16>
    %cst_125 = arith.constant dense<0.000000e+00> : vector<8x512xf32>
    %278 = tpu.matmul %276, %277, %cst_125 {dimension_numbers = #tpu.dot_dimension_numbers<[1], [0], [0], [1], [0, 0, 1, 1], [], []>} : vector<8x128xbf16>, vector<128x512xbf16>, vector<8x512xf32> -> vector<8x512xf32>
    %279 = arith.truncf %273 : vector<8x128xf32> to vector<8x128xbf16>
    %c0_126 = arith.constant 0 : index
    %c0_127 = arith.constant 0 : index
    %280 = vector.load %arg5[%c0_126, %c0_127] : memref<128x512xbf16, #tpu.memory_space<vmem>>, vector<128x512xbf16>
    %cst_128 = arith.constant dense<0.000000e+00> : vector<8x512xf32>
    %281 = tpu.matmul %279, %280, %cst_128 {dimension_numbers = #tpu.dot_dimension_numbers<[1], [0], [0], [1], [0, 0, 1, 1], [], []>} : vector<8x128xbf16>, vector<128x512xbf16>, vector<8x512xf32> -> vector<8x512xf32>
    %282 = arith.addf %278, %281 : vector<8x512xf32>
    %283 = arith.addf %282, %6 : vector<8x512xf32>
    %284 = vector.extract_strided_slice %283 {offsets = [0, 0], sizes = [8, 128], strides = [1, 1]} : vector<8x512xf32> to vector<8x128xf32>
    %285 = arith.negf %284 : vector<8x128xf32>
    %286 = math.exp %285 : vector<8x128xf32>
    %cst_129 = arith.constant 1.000000e+00 : f32
    %287 = vector.broadcast %cst_129 : f32 to vector<8x128xf32>
    %288 = arith.addf %287, %286 : vector<8x128xf32>
    %289 = arith.divf %287, %288 : vector<8x128xf32>
    %290 = vector.extract_strided_slice %283 {offsets = [0, 128], sizes = [8, 128], strides = [1, 1]} : vector<8x512xf32> to vector<8x128xf32>
    %291 = arith.negf %290 : vector<8x128xf32>
    %292 = math.exp %291 : vector<8x128xf32>
    %cst_130 = arith.constant 1.000000e+00 : f32
    %293 = vector.broadcast %cst_130 : f32 to vector<8x128xf32>
    %294 = arith.addf %293, %292 : vector<8x128xf32>
    %295 = arith.divf %293, %294 : vector<8x128xf32>
    %296 = vector.extract_strided_slice %283 {offsets = [0, 256], sizes = [8, 128], strides = [1, 1]} : vector<8x512xf32> to vector<8x128xf32>
    %297 = math.tanh %296 : vector<8x128xf32>
    %298 = vector.extract_strided_slice %283 {offsets = [0, 384], sizes = [8, 128], strides = [1, 1]} : vector<8x512xf32> to vector<8x128xf32>
    %299 = arith.negf %298 : vector<8x128xf32>
    %300 = math.exp %299 : vector<8x128xf32>
    %cst_131 = arith.constant 1.000000e+00 : f32
    %301 = vector.broadcast %cst_131 : f32 to vector<8x128xf32>
    %302 = arith.addf %301, %300 : vector<8x128xf32>
    %303 = arith.divf %301, %302 : vector<8x128xf32>
    %304 = arith.mulf %295, %275 : vector<8x128xf32>
    %305 = arith.mulf %289, %297 : vector<8x128xf32>
    %306 = arith.addf %304, %305 : vector<8x128xf32>
    %307 = math.tanh %306 : vector<8x128xf32>
    %308 = arith.mulf %303, %307 : vector<8x128xf32>
    %309 = vector.shape_cast %224 : vector<8x1xi1> to vector<8x1xi1>
    %310 = vector.broadcast %309 : vector<8x1xi1> to vector<8x128xi1>
    %311 = arith.select %310, %308, %273 : vector<8x128xi1>, vector<8x128xf32>
    %312 = vector.shape_cast %224 : vector<8x1xi1> to vector<8x1xi1>
    %313 = vector.broadcast %312 : vector<8x1xi1> to vector<8x128xi1>
    %314 = arith.select %313, %306, %275 : vector<8x128xi1>, vector<8x128xf32>
    %c1_132 = arith.constant 1 : index
    %c0_133 = arith.constant 0 : index
    %c0_134 = arith.constant 0 : index
    %315 = vector.load %arg9[%c1_132, %c0_133, %c0_134] : memref<2x8x128xf32, #tpu.memory_space<vmem>>, vector<1x8x128xf32>
    %316 = vector.shape_cast %315 : vector<1x8x128xf32> to vector<8x128xf32>
    %317 = vector.shape_cast %311 : vector<8x128xf32> to vector<1x8x128xf32>
    tpu.vector_store %arg9[%c1_132, %c0_133, %c0_134], %317 {strides = array<i32>} : memref<2x8x128xf32, #tpu.memory_space<vmem>>, vector<1x8x128xf32>,
    %c1_135 = arith.constant 1 : index
    %c0_136 = arith.constant 0 : index
    %c0_137 = arith.constant 0 : index
    %318 = vector.load %arg10[%c1_135, %c0_136, %c0_137] : memref<2x8x128xf32, #tpu.memory_space<vmem>>, vector<1x8x128xf32>
    %319 = vector.shape_cast %318 : vector<1x8x128xf32> to vector<8x128xf32>
    %320 = vector.shape_cast %314 : vector<8x128xf32> to vector<1x8x128xf32>
    tpu.vector_store %arg10[%c1_135, %c0_136, %c0_137], %320 {strides = array<i32>} : memref<2x8x128xf32, #tpu.memory_space<vmem>>, vector<1x8x128xf32>,
    %cst_138 = arith.constant 0.000000e+00 : f32
    %321 = vector.shape_cast %224 : vector<8x1xi1> to vector<8x1xi1>
    %322 = vector.broadcast %321 : vector<8x1xi1> to vector<8x128xi1>
    %323 = vector.broadcast %cst_138 : f32 to vector<8x128xf32>
    %324 = arith.select %322, %311, %323 : vector<8x128xi1>, vector<8x128xf32>
    %c2_139 = arith.constant 2 : index
    %c0_140 = arith.constant 0 : index
    %c0_141 = arith.constant 0 : index
    %325 = vector.load %arg7[%c2_139, %c0_140, %c0_141] : memref<8x8x128xf32, #tpu.memory_space<vmem>>, vector<1x8x128xf32>
    %326 = vector.shape_cast %325 : vector<1x8x128xf32> to vector<8x128xf32>
    %327 = vector.shape_cast %324 : vector<8x128xf32> to vector<1x8x128xf32>
    tpu.vector_store %arg7[%c2_139, %c0_140, %c0_141], %327 {strides = array<i32>} : memref<8x8x128xf32, #tpu.memory_space<vmem>>, vector<1x8x128xf32>,
    %c8_i32_142 = arith.constant 8 : i32
    %328 = arith.muli %arg0, %c8_i32_142 : i32
    %c3_i32 = arith.constant 3 : i32
    %329 = arith.addi %328, %c3_i32 : i32
    %330 = vector.broadcast %329 : i32 to vector<8x1xi32>
    %331 = arith.cmpi sgt, %3, %330 : vector<8x1xi32>
    %c0_143 = arith.constant 0 : index
    %c0_144 = arith.constant 0 : index
    %c0_145 = arith.constant 0 : index
    %332 = vector.load %arg9[%c0_143, %c0_144, %c0_145] : memref<2x8x128xf32, #tpu.memory_space<vmem>>, vector<1x8x128xf32>
    %333 = vector.shape_cast %332 : vector<1x8x128xf32> to vector<8x128xf32>
    %c0_146 = arith.constant 0 : index
    %c0_147 = arith.constant 0 : index
    %c0_148 = arith.constant 0 : index
    %334 = vector.load %arg10[%c0_146, %c0_147, %c0_148] : memref<2x8x128xf32, #tpu.memory_space<vmem>>, vector<1x8x128xf32>
    %335 = vector.shape_cast %334 : vector<1x8x128xf32> to vector<8x128xf32>
    %c3 = arith.constant 3 : index
    %c0_149 = arith.constant 0 : index
    %c0_150 = arith.constant 0 : index
    %336 = vector.load %arg1[%c3, %c0_149, %c0_150] : memref<8x8x512xf32, #tpu.memory_space<vmem>>, vector<1x8x512xf32>
    %337 = vector.shape_cast %336 : vector<1x8x512xf32> to vector<8x512xf32>
    %338 = arith.truncf %333 : vector<8x128xf32> to vector<8x128xbf16>
    %c0_151 = arith.constant 0 : index
    %c0_152 = arith.constant 0 : index
    %339 = vector.load %arg3[%c0_151, %c0_152] : memref<128x512xbf16, #tpu.memory_space<vmem>>, vector<128x512xbf16>
    %cst_153 = arith.constant dense<0.000000e+00> : vector<8x512xf32>
    %340 = tpu.matmul %338, %339, %cst_153 {dimension_numbers = #tpu.dot_dimension_numbers<[1], [0], [0], [1], [0, 0, 1, 1], [], []>} : vector<8x128xbf16>, vector<128x512xbf16>, vector<8x512xf32> -> vector<8x512xf32>
    %341 = arith.addf %337, %340 : vector<8x512xf32>
    %342 = vector.extract_strided_slice %341 {offsets = [0, 0], sizes = [8, 128], strides = [1, 1]} : vector<8x512xf32> to vector<8x128xf32>
    %343 = arith.negf %342 : vector<8x128xf32>
    %344 = math.exp %343 : vector<8x128xf32>
    %cst_154 = arith.constant 1.000000e+00 : f32
    %345 = vector.broadcast %cst_154 : f32 to vector<8x128xf32>
    %346 = arith.addf %345, %344 : vector<8x128xf32>
    %347 = arith.divf %345, %346 : vector<8x128xf32>
    %348 = vector.extract_strided_slice %341 {offsets = [0, 128], sizes = [8, 128], strides = [1, 1]} : vector<8x512xf32> to vector<8x128xf32>
    %349 = arith.negf %348 : vector<8x128xf32>
    %350 = math.exp %349 : vector<8x128xf32>
    %cst_155 = arith.constant 1.000000e+00 : f32
    %351 = vector.broadcast %cst_155 : f32 to vector<8x128xf32>
    %352 = arith.addf %351, %350 : vector<8x128xf32>
    %353 = arith.divf %351, %352 : vector<8x128xf32>
    %354 = vector.extract_strided_slice %341 {offsets = [0, 256], sizes = [8, 128], strides = [1, 1]} : vector<8x512xf32> to vector<8x128xf32>
    %355 = math.tanh %354 : vector<8x128xf32>
    %356 = vector.extract_strided_slice %341 {offsets = [0, 384], sizes = [8, 128], strides = [1, 1]} : vector<8x512xf32> to vector<8x128xf32>
    %357 = arith.negf %356 : vector<8x128xf32>
    %358 = math.exp %357 : vector<8x128xf32>
    %cst_156 = arith.constant 1.000000e+00 : f32
    %359 = vector.broadcast %cst_156 : f32 to vector<8x128xf32>
    %360 = arith.addf %359, %358 : vector<8x128xf32>
    %361 = arith.divf %359, %360 : vector<8x128xf32>
    %362 = arith.mulf %353, %335 : vector<8x128xf32>
    %363 = arith.mulf %347, %355 : vector<8x128xf32>
    %364 = arith.addf %362, %363 : vector<8x128xf32>
    %365 = math.tanh %364 : vector<8x128xf32>
    %366 = arith.mulf %361, %365 : vector<8x128xf32>
    %367 = vector.shape_cast %331 : vector<8x1xi1> to vector<8x1xi1>
    %368 = vector.broadcast %367 : vector<8x1xi1> to vector<8x128xi1>
    %369 = arith.select %368, %366, %333 : vector<8x128xi1>, vector<8x128xf32>
    %370 = vector.shape_cast %331 : vector<8x1xi1> to vector<8x1xi1>
    %371 = vector.broadcast %370 : vector<8x1xi1> to vector<8x128xi1>
    %372 = arith.select %371, %364, %335 : vector<8x128xi1>, vector<8x128xf32>
    %c0_157 = arith.constant 0 : index
    %c0_158 = arith.constant 0 : index
    %c0_159 = arith.constant 0 : index
    %373 = vector.load %arg9[%c0_157, %c0_158, %c0_159] : memref<2x8x128xf32, #tpu.memory_space<vmem>>, vector<1x8x128xf32>
    %374 = vector.shape_cast %373 : vector<1x8x128xf32> to vector<8x128xf32>
    %375 = vector.shape_cast %369 : vector<8x128xf32> to vector<1x8x128xf32>
    tpu.vector_store %arg9[%c0_157, %c0_158, %c0_159], %375 {strides = array<i32>} : memref<2x8x128xf32, #tpu.memory_space<vmem>>, vector<1x8x128xf32>,
    %c0_160 = arith.constant 0 : index
    %c0_161 = arith.constant 0 : index
    %c0_162 = arith.constant 0 : index
    %376 = vector.load %arg10[%c0_160, %c0_161, %c0_162] : memref<2x8x128xf32, #tpu.memory_space<vmem>>, vector<1x8x128xf32>
    %377 = vector.shape_cast %376 : vector<1x8x128xf32> to vector<8x128xf32>
    %378 = vector.shape_cast %372 : vector<8x128xf32> to vector<1x8x128xf32>
    tpu.vector_store %arg10[%c0_160, %c0_161, %c0_162], %378 {strides = array<i32>} : memref<2x8x128xf32, #tpu.memory_space<vmem>>, vector<1x8x128xf32>,
    %c1_163 = arith.constant 1 : index
    %c0_164 = arith.constant 0 : index
    %c0_165 = arith.constant 0 : index
    %379 = vector.load %arg9[%c1_163, %c0_164, %c0_165] : memref<2x8x128xf32, #tpu.memory_space<vmem>>, vector<1x8x128xf32>
    %380 = vector.shape_cast %379 : vector<1x8x128xf32> to vector<8x128xf32>
    %c1_166 = arith.constant 1 : index
    %c0_167 = arith.constant 0 : index
    %c0_168 = arith.constant 0 : index
    %381 = vector.load %arg10[%c1_166, %c0_167, %c0_168] : memref<2x8x128xf32, #tpu.memory_space<vmem>>, vector<1x8x128xf32>
    %382 = vector.shape_cast %381 : vector<1x8x128xf32> to vector<8x128xf32>
    %383 = arith.truncf %369 : vector<8x128xf32> to vector<8x128xbf16>
    %c0_169 = arith.constant 0 : index
    %c0_170 = arith.constant 0 : index
    %384 = vector.load %arg4[%c0_169, %c0_170] : memref<128x512xbf16, #tpu.memory_space<vmem>>, vector<128x512xbf16>
    %cst_171 = arith.constant dense<0.000000e+00> : vector<8x512xf32>
    %385 = tpu.matmul %383, %384, %cst_171 {dimension_numbers = #tpu.dot_dimension_numbers<[1], [0], [0], [1], [0, 0, 1, 1], [], []>} : vector<8x128xbf16>, vector<128x512xbf16>, vector<8x512xf32> -> vector<8x512xf32>
    %386 = arith.truncf %380 : vector<8x128xf32> to vector<8x128xbf16>
    %c0_172 = arith.constant 0 : index
    %c0_173 = arith.constant 0 : index
    %387 = vector.load %arg5[%c0_172, %c0_173] : memref<128x512xbf16, #tpu.memory_space<vmem>>, vector<128x512xbf16>
    %cst_174 = arith.constant dense<0.000000e+00> : vector<8x512xf32>
    %388 = tpu.matmul %386, %387, %cst_174 {dimension_numbers = #tpu.dot_dimension_numbers<[1], [0], [0], [1], [0, 0, 1, 1], [], []>} : vector<8x128xbf16>, vector<128x512xbf16>, vector<8x512xf32> -> vector<8x512xf32>
    %389 = arith.addf %385, %388 : vector<8x512xf32>
    %390 = arith.addf %389, %6 : vector<8x512xf32>
    %391 = vector.extract_strided_slice %390 {offsets = [0, 0], sizes = [8, 128], strides = [1, 1]} : vector<8x512xf32> to vector<8x128xf32>
    %392 = arith.negf %391 : vector<8x128xf32>
    %393 = math.exp %392 : vector<8x128xf32>
    %cst_175 = arith.constant 1.000000e+00 : f32
    %394 = vector.broadcast %cst_175 : f32 to vector<8x128xf32>
    %395 = arith.addf %394, %393 : vector<8x128xf32>
    %396 = arith.divf %394, %395 : vector<8x128xf32>
    %397 = vector.extract_strided_slice %390 {offsets = [0, 128], sizes = [8, 128], strides = [1, 1]} : vector<8x512xf32> to vector<8x128xf32>
    %398 = arith.negf %397 : vector<8x128xf32>
    %399 = math.exp %398 : vector<8x128xf32>
    %cst_176 = arith.constant 1.000000e+00 : f32
    %400 = vector.broadcast %cst_176 : f32 to vector<8x128xf32>
    %401 = arith.addf %400, %399 : vector<8x128xf32>
    %402 = arith.divf %400, %401 : vector<8x128xf32>
    %403 = vector.extract_strided_slice %390 {offsets = [0, 256], sizes = [8, 128], strides = [1, 1]} : vector<8x512xf32> to vector<8x128xf32>
    %404 = math.tanh %403 : vector<8x128xf32>
    %405 = vector.extract_strided_slice %390 {offsets = [0, 384], sizes = [8, 128], strides = [1, 1]} : vector<8x512xf32> to vector<8x128xf32>
    %406 = arith.negf %405 : vector<8x128xf32>
    %407 = math.exp %406 : vector<8x128xf32>
    %cst_177 = arith.constant 1.000000e+00 : f32
    %408 = vector.broadcast %cst_177 : f32 to vector<8x128xf32>
    %409 = arith.addf %408, %407 : vector<8x128xf32>
    %410 = arith.divf %408, %409 : vector<8x128xf32>
    %411 = arith.mulf %402, %382 : vector<8x128xf32>
    %412 = arith.mulf %396, %404 : vector<8x128xf32>
    %413 = arith.addf %411, %412 : vector<8x128xf32>
    %414 = math.tanh %413 : vector<8x128xf32>
    %415 = arith.mulf %410, %414 : vector<8x128xf32>
    %416 = vector.shape_cast %331 : vector<8x1xi1> to vector<8x1xi1>
    %417 = vector.broadcast %416 : vector<8x1xi1> to vector<8x128xi1>
    %418 = arith.select %417, %415, %380 : vector<8x128xi1>, vector<8x128xf32>
    %419 = vector.shape_cast %331 : vector<8x1xi1> to vector<8x1xi1>
    %420 = vector.broadcast %419 : vector<8x1xi1> to vector<8x128xi1>
    %421 = arith.select %420, %413, %382 : vector<8x128xi1>, vector<8x128xf32>
    %c1_178 = arith.constant 1 : index
    %c0_179 = arith.constant 0 : index
    %c0_180 = arith.constant 0 : index
    %422 = vector.load %arg9[%c1_178, %c0_179, %c0_180] : memref<2x8x128xf32, #tpu.memory_space<vmem>>, vector<1x8x128xf32>
    %423 = vector.shape_cast %422 : vector<1x8x128xf32> to vector<8x128xf32>
    %424 = vector.shape_cast %418 : vector<8x128xf32> to vector<1x8x128xf32>
    tpu.vector_store %arg9[%c1_178, %c0_179, %c0_180], %424 {strides = array<i32>} : memref<2x8x128xf32, #tpu.memory_space<vmem>>, vector<1x8x128xf32>,
    %c1_181 = arith.constant 1 : index
    %c0_182 = arith.constant 0 : index
    %c0_183 = arith.constant 0 : index
    %425 = vector.load %arg10[%c1_181, %c0_182, %c0_183] : memref<2x8x128xf32, #tpu.memory_space<vmem>>, vector<1x8x128xf32>
    %426 = vector.shape_cast %425 : vector<1x8x128xf32> to vector<8x128xf32>
    %427 = vector.shape_cast %421 : vector<8x128xf32> to vector<1x8x128xf32>
    tpu.vector_store %arg10[%c1_181, %c0_182, %c0_183], %427 {strides = array<i32>} : memref<2x8x128xf32, #tpu.memory_space<vmem>>, vector<1x8x128xf32>,
    %cst_184 = arith.constant 0.000000e+00 : f32
    %428 = vector.shape_cast %331 : vector<8x1xi1> to vector<8x1xi1>
    %429 = vector.broadcast %428 : vector<8x1xi1> to vector<8x128xi1>
    %430 = vector.broadcast %cst_184 : f32 to vector<8x128xf32>
    %431 = arith.select %429, %418, %430 : vector<8x128xi1>, vector<8x128xf32>
    %c3_185 = arith.constant 3 : index
    %c0_186 = arith.constant 0 : index
    %c0_187 = arith.constant 0 : index
    %432 = vector.load %arg7[%c3_185, %c0_186, %c0_187] : memref<8x8x128xf32, #tpu.memory_space<vmem>>, vector<1x8x128xf32>
    %433 = vector.shape_cast %432 : vector<1x8x128xf32> to vector<8x128xf32>
    %434 = vector.shape_cast %431 : vector<8x128xf32> to vector<1x8x128xf32>
    tpu.vector_store %arg7[%c3_185, %c0_186, %c0_187], %434 {strides = array<i32>} : memref<8x8x128xf32, #tpu.memory_space<vmem>>, vector<1x8x128xf32>,
    %c8_i32_188 = arith.constant 8 : i32
    %435 = arith.muli %arg0, %c8_i32_188 : i32
    %c4_i32 = arith.constant 4 : i32
    %436 = arith.addi %435, %c4_i32 : i32
    %437 = vector.broadcast %436 : i32 to vector<8x1xi32>
    %438 = arith.cmpi sgt, %3, %437 : vector<8x1xi32>
    %c0_189 = arith.constant 0 : index
    %c0_190 = arith.constant 0 : index
    %c0_191 = arith.constant 0 : index
    %439 = vector.load %arg9[%c0_189, %c0_190, %c0_191] : memref<2x8x128xf32, #tpu.memory_space<vmem>>, vector<1x8x128xf32>
    %440 = vector.shape_cast %439 : vector<1x8x128xf32> to vector<8x128xf32>
    %c0_192 = arith.constant 0 : index
    %c0_193 = arith.constant 0 : index
    %c0_194 = arith.constant 0 : index
    %441 = vector.load %arg10[%c0_192, %c0_193, %c0_194] : memref<2x8x128xf32, #tpu.memory_space<vmem>>, vector<1x8x128xf32>
    %442 = vector.shape_cast %441 : vector<1x8x128xf32> to vector<8x128xf32>
    %c4 = arith.constant 4 : index
    %c0_195 = arith.constant 0 : index
    %c0_196 = arith.constant 0 : index
    %443 = vector.load %arg1[%c4, %c0_195, %c0_196] : memref<8x8x512xf32, #tpu.memory_space<vmem>>, vector<1x8x512xf32>
    %444 = vector.shape_cast %443 : vector<1x8x512xf32> to vector<8x512xf32>
    %445 = arith.truncf %440 : vector<8x128xf32> to vector<8x128xbf16>
    %c0_197 = arith.constant 0 : index
    %c0_198 = arith.constant 0 : index
    %446 = vector.load %arg3[%c0_197, %c0_198] : memref<128x512xbf16, #tpu.memory_space<vmem>>, vector<128x512xbf16>
    %cst_199 = arith.constant dense<0.000000e+00> : vector<8x512xf32>
    %447 = tpu.matmul %445, %446, %cst_199 {dimension_numbers = #tpu.dot_dimension_numbers<[1], [0], [0], [1], [0, 0, 1, 1], [], []>} : vector<8x128xbf16>, vector<128x512xbf16>, vector<8x512xf32> -> vector<8x512xf32>
    %448 = arith.addf %444, %447 : vector<8x512xf32>
    %449 = vector.extract_strided_slice %448 {offsets = [0, 0], sizes = [8, 128], strides = [1, 1]} : vector<8x512xf32> to vector<8x128xf32>
    %450 = arith.negf %449 : vector<8x128xf32>
    %451 = math.exp %450 : vector<8x128xf32>
    %cst_200 = arith.constant 1.000000e+00 : f32
    %452 = vector.broadcast %cst_200 : f32 to vector<8x128xf32>
    %453 = arith.addf %452, %451 : vector<8x128xf32>
    %454 = arith.divf %452, %453 : vector<8x128xf32>
    %455 = vector.extract_strided_slice %448 {offsets = [0, 128], sizes = [8, 128], strides = [1, 1]} : vector<8x512xf32> to vector<8x128xf32>
    %456 = arith.negf %455 : vector<8x128xf32>
    %457 = math.exp %456 : vector<8x128xf32>
    %cst_201 = arith.constant 1.000000e+00 : f32
    %458 = vector.broadcast %cst_201 : f32 to vector<8x128xf32>
    %459 = arith.addf %458, %457 : vector<8x128xf32>
    %460 = arith.divf %458, %459 : vector<8x128xf32>
    %461 = vector.extract_strided_slice %448 {offsets = [0, 256], sizes = [8, 128], strides = [1, 1]} : vector<8x512xf32> to vector<8x128xf32>
    %462 = math.tanh %461 : vector<8x128xf32>
    %463 = vector.extract_strided_slice %448 {offsets = [0, 384], sizes = [8, 128], strides = [1, 1]} : vector<8x512xf32> to vector<8x128xf32>
    %464 = arith.negf %463 : vector<8x128xf32>
    %465 = math.exp %464 : vector<8x128xf32>
    %cst_202 = arith.constant 1.000000e+00 : f32
    %466 = vector.broadcast %cst_202 : f32 to vector<8x128xf32>
    %467 = arith.addf %466, %465 : vector<8x128xf32>
    %468 = arith.divf %466, %467 : vector<8x128xf32>
    %469 = arith.mulf %460, %442 : vector<8x128xf32>
    %470 = arith.mulf %454, %462 : vector<8x128xf32>
    %471 = arith.addf %469, %470 : vector<8x128xf32>
    %472 = math.tanh %471 : vector<8x128xf32>
    %473 = arith.mulf %468, %472 : vector<8x128xf32>
    %474 = vector.shape_cast %438 : vector<8x1xi1> to vector<8x1xi1>
    %475 = vector.broadcast %474 : vector<8x1xi1> to vector<8x128xi1>
    %476 = arith.select %475, %473, %440 : vector<8x128xi1>, vector<8x128xf32>
    %477 = vector.shape_cast %438 : vector<8x1xi1> to vector<8x1xi1>
    %478 = vector.broadcast %477 : vector<8x1xi1> to vector<8x128xi1>
    %479 = arith.select %478, %471, %442 : vector<8x128xi1>, vector<8x128xf32>
    %c0_203 = arith.constant 0 : index
    %c0_204 = arith.constant 0 : index
    %c0_205 = arith.constant 0 : index
    %480 = vector.load %arg9[%c0_203, %c0_204, %c0_205] : memref<2x8x128xf32, #tpu.memory_space<vmem>>, vector<1x8x128xf32>
    %481 = vector.shape_cast %480 : vector<1x8x128xf32> to vector<8x128xf32>
    %482 = vector.shape_cast %476 : vector<8x128xf32> to vector<1x8x128xf32>
    tpu.vector_store %arg9[%c0_203, %c0_204, %c0_205], %482 {strides = array<i32>} : memref<2x8x128xf32, #tpu.memory_space<vmem>>, vector<1x8x128xf32>,
    %c0_206 = arith.constant 0 : index
    %c0_207 = arith.constant 0 : index
    %c0_208 = arith.constant 0 : index
    %483 = vector.load %arg10[%c0_206, %c0_207, %c0_208] : memref<2x8x128xf32, #tpu.memory_space<vmem>>, vector<1x8x128xf32>
    %484 = vector.shape_cast %483 : vector<1x8x128xf32> to vector<8x128xf32>
    %485 = vector.shape_cast %479 : vector<8x128xf32> to vector<1x8x128xf32>
    tpu.vector_store %arg10[%c0_206, %c0_207, %c0_208], %485 {strides = array<i32>} : memref<2x8x128xf32, #tpu.memory_space<vmem>>, vector<1x8x128xf32>,
    %c1_209 = arith.constant 1 : index
    %c0_210 = arith.constant 0 : index
    %c0_211 = arith.constant 0 : index
    %486 = vector.load %arg9[%c1_209, %c0_210, %c0_211] : memref<2x8x128xf32, #tpu.memory_space<vmem>>, vector<1x8x128xf32>
    %487 = vector.shape_cast %486 : vector<1x8x128xf32> to vector<8x128xf32>
    %c1_212 = arith.constant 1 : index
    %c0_213 = arith.constant 0 : index
    %c0_214 = arith.constant 0 : index
    %488 = vector.load %arg10[%c1_212, %c0_213, %c0_214] : memref<2x8x128xf32, #tpu.memory_space<vmem>>, vector<1x8x128xf32>
    %489 = vector.shape_cast %488 : vector<1x8x128xf32> to vector<8x128xf32>
    %490 = arith.truncf %476 : vector<8x128xf32> to vector<8x128xbf16>
    %c0_215 = arith.constant 0 : index
    %c0_216 = arith.constant 0 : index
    %491 = vector.load %arg4[%c0_215, %c0_216] : memref<128x512xbf16, #tpu.memory_space<vmem>>, vector<128x512xbf16>
    %cst_217 = arith.constant dense<0.000000e+00> : vector<8x512xf32>
    %492 = tpu.matmul %490, %491, %cst_217 {dimension_numbers = #tpu.dot_dimension_numbers<[1], [0], [0], [1], [0, 0, 1, 1], [], []>} : vector<8x128xbf16>, vector<128x512xbf16>, vector<8x512xf32> -> vector<8x512xf32>
    %493 = arith.truncf %487 : vector<8x128xf32> to vector<8x128xbf16>
    %c0_218 = arith.constant 0 : index
    %c0_219 = arith.constant 0 : index
    %494 = vector.load %arg5[%c0_218, %c0_219] : memref<128x512xbf16, #tpu.memory_space<vmem>>, vector<128x512xbf16>
    %cst_220 = arith.constant dense<0.000000e+00> : vector<8x512xf32>
    %495 = tpu.matmul %493, %494, %cst_220 {dimension_numbers = #tpu.dot_dimension_numbers<[1], [0], [0], [1], [0, 0, 1, 1], [], []>} : vector<8x128xbf16>, vector<128x512xbf16>, vector<8x512xf32> -> vector<8x512xf32>
    %496 = arith.addf %492, %495 : vector<8x512xf32>
    %497 = arith.addf %496, %6 : vector<8x512xf32>
    %498 = vector.extract_strided_slice %497 {offsets = [0, 0], sizes = [8, 128], strides = [1, 1]} : vector<8x512xf32> to vector<8x128xf32>
    %499 = arith.negf %498 : vector<8x128xf32>
    %500 = math.exp %499 : vector<8x128xf32>
    %cst_221 = arith.constant 1.000000e+00 : f32
    %501 = vector.broadcast %cst_221 : f32 to vector<8x128xf32>
    %502 = arith.addf %501, %500 : vector<8x128xf32>
    %503 = arith.divf %501, %502 : vector<8x128xf32>
    %504 = vector.extract_strided_slice %497 {offsets = [0, 128], sizes = [8, 128], strides = [1, 1]} : vector<8x512xf32> to vector<8x128xf32>
    %505 = arith.negf %504 : vector<8x128xf32>
    %506 = math.exp %505 : vector<8x128xf32>
    %cst_222 = arith.constant 1.000000e+00 : f32
    %507 = vector.broadcast %cst_222 : f32 to vector<8x128xf32>
    %508 = arith.addf %507, %506 : vector<8x128xf32>
    %509 = arith.divf %507, %508 : vector<8x128xf32>
    %510 = vector.extract_strided_slice %497 {offsets = [0, 256], sizes = [8, 128], strides = [1, 1]} : vector<8x512xf32> to vector<8x128xf32>
    %511 = math.tanh %510 : vector<8x128xf32>
    %512 = vector.extract_strided_slice %497 {offsets = [0, 384], sizes = [8, 128], strides = [1, 1]} : vector<8x512xf32> to vector<8x128xf32>
    %513 = arith.negf %512 : vector<8x128xf32>
    %514 = math.exp %513 : vector<8x128xf32>
    %cst_223 = arith.constant 1.000000e+00 : f32
    %515 = vector.broadcast %cst_223 : f32 to vector<8x128xf32>
    %516 = arith.addf %515, %514 : vector<8x128xf32>
    %517 = arith.divf %515, %516 : vector<8x128xf32>
    %518 = arith.mulf %509, %489 : vector<8x128xf32>
    %519 = arith.mulf %503, %511 : vector<8x128xf32>
    %520 = arith.addf %518, %519 : vector<8x128xf32>
    %521 = math.tanh %520 : vector<8x128xf32>
    %522 = arith.mulf %517, %521 : vector<8x128xf32>
    %523 = vector.shape_cast %438 : vector<8x1xi1> to vector<8x1xi1>
    %524 = vector.broadcast %523 : vector<8x1xi1> to vector<8x128xi1>
    %525 = arith.select %524, %522, %487 : vector<8x128xi1>, vector<8x128xf32>
    %526 = vector.shape_cast %438 : vector<8x1xi1> to vector<8x1xi1>
    %527 = vector.broadcast %526 : vector<8x1xi1> to vector<8x128xi1>
    %528 = arith.select %527, %520, %489 : vector<8x128xi1>, vector<8x128xf32>
    %c1_224 = arith.constant 1 : index
    %c0_225 = arith.constant 0 : index
    %c0_226 = arith.constant 0 : index
    %529 = vector.load %arg9[%c1_224, %c0_225, %c0_226] : memref<2x8x128xf32, #tpu.memory_space<vmem>>, vector<1x8x128xf32>
    %530 = vector.shape_cast %529 : vector<1x8x128xf32> to vector<8x128xf32>
    %531 = vector.shape_cast %525 : vector<8x128xf32> to vector<1x8x128xf32>
    tpu.vector_store %arg9[%c1_224, %c0_225, %c0_226], %531 {strides = array<i32>} : memref<2x8x128xf32, #tpu.memory_space<vmem>>, vector<1x8x128xf32>,
    %c1_227 = arith.constant 1 : index
    %c0_228 = arith.constant 0 : index
    %c0_229 = arith.constant 0 : index
    %532 = vector.load %arg10[%c1_227, %c0_228, %c0_229] : memref<2x8x128xf32, #tpu.memory_space<vmem>>, vector<1x8x128xf32>
    %533 = vector.shape_cast %532 : vector<1x8x128xf32> to vector<8x128xf32>
    %534 = vector.shape_cast %528 : vector<8x128xf32> to vector<1x8x128xf32>
    tpu.vector_store %arg10[%c1_227, %c0_228, %c0_229], %534 {strides = array<i32>} : memref<2x8x128xf32, #tpu.memory_space<vmem>>, vector<1x8x128xf32>,
    %cst_230 = arith.constant 0.000000e+00 : f32
    %535 = vector.shape_cast %438 : vector<8x1xi1> to vector<8x1xi1>
    %536 = vector.broadcast %535 : vector<8x1xi1> to vector<8x128xi1>
    %537 = vector.broadcast %cst_230 : f32 to vector<8x128xf32>
    %538 = arith.select %536, %525, %537 : vector<8x128xi1>, vector<8x128xf32>
    %c4_231 = arith.constant 4 : index
    %c0_232 = arith.constant 0 : index
    %c0_233 = arith.constant 0 : index
    %539 = vector.load %arg7[%c4_231, %c0_232, %c0_233] : memref<8x8x128xf32, #tpu.memory_space<vmem>>, vector<1x8x128xf32>
    %540 = vector.shape_cast %539 : vector<1x8x128xf32> to vector<8x128xf32>
    %541 = vector.shape_cast %538 : vector<8x128xf32> to vector<1x8x128xf32>
    tpu.vector_store %arg7[%c4_231, %c0_232, %c0_233], %541 {strides = array<i32>} : memref<8x8x128xf32, #tpu.memory_space<vmem>>, vector<1x8x128xf32>,
    %c8_i32_234 = arith.constant 8 : i32
    %542 = arith.muli %arg0, %c8_i32_234 : i32
    %c5_i32 = arith.constant 5 : i32
    %543 = arith.addi %542, %c5_i32 : i32
    %544 = vector.broadcast %543 : i32 to vector<8x1xi32>
    %545 = arith.cmpi sgt, %3, %544 : vector<8x1xi32>
    %c0_235 = arith.constant 0 : index
    %c0_236 = arith.constant 0 : index
    %c0_237 = arith.constant 0 : index
    %546 = vector.load %arg9[%c0_235, %c0_236, %c0_237] : memref<2x8x128xf32, #tpu.memory_space<vmem>>, vector<1x8x128xf32>
    %547 = vector.shape_cast %546 : vector<1x8x128xf32> to vector<8x128xf32>
    %c0_238 = arith.constant 0 : index
    %c0_239 = arith.constant 0 : index
    %c0_240 = arith.constant 0 : index
    %548 = vector.load %arg10[%c0_238, %c0_239, %c0_240] : memref<2x8x128xf32, #tpu.memory_space<vmem>>, vector<1x8x128xf32>
    %549 = vector.shape_cast %548 : vector<1x8x128xf32> to vector<8x128xf32>
    %c5 = arith.constant 5 : index
    %c0_241 = arith.constant 0 : index
    %c0_242 = arith.constant 0 : index
    %550 = vector.load %arg1[%c5, %c0_241, %c0_242] : memref<8x8x512xf32, #tpu.memory_space<vmem>>, vector<1x8x512xf32>
    %551 = vector.shape_cast %550 : vector<1x8x512xf32> to vector<8x512xf32>
    %552 = arith.truncf %547 : vector<8x128xf32> to vector<8x128xbf16>
    %c0_243 = arith.constant 0 : index
    %c0_244 = arith.constant 0 : index
    %553 = vector.load %arg3[%c0_243, %c0_244] : memref<128x512xbf16, #tpu.memory_space<vmem>>, vector<128x512xbf16>
    %cst_245 = arith.constant dense<0.000000e+00> : vector<8x512xf32>
    %554 = tpu.matmul %552, %553, %cst_245 {dimension_numbers = #tpu.dot_dimension_numbers<[1], [0], [0], [1], [0, 0, 1, 1], [], []>} : vector<8x128xbf16>, vector<128x512xbf16>, vector<8x512xf32> -> vector<8x512xf32>
    %555 = arith.addf %551, %554 : vector<8x512xf32>
    %556 = vector.extract_strided_slice %555 {offsets = [0, 0], sizes = [8, 128], strides = [1, 1]} : vector<8x512xf32> to vector<8x128xf32>
    %557 = arith.negf %556 : vector<8x128xf32>
    %558 = math.exp %557 : vector<8x128xf32>
    %cst_246 = arith.constant 1.000000e+00 : f32
    %559 = vector.broadcast %cst_246 : f32 to vector<8x128xf32>
    %560 = arith.addf %559, %558 : vector<8x128xf32>
    %561 = arith.divf %559, %560 : vector<8x128xf32>
    %562 = vector.extract_strided_slice %555 {offsets = [0, 128], sizes = [8, 128], strides = [1, 1]} : vector<8x512xf32> to vector<8x128xf32>
    %563 = arith.negf %562 : vector<8x128xf32>
    %564 = math.exp %563 : vector<8x128xf32>
    %cst_247 = arith.constant 1.000000e+00 : f32
    %565 = vector.broadcast %cst_247 : f32 to vector<8x128xf32>
    %566 = arith.addf %565, %564 : vector<8x128xf32>
    %567 = arith.divf %565, %566 : vector<8x128xf32>
    %568 = vector.extract_strided_slice %555 {offsets = [0, 256], sizes = [8, 128], strides = [1, 1]} : vector<8x512xf32> to vector<8x128xf32>
    %569 = math.tanh %568 : vector<8x128xf32>
    %570 = vector.extract_strided_slice %555 {offsets = [0, 384], sizes = [8, 128], strides = [1, 1]} : vector<8x512xf32> to vector<8x128xf32>
    %571 = arith.negf %570 : vector<8x128xf32>
    %572 = math.exp %571 : vector<8x128xf32>
    %cst_248 = arith.constant 1.000000e+00 : f32
    %573 = vector.broadcast %cst_248 : f32 to vector<8x128xf32>
    %574 = arith.addf %573, %572 : vector<8x128xf32>
    %575 = arith.divf %573, %574 : vector<8x128xf32>
    %576 = arith.mulf %567, %549 : vector<8x128xf32>
    %577 = arith.mulf %561, %569 : vector<8x128xf32>
    %578 = arith.addf %576, %577 : vector<8x128xf32>
    %579 = math.tanh %578 : vector<8x128xf32>
    %580 = arith.mulf %575, %579 : vector<8x128xf32>
    %581 = vector.shape_cast %545 : vector<8x1xi1> to vector<8x1xi1>
    %582 = vector.broadcast %581 : vector<8x1xi1> to vector<8x128xi1>
    %583 = arith.select %582, %580, %547 : vector<8x128xi1>, vector<8x128xf32>
    %584 = vector.shape_cast %545 : vector<8x1xi1> to vector<8x1xi1>
    %585 = vector.broadcast %584 : vector<8x1xi1> to vector<8x128xi1>
    %586 = arith.select %585, %578, %549 : vector<8x128xi1>, vector<8x128xf32>
    %c0_249 = arith.constant 0 : index
    %c0_250 = arith.constant 0 : index
    %c0_251 = arith.constant 0 : index
    %587 = vector.load %arg9[%c0_249, %c0_250, %c0_251] : memref<2x8x128xf32, #tpu.memory_space<vmem>>, vector<1x8x128xf32>
    %588 = vector.shape_cast %587 : vector<1x8x128xf32> to vector<8x128xf32>
    %589 = vector.shape_cast %583 : vector<8x128xf32> to vector<1x8x128xf32>
    tpu.vector_store %arg9[%c0_249, %c0_250, %c0_251], %589 {strides = array<i32>} : memref<2x8x128xf32, #tpu.memory_space<vmem>>, vector<1x8x128xf32>,
    %c0_252 = arith.constant 0 : index
    %c0_253 = arith.constant 0 : index
    %c0_254 = arith.constant 0 : index
    %590 = vector.load %arg10[%c0_252, %c0_253, %c0_254] : memref<2x8x128xf32, #tpu.memory_space<vmem>>, vector<1x8x128xf32>
    %591 = vector.shape_cast %590 : vector<1x8x128xf32> to vector<8x128xf32>
    %592 = vector.shape_cast %586 : vector<8x128xf32> to vector<1x8x128xf32>
    tpu.vector_store %arg10[%c0_252, %c0_253, %c0_254], %592 {strides = array<i32>} : memref<2x8x128xf32, #tpu.memory_space<vmem>>, vector<1x8x128xf32>,
    %c1_255 = arith.constant 1 : index
    %c0_256 = arith.constant 0 : index
    %c0_257 = arith.constant 0 : index
    %593 = vector.load %arg9[%c1_255, %c0_256, %c0_257] : memref<2x8x128xf32, #tpu.memory_space<vmem>>, vector<1x8x128xf32>
    %594 = vector.shape_cast %593 : vector<1x8x128xf32> to vector<8x128xf32>
    %c1_258 = arith.constant 1 : index
    %c0_259 = arith.constant 0 : index
    %c0_260 = arith.constant 0 : index
    %595 = vector.load %arg10[%c1_258, %c0_259, %c0_260] : memref<2x8x128xf32, #tpu.memory_space<vmem>>, vector<1x8x128xf32>
    %596 = vector.shape_cast %595 : vector<1x8x128xf32> to vector<8x128xf32>
    %597 = arith.truncf %583 : vector<8x128xf32> to vector<8x128xbf16>
    %c0_261 = arith.constant 0 : index
    %c0_262 = arith.constant 0 : index
    %598 = vector.load %arg4[%c0_261, %c0_262] : memref<128x512xbf16, #tpu.memory_space<vmem>>, vector<128x512xbf16>
    %cst_263 = arith.constant dense<0.000000e+00> : vector<8x512xf32>
    %599 = tpu.matmul %597, %598, %cst_263 {dimension_numbers = #tpu.dot_dimension_numbers<[1], [0], [0], [1], [0, 0, 1, 1], [], []>} : vector<8x128xbf16>, vector<128x512xbf16>, vector<8x512xf32> -> vector<8x512xf32>
    %600 = arith.truncf %594 : vector<8x128xf32> to vector<8x128xbf16>
    %c0_264 = arith.constant 0 : index
    %c0_265 = arith.constant 0 : index
    %601 = vector.load %arg5[%c0_264, %c0_265] : memref<128x512xbf16, #tpu.memory_space<vmem>>, vector<128x512xbf16>
    %cst_266 = arith.constant dense<0.000000e+00> : vector<8x512xf32>
    %602 = tpu.matmul %600, %601, %cst_266 {dimension_numbers = #tpu.dot_dimension_numbers<[1], [0], [0], [1], [0, 0, 1, 1], [], []>} : vector<8x128xbf16>, vector<128x512xbf16>, vector<8x512xf32> -> vector<8x512xf32>
    %603 = arith.addf %599, %602 : vector<8x512xf32>
    %604 = arith.addf %603, %6 : vector<8x512xf32>
    %605 = vector.extract_strided_slice %604 {offsets = [0, 0], sizes = [8, 128], strides = [1, 1]} : vector<8x512xf32> to vector<8x128xf32>
    %606 = arith.negf %605 : vector<8x128xf32>
    %607 = math.exp %606 : vector<8x128xf32>
    %cst_267 = arith.constant 1.000000e+00 : f32
    %608 = vector.broadcast %cst_267 : f32 to vector<8x128xf32>
    %609 = arith.addf %608, %607 : vector<8x128xf32>
    %610 = arith.divf %608, %609 : vector<8x128xf32>
    %611 = vector.extract_strided_slice %604 {offsets = [0, 128], sizes = [8, 128], strides = [1, 1]} : vector<8x512xf32> to vector<8x128xf32>
    %612 = arith.negf %611 : vector<8x128xf32>
    %613 = math.exp %612 : vector<8x128xf32>
    %cst_268 = arith.constant 1.000000e+00 : f32
    %614 = vector.broadcast %cst_268 : f32 to vector<8x128xf32>
    %615 = arith.addf %614, %613 : vector<8x128xf32>
    %616 = arith.divf %614, %615 : vector<8x128xf32>
    %617 = vector.extract_strided_slice %604 {offsets = [0, 256], sizes = [8, 128], strides = [1, 1]} : vector<8x512xf32> to vector<8x128xf32>
    %618 = math.tanh %617 : vector<8x128xf32>
    %619 = vector.extract_strided_slice %604 {offsets = [0, 384], sizes = [8, 128], strides = [1, 1]} : vector<8x512xf32> to vector<8x128xf32>
    %620 = arith.negf %619 : vector<8x128xf32>
    %621 = math.exp %620 : vector<8x128xf32>
    %cst_269 = arith.constant 1.000000e+00 : f32
    %622 = vector.broadcast %cst_269 : f32 to vector<8x128xf32>
    %623 = arith.addf %622, %621 : vector<8x128xf32>
    %624 = arith.divf %622, %623 : vector<8x128xf32>
    %625 = arith.mulf %616, %596 : vector<8x128xf32>
    %626 = arith.mulf %610, %618 : vector<8x128xf32>
    %627 = arith.addf %625, %626 : vector<8x128xf32>
    %628 = math.tanh %627 : vector<8x128xf32>
    %629 = arith.mulf %624, %628 : vector<8x128xf32>
    %630 = vector.shape_cast %545 : vector<8x1xi1> to vector<8x1xi1>
    %631 = vector.broadcast %630 : vector<8x1xi1> to vector<8x128xi1>
    %632 = arith.select %631, %629, %594 : vector<8x128xi1>, vector<8x128xf32>
    %633 = vector.shape_cast %545 : vector<8x1xi1> to vector<8x1xi1>
    %634 = vector.broadcast %633 : vector<8x1xi1> to vector<8x128xi1>
    %635 = arith.select %634, %627, %596 : vector<8x128xi1>, vector<8x128xf32>
    %c1_270 = arith.constant 1 : index
    %c0_271 = arith.constant 0 : index
    %c0_272 = arith.constant 0 : index
    %636 = vector.load %arg9[%c1_270, %c0_271, %c0_272] : memref<2x8x128xf32, #tpu.memory_space<vmem>>, vector<1x8x128xf32>
    %637 = vector.shape_cast %636 : vector<1x8x128xf32> to vector<8x128xf32>
    %638 = vector.shape_cast %632 : vector<8x128xf32> to vector<1x8x128xf32>
    tpu.vector_store %arg9[%c1_270, %c0_271, %c0_272], %638 {strides = array<i32>} : memref<2x8x128xf32, #tpu.memory_space<vmem>>, vector<1x8x128xf32>,
    %c1_273 = arith.constant 1 : index
    %c0_274 = arith.constant 0 : index
    %c0_275 = arith.constant 0 : index
    %639 = vector.load %arg10[%c1_273, %c0_274, %c0_275] : memref<2x8x128xf32, #tpu.memory_space<vmem>>, vector<1x8x128xf32>
    %640 = vector.shape_cast %639 : vector<1x8x128xf32> to vector<8x128xf32>
    %641 = vector.shape_cast %635 : vector<8x128xf32> to vector<1x8x128xf32>
    tpu.vector_store %arg10[%c1_273, %c0_274, %c0_275], %641 {strides = array<i32>} : memref<2x8x128xf32, #tpu.memory_space<vmem>>, vector<1x8x128xf32>,
    %cst_276 = arith.constant 0.000000e+00 : f32
    %642 = vector.shape_cast %545 : vector<8x1xi1> to vector<8x1xi1>
    %643 = vector.broadcast %642 : vector<8x1xi1> to vector<8x128xi1>
    %644 = vector.broadcast %cst_276 : f32 to vector<8x128xf32>
    %645 = arith.select %643, %632, %644 : vector<8x128xi1>, vector<8x128xf32>
    %c5_277 = arith.constant 5 : index
    %c0_278 = arith.constant 0 : index
    %c0_279 = arith.constant 0 : index
    %646 = vector.load %arg7[%c5_277, %c0_278, %c0_279] : memref<8x8x128xf32, #tpu.memory_space<vmem>>, vector<1x8x128xf32>
    %647 = vector.shape_cast %646 : vector<1x8x128xf32> to vector<8x128xf32>
    %648 = vector.shape_cast %645 : vector<8x128xf32> to vector<1x8x128xf32>
    tpu.vector_store %arg7[%c5_277, %c0_278, %c0_279], %648 {strides = array<i32>} : memref<8x8x128xf32, #tpu.memory_space<vmem>>, vector<1x8x128xf32>,
    %c8_i32_280 = arith.constant 8 : i32
    %649 = arith.muli %arg0, %c8_i32_280 : i32
    %c6_i32 = arith.constant 6 : i32
    %650 = arith.addi %649, %c6_i32 : i32
    %651 = vector.broadcast %650 : i32 to vector<8x1xi32>
    %652 = arith.cmpi sgt, %3, %651 : vector<8x1xi32>
    %c0_281 = arith.constant 0 : index
    %c0_282 = arith.constant 0 : index
    %c0_283 = arith.constant 0 : index
    %653 = vector.load %arg9[%c0_281, %c0_282, %c0_283] : memref<2x8x128xf32, #tpu.memory_space<vmem>>, vector<1x8x128xf32>
    %654 = vector.shape_cast %653 : vector<1x8x128xf32> to vector<8x128xf32>
    %c0_284 = arith.constant 0 : index
    %c0_285 = arith.constant 0 : index
    %c0_286 = arith.constant 0 : index
    %655 = vector.load %arg10[%c0_284, %c0_285, %c0_286] : memref<2x8x128xf32, #tpu.memory_space<vmem>>, vector<1x8x128xf32>
    %656 = vector.shape_cast %655 : vector<1x8x128xf32> to vector<8x128xf32>
    %c6 = arith.constant 6 : index
    %c0_287 = arith.constant 0 : index
    %c0_288 = arith.constant 0 : index
    %657 = vector.load %arg1[%c6, %c0_287, %c0_288] : memref<8x8x512xf32, #tpu.memory_space<vmem>>, vector<1x8x512xf32>
    %658 = vector.shape_cast %657 : vector<1x8x512xf32> to vector<8x512xf32>
    %659 = arith.truncf %654 : vector<8x128xf32> to vector<8x128xbf16>
    %c0_289 = arith.constant 0 : index
    %c0_290 = arith.constant 0 : index
    %660 = vector.load %arg3[%c0_289, %c0_290] : memref<128x512xbf16, #tpu.memory_space<vmem>>, vector<128x512xbf16>
    %cst_291 = arith.constant dense<0.000000e+00> : vector<8x512xf32>
    %661 = tpu.matmul %659, %660, %cst_291 {dimension_numbers = #tpu.dot_dimension_numbers<[1], [0], [0], [1], [0, 0, 1, 1], [], []>} : vector<8x128xbf16>, vector<128x512xbf16>, vector<8x512xf32> -> vector<8x512xf32>
    %662 = arith.addf %658, %661 : vector<8x512xf32>
    %663 = vector.extract_strided_slice %662 {offsets = [0, 0], sizes = [8, 128], strides = [1, 1]} : vector<8x512xf32> to vector<8x128xf32>
    %664 = arith.negf %663 : vector<8x128xf32>
    %665 = math.exp %664 : vector<8x128xf32>
    %cst_292 = arith.constant 1.000000e+00 : f32
    %666 = vector.broadcast %cst_292 : f32 to vector<8x128xf32>
    %667 = arith.addf %666, %665 : vector<8x128xf32>
    %668 = arith.divf %666, %667 : vector<8x128xf32>
    %669 = vector.extract_strided_slice %662 {offsets = [0, 128], sizes = [8, 128], strides = [1, 1]} : vector<8x512xf32> to vector<8x128xf32>
    %670 = arith.negf %669 : vector<8x128xf32>
    %671 = math.exp %670 : vector<8x128xf32>
    %cst_293 = arith.constant 1.000000e+00 : f32
    %672 = vector.broadcast %cst_293 : f32 to vector<8x128xf32>
    %673 = arith.addf %672, %671 : vector<8x128xf32>
    %674 = arith.divf %672, %673 : vector<8x128xf32>
    %675 = vector.extract_strided_slice %662 {offsets = [0, 256], sizes = [8, 128], strides = [1, 1]} : vector<8x512xf32> to vector<8x128xf32>
    %676 = math.tanh %675 : vector<8x128xf32>
    %677 = vector.extract_strided_slice %662 {offsets = [0, 384], sizes = [8, 128], strides = [1, 1]} : vector<8x512xf32> to vector<8x128xf32>
    %678 = arith.negf %677 : vector<8x128xf32>
    %679 = math.exp %678 : vector<8x128xf32>
    %cst_294 = arith.constant 1.000000e+00 : f32
    %680 = vector.broadcast %cst_294 : f32 to vector<8x128xf32>
    %681 = arith.addf %680, %679 : vector<8x128xf32>
    %682 = arith.divf %680, %681 : vector<8x128xf32>
    %683 = arith.mulf %674, %656 : vector<8x128xf32>
    %684 = arith.mulf %668, %676 : vector<8x128xf32>
    %685 = arith.addf %683, %684 : vector<8x128xf32>
    %686 = math.tanh %685 : vector<8x128xf32>
    %687 = arith.mulf %682, %686 : vector<8x128xf32>
    %688 = vector.shape_cast %652 : vector<8x1xi1> to vector<8x1xi1>
    %689 = vector.broadcast %688 : vector<8x1xi1> to vector<8x128xi1>
    %690 = arith.select %689, %687, %654 : vector<8x128xi1>, vector<8x128xf32>
    %691 = vector.shape_cast %652 : vector<8x1xi1> to vector<8x1xi1>
    %692 = vector.broadcast %691 : vector<8x1xi1> to vector<8x128xi1>
    %693 = arith.select %692, %685, %656 : vector<8x128xi1>, vector<8x128xf32>
    %c0_295 = arith.constant 0 : index
    %c0_296 = arith.constant 0 : index
    %c0_297 = arith.constant 0 : index
    %694 = vector.load %arg9[%c0_295, %c0_296, %c0_297] : memref<2x8x128xf32, #tpu.memory_space<vmem>>, vector<1x8x128xf32>
    %695 = vector.shape_cast %694 : vector<1x8x128xf32> to vector<8x128xf32>
    %696 = vector.shape_cast %690 : vector<8x128xf32> to vector<1x8x128xf32>
    tpu.vector_store %arg9[%c0_295, %c0_296, %c0_297], %696 {strides = array<i32>} : memref<2x8x128xf32, #tpu.memory_space<vmem>>, vector<1x8x128xf32>,
    %c0_298 = arith.constant 0 : index
    %c0_299 = arith.constant 0 : index
    %c0_300 = arith.constant 0 : index
    %697 = vector.load %arg10[%c0_298, %c0_299, %c0_300] : memref<2x8x128xf32, #tpu.memory_space<vmem>>, vector<1x8x128xf32>
    %698 = vector.shape_cast %697 : vector<1x8x128xf32> to vector<8x128xf32>
    %699 = vector.shape_cast %693 : vector<8x128xf32> to vector<1x8x128xf32>
    tpu.vector_store %arg10[%c0_298, %c0_299, %c0_300], %699 {strides = array<i32>} : memref<2x8x128xf32, #tpu.memory_space<vmem>>, vector<1x8x128xf32>,
    %c1_301 = arith.constant 1 : index
    %c0_302 = arith.constant 0 : index
    %c0_303 = arith.constant 0 : index
    %700 = vector.load %arg9[%c1_301, %c0_302, %c0_303] : memref<2x8x128xf32, #tpu.memory_space<vmem>>, vector<1x8x128xf32>
    %701 = vector.shape_cast %700 : vector<1x8x128xf32> to vector<8x128xf32>
    %c1_304 = arith.constant 1 : index
    %c0_305 = arith.constant 0 : index
    %c0_306 = arith.constant 0 : index
    %702 = vector.load %arg10[%c1_304, %c0_305, %c0_306] : memref<2x8x128xf32, #tpu.memory_space<vmem>>, vector<1x8x128xf32>
    %703 = vector.shape_cast %702 : vector<1x8x128xf32> to vector<8x128xf32>
    %704 = arith.truncf %690 : vector<8x128xf32> to vector<8x128xbf16>
    %c0_307 = arith.constant 0 : index
    %c0_308 = arith.constant 0 : index
    %705 = vector.load %arg4[%c0_307, %c0_308] : memref<128x512xbf16, #tpu.memory_space<vmem>>, vector<128x512xbf16>
    %cst_309 = arith.constant dense<0.000000e+00> : vector<8x512xf32>
    %706 = tpu.matmul %704, %705, %cst_309 {dimension_numbers = #tpu.dot_dimension_numbers<[1], [0], [0], [1], [0, 0, 1, 1], [], []>} : vector<8x128xbf16>, vector<128x512xbf16>, vector<8x512xf32> -> vector<8x512xf32>
    %707 = arith.truncf %701 : vector<8x128xf32> to vector<8x128xbf16>
    %c0_310 = arith.constant 0 : index
    %c0_311 = arith.constant 0 : index
    %708 = vector.load %arg5[%c0_310, %c0_311] : memref<128x512xbf16, #tpu.memory_space<vmem>>, vector<128x512xbf16>
    %cst_312 = arith.constant dense<0.000000e+00> : vector<8x512xf32>
    %709 = tpu.matmul %707, %708, %cst_312 {dimension_numbers = #tpu.dot_dimension_numbers<[1], [0], [0], [1], [0, 0, 1, 1], [], []>} : vector<8x128xbf16>, vector<128x512xbf16>, vector<8x512xf32> -> vector<8x512xf32>
    %710 = arith.addf %706, %709 : vector<8x512xf32>
    %711 = arith.addf %710, %6 : vector<8x512xf32>
    %712 = vector.extract_strided_slice %711 {offsets = [0, 0], sizes = [8, 128], strides = [1, 1]} : vector<8x512xf32> to vector<8x128xf32>
    %713 = arith.negf %712 : vector<8x128xf32>
    %714 = math.exp %713 : vector<8x128xf32>
    %cst_313 = arith.constant 1.000000e+00 : f32
    %715 = vector.broadcast %cst_313 : f32 to vector<8x128xf32>
    %716 = arith.addf %715, %714 : vector<8x128xf32>
    %717 = arith.divf %715, %716 : vector<8x128xf32>
    %718 = vector.extract_strided_slice %711 {offsets = [0, 128], sizes = [8, 128], strides = [1, 1]} : vector<8x512xf32> to vector<8x128xf32>
    %719 = arith.negf %718 : vector<8x128xf32>
    %720 = math.exp %719 : vector<8x128xf32>
    %cst_314 = arith.constant 1.000000e+00 : f32
    %721 = vector.broadcast %cst_314 : f32 to vector<8x128xf32>
    %722 = arith.addf %721, %720 : vector<8x128xf32>
    %723 = arith.divf %721, %722 : vector<8x128xf32>
    %724 = vector.extract_strided_slice %711 {offsets = [0, 256], sizes = [8, 128], strides = [1, 1]} : vector<8x512xf32> to vector<8x128xf32>
    %725 = math.tanh %724 : vector<8x128xf32>
    %726 = vector.extract_strided_slice %711 {offsets = [0, 384], sizes = [8, 128], strides = [1, 1]} : vector<8x512xf32> to vector<8x128xf32>
    %727 = arith.negf %726 : vector<8x128xf32>
    %728 = math.exp %727 : vector<8x128xf32>
    %cst_315 = arith.constant 1.000000e+00 : f32
    %729 = vector.broadcast %cst_315 : f32 to vector<8x128xf32>
    %730 = arith.addf %729, %728 : vector<8x128xf32>
    %731 = arith.divf %729, %730 : vector<8x128xf32>
    %732 = arith.mulf %723, %703 : vector<8x128xf32>
    %733 = arith.mulf %717, %725 : vector<8x128xf32>
    %734 = arith.addf %732, %733 : vector<8x128xf32>
    %735 = math.tanh %734 : vector<8x128xf32>
    %736 = arith.mulf %731, %735 : vector<8x128xf32>
    %737 = vector.shape_cast %652 : vector<8x1xi1> to vector<8x1xi1>
    %738 = vector.broadcast %737 : vector<8x1xi1> to vector<8x128xi1>
    %739 = arith.select %738, %736, %701 : vector<8x128xi1>, vector<8x128xf32>
    %740 = vector.shape_cast %652 : vector<8x1xi1> to vector<8x1xi1>
    %741 = vector.broadcast %740 : vector<8x1xi1> to vector<8x128xi1>
    %742 = arith.select %741, %734, %703 : vector<8x128xi1>, vector<8x128xf32>
    %c1_316 = arith.constant 1 : index
    %c0_317 = arith.constant 0 : index
    %c0_318 = arith.constant 0 : index
    %743 = vector.load %arg9[%c1_316, %c0_317, %c0_318] : memref<2x8x128xf32, #tpu.memory_space<vmem>>, vector<1x8x128xf32>
    %744 = vector.shape_cast %743 : vector<1x8x128xf32> to vector<8x128xf32>
    %745 = vector.shape_cast %739 : vector<8x128xf32> to vector<1x8x128xf32>
    tpu.vector_store %arg9[%c1_316, %c0_317, %c0_318], %745 {strides = array<i32>} : memref<2x8x128xf32, #tpu.memory_space<vmem>>, vector<1x8x128xf32>,
    %c1_319 = arith.constant 1 : index
    %c0_320 = arith.constant 0 : index
    %c0_321 = arith.constant 0 : index
    %746 = vector.load %arg10[%c1_319, %c0_320, %c0_321] : memref<2x8x128xf32, #tpu.memory_space<vmem>>, vector<1x8x128xf32>
    %747 = vector.shape_cast %746 : vector<1x8x128xf32> to vector<8x128xf32>
    %748 = vector.shape_cast %742 : vector<8x128xf32> to vector<1x8x128xf32>
    tpu.vector_store %arg10[%c1_319, %c0_320, %c0_321], %748 {strides = array<i32>} : memref<2x8x128xf32, #tpu.memory_space<vmem>>, vector<1x8x128xf32>,
    %cst_322 = arith.constant 0.000000e+00 : f32
    %749 = vector.shape_cast %652 : vector<8x1xi1> to vector<8x1xi1>
    %750 = vector.broadcast %749 : vector<8x1xi1> to vector<8x128xi1>
    %751 = vector.broadcast %cst_322 : f32 to vector<8x128xf32>
    %752 = arith.select %750, %739, %751 : vector<8x128xi1>, vector<8x128xf32>
    %c6_323 = arith.constant 6 : index
    %c0_324 = arith.constant 0 : index
    %c0_325 = arith.constant 0 : index
    %753 = vector.load %arg7[%c6_323, %c0_324, %c0_325] : memref<8x8x128xf32, #tpu.memory_space<vmem>>, vector<1x8x128xf32>
    %754 = vector.shape_cast %753 : vector<1x8x128xf32> to vector<8x128xf32>
    %755 = vector.shape_cast %752 : vector<8x128xf32> to vector<1x8x128xf32>
    tpu.vector_store %arg7[%c6_323, %c0_324, %c0_325], %755 {strides = array<i32>} : memref<8x8x128xf32, #tpu.memory_space<vmem>>, vector<1x8x128xf32>,
    %c8_i32_326 = arith.constant 8 : i32
    %756 = arith.muli %arg0, %c8_i32_326 : i32
    %c7_i32 = arith.constant 7 : i32
    %757 = arith.addi %756, %c7_i32 : i32
    %758 = vector.broadcast %757 : i32 to vector<8x1xi32>
    %759 = arith.cmpi sgt, %3, %758 : vector<8x1xi32>
    %c0_327 = arith.constant 0 : index
    %c0_328 = arith.constant 0 : index
    %c0_329 = arith.constant 0 : index
    %760 = vector.load %arg9[%c0_327, %c0_328, %c0_329] : memref<2x8x128xf32, #tpu.memory_space<vmem>>, vector<1x8x128xf32>
    %761 = vector.shape_cast %760 : vector<1x8x128xf32> to vector<8x128xf32>
    %c0_330 = arith.constant 0 : index
    %c0_331 = arith.constant 0 : index
    %c0_332 = arith.constant 0 : index
    %762 = vector.load %arg10[%c0_330, %c0_331, %c0_332] : memref<2x8x128xf32, #tpu.memory_space<vmem>>, vector<1x8x128xf32>
    %763 = vector.shape_cast %762 : vector<1x8x128xf32> to vector<8x128xf32>
    %c7 = arith.constant 7 : index
    %c0_333 = arith.constant 0 : index
    %c0_334 = arith.constant 0 : index
    %764 = vector.load %arg1[%c7, %c0_333, %c0_334] : memref<8x8x512xf32, #tpu.memory_space<vmem>>, vector<1x8x512xf32>
    %765 = vector.shape_cast %764 : vector<1x8x512xf32> to vector<8x512xf32>
    %766 = arith.truncf %761 : vector<8x128xf32> to vector<8x128xbf16>
    %c0_335 = arith.constant 0 : index
    %c0_336 = arith.constant 0 : index
    %767 = vector.load %arg3[%c0_335, %c0_336] : memref<128x512xbf16, #tpu.memory_space<vmem>>, vector<128x512xbf16>
    %cst_337 = arith.constant dense<0.000000e+00> : vector<8x512xf32>
    %768 = tpu.matmul %766, %767, %cst_337 {dimension_numbers = #tpu.dot_dimension_numbers<[1], [0], [0], [1], [0, 0, 1, 1], [], []>} : vector<8x128xbf16>, vector<128x512xbf16>, vector<8x512xf32> -> vector<8x512xf32>
    %769 = arith.addf %765, %768 : vector<8x512xf32>
    %770 = vector.extract_strided_slice %769 {offsets = [0, 0], sizes = [8, 128], strides = [1, 1]} : vector<8x512xf32> to vector<8x128xf32>
    %771 = arith.negf %770 : vector<8x128xf32>
    %772 = math.exp %771 : vector<8x128xf32>
    %cst_338 = arith.constant 1.000000e+00 : f32
    %773 = vector.broadcast %cst_338 : f32 to vector<8x128xf32>
    %774 = arith.addf %773, %772 : vector<8x128xf32>
    %775 = arith.divf %773, %774 : vector<8x128xf32>
    %776 = vector.extract_strided_slice %769 {offsets = [0, 128], sizes = [8, 128], strides = [1, 1]} : vector<8x512xf32> to vector<8x128xf32>
    %777 = arith.negf %776 : vector<8x128xf32>
    %778 = math.exp %777 : vector<8x128xf32>
    %cst_339 = arith.constant 1.000000e+00 : f32
    %779 = vector.broadcast %cst_339 : f32 to vector<8x128xf32>
    %780 = arith.addf %779, %778 : vector<8x128xf32>
    %781 = arith.divf %779, %780 : vector<8x128xf32>
    %782 = vector.extract_strided_slice %769 {offsets = [0, 256], sizes = [8, 128], strides = [1, 1]} : vector<8x512xf32> to vector<8x128xf32>
    %783 = math.tanh %782 : vector<8x128xf32>
    %784 = vector.extract_strided_slice %769 {offsets = [0, 384], sizes = [8, 128], strides = [1, 1]} : vector<8x512xf32> to vector<8x128xf32>
    %785 = arith.negf %784 : vector<8x128xf32>
    %786 = math.exp %785 : vector<8x128xf32>
    %cst_340 = arith.constant 1.000000e+00 : f32
    %787 = vector.broadcast %cst_340 : f32 to vector<8x128xf32>
    %788 = arith.addf %787, %786 : vector<8x128xf32>
    %789 = arith.divf %787, %788 : vector<8x128xf32>
    %790 = arith.mulf %781, %763 : vector<8x128xf32>
    %791 = arith.mulf %775, %783 : vector<8x128xf32>
    %792 = arith.addf %790, %791 : vector<8x128xf32>
    %793 = math.tanh %792 : vector<8x128xf32>
    %794 = arith.mulf %789, %793 : vector<8x128xf32>
    %795 = vector.shape_cast %759 : vector<8x1xi1> to vector<8x1xi1>
    %796 = vector.broadcast %795 : vector<8x1xi1> to vector<8x128xi1>
    %797 = arith.select %796, %794, %761 : vector<8x128xi1>, vector<8x128xf32>
    %798 = vector.shape_cast %759 : vector<8x1xi1> to vector<8x1xi1>
    %799 = vector.broadcast %798 : vector<8x1xi1> to vector<8x128xi1>
    %800 = arith.select %799, %792, %763 : vector<8x128xi1>, vector<8x128xf32>
    %c0_341 = arith.constant 0 : index
    %c0_342 = arith.constant 0 : index
    %c0_343 = arith.constant 0 : index
    %801 = vector.load %arg9[%c0_341, %c0_342, %c0_343] : memref<2x8x128xf32, #tpu.memory_space<vmem>>, vector<1x8x128xf32>
    %802 = vector.shape_cast %801 : vector<1x8x128xf32> to vector<8x128xf32>
    %803 = vector.shape_cast %797 : vector<8x128xf32> to vector<1x8x128xf32>
    tpu.vector_store %arg9[%c0_341, %c0_342, %c0_343], %803 {strides = array<i32>} : memref<2x8x128xf32, #tpu.memory_space<vmem>>, vector<1x8x128xf32>,
    %c0_344 = arith.constant 0 : index
    %c0_345 = arith.constant 0 : index
    %c0_346 = arith.constant 0 : index
    %804 = vector.load %arg10[%c0_344, %c0_345, %c0_346] : memref<2x8x128xf32, #tpu.memory_space<vmem>>, vector<1x8x128xf32>
    %805 = vector.shape_cast %804 : vector<1x8x128xf32> to vector<8x128xf32>
    %806 = vector.shape_cast %800 : vector<8x128xf32> to vector<1x8x128xf32>
    tpu.vector_store %arg10[%c0_344, %c0_345, %c0_346], %806 {strides = array<i32>} : memref<2x8x128xf32, #tpu.memory_space<vmem>>, vector<1x8x128xf32>,
    %c1_347 = arith.constant 1 : index
    %c0_348 = arith.constant 0 : index
    %c0_349 = arith.constant 0 : index
    %807 = vector.load %arg9[%c1_347, %c0_348, %c0_349] : memref<2x8x128xf32, #tpu.memory_space<vmem>>, vector<1x8x128xf32>
    %808 = vector.shape_cast %807 : vector<1x8x128xf32> to vector<8x128xf32>
    %c1_350 = arith.constant 1 : index
    %c0_351 = arith.constant 0 : index
    %c0_352 = arith.constant 0 : index
    %809 = vector.load %arg10[%c1_350, %c0_351, %c0_352] : memref<2x8x128xf32, #tpu.memory_space<vmem>>, vector<1x8x128xf32>
    %810 = vector.shape_cast %809 : vector<1x8x128xf32> to vector<8x128xf32>
    %811 = arith.truncf %797 : vector<8x128xf32> to vector<8x128xbf16>
    %c0_353 = arith.constant 0 : index
    %c0_354 = arith.constant 0 : index
    %812 = vector.load %arg4[%c0_353, %c0_354] : memref<128x512xbf16, #tpu.memory_space<vmem>>, vector<128x512xbf16>
    %cst_355 = arith.constant dense<0.000000e+00> : vector<8x512xf32>
    %813 = tpu.matmul %811, %812, %cst_355 {dimension_numbers = #tpu.dot_dimension_numbers<[1], [0], [0], [1], [0, 0, 1, 1], [], []>} : vector<8x128xbf16>, vector<128x512xbf16>, vector<8x512xf32> -> vector<8x512xf32>
    %814 = arith.truncf %808 : vector<8x128xf32> to vector<8x128xbf16>
    %c0_356 = arith.constant 0 : index
    %c0_357 = arith.constant 0 : index
    %815 = vector.load %arg5[%c0_356, %c0_357] : memref<128x512xbf16, #tpu.memory_space<vmem>>, vector<128x512xbf16>
    %cst_358 = arith.constant dense<0.000000e+00> : vector<8x512xf32>
    %816 = tpu.matmul %814, %815, %cst_358 {dimension_numbers = #tpu.dot_dimension_numbers<[1], [0], [0], [1], [0, 0, 1, 1], [], []>} : vector<8x128xbf16>, vector<128x512xbf16>, vector<8x512xf32> -> vector<8x512xf32>
    %817 = arith.addf %813, %816 : vector<8x512xf32>
    %818 = arith.addf %817, %6 : vector<8x512xf32>
    %819 = vector.extract_strided_slice %818 {offsets = [0, 0], sizes = [8, 128], strides = [1, 1]} : vector<8x512xf32> to vector<8x128xf32>
    %820 = arith.negf %819 : vector<8x128xf32>
    %821 = math.exp %820 : vector<8x128xf32>
    %cst_359 = arith.constant 1.000000e+00 : f32
    %822 = vector.broadcast %cst_359 : f32 to vector<8x128xf32>
    %823 = arith.addf %822, %821 : vector<8x128xf32>
    %824 = arith.divf %822, %823 : vector<8x128xf32>
    %825 = vector.extract_strided_slice %818 {offsets = [0, 128], sizes = [8, 128], strides = [1, 1]} : vector<8x512xf32> to vector<8x128xf32>
    %826 = arith.negf %825 : vector<8x128xf32>
    %827 = math.exp %826 : vector<8x128xf32>
    %cst_360 = arith.constant 1.000000e+00 : f32
    %828 = vector.broadcast %cst_360 : f32 to vector<8x128xf32>
    %829 = arith.addf %828, %827 : vector<8x128xf32>
    %830 = arith.divf %828, %829 : vector<8x128xf32>
    %831 = vector.extract_strided_slice %818 {offsets = [0, 256], sizes = [8, 128], strides = [1, 1]} : vector<8x512xf32> to vector<8x128xf32>
    %832 = math.tanh %831 : vector<8x128xf32>
    %833 = vector.extract_strided_slice %818 {offsets = [0, 384], sizes = [8, 128], strides = [1, 1]} : vector<8x512xf32> to vector<8x128xf32>
    %834 = arith.negf %833 : vector<8x128xf32>
    %835 = math.exp %834 : vector<8x128xf32>
    %cst_361 = arith.constant 1.000000e+00 : f32
    %836 = vector.broadcast %cst_361 : f32 to vector<8x128xf32>
    %837 = arith.addf %836, %835 : vector<8x128xf32>
    %838 = arith.divf %836, %837 : vector<8x128xf32>
    %839 = arith.mulf %830, %810 : vector<8x128xf32>
    %840 = arith.mulf %824, %832 : vector<8x128xf32>
    %841 = arith.addf %839, %840 : vector<8x128xf32>
    %842 = math.tanh %841 : vector<8x128xf32>
    %843 = arith.mulf %838, %842 : vector<8x128xf32>
    %844 = vector.shape_cast %759 : vector<8x1xi1> to vector<8x1xi1>
    %845 = vector.broadcast %844 : vector<8x1xi1> to vector<8x128xi1>
    %846 = arith.select %845, %843, %808 : vector<8x128xi1>, vector<8x128xf32>
    %847 = vector.shape_cast %759 : vector<8x1xi1> to vector<8x1xi1>
    %848 = vector.broadcast %847 : vector<8x1xi1> to vector<8x128xi1>
    %849 = arith.select %848, %841, %810 : vector<8x128xi1>, vector<8x128xf32>
    %c1_362 = arith.constant 1 : index
    %c0_363 = arith.constant 0 : index
    %c0_364 = arith.constant 0 : index
    %850 = vector.load %arg9[%c1_362, %c0_363, %c0_364] : memref<2x8x128xf32, #tpu.memory_space<vmem>>, vector<1x8x128xf32>
    %851 = vector.shape_cast %850 : vector<1x8x128xf32> to vector<8x128xf32>
    %852 = vector.shape_cast %846 : vector<8x128xf32> to vector<1x8x128xf32>
    tpu.vector_store %arg9[%c1_362, %c0_363, %c0_364], %852 {strides = array<i32>} : memref<2x8x128xf32, #tpu.memory_space<vmem>>, vector<1x8x128xf32>,
    %c1_365 = arith.constant 1 : index
    %c0_366 = arith.constant 0 : index
    %c0_367 = arith.constant 0 : index
    %853 = vector.load %arg10[%c1_365, %c0_366, %c0_367] : memref<2x8x128xf32, #tpu.memory_space<vmem>>, vector<1x8x128xf32>
    %854 = vector.shape_cast %853 : vector<1x8x128xf32> to vector<8x128xf32>
    %855 = vector.shape_cast %849 : vector<8x128xf32> to vector<1x8x128xf32>
    tpu.vector_store %arg10[%c1_365, %c0_366, %c0_367], %855 {strides = array<i32>} : memref<2x8x128xf32, #tpu.memory_space<vmem>>, vector<1x8x128xf32>,
    %cst_368 = arith.constant 0.000000e+00 : f32
    %856 = vector.shape_cast %759 : vector<8x1xi1> to vector<8x1xi1>
    %857 = vector.broadcast %856 : vector<8x1xi1> to vector<8x128xi1>
    %858 = vector.broadcast %cst_368 : f32 to vector<8x128xf32>
    %859 = arith.select %857, %846, %858 : vector<8x128xi1>, vector<8x128xf32>
    %c7_369 = arith.constant 7 : index
    %c0_370 = arith.constant 0 : index
    %c0_371 = arith.constant 0 : index
    %860 = vector.load %arg7[%c7_369, %c0_370, %c0_371] : memref<8x8x128xf32, #tpu.memory_space<vmem>>, vector<1x8x128xf32>
    %861 = vector.shape_cast %860 : vector<1x8x128xf32> to vector<8x128xf32>
    %862 = vector.shape_cast %859 : vector<8x128xf32> to vector<1x8x128xf32>
    tpu.vector_store %arg7[%c7_369, %c0_370, %c0_371], %862 {strides = array<i32>} : memref<8x8x128xf32, #tpu.memory_space<vmem>>, vector<1x8x128xf32>,
    %c1_i32_372 = arith.constant 1 : i32
    %863 = arith.cmpi eq, %arg0, %c1_i32_372 : i32
    %864 = arith.extui %863 : i1 to i32
    %c0_i32_373 = arith.constant 0 : i32
    %865 = arith.cmpi ne, %864, %c0_i32_373 : i32
    scf.if %865 {
      %c0_374 = arith.constant 0 : index
      %c0_375 = arith.constant 0 : index
      %c0_376 = arith.constant 0 : index
      %866 = vector.load %arg9[%c0_374, %c0_375, %c0_376] : memref<2x8x128xf32, #tpu.memory_space<vmem>>, vector<2x8x128xf32>
      %c0_377 = arith.constant 0 : index
      %c0_378 = arith.constant 0 : index
      %c0_379 = arith.constant 0 : index
      %867 = vector.load %arg8[%c0_377, %c0_378, %c0_379] : memref<2x8x128xf32, #tpu.memory_space<vmem>>, vector<2x8x128xf32>
      tpu.vector_store %arg8[%c0_377, %c0_378, %c0_379], %866 {strides = array<i32>} : memref<2x8x128xf32, #tpu.memory_space<vmem>>, vector<2x8x128xf32>,
    } else {
    }
    return
  }
  func.func @transform_0(%arg0: i32) -> (i32, i32, i32) {
    %c0_i32 = arith.constant 0 : i32
    %c0_i32_0 = arith.constant 0 : i32
    %c0_i32_1 = arith.constant 0 : i32
    return %arg0, %c0_i32, %c0_i32_0 : i32, i32, i32
  }
  func.func @transform_1(%arg0: i32) -> (i32, i32) {
    %c0_i32 = arith.constant 0 : i32
    %c0_i32_0 = arith.constant 0 : i32
    %c0_i32_1 = arith.constant 0 : i32
    return %c0_i32, %c0_i32_0 : i32, i32
  }
  func.func @transform_2(%arg0: i32) -> (i32, i32) {
    %c0_i32 = arith.constant 0 : i32
    %c0_i32_0 = arith.constant 0 : i32
    %c0_i32_1 = arith.constant 0 : i32
    return %c0_i32, %c0_i32_0 : i32, i32
  }
  func.func @transform_3(%arg0: i32) -> (i32, i32) {
    %c0_i32 = arith.constant 0 : i32
    %c0_i32_0 = arith.constant 0 : i32
    %c0_i32_1 = arith.constant 0 : i32
    return %c0_i32, %c0_i32_0 : i32, i32
  }
  func.func @transform_4(%arg0: i32) -> (i32, i32) {
    %c0_i32 = arith.constant 0 : i32
    %c0_i32_0 = arith.constant 0 : i32
    %c0_i32_1 = arith.constant 0 : i32
    return %c0_i32, %c0_i32_0 : i32, i32
  }
  func.func @transform_5(%arg0: i32) -> (i32, i32) {
    %c0_i32 = arith.constant 0 : i32
    %c0_i32_0 = arith.constant 0 : i32
    %c0_i32_1 = arith.constant 0 : i32
    return %c0_i32, %c0_i32_0 : i32, i32
  }
  func.func @transform_6(%arg0: i32) -> (i32, i32, i32) {
    %c0_i32 = arith.constant 0 : i32
    %c0_i32_0 = arith.constant 0 : i32
    %c0_i32_1 = arith.constant 0 : i32
    return %arg0, %c0_i32, %c0_i32_0 : i32, i32, i32
  }
  func.func @transform_7(%arg0: i32) -> (i32, i32, i32) {
    %c0_i32 = arith.constant 0 : i32
    %c0_i32_0 = arith.constant 0 : i32
    %c0_i32_1 = arith.constant 0 : i32
    %c0_i32_2 = arith.constant 0 : i32
    return %c0_i32, %c0_i32_0, %c0_i32_1 : i32, i32, i32
  }
}

</mosaic_0001>

<llo_original>
// kernel: tpu_custom_call.1
$region0: #{tpu_custom_call.1}
  #allocation0 [shape = 'u32[]', space=smem, size = 0x4, offset = 0x4, fixed_abs, tag = 'smem constant byte address 0x4 - core index']
  #allocation1 [shape = 'u32[144,128]{1,0:T(1,128)}', space=vmem, size = 0x12000, scoped, tag = 'internal scratch']
  #allocation2 [shape = 'f32[2,8,128]{2,1,0:T(8,128)}', space=vmem, size = 0x2000, scoped, tag = 'scratch operand']
  #allocation3 [shape = 'f32[2,8,128]{2,1,0:T(8,128)}', space=vmem, size = 0x2000, scoped, tag = 'scratch operand']
  %s0 = inlined_call_operand.hbm [shape: f32[16,8,512], index: 0, kind: input, shape index: {}]
  %s1 = inlined_call_operand.vmem [shape: s32[8,1], index: 1, kind: input, shape index: {}]
  %s2 = inlined_call_operand.hbm [shape: bf16[128,512], index: 2, kind: input, shape index: {}]
  %s3 = inlined_call_operand.hbm [shape: bf16[128,512], index: 3, kind: input, shape index: {}]
  %s4 = inlined_call_operand.hbm [shape: bf16[128,512], index: 4, kind: input, shape index: {}]
  %s5 = inlined_call_operand.vmem [shape: f32[1,512], index: 5, kind: input, shape index: {}]
  %s6 = inlined_call_operand.hbm [shape: f32[16,8,128], index: 6, kind: output, shape index: {0}]
  %s7 = inlined_call_operand.hbm [shape: f32[2,8,128], index: 7, kind: output, shape index: {1}]
  %8 = xla_tuple %s6, %s7
  %s9 = sld [smem:[#allocation0]]
  $region89: #{tpu_custom_call.1} parent=0
    _
  %s11 = ssub.s32 1, %s9
  %s12 = scalar_select 0, %s11, %s9
  $region1: #{tpu_custom_call.1} parent=0
    #allocation4 [shape = 'u8[262144]{0}', space=vmem, size = 0x40000, scoped, tag = 'input window, operand 0']
    #allocation5 [shape = 's32[2]{0}', space=sflag, size = 0x8, scoped, tag = 'scoped memory for tpu_custom_call.1']
    #allocation6 [shape = 's32[2]{0}', space=sflag, size = 0x8, scoped, tag = 'scoped memory for tpu_custom_call.1']
    #allocation7 [shape = 'u8[131072]{0}', space=vmem, size = 0x20000, scoped, tag = 'input window, operand 2, single buffered']
    #allocation8 [shape = 's32[1]{0}', space=sflag, size = 0x4, scoped, tag = 'scoped memory for tpu_custom_call.1']
    #allocation9 [shape = 'u8[131072]{0}', space=vmem, size = 0x20000, scoped, tag = 'input window, operand 3, single buffered']
    #allocation10 [shape = 'u8[131072]{0}', space=vmem, size = 0x20000, scoped, tag = 'input window, operand 4, single buffered']
    #allocation11 [shape = 's32[1]{0}', space=sflag, size = 0x4, scoped, tag = 'scoped memory for tpu_custom_call.1']
    #allocation12 [shape = 'u8[65536]{0}', space=vmem, size = 0x10000, scoped, tag = 'output window, operand 0']
    #allocation13 [shape = 'u8[8192]{0}', space=vmem, size = 0x2000, scoped, tag = 'output window, operand 1, single buffered']
    #allocation14 [shape = 's32[1]{0}', space=sflag, size = 0x4, scoped, tag = 'scoped memory for tpu_custom_call.1']
    %13 = vsyncpa [#allocation5], 0
    %s14 = scalar_lea.sflag [#allocation5], 1
    %15 = vsyncpa %s14, 0
    %16 = vsyncpa [#allocation8], 0
    %17 = vsyncpa [#allocation11], 0
    %18 = vsyncpa [#allocation6], 0
    %s19 = scalar_lea.sflag [#allocation6], 1
    %20 = vsyncpa %s19, 0
    %21 = vsyncpa [#allocation14], 0
    loop: start=0, step=1, limit=4
    $region2: #{tpu_custom_call.1} parent=1 // loop_pre_header
      _
    $region3: #{tpu_custom_call.1} parent=1 // loop_header
      %s23 = sphi 0, %s27
      %p24 = scmp.ge.s32.totalorder %s23, 4
      %s33 = sphi 0, %s35
      %s36 = sphi 0, %s33
      %s37 = sphi 0, %s36
      %s53 = sphi 0, %s37
      %s57 = sphi 0, %s57
      %s59 = sphi 0, %s57
      %s60 = sphi 0, %s59
      %s74 = sphi 0, %s60
      %s78 = sphi 0, %s78
      %s80 = sphi 0, %s78
      %s81 = sphi 0, %s80
      %s95 = sphi 0, %s81
      %s99 = sphi 0, %s99
      %s101 = sphi 0, %s99
      %s102 = sphi 0, %s101
      %s116 = sphi 0, %s102
      %s120 = sphi 0, %s120
      %s122 = sphi 0, %s120
      %s123 = sphi 0, %s122
      %s137 = sphi 0, %s123
      %s141 = sphi 0, %s141
      %s143 = sphi 0, %s141
      %s144 = sphi 0, %s143
      %s158 = sphi 0, %s144
      %s164 = sphi 0, %s166
      %s167 = sphi 0, %s164
      %s168 = sphi 0, %s167
      %s184 = sphi 0, %s168
      %s188 = sphi 0, %s188
      %s190 = sphi 0, %s188
      %s191 = sphi 0, %s190
      %s205 = sphi 0, %s191
    $region4: #{tpu_custom_call.1} parent=1 // loop_header_branch
      %26 = sbr.rel (%p24) target = $region8
    $region5: #{tpu_custom_call.1} parent=1 // loop_body
      %s28 = ssub.s32 %s23, 1
      %s29 = ssub.s32 %s23, 2
      %s30 = sadd.s32 %s23, 1
      %s31 = ssub.s32 %s23, %s30
      %p32 = scmp.eq.s32.totalorder %s31, 0
      %s34 = sadd.s32 %s33, 1
      %s35 = scalar_select %p32, %s33, %s34
      %p38 = pneg %p32
      %p39 = scmp.eq.s32.totalorder %s23, 1
      %p40 = por %p38, %p39
      %p41 = scmp.ne.s32.totalorder %s33, %s36
      %p42 = scmp.eq.s32.totalorder %s23, 0
      %p43 = por %p41, %p42
      %p44 = scmp.ne.s32.totalorder %s33, %s36
      %p45 = scmp.eq.s32.totalorder %s28, 1
      %p46 = por %p44, %p45
      %p47 = scmp.ne.s32.totalorder %s36, %s37
      %p48 = scmp.eq.s32.totalorder %s28, 0
      %p49 = por %p47, %p48
      %p50 = scmp.ne.s32.totalorder %s36, %s37
      %p51 = scmp.eq.s32.totalorder %s29, 1
      %p52 = por %p50, %p51
      %p54 = scmp.ne.s32.totalorder %s37, %s53
      %p55 = scmp.eq.s32.totalorder %s29, 0
      %p56 = por %p54, %p55
      %s58 = sadd.s32 %s57, 1
      %p61 = scmp.eq.s32.totalorder %s23, 1
      %p62 = scmp.ne.s32.totalorder %s57, %s59
      %p63 = scmp.eq.s32.totalorder %s23, 0
      %p64 = por %p62, %p63
      %p65 = scmp.ne.s32.totalorder %s57, %s59
      %p66 = scmp.eq.s32.totalorder %s28, 1
      %p67 = por %p65, %p66
      %p68 = scmp.ne.s32.totalorder %s59, %s60
      %p69 = scmp.eq.s32.totalorder %s28, 0
      %p70 = por %p68, %p69
      %p71 = scmp.ne.s32.totalorder %s59, %s60
      %p72 = scmp.eq.s32.totalorder %s29, 1
      %p73 = por %p71, %p72
      %p75 = scmp.ne.s32.totalorder %s60, %s74
      %p76 = scmp.eq.s32.totalorder %s29, 0
      %p77 = por %p75, %p76
      %s79 = sadd.s32 %s78, 1
      %p82 = scmp.eq.s32.totalorder %s23, 1
      %p83 = scmp.ne.s32.totalorder %s78, %s80
      %p84 = scmp.eq.s32.totalorder %s23, 0
      %p85 = por %p83, %p84
      %p86 = scmp.ne.s32.totalorder %s78, %s80
      %p87 = scmp.eq.s32.totalorder %s28, 1
      %p88 = por %p86, %p87
      %p89 = scmp.ne.s32.totalorder %s80, %s81
      %p90 = scmp.eq.s32.totalorder %s28, 0
      %p91 = por %p89, %p90
      %p92 = scmp.ne.s32.totalorder %s80, %s81
      %p93 = scmp.eq.s32.totalorder %s29, 1
      %p94 = por %p92, %p93
      %p96 = scmp.ne.s32.totalorder %s81, %s95
      %p97 = scmp.eq.s32.totalorder %s29, 0
      %p98 = por %p96, %p97
      %s100 = sadd.s32 %s99, 1
      %p103 = scmp.eq.s32.totalorder %s23, 1
      %p104 = scmp.ne.s32.totalorder %s99, %s101
      %p105 = scmp.eq.s32.totalorder %s23, 0
      %p106 = por %p104, %p105
      %p107 = scmp.ne.s32.totalorder %s99, %s101
      %p108 = scmp.eq.s32.totalorder %s28, 1
      %p109 = por %p107, %p108
      %p110 = scmp.ne.s32.totalorder %s101, %s102
      %p111 = scmp.eq.s32.totalorder %s28, 0
      %p112 = por %p110, %p111
      %p113 = scmp.ne.s32.totalorder %s101, %s102
      %p114 = scmp.eq.s32.totalorder %s29, 1
      %p115 = por %p113, %p114
      %p117 = scmp.ne.s32.totalorder %s102, %s116
      %p118 = scmp.eq.s32.totalorder %s29, 0
      %p119 = por %p117, %p118
      %s121 = sadd.s32 %s120, 1
      %p124 = scmp.eq.s32.totalorder %s23, 1
      %p125 = scmp.ne.s32.totalorder %s120, %s122
      %p126 = scmp.eq.s32.totalorder %s23, 0
      %p127 = por %p125, %p126
      %p128 = scmp.ne.s32.totalorder %s120, %s122
      %p129 = scmp.eq.s32.totalorder %s28, 1
      %p130 = por %p128, %p129
      %p131 = scmp.ne.s32.totalorder %s122, %s123
      %p132 = scmp.eq.s32.totalorder %s28, 0
      %p133 = por %p131, %p132
      %p134 = scmp.ne.s32.totalorder %s122, %s123
      %p135 = scmp.eq.s32.totalorder %s29, 1
      %p136 = por %p134, %p135
      %p138 = scmp.ne.s32.totalorder %s123, %s137
      %p139 = scmp.eq.s32.totalorder %s29, 0
      %p140 = por %p138, %p139
      %s142 = sadd.s32 %s141, 1
      %p145 = scmp.eq.s32.totalorder %s23, 1
      %p146 = scmp.ne.s32.totalorder %s141, %s143
      %p147 = scmp.eq.s32.totalorder %s23, 0
      %p148 = por %p146, %p147
      %p149 = scmp.ne.s32.totalorder %s141, %s143
      %p150 = scmp.eq.s32.totalorder %s28, 1
      %p151 = por %p149, %p150
      %p152 = scmp.ne.s32.totalorder %s143, %s144
      %p153 = scmp.eq.s32.totalorder %s28, 0
      %p154 = por %p152, %p153
      %p155 = scmp.ne.s32.totalorder %s143, %s144
      %p156 = scmp.eq.s32.totalorder %s29, 1
      %p157 = por %p155, %p156
      %p159 = scmp.ne.s32.totalorder %s144, %s158
      %p160 = scmp.eq.s32.totalorder %s29, 0
      %p161 = por %p159, %p160
      %s162 = ssub.s32 %s23, %s30
      %p163 = scmp.eq.s32.totalorder %s162, 0
      %s165 = sadd.s32 %s164, 1
      %s166 = scalar_select %p163, %s164, %s165
      %p169 = pneg %p163
      %p170 = scmp.eq.s32.totalorder %s23, 1
      %p171 = por %p169, %p170
      %p172 = scmp.ne.s32.totalorder %s164, %s167
      %p173 = scmp.eq.s32.totalorder %s23, 0
      %p174 = por %p172, %p173
      %p175 = scmp.ne.s32.totalorder %s164, %s167
      %p176 = scmp.eq.s32.totalorder %s28, 1
      %p177 = por %p175, %p176
      %p178 = scmp.ne.s32.totalorder %s167, %s168
      %p179 = scmp.eq.s32.totalorder %s28, 0
      %p180 = por %p178, %p179
      %p181 = scmp.ne.s32.totalorder %s167, %s168
      %p182 = scmp.eq.s32.totalorder %s29, 1
      %p183 = por %p181, %p182
      %p185 = scmp.ne.s32.totalorder %s168, %s184
      %p186 = scmp.eq.s32.totalorder %s29, 0
      %p187 = por %p185, %p186
      %s189 = sadd.s32 %s188, 1
      %p192 = scmp.eq.s32.totalorder %s23, 1
      %p193 = scmp.ne.s32.totalorder %s188, %s190
      %p194 = scmp.eq.s32.totalorder %s23, 0
      %p195 = por %p193, %p194
      %p196 = scmp.ne.s32.totalorder %s188, %s190
      %p197 = scmp.eq.s32.totalorder %s28, 1
      %p198 = por %p196, %p197
      %p199 = scmp.ne.s32.totalorder %s190, %s191
      %p200 = scmp.eq.s32.totalorder %s28, 0
      %p201 = por %p199, %p200
      %p202 = scmp.ne.s32.totalorder %s190, %s191
      %p203 = scmp.eq.s32.totalorder %s29, 1
      %p204 = por %p202, %p203
      %p206 = scmp.ne.s32.totalorder %s191, %s205
      %p207 = scmp.eq.s32.totalorder %s29, 0
      %p208 = por %p206, %p207
      %p209 = scmp.le.s32.totalorder 1, %s23
      %p210 = scmp.lt.s32.totalorder %s23, 3
      %p211 = pnand %p209, %p210
      %p212 = pneg %p211
      // Predicated region
      $region9: #{tpu_custom_call.1} parent=5 // pred_check
        _
      $region10: #{tpu_custom_call.1} parent=5 // pred_check_branch
        %214 = sbr.rel (%p211) target = $region12
      $region11: #{tpu_custom_call.1} parent=5 // pred_region
        %s215 = ssub.s32 %s23, 1
        // Predicated region
        $region13: #{tpu_custom_call.1} parent=11 // pred_check
          %p216 = pneg %p70
        $region14: #{tpu_custom_call.1} parent=11 // pred_check_branch
          %218 = sbr.rel (%p216) target = $region16
        $region15: #{tpu_custom_call.1} parent=11 // pred_region
          _
        $region16: #{tpu_custom_call.1} parent=11 // pred_fallthru
          _
        // Predicated region
        $region17: #{tpu_custom_call.1} parent=11 // pred_check
          %p219 = pneg %p91
        $region18: #{tpu_custom_call.1} parent=11 // pred_check_branch
          %221 = sbr.rel (%p219) target = $region20
        $region19: #{tpu_custom_call.1} parent=11 // pred_region
          %s223 = ssub.s32 4096, 4096
          %224 = vsyncadd [#allocation8], %s223
          %s225 = sshll.u32 [#allocation7], 4
          %s226 = int_to_ptr.vmem [resolvable:$true] %s225
          %231 = dma.hbm_to_vmem [thread:$0]  %s2, 4096, %s226, [#allocation8], 256, 256, 16
        $region20: #{tpu_custom_call.1} parent=11 // pred_fallthru
          _
        // Predicated region
        $region21: #{tpu_custom_call.1} parent=11 // pred_check
          %p232 = pneg %p112
        $region22: #{tpu_custom_call.1} parent=11 // pred_check_branch
          %234 = sbr.rel (%p232) target = $region24
        $region23: #{tpu_custom_call.1} parent=11 // pred_region
          %s236 = ssub.s32 4096, 4096
          %237 = vsyncadd [#allocation8], %s236
          %s238 = sshll.u32 [#allocation9], 4
          %s239 = int_to_ptr.vmem [resolvable:$true] %s238
          %244 = dma.hbm_to_vmem [thread:$0]  %s3, 4096, %s239, [#allocation8], 256, 256, 16
        $region24: #{tpu_custom_call.1} parent=11 // pred_fallthru
          _
        // Predicated region
        $region25: #{tpu_custom_call.1} parent=11 // pred_check
          %p245 = pneg %p133
        $region26: #{tpu_custom_call.1} parent=11 // pred_check_branch
          %247 = sbr.rel (%p245) target = $region28
        $region27: #{tpu_custom_call.1} parent=11 // pred_region
          %s249 = ssub.s32 4096, 4096
          %250 = vsyncadd [#allocation11], %s249
          %s251 = sshll.u32 [#allocation10], 4
          %s252 = int_to_ptr.vmem [resolvable:$true] %s251
          %257 = dma.hbm_to_vmem [thread:$0]  %s4, 4096, %s252, [#allocation11], 256, 256, 16
        $region28: #{tpu_custom_call.1} parent=11 // pred_fallthru
          _
        // Predicated region
        $region29: #{tpu_custom_call.1} parent=11 // pred_check
          %p258 = pneg %p154
        $region30: #{tpu_custom_call.1} parent=11 // pred_check_branch
          %260 = sbr.rel (%p258) target = $region32
        $region31: #{tpu_custom_call.1} parent=11 // pred_region
          _
        $region32: #{tpu_custom_call.1} parent=11 // pred_fallthru
          _
      $region12: #{tpu_custom_call.1} parent=5 // pred_fallthru
        _
      %p261 = scmp.lt.s32.totalorder %s23, 2
      // Predicated region
      $region33: #{tpu_custom_call.1} parent=5 // pred_check
        %p262 = pneg %p261
      $region34: #{tpu_custom_call.1} parent=5 // pred_check_branch
        %264 = sbr.rel (%p262) target = $region36
      $region35: #{tpu_custom_call.1} parent=5 // pred_region
        // Predicated region
        $region37: #{tpu_custom_call.1} parent=35 // pred_check
          %p265 = pneg %p43
        $region38: #{tpu_custom_call.1} parent=35 // pred_check_branch
          %267 = sbr.rel (%p265) target = $region40
        $region39: #{tpu_custom_call.1} parent=35 // pred_region
          %s268 = sand.u32 %s33, 1
          %s269 = scalar_lea.sflag [#allocation5], %s268
          %s270 = sand.u32 %s33, 1
          %s271 = smul.addr %s270, 256
          %s272 = scalar_lea.vmem [#allocation4], %s271
          %s273 = smul.u32 8, %s23
          %s275 = ssub.s32 4096, 4096
          %276 = vsyncadd %s269, %s275
          %s277 = smul.addr %s273, 4
          %s278 = smul.addr %s277, 128
          %s279 = scalar_lea.hbm %s0, %s278
          %s280 = sshll.u32 %s272, 4
          %s281 = int_to_ptr.vmem [resolvable:$true] %s280
          %286 = dma.hbm_to_vmem [thread:$0]  %s279, 4096, %s281, %s269, 512, 512, 32
        $region40: #{tpu_custom_call.1} parent=35 // pred_fallthru
          _
      $region36: #{tpu_custom_call.1} parent=5 // pred_fallthru
        _
      %p287 = scmp.le.s32.totalorder 1, %s23
      %p288 = scmp.lt.s32.totalorder %s23, 3
      %p289 = pnand %p287, %p288
      %p290 = pneg %p289
      // Predicated region
      $region41: #{tpu_custom_call.1} parent=5 // pred_check
        _
      $region42: #{tpu_custom_call.1} parent=5 // pred_check_branch
        %292 = sbr.rel (%p289) target = $region44
      $region43: #{tpu_custom_call.1} parent=5 // pred_region
        %s293 = ssub.s32 %s23, 1
        %s294 = sand.u32 %s36, 1
        %s295 = scalar_lea.sflag [#allocation5], %s294
        %s296 = sand.u32 %s36, 1
        %s297 = smul.addr %s296, 256
        %s298 = scalar_lea.vmem [#allocation4], %s297
        // Predicated region
        $region45: #{tpu_custom_call.1} parent=43 // pred_check
          %p299 = pneg %p49
        $region46: #{tpu_custom_call.1} parent=43 // pred_check_branch
          %301 = sbr.rel (%p299) target = $region48
        $region47: #{tpu_custom_call.1} parent=43 // pred_region
          %302 = dma.done %s295, 4096
        $region48: #{tpu_custom_call.1} parent=43 // pred_fallthru
          _
        // Predicated region
        $region49: #{tpu_custom_call.1} parent=43 // pred_check
          %p303 = pneg %p91
        $region50: #{tpu_custom_call.1} parent=43 // pred_check_branch
          %305 = sbr.rel (%p303) target = $region52
        $region51: #{tpu_custom_call.1} parent=43 // pred_region
          %306 = dma.done [#allocation8], 4096
        $region52: #{tpu_custom_call.1} parent=43 // pred_fallthru
          _
        // Predicated region
        $region53: #{tpu_custom_call.1} parent=43 // pred_check
          %p307 = pneg %p112
        $region54: #{tpu_custom_call.1} parent=43 // pred_check_branch
          %309 = sbr.rel (%p307) target = $region56
        $region55: #{tpu_custom_call.1} parent=43 // pred_region
          %310 = dma.done [#allocation8], 4096
        $region56: #{tpu_custom_call.1} parent=43 // pred_fallthru
          _
        // Predicated region
        $region57: #{tpu_custom_call.1} parent=43 // pred_check
          %p311 = pneg %p133
        $region58: #{tpu_custom_call.1} parent=43 // pred_check_branch
          %313 = sbr.rel (%p311) target = $region60
        $region59: #{tpu_custom_call.1} parent=43 // pred_region
          %314 = dma.done [#allocation11], 4096
        $region60: #{tpu_custom_call.1} parent=43 // pred_fallthru
          _
        %s315 = sand.u32 %s36, 1
        %s316 = scalar_lea.sflag [#allocation5], %s315
        %s317 = sand.u32 %s36, 1
        %s318 = smul.addr %s317, 256
        %s319 = scalar_lea.vmem [#allocation4], %s318
        %p320 = pneg %p49
        %p321 = pneg %p46
        %p322 = pneg %p70
        %p323 = pneg %p67
        %p324 = pneg %p91
        %p325 = pneg %p88
        %p326 = pneg %p112
        %p327 = pneg %p109
        %p328 = pneg %p133
        %p329 = pneg %p130
        %p330 = pneg %p154
        %p331 = pneg %p151
        %p332 = pneg %p180
        %p333 = pneg %p177
        %s334 = sand.u32 %s167, 1
        %s335 = scalar_lea.sflag [#allocation6], %s334
        %s336 = sand.u32 %s167, 1
        %s337 = smul.addr %s336, 64
        %s338 = scalar_lea.vmem [#allocation12], %s337
        %p339 = pneg %p201
        %p340 = pneg %p198
        %s341 = smul.u32 8, %s28
        %s342 = smul.u32 8, %s28
        %p344 = scmp.eq.s32.totalorder %s28, 0
        // Predicated region
        $region61: #{tpu_custom_call.1} parent=43 // pred_check
          %p345 = pneg %p344
        $region62: #{tpu_custom_call.1} parent=43 // pred_check_branch
          %347 = sbr.rel (%p345) target = $region64
        $region63: #{tpu_custom_call.1} parent=43 // pred_region
          %348 = vst [vmem:[#allocation2] sm:$0xff] 0.0
          %349 = vst [vmem:[#allocation2 + $0x8] sm:$0xff] 0.0
          %350 = vst [vmem:[#allocation3] sm:$0xff] 0.0
          %351 = vst [vmem:[#allocation3 + $0x8] sm:$0xff] 0.0
        $region64: #{tpu_custom_call.1} parent=43 // pred_fallthru
          _
        %v352 = vld [vmem:[%s1] sm:$0xff]
        %v353 = vld [vmem:[%s5] sm:$0xf]
        %v355 = vlaneseq
        %v356 = vshrl.u32 %v355, 7
        %v357 = vsub.s32 0, %v356
        %v358 = vrot.slane %v353, %v357
        %v359 = vlaneseq
        %v360 = vshrl.u32 %v359, 7
        %v361 = vsub.s32 1, %v360
        %v362 = vrot.slane %v353, %v361
        %v363 = vlaneseq
        %v364 = vshrl.u32 %v363, 7
        %v365 = vsub.s32 2, %v364
        %v366 = vrot.slane %v353, %v365
        %v367 = vlaneseq
        %v368 = vshrl.u32 %v367, 7
        %v369 = vsub.s32 3, %v368
        %v370 = vrot.slane %v353, %v369
        %s375 = smul.u32 %s28, 8
        %v376 = vstv %s375
        %vm377 = vcmp.gt.s32.totalorder %v352, %v376
        %v378 = vld [vmem:[#allocation2] sm:$0xff]
        %v379 = vld [vmem:[#allocation3] sm:$0xff]
        %v380 = vld [vmem:[%s298] sm:$0xff]
        %v381 = vld [vmem:[%s298 + $0x8] sm:$0xff]
        %v382 = vld [vmem:[%s298 + $0x10] sm:$0xff]
        %v383 = vld [vmem:[%s298 + $0x18] sm:$0xff]
        %v384 = vpack.c.bf16 %v378, %v378
        %v385 = vld [vmem:[#allocation7] sm:$0xff]
        %v386 = vld [vmem:[#allocation7 + $0x8] sm:$0xff]
        %v387 = vld [vmem:[#allocation7 + $0x10] sm:$0xff]
        %v388 = vld [vmem:[#allocation7 + $0x18] sm:$0xff]
        %v389 = vld [vmem:[#allocation7 + $0x20] sm:$0xff]
        %v390 = vld [vmem:[#allocation7 + $0x28] sm:$0xff]
        %v391 = vld [vmem:[#allocation7 + $0x30] sm:$0xff]
        %v392 = vld [vmem:[#allocation7 + $0x38] sm:$0xff]
        %v393 = vld [vmem:[#allocation7 + $0x40] sm:$0xff]
        %v394 = vld [vmem:[#allocation7 + $0x48] sm:$0xff]
        %v395 = vld [vmem:[#allocation7 + $0x50] sm:$0xff]
        %v396 = vld [vmem:[#allocation7 + $0x58] sm:$0xff]
        %v397 = vld [vmem:[#allocation7 + $0x60] sm:$0xff]
        %v398 = vld [vmem:[#allocation7 + $0x68] sm:$0xff]
        %v399 = vld [vmem:[#allocation7 + $0x70] sm:$0xff]
        %v400 = vld [vmem:[#allocation7 + $0x78] sm:$0xff]
        %v401 = vld [vmem:[#allocation7 + $0x80] sm:$0xff]
        %v402 = vld [vmem:[#allocation7 + $0x88] sm:$0xff]
        %v403 = vld [vmem:[#allocation7 + $0x90] sm:$0xff]
        %v404 = vld [vmem:[#allocation7 + $0x98] sm:$0xff]
        %v405 = vld [vmem:[#allocation7 + $0xa0] sm:$0xff]
        %v406 = vld [vmem:[#allocation7 + $0xa8] sm:$0xff]
        %v407 = vld [vmem:[#allocation7 + $0xb0] sm:$0xff]
        %v408 = vld [vmem:[#allocation7 + $0xb8] sm:$0xff]
        %v409 = vld [vmem:[#allocation7 + $0xc0] sm:$0xff]
        %v410 = vld [vmem:[#allocation7 + $0xc8] sm:$0xff]
        %v411 = vld [vmem:[#allocation7 + $0xd0] sm:$0xff]
        %v412 = vld [vmem:[#allocation7 + $0xd8] sm:$0xff]
        %v413 = vld [vmem:[#allocation7 + $0xe0] sm:$0xff]
        %v414 = vld [vmem:[#allocation7 + $0xe8] sm:$0xff]
        %v415 = vld [vmem:[#allocation7 + $0xf0] sm:$0xff]
        %v416 = vld [vmem:[#allocation7 + $0xf8] sm:$0xff]
        %v449 = vunpack.c.l.b16 %v385
        %v450 = vunpack.c.h.b16 %v385
        %v451 = vunpack.c.l.b16 %v386
        %v452 = vunpack.c.h.b16 %v386
        %v453 = vunpack.c.l.b16 %v387
        %v454 = vunpack.c.h.b16 %v387
        %v455 = vunpack.c.l.b16 %v388
        %v456 = vunpack.c.h.b16 %v388
        %v457 = vunpack.c.l.b16 %v389
        %v458 = vunpack.c.h.b16 %v389
        %v459 = vunpack.c.l.b16 %v390
        %v460 = vunpack.c.h.b16 %v390
        %v461 = vunpack.c.l.b16 %v391
        %v462 = vunpack.c.h.b16 %v391
        %v463 = vunpack.c.l.b16 %v392
        %v464 = vunpack.c.h.b16 %v392
        %v465 = vunpack.c.l.b16 %v393
        %v466 = vunpack.c.h.b16 %v393
        %v467 = vunpack.c.l.b16 %v394
        %v468 = vunpack.c.h.b16 %v394
        %v469 = vunpack.c.l.b16 %v395
        %v470 = vunpack.c.h.b16 %v395
        %v471 = vunpack.c.l.b16 %v396
        %v472 = vunpack.c.h.b16 %v396
        %v473 = vunpack.c.l.b16 %v397
        %v474 = vunpack.c.h.b16 %v397
        %v475 = vunpack.c.l.b16 %v398
        %v476 = vunpack.c.h.b16 %v398
        %v477 = vunpack.c.l.b16 %v399
        %v478 = vunpack.c.h.b16 %v399
        %v479 = vunpack.c.l.b16 %v400
        %v480 = vunpack.c.h.b16 %v400
        %v481 = vunpack.c.l.b16 %v401
        %v482 = vunpack.c.h.b16 %v401
        %v483 = vunpack.c.l.b16 %v402
        %v484 = vunpack.c.h.b16 %v402
        %v485 = vunpack.c.l.b16 %v403
        %v486 = vunpack.c.h.b16 %v403
        %v487 = vunpack.c.l.b16 %v404
        %v488 = vunpack.c.h.b16 %v404
        %v489 = vunpack.c.l.b16 %v405
        %v490 = vunpack.c.h.b16 %v405
        %v491 = vunpack.c.l.b16 %v406
        %v492 = vunpack.c.h.b16 %v406
        %v493 = vunpack.c.l.b16 %v407
        %v494 = vunpack.c.h.b16 %v407
        %v495 = vunpack.c.l.b16 %v408
        %v496 = vunpack.c.h.b16 %v408
        %v497 = vunpack.c.l.b16 %v409
        %v498 = vunpack.c.h.b16 %v409
        %v499 = vunpack.c.l.b16 %v410
        %v500 = vunpack.c.h.b16 %v410
        %v501 = vunpack.c.l.b16 %v411
        %v502 = vunpack.c.h.b16 %v411
        %v503 = vunpack.c.l.b16 %v412
        %v504 = vunpack.c.h.b16 %v412
        %v505 = vunpack.c.l.b16 %v413
        %v506 = vunpack.c.h.b16 %v413
        %v507 = vunpack.c.l.b16 %v414
        %v508 = vunpack.c.h.b16 %v414
        %v509 = vunpack.c.l.b16 %v415
        %v510 = vunpack.c.h.b16 %v415
        %v511 = vunpack.c.l.b16 %v416
        %v512 = vunpack.c.h.b16 %v416
        %v513 = vpack.c.b16 %v453, %v449
        %v514 = vpack.c.b16 %v454, %v450
        %v515 = vpack.c.b16 %v455, %v451
        %v516 = vpack.c.b16 %v456, %v452
        %v517 = vpack.c.b16 %v461, %v457
        %v518 = vpack.c.b16 %v462, %v458
        %v519 = vpack.c.b16 %v463, %v459
        %v520 = vpack.c.b16 %v464, %v460
        %v521 = vpack.c.b16 %v469, %v465
        %v522 = vpack.c.b16 %v470, %v466
        %v523 = vpack.c.b16 %v471, %v467
        %v524 = vpack.c.b16 %v472, %v468
        %v525 = vpack.c.b16 %v477, %v473
        %v526 = vpack.c.b16 %v478, %v474
        %v527 = vpack.c.b16 %v479, %v475
        %v528 = vpack.c.b16 %v480, %v476
        %v529 = vpack.c.b16 %v485, %v481
        %v530 = vpack.c.b16 %v486, %v482
        %v531 = vpack.c.b16 %v487, %v483
        %v532 = vpack.c.b16 %v488, %v484
        %v533 = vpack.c.b16 %v493, %v489
        %v534 = vpack.c.b16 %v494, %v490
        %v535 = vpack.c.b16 %v495, %v491
        %v536 = vpack.c.b16 %v496, %v492
        %v537 = vpack.c.b16 %v501, %v497
        %v538 = vpack.c.b16 %v502, %v498
        %v539 = vpack.c.b16 %v503, %v499
        %v540 = vpack.c.b16 %v504, %v500
        %v541 = vpack.c.b16 %v509, %v505
        %v542 = vpack.c.b16 %v510, %v506
        %v543 = vpack.c.b16 %v511, %v507
        %v544 = vpack.c.b16 %v512, %v508
        %577 = vmatprep.subr.bf16.mxu0 %v542
        %578 = vmatpush1.bf16.msra.mxu0 %v541
        %579 = vmatprep.subr.bf16.mxu0 %v538
        %580 = vmatpush1.bf16.msra.mxu0 %v537
        %581 = vmatprep.subr.bf16.mxu0 %v534
        %582 = vmatpush1.bf16.msra.mxu0 %v533
        %583 = vmatprep.subr.bf16.mxu0 %v530
        %584 = vmatpush1.bf16.msra.mxu0 %v529
        %585 = vmatprep.subr.bf16.mxu0 %v526
        %586 = vmatpush1.bf16.msra.mxu0 %v525
        %587 = vmatprep.subr.bf16.mxu0 %v522
        %588 = vmatpush1.bf16.msra.mxu0 %v521
        %589 = vmatprep.subr.bf16.mxu0 %v518
        %590 = vmatpush1.bf16.msra.mxu0 %v517
        %591 = vmatprep.subr.bf16.mxu0 %v514
        %592 = vmatpush1.bf16.msra.mxu0 %v513
        %593 = vmatprep.subr.bf16.mxu0 0
        %594 = vmatpush2.bf16.msra.mxu0 0
        %595 = vmatprep.subr.bf16.mxu0 0
        %596 = vmatpush2.bf16.msra.mxu0 0
        %597 = vmatprep.subr.bf16.mxu0 0
        %598 = vmatpush2.bf16.msra.mxu0 0
        %599 = vmatprep.subr.bf16.mxu0 0
        %600 = vmatpush2.bf16.msra.mxu0 0
        %601 = vmatprep.subr.bf16.mxu0 0
        %602 = vmatpush2.bf16.msra.mxu0 0
        %603 = vmatprep.subr.bf16.mxu0 0
        %604 = vmatpush2.bf16.msra.mxu0 0
        %605 = vmatprep.subr.bf16.mxu0 0
        %606 = vmatpush2.bf16.msra.mxu0 0
        %607 = vmatprep.subr.bf16.mxu0 0
        %608 = vmatpush2.bf16.msra.mxu0 0
        %609 = vmatprep.mubr.bf16.mxu0 0
        %610 = vmatmul.mubr.bf16.gmra.mxu0 %v384
        %v611 = vpop.f32.mrf.mxu0
        %v612 = vadd.f32 0.0, %v611
        %v613 = vpop.f32.mrf.mxu0
        %v614 = vadd.f32 0.0, %v613
        %v615 = vpop.f32.mrf.mxu0
        %v616 = vpop.f32.mrf.mxu0
        %617 = vdwg.mxu0
        %618 = vmatprep.subr.bf16.mxu0 %v544
        %619 = vmatpush1.bf16.msra.mxu0 %v543
        %620 = vmatprep.subr.bf16.mxu0 %v540
        %621 = vmatpush1.bf16.msra.mxu0 %v539
        %622 = vmatprep.subr.bf16.mxu0 %v536
        %623 = vmatpush1.bf16.msra.mxu0 %v535
        %624 = vmatprep.subr.bf16.mxu0 %v532
        %625 = vmatpush1.bf16.msra.mxu0 %v531
        %626 = vmatprep.subr.bf16.mxu0 %v528
        %627 = vmatpush1.bf16.msra.mxu0 %v527
        %628 = vmatprep.subr.bf16.mxu0 %v524
        %629 = vmatpush1.bf16.msra.mxu0 %v523
        %630 = vmatprep.subr.bf16.mxu0 %v520
        %631 = vmatpush1.bf16.msra.mxu0 %v519
        %632 = vmatprep.subr.bf16.mxu0 %v516
        %633 = vmatpush1.bf16.msra.mxu0 %v515
        %634 = vmatprep.subr.bf16.mxu0 0
        %635 = vmatpush2.bf16.msra.mxu0 0
        %636 = vmatprep.subr.bf16.mxu0 0
        %637 = vmatpush2.bf16.msra.mxu0 0
        %638 = vmatprep.subr.bf16.mxu0 0
        %639 = vmatpush2.bf16.msra.mxu0 0
        %640 = vmatprep.subr.bf16.mxu0 0
        %641 = vmatpush2.bf16.msra.mxu0 0
        %642 = vmatprep.subr.bf16.mxu0 0
        %643 = vmatpush2.bf16.msra.mxu0 0
        %644 = vmatprep.subr.bf16.mxu0 0
        %645 = vmatpush2.bf16.msra.mxu0 0
        %646 = vmatprep.subr.bf16.mxu0 0
        %647 = vmatpush2.bf16.msra.mxu0 0
        %648 = vmatprep.subr.bf16.mxu0 0
        %649 = vmatpush2.bf16.msra.mxu0 0
        %650 = vmatprep.mubr.bf16.mxu0 0
        %651 = vmatmul.mubr.bf16.gmra.mxu0 %v384
        %v652 = vpop.f32.mrf.mxu0
        %v653 = vadd.f32 0.0, %v652
        %v654 = vpop.f32.mrf.mxu0
        %v655 = vadd.f32 0.0, %v654
        %v656 = vpop.f32.mrf.mxu0
        %v657 = vpop.f32.mrf.mxu0
        %658 = vdwg.mxu0
        %v659 = vadd.f32 %v380, %v612
        %v660 = vadd.f32 %v381, %v614
        %v661 = vadd.f32 %v382, %v653
        %v662 = vadd.f32 %v383, %v655
        %v663 = vxor.u32 %v659, 2147483648
        %v664 = vmul.f32 %v663, 1.442695
        %v665 = vpow.pop %v664
        %v666 = vadd.f32 %v665, 1.0
        %v667 = vrcp.pop %v666
        %v668 = vmul.f32 1.0, %v667
        %v669 = vxor.u32 %v660, 2147483648
        %v670 = vmul.f32 %v669, 1.442695
        %v671 = vpow.pop %v670
        %v672 = vadd.f32 %v671, 1.0
        %v673 = vrcp.pop %v672
        %v674 = vmul.f32 1.0, %v673
        %v675 = vtanh.pop %v661
        %v676 = vxor.u32 %v662, 2147483648
        %v677 = vmul.f32 %v676, 1.442695
        %v678 = vpow.pop %v677
        %v679 = vadd.f32 %v678, 1.0
        %v680 = vrcp.pop %v679
        %v681 = vmul.f32 1.0, %v680
        %v682 = vmul.f32 %v674, %v379
        %v683 = vmul.f32 %v668, %v675
        %v684 = vadd.f32 %v682, %v683
        %v685 = vtanh.pop %v684
        %v686 = vmul.f32 %v681, %v685
        %v687 = vsel %vm377, 1, 0
        %688 = vset.pattern.permute.xlu0 0
        %689 = vperm.xlu0 %688, %v687
        %v690 = vpop.permute.xlu0 %689
        %vm691 = vcmp.eq.s32.totalorder %v690, 1
        %v692 = vsel %vm691, %v686, %v378
        %v693 = vsel %vm691, %v684, %v379
        %694 = vst [vmem:[#allocation2] sm:$0xff] %v692
        %695 = vst [vmem:[#allocation3] sm:$0xff] %v693
        %s696 = scalar_lea.vmem [#allocation2], 8
        %v697 = vld [vmem:[%s696] sm:$0xff]
        %s698 = scalar_lea.vmem [#allocation3], 8
        %v699 = vld [vmem:[%s698] sm:$0xff]
        %v700 = vpack.c.bf16 %v692, %v692
        %v701 = vld [vmem:[#allocation9] sm:$0xff]
        %v702 = vld [vmem:[#allocation9 + $0x8] sm:$0xff]
        %v703 = vld [vmem:[#allocation9 + $0x10] sm:$0xff]
        %v704 = vld [vmem:[#allocation9 + $0x18] sm:$0xff]
        %v705 = vld [vmem:[#allocation9 + $0x20] sm:$0xff]
        %v706 = vld [vmem:[#allocation9 + $0x28] sm:$0xff]
        %v707 = vld [vmem:[#allocation9 + $0x30] sm:$0xff]
        %v708 = vld [vmem:[#allocation9 + $0x38] sm:$0xff]
        %v709 = vld [vmem:[#allocation9 + $0x40] sm:$0xff]
        %v710 = vld [vmem:[#allocation9 + $0x48] sm:$0xff]
        %v711 = vld [vmem:[#allocation9 + $0x50] sm:$0xff]
        %v712 = vld [vmem:[#allocation9 + $0x58] sm:$0xff]
        %v713 = vld [vmem:[#allocation9 + $0x60] sm:$0xff]
        %v714 = vld [vmem:[#allocation9 + $0x68] sm:$0xff]
        %v715 = vld [vmem:[#allocation9 + $0x70] sm:$0xff]
        %v716 = vld [vmem:[#allocation9 + $0x78] sm:$0xff]
        %v717 = vld [vmem:[#allocation9 + $0x80] sm:$0xff]
        %v718 = vld [vmem:[#allocation9 + $0x88] sm:$0xff]
        %v719 = vld [vmem:[#allocation9 + $0x90] sm:$0xff]
        %v720 = vld [vmem:[#allocation9 + $0x98] sm:$0xff]
        %v721 = vld [vmem:[#allocation9 + $0xa0] sm:$0xff]
        %v722 = vld [vmem:[#allocation9 + $0xa8] sm:$0xff]
        %v723 = vld [vmem:[#allocation9 + $0xb0] sm:$0xff]
        %v724 = vld [vmem:[#allocation9 + $0xb8] sm:$0xff]
        %v725 = vld [vmem:[#allocation9 + $0xc0] sm:$0xff]
        %v726 = vld [vmem:[#allocation9 + $0xc8] sm:$0xff]
        %v727 = vld [vmem:[#allocation9 + $0xd0] sm:$0xff]
        %v728 = vld [vmem:[#allocation9 + $0xd8] sm:$0xff]
        %v729 = vld [vmem:[#allocation9 + $0xe0] sm:$0xff]
        %v730 = vld [vmem:[#allocation9 + $0xe8] sm:$0xff]
        %v731 = vld [vmem:[#allocation9 + $0xf0] sm:$0xff]
        %v732 = vld [vmem:[#allocation9 + $0xf8] sm:$0xff]
        %v733 = vpack.c.bf16 %v697, %v697
        %v734 = vld [vmem:[#allocation10] sm:$0xff]
        %v735 = vld [vmem:[#allocation10 + $0x8] sm:$0xff]
        %v736 = vld [vmem:[#allocation10 + $0x10] sm:$0xff]
        %v737 = vld [vmem:[#allocation10 + $0x18] sm:$0xff]
        %v738 = vld [vmem:[#allocation10 + $0x20] sm:$0xff]
        %v739 = vld [vmem:[#allocation10 + $0x28] sm:$0xff]
        %v740 = vld [vmem:[#allocation10 + $0x30] sm:$0xff]
        %v741 = vld [vmem:[#allocation10 + $0x38] sm:$0xff]
        %v742 = vld [vmem:[#allocation10 + $0x40] sm:$0xff]
        %v743 = vld [vmem:[#allocation10 + $0x48] sm:$0xff]
        %v744 = vld [vmem:[#allocation10 + $0x50] sm:$0xff]
        %v745 = vld [vmem:[#allocation10 + $0x58] sm:$0xff]
        %v746 = vld [vmem:[#allocation10 + $0x60] sm:$0xff]
        %v747 = vld [vmem:[#allocation10 + $0x68] sm:$0xff]
        %v748 = vld [vmem:[#allocation10 + $0x70] sm:$0xff]
        %v749 = vld [vmem:[#allocation10 + $0x78] sm:$0xff]
        %v750 = vld [vmem:[#allocation10 + $0x80] sm:$0xff]
        %v751 = vld [vmem:[#allocation10 + $0x88] sm:$0xff]
        %v752 = vld [vmem:[#allocation10 + $0x90] sm:$0xff]
        %v753 = vld [vmem:[#allocation10 + $0x98] sm:$0xff]
        %v754 = vld [vmem:[#allocation10 + $0xa0] sm:$0xff]
        %v755 = vld [vmem:[#allocation10 + $0xa8] sm:$0xff]
        %v756 = vld [vmem:[#allocation10 + $0xb0] sm:$0xff]
        %v757 = vld [vmem:[#allocation10 + $0xb8] sm:$0xff]
        %v758 = vld [vmem:[#allocation10 + $0xc0] sm:$0xff]
        %v759 = vld [vmem:[#allocation10 + $0xc8] sm:$0xff]
        %v760 = vld [vmem:[#allocation10 + $0xd0] sm:$0xff]
        %v761 = vld [vmem:[#allocation10 + $0xd8] sm:$0xff]
        %v762 = vld [vmem:[#allocation10 + $0xe0] sm:$0xff]
        %v763 = vld [vmem:[#allocation10 + $0xe8] sm:$0xff]
        %v764 = vld [vmem:[#allocation10 + $0xf0] sm:$0xff]
        %v765 = vld [vmem:[#allocation10 + $0xf8] sm:$0xff]
        %v798 = vunpack.c.l.b16 %v734
        %v799 = vunpack.c.h.b16 %v734
        %v800 = vunpack.c.l.b16 %v735
        %v801 = vunpack.c.h.b16 %v735
        %v802 = vunpack.c.l.b16 %v736
        %v803 = vunpack.c.h.b16 %v736
        %v804 = vunpack.c.l.b16 %v737
        %v805 = vunpack.c.h.b16 %v737
        %v806 = vunpack.c.l.b16 %v738
        %v807 = vunpack.c.h.b16 %v738
        %v808 = vunpack.c.l.b16 %v739
        %v809 = vunpack.c.h.b16 %v739
        %v810 = vunpack.c.l.b16 %v740
        %v811 = vunpack.c.h.b16 %v740
        %v812 = vunpack.c.l.b16 %v741
        %v813 = vunpack.c.h.b16 %v741
        %v814 = vunpack.c.l.b16 %v742
        %v815 = vunpack.c.h.b16 %v742
        %v816 = vunpack.c.l.b16 %v743
        %v817 = vunpack.c.h.b16 %v743
        %v818 = vunpack.c.l.b16 %v744
        %v819 = vunpack.c.h.b16 %v744
        %v820 = vunpack.c.l.b16 %v745
        %v821 = vunpack.c.h.b16 %v745
        %v822 = vunpack.c.l.b16 %v746
        %v823 = vunpack.c.h.b16 %v746
        %v824 = vunpack.c.l.b16 %v747
        %v825 = vunpack.c.h.b16 %v747
        %v826 = vunpack.c.l.b16 %v748
        %v827 = vunpack.c.h.b16 %v748
        %v828 = vunpack.c.l.b16 %v749
        %v829 = vunpack.c.h.b16 %v749
        %v830 = vunpack.c.l.b16 %v750
        %v831 = vunpack.c.h.b16 %v750
        %v832 = vunpack.c.l.b16 %v751
        %v833 = vunpack.c.h.b16 %v751
        %v834 = vunpack.c.l.b16 %v752
        %v835 = vunpack.c.h.b16 %v752
        %v836 = vunpack.c.l.b16 %v753
        %v837 = vunpack.c.h.b16 %v753
        %v838 = vunpack.c.l.b16 %v754
        %v839 = vunpack.c.h.b16 %v754
        %v840 = vunpack.c.l.b16 %v755
        %v841 = vunpack.c.h.b16 %v755
        %v842 = vunpack.c.l.b16 %v756
        %v843 = vunpack.c.h.b16 %v756
        %v844 = vunpack.c.l.b16 %v757
        %v845 = vunpack.c.h.b16 %v757
        %v846 = vunpack.c.l.b16 %v758
        %v847 = vunpack.c.h.b16 %v758
        %v848 = vunpack.c.l.b16 %v759
        %v849 = vunpack.c.h.b16 %v759
        %v850 = vunpack.c.l.b16 %v760
        %v851 = vunpack.c.h.b16 %v760
        %v852 = vunpack.c.l.b16 %v761
        %v853 = vunpack.c.h.b16 %v761
        %v854 = vunpack.c.l.b16 %v762
        %v855 = vunpack.c.h.b16 %v762
        %v856 = vunpack.c.l.b16 %v763
        %v857 = vunpack.c.h.b16 %v763
        %v858 = vunpack.c.l.b16 %v764
        %v859 = vunpack.c.h.b16 %v764
        %v860 = vunpack.c.l.b16 %v765
        %v861 = vunpack.c.h.b16 %v765
        %v862 = vpack.c.b16 %v802, %v798
        %v863 = vpack.c.b16 %v803, %v799
        %v864 = vpack.c.b16 %v804, %v800
        %v865 = vpack.c.b16 %v805, %v801
        %v866 = vpack.c.b16 %v810, %v806
        %v867 = vpack.c.b16 %v811, %v807
        %v868 = vpack.c.b16 %v812, %v808
        %v869 = vpack.c.b16 %v813, %v809
        %v870 = vpack.c.b16 %v818, %v814
        %v871 = vpack.c.b16 %v819, %v815
        %v872 = vpack.c.b16 %v820, %v816
        %v873 = vpack.c.b16 %v821, %v817
        %v874 = vpack.c.b16 %v826, %v822
        %v875 = vpack.c.b16 %v827, %v823
        %v876 = vpack.c.b16 %v828, %v824
        %v877 = vpack.c.b16 %v829, %v825
        %v878 = vpack.c.b16 %v834, %v830
        %v879 = vpack.c.b16 %v835, %v831
        %v880 = vpack.c.b16 %v836, %v832
        %v881 = vpack.c.b16 %v837, %v833
        %v882 = vpack.c.b16 %v842, %v838
        %v883 = vpack.c.b16 %v843, %v839
        %v884 = vpack.c.b16 %v844, %v840
        %v885 = vpack.c.b16 %v845, %v841
        %v886 = vpack.c.b16 %v850, %v846
        %v887 = vpack.c.b16 %v851, %v847
        %v888 = vpack.c.b16 %v852, %v848
        %v889 = vpack.c.b16 %v853, %v849
        %v890 = vpack.c.b16 %v858, %v854
        %v891 = vpack.c.b16 %v859, %v855
        %v892 = vpack.c.b16 %v860, %v856
        %v893 = vpack.c.b16 %v861, %v857
        %926 = vmatprep.subr.bf16.mxu0 %v891
        %927 = vmatpush1.bf16.msra.mxu0 %v890
        %928 = vmatprep.subr.bf16.mxu0 %v887
        %929 = vmatpush1.bf16.msra.mxu0 %v886
        %930 = vmatprep.subr.bf16.mxu0 %v883
        %931 = vmatpush1.bf16.msra.mxu0 %v882
        %932 = vmatprep.subr.bf16.mxu0 %v879
        %933 = vmatpush1.bf16.msra.mxu0 %v878
        %934 = vmatprep.subr.bf16.mxu0 %v875
        %935 = vmatpush1.bf16.msra.mxu0 %v874
        %936 = vmatprep.subr.bf16.mxu0 %v871
        %937 = vmatpush1.bf16.msra.mxu0 %v870
        %938 = vmatprep.subr.bf16.mxu0 %v867
        %939 = vmatpush1.bf16.msra.mxu0 %v866
        %940 = vmatprep.subr.bf16.mxu0 %v863
        %941 = vmatpush1.bf16.msra.mxu0 %v862
        %942 = vmatprep.subr.bf16.mxu0 0
        %943 = vmatpush2.bf16.msra.mxu0 0
        %944 = vmatprep.subr.bf16.mxu0 0
        %945 = vmatpush2.bf16.msra.mxu0 0
        %946 = vmatprep.subr.bf16.mxu0 0
        %947 = vmatpush2.bf16.msra.mxu0 0
        %948 = vmatprep.subr.bf16.mxu0 0
        %949 = vmatpush2.bf16.msra.mxu0 0
        %950 = vmatprep.subr.bf16.mxu0 0
        %951 = vmatpush2.bf16.msra.mxu0 0
        %952 = vmatprep.subr.bf16.mxu0 0
        %953 = vmatpush2.bf16.msra.mxu0 0
        %954 = vmatprep.subr.bf16.mxu0 0
        %955 = vmatpush2.bf16.msra.mxu0 0
        %956 = vmatprep.subr.bf16.mxu0 0
        %957 = vmatpush2.bf16.msra.mxu0 0
        %958 = vmatprep.mubr.bf16.mxu0 0
        %959 = vmatmul.mubr.bf16.gmra.mxu0 %v733
        %v960 = vpop.f32.mrf.mxu0
        %v961 = vadd.f32 0.0, %v960
        %v962 = vpop.f32.mrf.mxu0
        %v963 = vadd.f32 0.0, %v962
        %v964 = vpop.f32.mrf.mxu0
        %v965 = vpop.f32.mrf.mxu0
        %966 = vdwg.mxu0
        %967 = vmatprep.subr.bf16.mxu0 %v893
        %968 = vmatpush1.bf16.msra.mxu0 %v892
        %969 = vmatprep.subr.bf16.mxu0 %v889
        %970 = vmatpush1.bf16.msra.mxu0 %v888
        %971 = vmatprep.subr.bf16.mxu0 %v885
        %972 = vmatpush1.bf16.msra.mxu0 %v884
        %973 = vmatprep.subr.bf16.mxu0 %v881
        %974 = vmatpush1.bf16.msra.mxu0 %v880
        %975 = vmatprep.subr.bf16.mxu0 %v877
        %976 = vmatpush1.bf16.msra.mxu0 %v876
        %977 = vmatprep.subr.bf16.mxu0 %v873
        %978 = vmatpush1.bf16.msra.mxu0 %v872
        %979 = vmatprep.subr.bf16.mxu0 %v869
        %980 = vmatpush1.bf16.msra.mxu0 %v868
        %981 = vmatprep.subr.bf16.mxu0 %v865
        %982 = vmatpush1.bf16.msra.mxu0 %v864
        %983 = vmatprep.subr.bf16.mxu0 0
        %984 = vmatpush2.bf16.msra.mxu0 0
        %985 = vmatprep.subr.bf16.mxu0 0
        %986 = vmatpush2.bf16.msra.mxu0 0
        %987 = vmatprep.subr.bf16.mxu0 0
        %988 = vmatpush2.bf16.msra.mxu0 0
        %989 = vmatprep.subr.bf16.mxu0 0
        %990 = vmatpush2.bf16.msra.mxu0 0
        %991 = vmatprep.subr.bf16.mxu0 0
        %992 = vmatpush2.bf16.msra.mxu0 0
        %993 = vmatprep.subr.bf16.mxu0 0
        %994 = vmatpush2.bf16.msra.mxu0 0
        %995 = vmatprep.subr.bf16.mxu0 0
        %996 = vmatpush2.bf16.msra.mxu0 0
        %997 = vmatprep.subr.bf16.mxu0 0
        %998 = vmatpush2.bf16.msra.mxu0 0
        %999 = vmatprep.mubr.bf16.mxu0 0
        %1000 = vmatmul.mubr.bf16.gmra.mxu0 %v733
        %v1001 = vpop.f32.mrf.mxu0
        %v1002 = vadd.f32 0.0, %v1001
        %v1003 = vpop.f32.mrf.mxu0
        %v1004 = vadd.f32 0.0, %v1003
        %v1005 = vpop.f32.mrf.mxu0
        %v1006 = vpop.f32.mrf.mxu0
        %1007 = vdwg.mxu0
        %v1040 = vunpack.c.l.b16 %v701
        %v1041 = vunpack.c.h.b16 %v701
        %v1042 = vunpack.c.l.b16 %v702
        %v1043 = vunpack.c.h.b16 %v702
        %v1044 = vunpack.c.l.b16 %v703
        %v1045 = vunpack.c.h.b16 %v703
        %v1046 = vunpack.c.l.b16 %v704
        %v1047 = vunpack.c.h.b16 %v704
        %v1048 = vunpack.c.l.b16 %v705
        %v1049 = vunpack.c.h.b16 %v705
        %v1050 = vunpack.c.l.b16 %v706
        %v1051 = vunpack.c.h.b16 %v706
        %v1052 = vunpack.c.l.b16 %v707
        %v1053 = vunpack.c.h.b16 %v707
        %v1054 = vunpack.c.l.b16 %v708
        %v1055 = vunpack.c.h.b16 %v708
        %v1056 = vunpack.c.l.b16 %v709
        %v1057 = vunpack.c.h.b16 %v709
        %v1058 = vunpack.c.l.b16 %v710
        %v1059 = vunpack.c.h.b16 %v710
        %v1060 = vunpack.c.l.b16 %v711
        %v1061 = vunpack.c.h.b16 %v711
        %v1062 = vunpack.c.l.b16 %v712
        %v1063 = vunpack.c.h.b16 %v712
        %v1064 = vunpack.c.l.b16 %v713
        %v1065 = vunpack.c.h.b16 %v713
        %v1066 = vunpack.c.l.b16 %v714
        %v1067 = vunpack.c.h.b16 %v714
        %v1068 = vunpack.c.l.b16 %v715
        %v1069 = vunpack.c.h.b16 %v715
        %v1070 = vunpack.c.l.b16 %v716
        %v1071 = vunpack.c.h.b16 %v716
        %v1072 = vunpack.c.l.b16 %v717
        %v1073 = vunpack.c.h.b16 %v717
        %v1074 = vunpack.c.l.b16 %v718
        %v1075 = vunpack.c.h.b16 %v718
        %v1076 = vunpack.c.l.b16 %v719
        %v1077 = vunpack.c.h.b16 %v719
        %v1078 = vunpack.c.l.b16 %v720
        %v1079 = vunpack.c.h.b16 %v720
        %v1080 = vunpack.c.l.b16 %v721
        %v1081 = vunpack.c.h.b16 %v721
        %v1082 = vunpack.c.l.b16 %v722
        %v1083 = vunpack.c.h.b16 %v722
        %v1084 = vunpack.c.l.b16 %v723
        %v1085 = vunpack.c.h.b16 %v723
        %v1086 = vunpack.c.l.b16 %v724
        %v1087 = vunpack.c.h.b16 %v724
        %v1088 = vunpack.c.l.b16 %v725
        %v1089 = vunpack.c.h.b16 %v725
        %v1090 = vunpack.c.l.b16 %v726
        %v1091 = vunpack.c.h.b16 %v726
        %v1092 = vunpack.c.l.b16 %v727
        %v1093 = vunpack.c.h.b16 %v727
        %v1094 = vunpack.c.l.b16 %v728
        %v1095 = vunpack.c.h.b16 %v728
        %v1096 = vunpack.c.l.b16 %v729
        %v1097 = vunpack.c.h.b16 %v729
        %v1098 = vunpack.c.l.b16 %v730
        %v1099 = vunpack.c.h.b16 %v730
        %v1100 = vunpack.c.l.b16 %v731
        %v1101 = vunpack.c.h.b16 %v731
        %v1102 = vunpack.c.l.b16 %v732
        %v1103 = vunpack.c.h.b16 %v732
        %v1104 = vpack.c.b16 %v1044, %v1040
        %v1105 = vpack.c.b16 %v1045, %v1041
        %v1106 = vpack.c.b16 %v1046, %v1042
        %v1107 = vpack.c.b16 %v1047, %v1043
        %v1108 = vpack.c.b16 %v1052, %v1048
        %v1109 = vpack.c.b16 %v1053, %v1049
        %v1110 = vpack.c.b16 %v1054, %v1050
        %v1111 = vpack.c.b16 %v1055, %v1051
        %v1112 = vpack.c.b16 %v1060, %v1056
        %v1113 = vpack.c.b16 %v1061, %v1057
        %v1114 = vpack.c.b16 %v1062, %v1058
        %v1115 = vpack.c.b16 %v1063, %v1059
        %v1116 = vpack.c.b16 %v1068, %v1064
        %v1117 = vpack.c.b16 %v1069, %v1065
        %v1118 = vpack.c.b16 %v1070, %v1066
        %v1119 = vpack.c.b16 %v1071, %v1067
        %v1120 = vpack.c.b16 %v1076, %v1072
        %v1121 = vpack.c.b16 %v1077, %v1073
        %v1122 = vpack.c.b16 %v1078, %v1074
        %v1123 = vpack.c.b16 %v1079, %v1075
        %v1124 = vpack.c.b16 %v1084, %v1080
        %v1125 = vpack.c.b16 %v1085, %v1081
        %v1126 = vpack.c.b16 %v1086, %v1082
        %v1127 = vpack.c.b16 %v1087, %v1083
        %v1128 = vpack.c.b16 %v1092, %v1088
        %v1129 = vpack.c.b16 %v1093, %v1089
        %v1130 = vpack.c.b16 %v1094, %v1090
        %v1131 = vpack.c.b16 %v1095, %v1091
        %v1132 = vpack.c.b16 %v1100, %v1096
        %v1133 = vpack.c.b16 %v1101, %v1097
        %v1134 = vpack.c.b16 %v1102, %v1098
        %v1135 = vpack.c.b16 %v1103, %v1099
        %1168 = vmatprep.subr.bf16.mxu0 %v1133
        %1169 = vmatpush1.bf16.msra.mxu0 %v1132
        %1170 = vmatprep.subr.bf16.mxu0 %v1129
        %1171 = vmatpush1.bf16.msra.mxu0 %v1128
        %1172 = vmatprep.subr.bf16.mxu0 %v1125
        %1173 = vmatpush1.bf16.msra.mxu0 %v1124
        %1174 = vmatprep.subr.bf16.mxu0 %v1121
        %1175 = vmatpush1.bf16.msra.mxu0 %v1120
        %1176 = vmatprep.subr.bf16.mxu0 %v1117
        %1177 = vmatpush1.bf16.msra.mxu0 %v1116
        %1178 = vmatprep.subr.bf16.mxu0 %v1113
        %1179 = vmatpush1.bf16.msra.mxu0 %v1112
        %1180 = vmatprep.subr.bf16.mxu0 %v1109
        %1181 = vmatpush1.bf16.msra.mxu0 %v1108
        %1182 = vmatprep.subr.bf16.mxu0 %v1105
        %1183 = vmatpush1.bf16.msra.mxu0 %v1104
        %1184 = vmatprep.subr.bf16.mxu0 0
        %1185 = vmatpush2.bf16.msra.mxu0 0
        %1186 = vmatprep.subr.bf16.mxu0 0
        %1187 = vmatpush2.bf16.msra.mxu0 0
        %1188 = vmatprep.subr.bf16.mxu0 0
        %1189 = vmatpush2.bf16.msra.mxu0 0
        %1190 = vmatprep.subr.bf16.mxu0 0
        %1191 = vmatpush2.bf16.msra.mxu0 0
        %1192 = vmatprep.subr.bf16.mxu0 0
        %1193 = vmatpush2.bf16.msra.mxu0 0
        %1194 = vmatprep.subr.bf16.mxu0 0
        %1195 = vmatpush2.bf16.msra.mxu0 0
        %1196 = vmatprep.subr.bf16.mxu0 0
        %1197 = vmatpush2.bf16.msra.mxu0 0
        %1198 = vmatprep.subr.bf16.mxu0 0
        %1199 = vmatpush2.bf16.msra.mxu0 0
        %1200 = vmatprep.mubr.bf16.mxu0 0
        %1201 = vmatmul.mubr.bf16.gmra.mxu0 %v700
        %v1202 = vpop.f32.mrf.mxu0
        %v1203 = vadd.f32 %v961, %v1202
        %v1204 = vpop.f32.mrf.mxu0
        %v1205 = vadd.f32 %v963, %v1204
        %v1206 = vpop.f32.mrf.mxu0
        %v1207 = vpop.f32.mrf.mxu0
        %1208 = vdwg.mxu0
        %1209 = vmatprep.subr.bf16.mxu0 %v1135
        %1210 = vmatpush1.bf16.msra.mxu0 %v1134
        %1211 = vmatprep.subr.bf16.mxu0 %v1131
        %1212 = vmatpush1.bf16.msra.mxu0 %v1130
        %1213 = vmatprep.subr.bf16.mxu0 %v1127
        %1214 = vmatpush1.bf16.msra.mxu0 %v1126
        %1215 = vmatprep.subr.bf16.mxu0 %v1123
        %1216 = vmatpush1.bf16.msra.mxu0 %v1122
        %1217 = vmatprep.subr.bf16.mxu0 %v1119
        %1218 = vmatpush1.bf16.msra.mxu0 %v1118
        %1219 = vmatprep.subr.bf16.mxu0 %v1115
        %1220 = vmatpush1.bf16.msra.mxu0 %v1114
        %1221 = vmatprep.subr.bf16.mxu0 %v1111
        %1222 = vmatpush1.bf16.msra.mxu0 %v1110
        %1223 = vmatprep.subr.bf16.mxu0 %v1107
        %1224 = vmatpush1.bf16.msra.mxu0 %v1106
        %1225 = vmatprep.subr.bf16.mxu0 0
        %1226 = vmatpush2.bf16.msra.mxu0 0
        %1227 = vmatprep.subr.bf16.mxu0 0
        %1228 = vmatpush2.bf16.msra.mxu0 0
        %1229 = vmatprep.subr.bf16.mxu0 0
        %1230 = vmatpush2.bf16.msra.mxu0 0
        %1231 = vmatprep.subr.bf16.mxu0 0
        %1232 = vmatpush2.bf16.msra.mxu0 0
        %1233 = vmatprep.subr.bf16.mxu0 0
        %1234 = vmatpush2.bf16.msra.mxu0 0
        %1235 = vmatprep.subr.bf16.mxu0 0
        %1236 = vmatpush2.bf16.msra.mxu0 0
        %1237 = vmatprep.subr.bf16.mxu0 0
        %1238 = vmatpush2.bf16.msra.mxu0 0
        %1239 = vmatprep.subr.bf16.mxu0 0
        %1240 = vmatpush2.bf16.msra.mxu0 0
        %1241 = vmatprep.mubr.bf16.mxu0 0
        %1242 = vmatmul.mubr.bf16.gmra.mxu0 %v700
        %v1243 = vpop.f32.mrf.mxu0
        %v1244 = vadd.f32 %v1002, %v1243
        %v1245 = vpop.f32.mrf.mxu0
        %v1246 = vadd.f32 %v1004, %v1245
        %v1247 = vpop.f32.mrf.mxu0
        %v1248 = vpop.f32.mrf.mxu0
        %1249 = vdwg.mxu0
        %v1250 = vadd.f32 %v1203, %v358
        %v1251 = vadd.f32 %v1205, %v362
        %v1252 = vadd.f32 %v1244, %v366
        %v1253 = vadd.f32 %v1246, %v370
        %v1254 = vxor.u32 %v1250, 2147483648
        %v1255 = vmul.f32 %v1254, 1.442695
        %v1256 = vpow.pop %v1255
        %v1257 = vadd.f32 %v1256, 1.0
        %v1258 = vrcp.pop %v1257
        %v1259 = vmul.f32 1.0, %v1258
        %v1260 = vxor.u32 %v1251, 2147483648
        %v1261 = vmul.f32 %v1260, 1.442695
        %v1262 = vpow.pop %v1261
        %v1263 = vadd.f32 %v1262, 1.0
        %v1264 = vrcp.pop %v1263
        %v1265 = vmul.f32 1.0, %v1264
        %v1266 = vtanh.pop %v1252
        %v1267 = vxor.u32 %v1253, 2147483648
        %v1268 = vmul.f32 %v1267, 1.442695
        %v1269 = vpow.pop %v1268
        %v1270 = vadd.f32 %v1269, 1.0
        %v1271 = vrcp.pop %v1270
        %v1272 = vmul.f32 1.0, %v1271
        %v1273 = vmul.f32 %v1265, %v699
        %v1274 = vmul.f32 %v1259, %v1266
        %v1275 = vadd.f32 %v1273, %v1274
        %v1276 = vtanh.pop %v1275
        %v1277 = vmul.f32 %v1272, %v1276
        %v1278 = vsel %vm691, %v1277, %v697
        %v1279 = vsel %vm691, %v1275, %v699
        %1280 = vst [vmem:[%s696] sm:$0xff] %v1278
        %1281 = vst [vmem:[%s698] sm:$0xff] %v1279
        %v1282 = vsel %vm691, %v1277, 0.0
        %1283 = vst [vmem:[%s338] sm:$0xff] %v1282
        %s1284 = sadd.s32 %s375, 1
        %v1285 = vstv %s1284
        %vm1286 = vcmp.gt.s32.totalorder %v352, %v1285
        %v1287 = vld [vmem:[#allocation2] sm:$0xff]
        %v1288 = vld [vmem:[#allocation3] sm:$0xff]
        %s1289 = scalar_lea.vmem %s298, 32 [#allocation4]
        %v1290 = vld [vmem:[%s1289] sm:$0xff]
        %v1291 = vld [vmem:[%s1289 + $0x8] sm:$0xff]
        %v1292 = vld [vmem:[%s1289 + $0x10] sm:$0xff]
        %v1293 = vld [vmem:[%s1289 + $0x18] sm:$0xff]
        %v1294 = vpack.c.bf16 %v1287, %v1287
        %v1295 = vld [vmem:[#allocation7] sm:$0xff]
        %v1296 = vld [vmem:[#allocation7 + $0x8] sm:$0xff]
        %v1297 = vld [vmem:[#allocation7 + $0x10] sm:$0xff]
        %v1298 = vld [vmem:[#allocation7 + $0x18] sm:$0xff]
        %v1299 = vld [vmem:[#allocation7 + $0x20] sm:$0xff]
        %v1300 = vld [vmem:[#allocation7 + $0x28] sm:$0xff]
        %v1301 = vld [vmem:[#allocation7 + $0x30] sm:$0xff]
        %v1302 = vld [vmem:[#allocation7 + $0x38] sm:$0xff]
        %v1303 = vld [vmem:[#allocation7 + $0x40] sm:$0xff]
        %v1304 = vld [vmem:[#allocation7 + $0x48] sm:$0xff]
        %v1305 = vld [vmem:[#allocation7 + $0x50] sm:$0xff]
        %v1306 = vld [vmem:[#allocation7 + $0x58] sm:$0xff]
        %v1307 = vld [vmem:[#allocation7 + $0x60] sm:$0xff]
        %v1308 = vld [vmem:[#allocation7 + $0x68] sm:$0xff]
        %v1309 = vld [vmem:[#allocation7 + $0x70] sm:$0xff]
        %v1310 = vld [vmem:[#allocation7 + $0x78] sm:$0xff]
        %v1311 = vld [vmem:[#allocation7 + $0x80] sm:$0xff]
        %v1312 = vld [vmem:[#allocation7 + $0x88] sm:$0xff]
        %v1313 = vld [vmem:[#allocation7 + $0x90] sm:$0xff]
        %v1314 = vld [vmem:[#allocation7 + $0x98] sm:$0xff]
        %v1315 = vld [vmem:[#allocation7 + $0xa0] sm:$0xff]
        %v1316 = vld [vmem:[#allocation7 + $0xa8] sm:$0xff]
        %v1317 = vld [vmem:[#allocation7 + $0xb0] sm:$0xff]
        %v1318 = vld [vmem:[#allocation7 + $0xb8] sm:$0xff]
        %v1319 = vld [vmem:[#allocation7 + $0xc0] sm:$0xff]
        %v1320 = vld [vmem:[#allocation7 + $0xc8] sm:$0xff]
        %v1321 = vld [vmem:[#allocation7 + $0xd0] sm:$0xff]
        %v1322 = vld [vmem:[#allocation7 + $0xd8] sm:$0xff]
        %v1323 = vld [vmem:[#allocation7 + $0xe0] sm:$0xff]
        %v1324 = vld [vmem:[#allocation7 + $0xe8] sm:$0xff]
        %v1325 = vld [vmem:[#allocation7 + $0xf0] sm:$0xff]
        %v1326 = vld [vmem:[#allocation7 + $0xf8] sm:$0xff]
        %v1359 = vunpack.c.l.b16 %v1295
        %v1360 = vunpack.c.h.b16 %v1295
        %v1361 = vunpack.c.l.b16 %v1296
        %v1362 = vunpack.c.h.b16 %v1296
        %v1363 = vunpack.c.l.b16 %v1297
        %v1364 = vunpack.c.h.b16 %v1297
        %v1365 = vunpack.c.l.b16 %v1298
        %v1366 = vunpack.c.h.b16 %v1298
        %v1367 = vunpack.c.l.b16 %v1299
        %v1368 = vunpack.c.h.b16 %v1299
        %v1369 = vunpack.c.l.b16 %v1300
        %v1370 = vunpack.c.h.b16 %v1300
        %v1371 = vunpack.c.l.b16 %v1301
        %v1372 = vunpack.c.h.b16 %v1301
        %v1373 = vunpack.c.l.b16 %v1302
        %v1374 = vunpack.c.h.b16 %v1302
        %v1375 = vunpack.c.l.b16 %v1303
        %v1376 = vunpack.c.h.b16 %v1303
        %v1377 = vunpack.c.l.b16 %v1304
        %v1378 = vunpack.c.h.b16 %v1304
        %v1379 = vunpack.c.l.b16 %v1305
        %v1380 = vunpack.c.h.b16 %v1305
        %v1381 = vunpack.c.l.b16 %v1306
        %v1382 = vunpack.c.h.b16 %v1306
        %v1383 = vunpack.c.l.b16 %v1307
        %v1384 = vunpack.c.h.b16 %v1307
        %v1385 = vunpack.c.l.b16 %v1308
        %v1386 = vunpack.c.h.b16 %v1308
        %v1387 = vunpack.c.l.b16 %v1309
        %v1388 = vunpack.c.h.b16 %v1309
        %v1389 = vunpack.c.l.b16 %v1310
        %v1390 = vunpack.c.h.b16 %v1310
        %v1391 = vunpack.c.l.b16 %v1311
        %v1392 = vunpack.c.h.b16 %v1311
        %v1393 = vunpack.c.l.b16 %v1312
        %v1394 = vunpack.c.h.b16 %v1312
        %v1395 = vunpack.c.l.b16 %v1313
        %v1396 = vunpack.c.h.b16 %v1313
        %v1397 = vunpack.c.l.b16 %v1314
        %v1398 = vunpack.c.h.b16 %v1314
        %v1399 = vunpack.c.l.b16 %v1315
        %v1400 = vunpack.c.h.b16 %v1315
        %v1401 = vunpack.c.l.b16 %v1316
        %v1402 = vunpack.c.h.b16 %v1316
        %v1403 = vunpack.c.l.b16 %v1317
        %v1404 = vunpack.c.h.b16 %v1317
        %v1405 = vunpack.c.l.b16 %v1318
        %v1406 = vunpack.c.h.b16 %v1318
        %v1407 = vunpack.c.l.b16 %v1319
        %v1408 = vunpack.c.h.b16 %v1319
        %v1409 = vunpack.c.l.b16 %v1320
        %v1410 = vunpack.c.h.b16 %v1320
        %v1411 = vunpack.c.l.b16 %v1321
        %v1412 = vunpack.c.h.b16 %v1321
        %v1413 = vunpack.c.l.b16 %v1322
        %v1414 = vunpack.c.h.b16 %v1322
        %v1415 = vunpack.c.l.b16 %v1323
        %v1416 = vunpack.c.h.b16 %v1323
        %v1417 = vunpack.c.l.b16 %v1324
        %v1418 = vunpack.c.h.b16 %v1324
        %v1419 = vunpack.c.l.b16 %v1325
        %v1420 = vunpack.c.h.b16 %v1325
        %v1421 = vunpack.c.l.b16 %v1326
        %v1422 = vunpack.c.h.b16 %v1326
        %v1423 = vpack.c.b16 %v1363, %v1359
        %v1424 = vpack.c.b16 %v1364, %v1360
        %v1425 = vpack.c.b16 %v1365, %v1361
        %v1426 = vpack.c.b16 %v1366, %v1362
        %v1427 = vpack.c.b16 %v1371, %v1367
        %v1428 = vpack.c.b16 %v1372, %v1368
        %v1429 = vpack.c.b16 %v1373, %v1369
        %v1430 = vpack.c.b16 %v1374, %v1370
        %v1431 = vpack.c.b16 %v1379, %v1375
        %v1432 = vpack.c.b16 %v1380, %v1376
        %v1433 = vpack.c.b16 %v1381, %v1377
        %v1434 = vpack.c.b16 %v1382, %v1378
        %v1435 = vpack.c.b16 %v1387, %v1383
        %v1436 = vpack.c.b16 %v1388, %v1384
        %v1437 = vpack.c.b16 %v1389, %v1385
        %v1438 = vpack.c.b16 %v1390, %v1386
        %v1439 = vpack.c.b16 %v1395, %v1391
        %v1440 = vpack.c.b16 %v1396, %v1392
        %v1441 = vpack.c.b16 %v1397, %v1393
        %v1442 = vpack.c.b16 %v1398, %v1394
        %v1443 = vpack.c.b16 %v1403, %v1399
        %v1444 = vpack.c.b16 %v1404, %v1400
        %v1445 = vpack.c.b16 %v1405, %v1401
        %v1446 = vpack.c.b16 %v1406, %v1402
        %v1447 = vpack.c.b16 %v1411, %v1407
        %v1448 = vpack.c.b16 %v1412, %v1408
        %v1449 = vpack.c.b16 %v1413, %v1409
        %v1450 = vpack.c.b16 %v1414, %v1410
        %v1451 = vpack.c.b16 %v1419, %v1415
        %v1452 = vpack.c.b16 %v1420, %v1416
        %v1453 = vpack.c.b16 %v1421, %v1417
        %v1454 = vpack.c.b16 %v1422, %v1418
        %1487 = vmatprep.subr.bf16.mxu0 %v1452
        %1488 = vmatpush1.bf16.msra.mxu0 %v1451
        %1489 = vmatprep.subr.bf16.mxu0 %v1448
        %1490 = vmatpush1.bf16.msra.mxu0 %v1447
        %1491 = vmatprep.subr.bf16.mxu0 %v1444
        %1492 = vmatpush1.bf16.msra.mxu0 %v1443
        %1493 = vmatprep.subr.bf16.mxu0 %v1440
        %1494 = vmatpush1.bf16.msra.mxu0 %v1439
        %1495 = vmatprep.subr.bf16.mxu0 %v1436
        %1496 = vmatpush1.bf16.msra.mxu0 %v1435
        %1497 = vmatprep.subr.bf16.mxu0 %v1432
        %1498 = vmatpush1.bf16.msra.mxu0 %v1431
        %1499 = vmatprep.subr.bf16.mxu0 %v1428
        %1500 = vmatpush1.bf16.msra.mxu0 %v1427
        %1501 = vmatprep.subr.bf16.mxu0 %v1424
        %1502 = vmatpush1.bf16.msra.mxu0 %v1423
        %1503 = vmatprep.subr.bf16.mxu0 0
        %1504 = vmatpush2.bf16.msra.mxu0 0
        %1505 = vmatprep.subr.bf16.mxu0 0
        %1506 = vmatpush2.bf16.msra.mxu0 0
        %1507 = vmatprep.subr.bf16.mxu0 0
        %1508 = vmatpush2.bf16.msra.mxu0 0
        %1509 = vmatprep.subr.bf16.mxu0 0
        %1510 = vmatpush2.bf16.msra.mxu0 0
        %1511 = vmatprep.subr.bf16.mxu0 0
        %1512 = vmatpush2.bf16.msra.mxu0 0
        %1513 = vmatprep.subr.bf16.mxu0 0
        %1514 = vmatpush2.bf16.msra.mxu0 0
        %1515 = vmatprep.subr.bf16.mxu0 0
        %1516 = vmatpush2.bf16.msra.mxu0 0
        %1517 = vmatprep.subr.bf16.mxu0 0
        %1518 = vmatpush2.bf16.msra.mxu0 0
        %1519 = vmatprep.mubr.bf16.mxu0 0
        %1520 = vmatmul.mubr.bf16.gmra.mxu0 %v1294
        %v1521 = vpop.f32.mrf.mxu0
        %v1522 = vadd.f32 0.0, %v1521
        %v1523 = vpop.f32.mrf.mxu0
        %v1524 = vadd.f32 0.0, %v1523
        %v1525 = vpop.f32.mrf.mxu0
        %v1526 = vpop.f32.mrf.mxu0
        %1527 = vdwg.mxu0
        %1528 = vmatprep.subr.bf16.mxu0 %v1454
        %1529 = vmatpush1.bf16.msra.mxu0 %v1453
        %1530 = vmatprep.subr.bf16.mxu0 %v1450
        %1531 = vmatpush1.bf16.msra.mxu0 %v1449
        %1532 = vmatprep.subr.bf16.mxu0 %v1446
        %1533 = vmatpush1.bf16.msra.mxu0 %v1445
        %1534 = vmatprep.subr.bf16.mxu0 %v1442
        %1535 = vmatpush1.bf16.msra.mxu0 %v1441
        %1536 = vmatprep.subr.bf16.mxu0 %v1438
        %1537 = vmatpush1.bf16.msra.mxu0 %v1437
        %1538 = vmatprep.subr.bf16.mxu0 %v1434
        %1539 = vmatpush1.bf16.msra.mxu0 %v1433
        %1540 = vmatprep.subr.bf16.mxu0 %v1430
        %1541 = vmatpush1.bf16.msra.mxu0 %v1429
        %1542 = vmatprep.subr.bf16.mxu0 %v1426
        %1543 = vmatpush1.bf16.msra.mxu0 %v1425
        %1544 = vmatprep.subr.bf16.mxu0 0
        %1545 = vmatpush2.bf16.msra.mxu0 0
        %1546 = vmatprep.subr.bf16.mxu0 0
        %1547 = vmatpush2.bf16.msra.mxu0 0
        %1548 = vmatprep.subr.bf16.mxu0 0
        %1549 = vmatpush2.bf16.msra.mxu0 0
        %1550 = vmatprep.subr.bf16.mxu0 0
        %1551 = vmatpush2.bf16.msra.mxu0 0
        %1552 = vmatprep.subr.bf16.mxu0 0
        %1553 = vmatpush2.bf16.msra.mxu0 0
        %1554 = vmatprep.subr.bf16.mxu0 0
        %1555 = vmatpush2.bf16.msra.mxu0 0
        %1556 = vmatprep.subr.bf16.mxu0 0
        %1557 = vmatpush2.bf16.msra.mxu0 0
        %1558 = vmatprep.subr.bf16.mxu0 0
        %1559 = vmatpush2.bf16.msra.mxu0 0
        %1560 = vmatprep.mubr.bf16.mxu0 0
        %1561 = vmatmul.mubr.bf16.gmra.mxu0 %v1294
        %v1562 = vpop.f32.mrf.mxu0
        %v1563 = vadd.f32 0.0, %v1562
        %v1564 = vpop.f32.mrf.mxu0
        %v1565 = vadd.f32 0.0, %v1564
        %v1566 = vpop.f32.mrf.mxu0
        %v1567 = vpop.f32.mrf.mxu0
        %1568 = vdwg.mxu0
        %v1569 = vadd.f32 %v1290, %v1522
        %v1570 = vadd.f32 %v1291, %v1524
        %v1571 = vadd.f32 %v1292, %v1563
        %v1572 = vadd.f32 %v1293, %v1565
        %v1573 = vxor.u32 %v1569, 2147483648
        %v1574 = vmul.f32 %v1573, 1.442695
        %v1575 = vpow.pop %v1574
        %v1576 = vadd.f32 %v1575, 1.0
        %v1577 = vrcp.pop %v1576
        %v1578 = vmul.f32 1.0, %v1577
        %v1579 = vxor.u32 %v1570, 2147483648
        %v1580 = vmul.f32 %v1579, 1.442695
        %v1581 = vpow.pop %v1580
        %v1582 = vadd.f32 %v1581, 1.0
        %v1583 = vrcp.pop %v1582
        %v1584 = vmul.f32 1.0, %v1583
        %v1585 = vtanh.pop %v1571
        %v1586 = vxor.u32 %v1572, 2147483648
        %v1587 = vmul.f32 %v1586, 1.442695
        %v1588 = vpow.pop %v1587
        %v1589 = vadd.f32 %v1588, 1.0
        %v1590 = vrcp.pop %v1589
        %v1591 = vmul.f32 1.0, %v1590
        %v1592 = vmul.f32 %v1584, %v1288
        %v1593 = vmul.f32 %v1578, %v1585
        %v1594 = vadd.f32 %v1592, %v1593
        %v1595 = vtanh.pop %v1594
        %v1596 = vmul.f32 %v1591, %v1595
        %v1597 = vsel %vm1286, 1, 0
        %1598 = vset.pattern.permute.xlu0 0
        %1599 = vperm.xlu0 %1598, %v1597
        %v1600 = vpop.permute.xlu0 %1599
        %vm1601 = vcmp.eq.s32.totalorder %v1600, 1
        %v1602 = vsel %vm1601, %v1596, %v1287
        %v1603 = vsel %vm1601, %v1594, %v1288
        %1604 = vst [vmem:[#allocation2] sm:$0xff] %v1602
        %1605 = vst [vmem:[#allocation3] sm:$0xff] %v1603
        %v1606 = vld [vmem:[%s696] sm:$0xff]
        %v1607 = vld [vmem:[%s698] sm:$0xff]
        %v1608 = vpack.c.bf16 %v1602, %v1602
        %v1609 = vld [vmem:[#allocation9] sm:$0xff]
        %v1610 = vld [vmem:[#allocation9 + $0x8] sm:$0xff]
        %v1611 = vld [vmem:[#allocation9 + $0x10] sm:$0xff]
        %v1612 = vld [vmem:[#allocation9 + $0x18] sm:$0xff]
        %v1613 = vld [vmem:[#allocation9 + $0x20] sm:$0xff]
        %v1614 = vld [vmem:[#allocation9 + $0x28] sm:$0xff]
        %v1615 = vld [vmem:[#allocation9 + $0x30] sm:$0xff]
        %v1616 = vld [vmem:[#allocation9 + $0x38] sm:$0xff]
        %v1617 = vld [vmem:[#allocation9 + $0x40] sm:$0xff]
        %v1618 = vld [vmem:[#allocation9 + $0x48] sm:$0xff]
        %v1619 = vld [vmem:[#allocation9 + $0x50] sm:$0xff]
        %v1620 = vld [vmem:[#allocation9 + $0x58] sm:$0xff]
        %v1621 = vld [vmem:[#allocation9 + $0x60] sm:$0xff]
        %v1622 = vld [vmem:[#allocation9 + $0x68] sm:$0xff]
        %v1623 = vld [vmem:[#allocation9 + $0x70] sm:$0xff]
        %v1624 = vld [vmem:[#allocation9 + $0x78] sm:$0xff]
        %v1625 = vld [vmem:[#allocation9 + $0x80] sm:$0xff]
        %v1626 = vld [vmem:[#allocation9 + $0x88] sm:$0xff]
        %v1627 = vld [vmem:[#allocation9 + $0x90] sm:$0xff]
        %v1628 = vld [vmem:[#allocation9 + $0x98] sm:$0xff]
        %v1629 = vld [vmem:[#allocation9 + $0xa0] sm:$0xff]
        %v1630 = vld [vmem:[#allocation9 + $0xa8] sm:$0xff]
        %v1631 = vld [vmem:[#allocation9 + $0xb0] sm:$0xff]
        %v1632 = vld [vmem:[#allocation9 + $0xb8] sm:$0xff]
        %v1633 = vld [vmem:[#allocation9 + $0xc0] sm:$0xff]
        %v1634 = vld [vmem:[#allocation9 + $0xc8] sm:$0xff]
        %v1635 = vld [vmem:[#allocation9 + $0xd0] sm:$0xff]
        %v1636 = vld [vmem:[#allocation9 + $0xd8] sm:$0xff]
        %v1637 = vld [vmem:[#allocation9 + $0xe0] sm:$0xff]
        %v1638 = vld [vmem:[#allocation9 + $0xe8] sm:$0xff]
        %v1639 = vld [vmem:[#allocation9 + $0xf0] sm:$0xff]
        %v1640 = vld [vmem:[#allocation9 + $0xf8] sm:$0xff]
        %v1641 = vpack.c.bf16 %v1606, %v1606
        %v1642 = vld [vmem:[#allocation10] sm:$0xff]
        %v1643 = vld [vmem:[#allocation10 + $0x8] sm:$0xff]
        %v1644 = vld [vmem:[#allocation10 + $0x10] sm:$0xff]
        %v1645 = vld [vmem:[#allocation10 + $0x18] sm:$0xff]
        %v1646 = vld [vmem:[#allocation10 + $0x20] sm:$0xff]
        %v1647 = vld [vmem:[#allocation10 + $0x28] sm:$0xff]
        %v1648 = vld [vmem:[#allocation10 + $0x30] sm:$0xff]
        %v1649 = vld [vmem:[#allocation10 + $0x38] sm:$0xff]
        %v1650 = vld [vmem:[#allocation10 + $0x40] sm:$0xff]
        %v1651 = vld [vmem:[#allocation10 + $0x48] sm:$0xff]
        %v1652 = vld [vmem:[#allocation10 + $0x50] sm:$0xff]
        %v1653 = vld [vmem:[#allocation10 + $0x58] sm:$0xff]
        %v1654 = vld [vmem:[#allocation10 + $0x60] sm:$0xff]
        %v1655 = vld [vmem:[#allocation10 + $0x68] sm:$0xff]
        %v1656 = vld [vmem:[#allocation10 + $0x70] sm:$0xff]
        %v1657 = vld [vmem:[#allocation10 + $0x78] sm:$0xff]
        %v1658 = vld [vmem:[#allocation10 + $0x80] sm:$0xff]
        %v1659 = vld [vmem:[#allocation10 + $0x88] sm:$0xff]
        %v1660 = vld [vmem:[#allocation10 + $0x90] sm:$0xff]
        %v1661 = vld [vmem:[#allocation10 + $0x98] sm:$0xff]
        %v1662 = vld [vmem:[#allocation10 + $0xa0] sm:$0xff]
        %v1663 = vld [vmem:[#allocation10 + $0xa8] sm:$0xff]
        %v1664 = vld [vmem:[#allocation10 + $0xb0] sm:$0xff]
        %v1665 = vld [vmem:[#allocation10 + $0xb8] sm:$0xff]
        %v1666 = vld [vmem:[#allocation10 + $0xc0] sm:$0xff]
        %v1667 = vld [vmem:[#allocation10 + $0xc8] sm:$0xff]
        %v1668 = vld [vmem:[#allocation10 + $0xd0] sm:$0xff]
        %v1669 = vld [vmem:[#allocation10 + $0xd8] sm:$0xff]
        %v1670 = vld [vmem:[#allocation10 + $0xe0] sm:$0xff]
        %v1671 = vld [vmem:[#allocation10 + $0xe8] sm:$0xff]
        %v1672 = vld [vmem:[#allocation10 + $0xf0] sm:$0xff]
        %v1673 = vld [vmem:[#allocation10 + $0xf8] sm:$0xff]
        %v1706 = vunpack.c.l.b16 %v1642
        %v1707 = vunpack.c.h.b16 %v1642
        %v1708 = vunpack.c.l.b16 %v1643
        %v1709 = vunpack.c.h.b16 %v1643
        %v1710 = vunpack.c.l.b16 %v1644
        %v1711 = vunpack.c.h.b16 %v1644
        %v1712 = vunpack.c.l.b16 %v1645
        %v1713 = vunpack.c.h.b16 %v1645
        %v1714 = vunpack.c.l.b16 %v1646
        %v1715 = vunpack.c.h.b16 %v1646
        %v1716 = vunpack.c.l.b16 %v1647
        %v1717 = vunpack.c.h.b16 %v1647
        %v1718 = vunpack.c.l.b16 %v1648
        %v1719 = vunpack.c.h.b16 %v1648
        %v1720 = vunpack.c.l.b16 %v1649
        %v1721 = vunpack.c.h.b16 %v1649
        %v1722 = vunpack.c.l.b16 %v1650
        %v1723 = vunpack.c.h.b16 %v1650
        %v1724 = vunpack.c.l.b16 %v1651
        %v1725 = vunpack.c.h.b16 %v1651
        %v1726 = vunpack.c.l.b16 %v1652
        %v1727 = vunpack.c.h.b16 %v1652
        %v1728 = vunpack.c.l.b16 %v1653
        %v1729 = vunpack.c.h.b16 %v1653
        %v1730 = vunpack.c.l.b16 %v1654
        %v1731 = vunpack.c.h.b16 %v1654
        %v1732 = vunpack.c.l.b16 %v1655
        %v1733 = vunpack.c.h.b16 %v1655
        %v1734 = vunpack.c.l.b16 %v1656
        %v1735 = vunpack.c.h.b16 %v1656
        %v1736 = vunpack.c.l.b16 %v1657
        %v1737 = vunpack.c.h.b16 %v1657
        %v1738 = vunpack.c.l.b16 %v1658
        %v1739 = vunpack.c.h.b16 %v1658
        %v1740 = vunpack.c.l.b16 %v1659
        %v1741 = vunpack.c.h.b16 %v1659
        %v1742 = vunpack.c.l.b16 %v1660
        %v1743 = vunpack.c.h.b16 %v1660
        %v1744 = vunpack.c.l.b16 %v1661
        %v1745 = vunpack.c.h.b16 %v1661
        %v1746 = vunpack.c.l.b16 %v1662
        %v1747 = vunpack.c.h.b16 %v1662
        %v1748 = vunpack.c.l.b16 %v1663
        %v1749 = vunpack.c.h.b16 %v1663
        %v1750 = vunpack.c.l.b16 %v1664
        %v1751 = vunpack.c.h.b16 %v1664
        %v1752 = vunpack.c.l.b16 %v1665
        %v1753 = vunpack.c.h.b16 %v1665
        %v1754 = vunpack.c.l.b16 %v1666
        %v1755 = vunpack.c.h.b16 %v1666
        %v1756 = vunpack.c.l.b16 %v1667
        %v1757 = vunpack.c.h.b16 %v1667
        %v1758 = vunpack.c.l.b16 %v1668
        %v1759 = vunpack.c.h.b16 %v1668
        %v1760 = vunpack.c.l.b16 %v1669
        %v1761 = vunpack.c.h.b16 %v1669
        %v1762 = vunpack.c.l.b16 %v1670
        %v1763 = vunpack.c.h.b16 %v1670
        %v1764 = vunpack.c.l.b16 %v1671
        %v1765 = vunpack.c.h.b16 %v1671
        %v1766 = vunpack.c.l.b16 %v1672
        %v1767 = vunpack.c.h.b16 %v1672
        %v1768 = vunpack.c.l.b16 %v1673
        %v1769 = vunpack.c.h.b16 %v1673
        %v1770 = vpack.c.b16 %v1710, %v1706
        %v1771 = vpack.c.b16 %v1711, %v1707
        %v1772 = vpack.c.b16 %v1712, %v1708
        %v1773 = vpack.c.b16 %v1713, %v1709
        %v1774 = vpack.c.b16 %v1718, %v1714
        %v1775 = vpack.c.b16 %v1719, %v1715
        %v1776 = vpack.c.b16 %v1720, %v1716
        %v1777 = vpack.c.b16 %v1721, %v1717
        %v1778 = vpack.c.b16 %v1726, %v1722
        %v1779 = vpack.c.b16 %v1727, %v1723
        %v1780 = vpack.c.b16 %v1728, %v1724
        %v1781 = vpack.c.b16 %v1729, %v1725
        %v1782 = vpack.c.b16 %v1734, %v1730
        %v1783 = vpack.c.b16 %v1735, %v1731
        %v1784 = vpack.c.b16 %v1736, %v1732
        %v1785 = vpack.c.b16 %v1737, %v1733
        %v1786 = vpack.c.b16 %v1742, %v1738
        %v1787 = vpack.c.b16 %v1743, %v1739
        %v1788 = vpack.c.b16 %v1744, %v1740
        %v1789 = vpack.c.b16 %v1745, %v1741
        %v1790 = vpack.c.b16 %v1750, %v1746
        %v1791 = vpack.c.b16 %v1751, %v1747
        %v1792 = vpack.c.b16 %v1752, %v1748
        %v1793 = vpack.c.b16 %v1753, %v1749
        %v1794 = vpack.c.b16 %v1758, %v1754
        %v1795 = vpack.c.b16 %v1759, %v1755
        %v1796 = vpack.c.b16 %v1760, %v1756
        %v1797 = vpack.c.b16 %v1761, %v1757
        %v1798 = vpack.c.b16 %v1766, %v1762
        %v1799 = vpack.c.b16 %v1767, %v1763
        %v1800 = vpack.c.b16 %v1768, %v1764
        %v1801 = vpack.c.b16 %v1769, %v1765
        %1834 = vmatprep.subr.bf16.mxu0 %v1799
        %1835 = vmatpush1.bf16.msra.mxu0 %v1798
        %1836 = vmatprep.subr.bf16.mxu0 %v1795
        %1837 = vmatpush1.bf16.msra.mxu0 %v1794
        %1838 = vmatprep.subr.bf16.mxu0 %v1791
        %1839 = vmatpush1.bf16.msra.mxu0 %v1790
        %1840 = vmatprep.subr.bf16.mxu0 %v1787
        %1841 = vmatpush1.bf16.msra.mxu0 %v1786
        %1842 = vmatprep.subr.bf16.mxu0 %v1783
        %1843 = vmatpush1.bf16.msra.mxu0 %v1782
        %1844 = vmatprep.subr.bf16.mxu0 %v1779
        %1845 = vmatpush1.bf16.msra.mxu0 %v1778
        %1846 = vmatprep.subr.bf16.mxu0 %v1775
        %1847 = vmatpush1.bf16.msra.mxu0 %v1774
        %1848 = vmatprep.subr.bf16.mxu0 %v1771
        %1849 = vmatpush1.bf16.msra.mxu0 %v1770
        %1850 = vmatprep.subr.bf16.mxu0 0
        %1851 = vmatpush2.bf16.msra.mxu0 0
        %1852 = vmatprep.subr.bf16.mxu0 0
        %1853 = vmatpush2.bf16.msra.mxu0 0
        %1854 = vmatprep.subr.bf16.mxu0 0
        %1855 = vmatpush2.bf16.msra.mxu0 0
        %1856 = vmatprep.subr.bf16.mxu0 0
        %1857 = vmatpush2.bf16.msra.mxu0 0
        %1858 = vmatprep.subr.bf16.mxu0 0
        %1859 = vmatpush2.bf16.msra.mxu0 0
        %1860 = vmatprep.subr.bf16.mxu0 0
        %1861 = vmatpush2.bf16.msra.mxu0 0
        %1862 = vmatprep.subr.bf16.mxu0 0
        %1863 = vmatpush2.bf16.msra.mxu0 0
        %1864 = vmatprep.subr.bf16.mxu0 0
        %1865 = vmatpush2.bf16.msra.mxu0 0
        %1866 = vmatprep.mubr.bf16.mxu0 0
        %1867 = vmatmul.mubr.bf16.gmra.mxu0 %v1641
        %v1868 = vpop.f32.mrf.mxu0
        %v1869 = vadd.f32 0.0, %v1868
        %v1870 = vpop.f32.mrf.mxu0
        %v1871 = vadd.f32 0.0, %v1870
        %v1872 = vpop.f32.mrf.mxu0
        %v1873 = vpop.f32.mrf.mxu0
        %1874 = vdwg.mxu0
        %1875 = vmatprep.subr.bf16.mxu0 %v1801
        %1876 = vmatpush1.bf16.msra.mxu0 %v1800
        %1877 = vmatprep.subr.bf16.mxu0 %v1797
        %1878 = vmatpush1.bf16.msra.mxu0 %v1796
        %1879 = vmatprep.subr.bf16.mxu0 %v1793
        %1880 = vmatpush1.bf16.msra.mxu0 %v1792
        %1881 = vmatprep.subr.bf16.mxu0 %v1789
        %1882 = vmatpush1.bf16.msra.mxu0 %v1788
        %1883 = vmatprep.subr.bf16.mxu0 %v1785
        %1884 = vmatpush1.bf16.msra.mxu0 %v1784
        %1885 = vmatprep.subr.bf16.mxu0 %v1781
        %1886 = vmatpush1.bf16.msra.mxu0 %v1780
        %1887 = vmatprep.subr.bf16.mxu0 %v1777
        %1888 = vmatpush1.bf16.msra.mxu0 %v1776
        %1889 = vmatprep.subr.bf16.mxu0 %v1773
        %1890 = vmatpush1.bf16.msra.mxu0 %v1772
        %1891 = vmatprep.subr.bf16.mxu0 0
        %1892 = vmatpush2.bf16.msra.mxu0 0
        %1893 = vmatprep.subr.bf16.mxu0 0
        %1894 = vmatpush2.bf16.msra.mxu0 0
        %1895 = vmatprep.subr.bf16.mxu0 0
        %1896 = vmatpush2.bf16.msra.mxu0 0
        %1897 = vmatprep.subr.bf16.mxu0 0
        %1898 = vmatpush2.bf16.msra.mxu0 0
        %1899 = vmatprep.subr.bf16.mxu0 0
        %1900 = vmatpush2.bf16.msra.mxu0 0
        %1901 = vmatprep.subr.bf16.mxu0 0
        %1902 = vmatpush2.bf16.msra.mxu0 0
        %1903 = vmatprep.subr.bf16.mxu0 0
        %1904 = vmatpush2.bf16.msra.mxu0 0
        %1905 = vmatprep.subr.bf16.mxu0 0
        %1906 = vmatpush2.bf16.msra.mxu0 0
        %1907 = vmatprep.mubr.bf16.mxu0 0
        %1908 = vmatmul.mubr.bf16.gmra.mxu0 %v1641
        %v1909 = vpop.f32.mrf.mxu0
        %v1910 = vadd.f32 0.0, %v1909
        %v1911 = vpop.f32.mrf.mxu0
        %v1912 = vadd.f32 0.0, %v1911
        %v1913 = vpop.f32.mrf.mxu0
        %v1914 = vpop.f32.mrf.mxu0
        %1915 = vdwg.mxu0
        %v1948 = vunpack.c.l.b16 %v1609
        %v1949 = vunpack.c.h.b16 %v1609
        %v1950 = vunpack.c.l.b16 %v1610
        %v1951 = vunpack.c.h.b16 %v1610
        %v1952 = vunpack.c.l.b16 %v1611
        %v1953 = vunpack.c.h.b16 %v1611
        %v1954 = vunpack.c.l.b16 %v1612
        %v1955 = vunpack.c.h.b16 %v1612
        %v1956 = vunpack.c.l.b16 %v1613
        %v1957 = vunpack.c.h.b16 %v1613
        %v1958 = vunpack.c.l.b16 %v1614
        %v1959 = vunpack.c.h.b16 %v1614
        %v1960 = vunpack.c.l.b16 %v1615
        %v1961 = vunpack.c.h.b16 %v1615
        %v1962 = vunpack.c.l.b16 %v1616
        %v1963 = vunpack.c.h.b16 %v1616
        %v1964 = vunpack.c.l.b16 %v1617
        %v1965 = vunpack.c.h.b16 %v1617
        %v1966 = vunpack.c.l.b16 %v1618
        %v1967 = vunpack.c.h.b16 %v1618
        %v1968 = vunpack.c.l.b16 %v1619
        %v1969 = vunpack.c.h.b16 %v1619
        %v1970 = vunpack.c.l.b16 %v1620
        %v1971 = vunpack.c.h.b16 %v1620
        %v1972 = vunpack.c.l.b16 %v1621
        %v1973 = vunpack.c.h.b16 %v1621
        %v1974 = vunpack.c.l.b16 %v1622
        %v1975 = vunpack.c.h.b16 %v1622
        %v1976 = vunpack.c.l.b16 %v1623
        %v1977 = vunpack.c.h.b16 %v1623
        %v1978 = vunpack.c.l.b16 %v1624
        %v1979 = vunpack.c.h.b16 %v1624
        %v1980 = vunpack.c.l.b16 %v1625
        %v1981 = vunpack.c.h.b16 %v1625
        %v1982 = vunpack.c.l.b16 %v1626
        %v1983 = vunpack.c.h.b16 %v1626
        %v1984 = vunpack.c.l.b16 %v1627
        %v1985 = vunpack.c.h.b16 %v1627
        %v1986 = vunpack.c.l.b16 %v1628
        %v1987 = vunpack.c.h.b16 %v1628
        %v1988 = vunpack.c.l.b16 %v1629
        %v1989 = vunpack.c.h.b16 %v1629
        %v1990 = vunpack.c.l.b16 %v1630
        %v1991 = vunpack.c.h.b16 %v1630
        %v1992 = vunpack.c.l.b16 %v1631
        %v1993 = vunpack.c.h.b16 %v1631
        %v1994 = vunpack.c.l.b16 %v1632
        %v1995 = vunpack.c.h.b16 %v1632
        %v1996 = vunpack.c.l.b16 %v1633
        %v1997 = vunpack.c.h.b16 %v1633
        %v1998 = vunpack.c.l.b16 %v1634
        %v1999 = vunpack.c.h.b16 %v1634
        %v2000 = vunpack.c.l.b16 %v1635
        %v2001 = vunpack.c.h.b16 %v1635
        %v2002 = vunpack.c.l.b16 %v1636
        %v2003 = vunpack.c.h.b16 %v1636
        %v2004 = vunpack.c.l.b16 %v1637
        %v2005 = vunpack.c.h.b16 %v1637
        %v2006 = vunpack.c.l.b16 %v1638
        %v2007 = vunpack.c.h.b16 %v1638
        %v2008 = vunpack.c.l.b16 %v1639
        %v2009 = vunpack.c.h.b16 %v1639
        %v2010 = vunpack.c.l.b16 %v1640
        %v2011 = vunpack.c.h.b16 %v1640
        %v2012 = vpack.c.b16 %v1952, %v1948
        %v2013 = vpack.c.b16 %v1953, %v1949
        %v2014 = vpack.c.b16 %v1954, %v1950
        %v2015 = vpack.c.b16 %v1955, %v1951
        %v2016 = vpack.c.b16 %v1960, %v1956
        %v2017 = vpack.c.b16 %v1961, %v1957
        %v2018 = vpack.c.b16 %v1962, %v1958
        %v2019 = vpack.c.b16 %v1963, %v1959
        %v2020 = vpack.c.b16 %v1968, %v1964
        %v2021 = vpack.c.b16 %v1969, %v1965
        %v2022 = vpack.c.b16 %v1970, %v1966
        %v2023 = vpack.c.b16 %v1971, %v1967
        %v2024 = vpack.c.b16 %v1976, %v1972
        %v2025 = vpack.c.b16 %v1977, %v1973
        %v2026 = vpack.c.b16 %v1978, %v1974
        %v2027 = vpack.c.b16 %v1979, %v1975
        %v2028 = vpack.c.b16 %v1984, %v1980
        %v2029 = vpack.c.b16 %v1985, %v1981
        %v2030 = vpack.c.b16 %v1986, %v1982
        %v2031 = vpack.c.b16 %v1987, %v1983
        %v2032 = vpack.c.b16 %v1992, %v1988
        %v2033 = vpack.c.b16 %v1993, %v1989
        %v2034 = vpack.c.b16 %v1994, %v1990
        %v2035 = vpack.c.b16 %v1995, %v1991
        %v2036 = vpack.c.b16 %v2000, %v1996
        %v2037 = vpack.c.b16 %v2001, %v1997
        %v2038 = vpack.c.b16 %v2002, %v1998
        %v2039 = vpack.c.b16 %v2003, %v1999
        %v2040 = vpack.c.b16 %v2008, %v2004
        %v2041 = vpack.c.b16 %v2009, %v2005
        %v2042 = vpack.c.b16 %v2010, %v2006
        %v2043 = vpack.c.b16 %v2011, %v2007
        %2076 = vmatprep.subr.bf16.mxu0 %v2041
        %2077 = vmatpush1.bf16.msra.mxu0 %v2040
        %2078 = vmatprep.subr.bf16.mxu0 %v2037
        %2079 = vmatpush1.bf16.msra.mxu0 %v2036
        %2080 = vmatprep.subr.bf16.mxu0 %v2033
        %2081 = vmatpush1.bf16.msra.mxu0 %v2032
        %2082 = vmatprep.subr.bf16.mxu0 %v2029
        %2083 = vmatpush1.bf16.msra.mxu0 %v2028
        %2084 = vmatprep.subr.bf16.mxu0 %v2025
        %2085 = vmatpush1.bf16.msra.mxu0 %v2024
        %2086 = vmatprep.subr.bf16.mxu0 %v2021
        %2087 = vmatpush1.bf16.msra.mxu0 %v2020
        %2088 = vmatprep.subr.bf16.mxu0 %v2017
        %2089 = vmatpush1.bf16.msra.mxu0 %v2016
        %2090 = vmatprep.subr.bf16.mxu0 %v2013
        %2091 = vmatpush1.bf16.msra.mxu0 %v2012
        %2092 = vmatprep.subr.bf16.mxu0 0
        %2093 = vmatpush2.bf16.msra.mxu0 0
        %2094 = vmatprep.subr.bf16.mxu0 0
        %2095 = vmatpush2.bf16.msra.mxu0 0
        %2096 = vmatprep.subr.bf16.mxu0 0
        %2097 = vmatpush2.bf16.msra.mxu0 0
        %2098 = vmatprep.subr.bf16.mxu0 0
        %2099 = vmatpush2.bf16.msra.mxu0 0
        %2100 = vmatprep.subr.bf16.mxu0 0
        %2101 = vmatpush2.bf16.msra.mxu0 0
        %2102 = vmatprep.subr.bf16.mxu0 0
        %2103 = vmatpush2.bf16.msra.mxu0 0
        %2104 = vmatprep.subr.bf16.mxu0 0
        %2105 = vmatpush2.bf16.msra.mxu0 0
        %2106 = vmatprep.subr.bf16.mxu0 0
        %2107 = vmatpush2.bf16.msra.mxu0 0
        %2108 = vmatprep.mubr.bf16.mxu0 0
        %2109 = vmatmul.mubr.bf16.gmra.mxu0 %v1608
        %v2110 = vpop.f32.mrf.mxu0
        %v2111 = vadd.f32 %v1869, %v2110
        %v2112 = vpop.f32.mrf.mxu0
        %v2113 = vadd.f32 %v1871, %v2112
        %v2114 = vpop.f32.mrf.mxu0
        %v2115 = vpop.f32.mrf.mxu0
        %2116 = vdwg.mxu0
        %2117 = vmatprep.subr.bf16.mxu0 %v2043
        %2118 = vmatpush1.bf16.msra.mxu0 %v2042
        %2119 = vmatprep.subr.bf16.mxu0 %v2039
        %2120 = vmatpush1.bf16.msra.mxu0 %v2038
        %2121 = vmatprep.subr.bf16.mxu0 %v2035
        %2122 = vmatpush1.bf16.msra.mxu0 %v2034
        %2123 = vmatprep.subr.bf16.mxu0 %v2031
        %2124 = vmatpush1.bf16.msra.mxu0 %v2030
        %2125 = vmatprep.subr.bf16.mxu0 %v2027
        %2126 = vmatpush1.bf16.msra.mxu0 %v2026
        %2127 = vmatprep.subr.bf16.mxu0 %v2023
        %2128 = vmatpush1.bf16.msra.mxu0 %v2022
        %2129 = vmatprep.subr.bf16.mxu0 %v2019
        %2130 = vmatpush1.bf16.msra.mxu0 %v2018
        %2131 = vmatprep.subr.bf16.mxu0 %v2015
        %2132 = vmatpush1.bf16.msra.mxu0 %v2014
        %2133 = vmatprep.subr.bf16.mxu0 0
        %2134 = vmatpush2.bf16.msra.mxu0 0
        %2135 = vmatprep.subr.bf16.mxu0 0
        %2136 = vmatpush2.bf16.msra.mxu0 0
        %2137 = vmatprep.subr.bf16.mxu0 0
        %2138 = vmatpush2.bf16.msra.mxu0 0
        %2139 = vmatprep.subr.bf16.mxu0 0
        %2140 = vmatpush2.bf16.msra.mxu0 0
        %2141 = vmatprep.subr.bf16.mxu0 0
        %2142 = vmatpush2.bf16.msra.mxu0 0
        %2143 = vmatprep.subr.bf16.mxu0 0
        %2144 = vmatpush2.bf16.msra.mxu0 0
        %2145 = vmatprep.subr.bf16.mxu0 0
        %2146 = vmatpush2.bf16.msra.mxu0 0
        %2147 = vmatprep.subr.bf16.mxu0 0
        %2148 = vmatpush2.bf16.msra.mxu0 0
        %2149 = vmatprep.mubr.bf16.mxu0 0
        %2150 = vmatmul.mubr.bf16.gmra.mxu0 %v1608
        %v2151 = vpop.f32.mrf.mxu0
        %v2152 = vadd.f32 %v1910, %v2151
        %v2153 = vpop.f32.mrf.mxu0
        %v2154 = vadd.f32 %v1912, %v2153
        %v2155 = vpop.f32.mrf.mxu0
        %v2156 = vpop.f32.mrf.mxu0
        %2157 = vdwg.mxu0
        %v2158 = vadd.f32 %v2111, %v358
        %v2159 = vadd.f32 %v2113, %v362
        %v2160 = vadd.f32 %v2152, %v366
        %v2161 = vadd.f32 %v2154, %v370
        %v2162 = vxor.u32 %v2158, 2147483648
        %v2163 = vmul.f32 %v2162, 1.442695
        %v2164 = vpow.pop %v2163
        %v2165 = vadd.f32 %v2164, 1.0
        %v2166 = vrcp.pop %v2165
        %v2167 = vmul.f32 1.0, %v2166
        %v2168 = vxor.u32 %v2159, 2147483648
        %v2169 = vmul.f32 %v2168, 1.442695
        %v2170 = vpow.pop %v2169
        %v2171 = vadd.f32 %v2170, 1.0
        %v2172 = vrcp.pop %v2171
        %v2173 = vmul.f32 1.0, %v2172
        %v2174 = vtanh.pop %v2160
        %v2175 = vxor.u32 %v2161, 2147483648
        %v2176 = vmul.f32 %v2175, 1.442695
        %v2177 = vpow.pop %v2176
        %v2178 = vadd.f32 %v2177, 1.0
        %v2179 = vrcp.pop %v2178
        %v2180 = vmul.f32 1.0, %v2179
        %v2181 = vmul.f32 %v2173, %v1607
        %v2182 = vmul.f32 %v2167, %v2174
        %v2183 = vadd.f32 %v2181, %v2182
        %v2184 = vtanh.pop %v2183
        %v2185 = vmul.f32 %v2180, %v2184
        %v2186 = vsel %vm1601, %v2185, %v1606
        %v2187 = vsel %vm1601, %v2183, %v1607
        %2188 = vst [vmem:[%s696] sm:$0xff] %v2186
        %2189 = vst [vmem:[%s698] sm:$0xff] %v2187
        %v2190 = vsel %vm1601, %v2185, 0.0
        %s2191 = scalar_lea.vmem %s338, 8 [#allocation12]
        %2192 = vst [vmem:[%s2191] sm:$0xff] %v2190
        %s2193 = sadd.s32 %s375, 2
        %v2194 = vstv %s2193
        %vm2195 = vcmp.gt.s32.totalorder %v352, %v2194
        %v2196 = vld [vmem:[#allocation2] sm:$0xff]
        %v2197 = vld [vmem:[#allocation3] sm:$0xff]
        %s2198 = scalar_lea.vmem %s298, 64 [#allocation4]
        %v2199 = vld [vmem:[%s2198] sm:$0xff]
        %v2200 = vld [vmem:[%s2198 + $0x8] sm:$0xff]
        %v2201 = vld [vmem:[%s2198 + $0x10] sm:$0xff]
        %v2202 = vld [vmem:[%s2198 + $0x18] sm:$0xff]
        %v2203 = vpack.c.bf16 %v2196, %v2196
        %v2204 = vld [vmem:[#allocation7] sm:$0xff]
        %v2205 = vld [vmem:[#allocation7 + $0x8] sm:$0xff]
        %v2206 = vld [vmem:[#allocation7 + $0x10] sm:$0xff]
        %v2207 = vld [vmem:[#allocation7 + $0x18] sm:$0xff]
        %v2208 = vld [vmem:[#allocation7 + $0x20] sm:$0xff]
        %v2209 = vld [vmem:[#allocation7 + $0x28] sm:$0xff]
        %v2210 = vld [vmem:[#allocation7 + $0x30] sm:$0xff]
        %v2211 = vld [vmem:[#allocation7 + $0x38] sm:$0xff]
        %v2212 = vld [vmem:[#allocation7 + $0x40] sm:$0xff]
        %v2213 = vld [vmem:[#allocation7 + $0x48] sm:$0xff]
        %v2214 = vld [vmem:[#allocation7 + $0x50] sm:$0xff]
        %v2215 = vld [vmem:[#allocation7 + $0x58] sm:$0xff]
        %v2216 = vld [vmem:[#allocation7 + $0x60] sm:$0xff]
        %v2217 = vld [vmem:[#allocation7 + $0x68] sm:$0xff]
        %v2218 = vld [vmem:[#allocation7 + $0x70] sm:$0xff]
        %v2219 = vld [vmem:[#allocation7 + $0x78] sm:$0xff]
        %v2220 = vld [vmem:[#allocation7 + $0x80] sm:$0xff]
        %v2221 = vld [vmem:[#allocation7 + $0x88] sm:$0xff]
        %v2222 = vld [vmem:[#allocation7 + $0x90] sm:$0xff]
        %v2223 = vld [vmem:[#allocation7 + $0x98] sm:$0xff]
        %v2224 = vld [vmem:[#allocation7 + $0xa0] sm:$0xff]
        %v2225 = vld [vmem:[#allocation7 + $0xa8] sm:$0xff]
        %v2226 = vld [vmem:[#allocation7 + $0xb0] sm:$0xff]
        %v2227 = vld [vmem:[#allocation7 + $0xb8] sm:$0xff]
        %v2228 = vld [vmem:[#allocation7 + $0xc0] sm:$0xff]
        %v2229 = vld [vmem:[#allocation7 + $0xc8] sm:$0xff]
        %v2230 = vld [vmem:[#allocation7 + $0xd0] sm:$0xff]
        %v2231 = vld [vmem:[#allocation7 + $0xd8] sm:$0xff]
        %v2232 = vld [vmem:[#allocation7 + $0xe0] sm:$0xff]
        %v2233 = vld [vmem:[#allocation7 + $0xe8] sm:$0xff]
        %v2234 = vld [vmem:[#allocation7 + $0xf0] sm:$0xff]
        %v2235 = vld [vmem:[#allocation7 + $0xf8] sm:$0xff]
        %v2268 = vunpack.c.l.b16 %v2204
        %v2269 = vunpack.c.h.b16 %v2204
        %v2270 = vunpack.c.l.b16 %v2205
        %v2271 = vunpack.c.h.b16 %v2205
        %v2272 = vunpack.c.l.b16 %v2206
        %v2273 = vunpack.c.h.b16 %v2206
        %v2274 = vunpack.c.l.b16 %v2207
        %v2275 = vunpack.c.h.b16 %v2207
        %v2276 = vunpack.c.l.b16 %v2208
        %v2277 = vunpack.c.h.b16 %v2208
        %v2278 = vunpack.c.l.b16 %v2209
        %v2279 = vunpack.c.h.b16 %v2209
        %v2280 = vunpack.c.l.b16 %v2210
        %v2281 = vunpack.c.h.b16 %v2210
        %v2282 = vunpack.c.l.b16 %v2211
        %v2283 = vunpack.c.h.b16 %v2211
        %v2284 = vunpack.c.l.b16 %v2212
        %v2285 = vunpack.c.h.b16 %v2212
        %v2286 = vunpack.c.l.b16 %v2213
        %v2287 = vunpack.c.h.b16 %v2213
        %v2288 = vunpack.c.l.b16 %v2214
        %v2289 = vunpack.c.h.b16 %v2214
        %v2290 = vunpack.c.l.b16 %v2215
        %v2291 = vunpack.c.h.b16 %v2215
        %v2292 = vunpack.c.l.b16 %v2216
        %v2293 = vunpack.c.h.b16 %v2216
        %v2294 = vunpack.c.l.b16 %v2217
        %v2295 = vunpack.c.h.b16 %v2217
        %v2296 = vunpack.c.l.b16 %v2218
        %v2297 = vunpack.c.h.b16 %v2218
        %v2298 = vunpack.c.l.b16 %v2219
        %v2299 = vunpack.c.h.b16 %v2219
        %v2300 = vunpack.c.l.b16 %v2220
        %v2301 = vunpack.c.h.b16 %v2220
        %v2302 = vunpack.c.l.b16 %v2221
        %v2303 = vunpack.c.h.b16 %v2221
        %v2304 = vunpack.c.l.b16 %v2222
        %v2305 = vunpack.c.h.b16 %v2222
        %v2306 = vunpack.c.l.b16 %v2223
        %v2307 = vunpack.c.h.b16 %v2223
        %v2308 = vunpack.c.l.b16 %v2224
        %v2309 = vunpack.c.h.b16 %v2224
        %v2310 = vunpack.c.l.b16 %v2225
        %v2311 = vunpack.c.h.b16 %v2225
        %v2312 = vunpack.c.l.b16 %v2226
        %v2313 = vunpack.c.h.b16 %v2226
        %v2314 = vunpack.c.l.b16 %v2227
        %v2315 = vunpack.c.h.b16 %v2227
        %v2316 = vunpack.c.l.b16 %v2228
        %v2317 = vunpack.c.h.b16 %v2228
        %v2318 = vunpack.c.l.b16 %v2229
        %v2319 = vunpack.c.h.b16 %v2229
        %v2320 = vunpack.c.l.b16 %v2230
        %v2321 = vunpack.c.h.b16 %v2230
        %v2322 = vunpack.c.l.b16 %v2231
        %v2323 = vunpack.c.h.b16 %v2231
        %v2324 = vunpack.c.l.b16 %v2232
        %v2325 = vunpack.c.h.b16 %v2232
        %v2326 = vunpack.c.l.b16 %v2233
        %v2327 = vunpack.c.h.b16 %v2233
        %v2328 = vunpack.c.l.b16 %v2234
        %v2329 = vunpack.c.h.b16 %v2234
        %v2330 = vunpack.c.l.b16 %v2235
        %v2331 = vunpack.c.h.b16 %v2235
        %v2332 = vpack.c.b16 %v2272, %v2268
        %v2333 = vpack.c.b16 %v2273, %v2269
        %v2334 = vpack.c.b16 %v2274, %v2270
        %v2335 = vpack.c.b16 %v2275, %v2271
        %v2336 = vpack.c.b16 %v2280, %v2276
        %v2337 = vpack.c.b16 %v2281, %v2277
        %v2338 = vpack.c.b16 %v2282, %v2278
        %v2339 = vpack.c.b16 %v2283, %v2279
        %v2340 = vpack.c.b16 %v2288, %v2284
        %v2341 = vpack.c.b16 %v2289, %v2285
        %v2342 = vpack.c.b16 %v2290, %v2286
        %v2343 = vpack.c.b16 %v2291, %v2287
        %v2344 = vpack.c.b16 %v2296, %v2292
        %v2345 = vpack.c.b16 %v2297, %v2293
        %v2346 = vpack.c.b16 %v2298, %v2294
        %v2347 = vpack.c.b16 %v2299, %v2295
        %v2348 = vpack.c.b16 %v2304, %v2300
        %v2349 = vpack.c.b16 %v2305, %v2301
        %v2350 = vpack.c.b16 %v2306, %v2302
        %v2351 = vpack.c.b16 %v2307, %v2303
        %v2352 = vpack.c.b16 %v2312, %v2308
        %v2353 = vpack.c.b16 %v2313, %v2309
        %v2354 = vpack.c.b16 %v2314, %v2310
        %v2355 = vpack.c.b16 %v2315, %v2311
        %v2356 = vpack.c.b16 %v2320, %v2316
        %v2357 = vpack.c.b16 %v2321, %v2317
        %v2358 = vpack.c.b16 %v2322, %v2318
        %v2359 = vpack.c.b16 %v2323, %v2319
        %v2360 = vpack.c.b16 %v2328, %v2324
        %v2361 = vpack.c.b16 %v2329, %v2325
        %v2362 = vpack.c.b16 %v2330, %v2326
        %v2363 = vpack.c.b16 %v2331, %v2327
        %2396 = vmatprep.subr.bf16.mxu0 %v2361
        %2397 = vmatpush1.bf16.msra.mxu0 %v2360
        %2398 = vmatprep.subr.bf16.mxu0 %v2357
        %2399 = vmatpush1.bf16.msra.mxu0 %v2356
        %2400 = vmatprep.subr.bf16.mxu0 %v2353
        %2401 = vmatpush1.bf16.msra.mxu0 %v2352
        %2402 = vmatprep.subr.bf16.mxu0 %v2349
        %2403 = vmatpush1.bf16.msra.mxu0 %v2348
        %2404 = vmatprep.subr.bf16.mxu0 %v2345
        %2405 = vmatpush1.bf16.msra.mxu0 %v2344
        %2406 = vmatprep.subr.bf16.mxu0 %v2341
        %2407 = vmatpush1.bf16.msra.mxu0 %v2340
        %2408 = vmatprep.subr.bf16.mxu0 %v2337
        %2409 = vmatpush1.bf16.msra.mxu0 %v2336
        %2410 = vmatprep.subr.bf16.mxu0 %v2333
        %2411 = vmatpush1.bf16.msra.mxu0 %v2332
        %2412 = vmatprep.subr.bf16.mxu0 0
        %2413 = vmatpush2.bf16.msra.mxu0 0
        %2414 = vmatprep.subr.bf16.mxu0 0
        %2415 = vmatpush2.bf16.msra.mxu0 0
        %2416 = vmatprep.subr.bf16.mxu0 0
        %2417 = vmatpush2.bf16.msra.mxu0 0
        %2418 = vmatprep.subr.bf16.mxu0 0
        %2419 = vmatpush2.bf16.msra.mxu0 0
        %2420 = vmatprep.subr.bf16.mxu0 0
        %2421 = vmatpush2.bf16.msra.mxu0 0
        %2422 = vmatprep.subr.bf16.mxu0 0
        %2423 = vmatpush2.bf16.msra.mxu0 0
        %2424 = vmatprep.subr.bf16.mxu0 0
        %2425 = vmatpush2.bf16.msra.mxu0 0
        %2426 = vmatprep.subr.bf16.mxu0 0
        %2427 = vmatpush2.bf16.msra.mxu0 0
        %2428 = vmatprep.mubr.bf16.mxu0 0
        %2429 = vmatmul.mubr.bf16.gmra.mxu0 %v2203
        %v2430 = vpop.f32.mrf.mxu0
        %v2431 = vadd.f32 0.0, %v2430
        %v2432 = vpop.f32.mrf.mxu0
        %v2433 = vadd.f32 0.0, %v2432
        %v2434 = vpop.f32.mrf.mxu0
        %v2435 = vpop.f32.mrf.mxu0
        %2436 = vdwg.mxu0
        %2437 = vmatprep.subr.bf16.mxu0 %v2363
        %2438 = vmatpush1.bf16.msra.mxu0 %v2362
        %2439 = vmatprep.subr.bf16.mxu0 %v2359
        %2440 = vmatpush1.bf16.msra.mxu0 %v2358
        %2441 = vmatprep.subr.bf16.mxu0 %v2355
        %2442 = vmatpush1.bf16.msra.mxu0 %v2354
        %2443 = vmatprep.subr.bf16.mxu0 %v2351
        %2444 = vmatpush1.bf16.msra.mxu0 %v2350
        %2445 = vmatprep.subr.bf16.mxu0 %v2347
        %2446 = vmatpush1.bf16.msra.mxu0 %v2346
        %2447 = vmatprep.subr.bf16.mxu0 %v2343
        %2448 = vmatpush1.bf16.msra.mxu0 %v2342
        %2449 = vmatprep.subr.bf16.mxu0 %v2339
        %2450 = vmatpush1.bf16.msra.mxu0 %v2338
        %2451 = vmatprep.subr.bf16.mxu0 %v2335
        %2452 = vmatpush1.bf16.msra.mxu0 %v2334
        %2453 = vmatprep.subr.bf16.mxu0 0
        %2454 = vmatpush2.bf16.msra.mxu0 0
        %2455 = vmatprep.subr.bf16.mxu0 0
        %2456 = vmatpush2.bf16.msra.mxu0 0
        %2457 = vmatprep.subr.bf16.mxu0 0
        %2458 = vmatpush2.bf16.msra.mxu0 0
        %2459 = vmatprep.subr.bf16.mxu0 0
        %2460 = vmatpush2.bf16.msra.mxu0 0
        %2461 = vmatprep.subr.bf16.mxu0 0
        %2462 = vmatpush2.bf16.msra.mxu0 0
        %2463 = vmatprep.subr.bf16.mxu0 0
        %2464 = vmatpush2.bf16.msra.mxu0 0
        %2465 = vmatprep.subr.bf16.mxu0 0
        %2466 = vmatpush2.bf16.msra.mxu0 0
        %2467 = vmatprep.subr.bf16.mxu0 0
        %2468 = vmatpush2.bf16.msra.mxu0 0
        %2469 = vmatprep.mubr.bf16.mxu0 0
        %2470 = vmatmul.mubr.bf16.gmra.mxu0 %v2203
        %v2471 = vpop.f32.mrf.mxu0
        %v2472 = vadd.f32 0.0, %v2471
        %v2473 = vpop.f32.mrf.mxu0
        %v2474 = vadd.f32 0.0, %v2473
        %v2475 = vpop.f32.mrf.mxu0
        %v2476 = vpop.f32.mrf.mxu0
        %2477 = vdwg.mxu0
        %v2478 = vadd.f32 %v2199, %v2431
        %v2479 = vadd.f32 %v2200, %v2433
        %v2480 = vadd.f32 %v2201, %v2472
        %v2481 = vadd.f32 %v2202, %v2474
        %v2482 = vxor.u32 %v2478, 2147483648
        %v2483 = vmul.f32 %v2482, 1.442695
        %v2484 = vpow.pop %v2483
        %v2485 = vadd.f32 %v2484, 1.0
        %v2486 = vrcp.pop %v2485
        %v2487 = vmul.f32 1.0, %v2486
        %v2488 = vxor.u32 %v2479, 2147483648
        %v2489 = vmul.f32 %v2488, 1.442695
        %v2490 = vpow.pop %v2489
        %v2491 = vadd.f32 %v2490, 1.0
        %v2492 = vrcp.pop %v2491
        %v2493 = vmul.f32 1.0, %v2492
        %v2494 = vtanh.pop %v2480
        %v2495 = vxor.u32 %v2481, 2147483648
        %v2496 = vmul.f32 %v2495, 1.442695
        %v2497 = vpow.pop %v2496
        %v2498 = vadd.f32 %v2497, 1.0
        %v2499 = vrcp.pop %v2498
        %v2500 = vmul.f32 1.0, %v2499
        %v2501 = vmul.f32 %v2493, %v2197
        %v2502 = vmul.f32 %v2487, %v2494
        %v2503 = vadd.f32 %v2501, %v2502
        %v2504 = vtanh.pop %v2503
        %v2505 = vmul.f32 %v2500, %v2504
        %v2506 = vsel %vm2195, 1, 0
        %2507 = vset.pattern.permute.xlu0 0
        %2508 = vperm.xlu0 %2507, %v2506
        %v2509 = vpop.permute.xlu0 %2508
        %vm2510 = vcmp.eq.s32.totalorder %v2509, 1
        %v2511 = vsel %vm2510, %v2505, %v2196
        %v2512 = vsel %vm2510, %v2503, %v2197
        %2513 = vst [vmem:[#allocation2] sm:$0xff] %v2511
        %2514 = vst [vmem:[#allocation3] sm:$0xff] %v2512
        %v2515 = vld [vmem:[%s696] sm:$0xff]
        %v2516 = vld [vmem:[%s698] sm:$0xff]
        %v2517 = vpack.c.bf16 %v2511, %v2511
        %v2518 = vld [vmem:[#allocation9] sm:$0xff]
        %v2519 = vld [vmem:[#allocation9 + $0x8] sm:$0xff]
        %v2520 = vld [vmem:[#allocation9 + $0x10] sm:$0xff]
        %v2521 = vld [vmem:[#allocation9 + $0x18] sm:$0xff]
        %v2522 = vld [vmem:[#allocation9 + $0x20] sm:$0xff]
        %v2523 = vld [vmem:[#allocation9 + $0x28] sm:$0xff]
        %v2524 = vld [vmem:[#allocation9 + $0x30] sm:$0xff]
        %v2525 = vld [vmem:[#allocation9 + $0x38] sm:$0xff]
        %v2526 = vld [vmem:[#allocation9 + $0x40] sm:$0xff]
        %v2527 = vld [vmem:[#allocation9 + $0x48] sm:$0xff]
        %v2528 = vld [vmem:[#allocation9 + $0x50] sm:$0xff]
        %v2529 = vld [vmem:[#allocation9 + $0x58] sm:$0xff]
        %v2530 = vld [vmem:[#allocation9 + $0x60] sm:$0xff]
        %v2531 = vld [vmem:[#allocation9 + $0x68] sm:$0xff]
        %v2532 = vld [vmem:[#allocation9 + $0x70] sm:$0xff]
        %v2533 = vld [vmem:[#allocation9 + $0x78] sm:$0xff]
        %v2534 = vld [vmem:[#allocation9 + $0x80] sm:$0xff]
        %v2535 = vld [vmem:[#allocation9 + $0x88] sm:$0xff]
        %v2536 = vld [vmem:[#allocation9 + $0x90] sm:$0xff]
        %v2537 = vld [vmem:[#allocation9 + $0x98] sm:$0xff]
        %v2538 = vld [vmem:[#allocation9 + $0xa0] sm:$0xff]
        %v2539 = vld [vmem:[#allocation9 + $0xa8] sm:$0xff]
        %v2540 = vld [vmem:[#allocation9 + $0xb0] sm:$0xff]
        %v2541 = vld [vmem:[#allocation9 + $0xb8] sm:$0xff]
        %v2542 = vld [vmem:[#allocation9 + $0xc0] sm:$0xff]
        %v2543 = vld [vmem:[#allocation9 + $0xc8] sm:$0xff]
        %v2544 = vld [vmem:[#allocation9 + $0xd0] sm:$0xff]
        %v2545 = vld [vmem:[#allocation9 + $0xd8] sm:$0xff]
        %v2546 = vld [vmem:[#allocation9 + $0xe0] sm:$0xff]
        %v2547 = vld [vmem:[#allocation9 + $0xe8] sm:$0xff]
        %v2548 = vld [vmem:[#allocation9 + $0xf0] sm:$0xff]
        %v2549 = vld [vmem:[#allocation9 + $0xf8] sm:$0xff]
        %v2550 = vpack.c.bf16 %v2515, %v2515
        %v2551 = vld [vmem:[#allocation10] sm:$0xff]
        %v2552 = vld [vmem:[#allocation10 + $0x8] sm:$0xff]
        %v2553 = vld [vmem:[#allocation10 + $0x10] sm:$0xff]
        %v2554 = vld [vmem:[#allocation10 + $0x18] sm:$0xff]
        %v2555 = vld [vmem:[#allocation10 + $0x20] sm:$0xff]
        %v2556 = vld [vmem:[#allocation10 + $0x28] sm:$0xff]
        %v2557 = vld [vmem:[#allocation10 + $0x30] sm:$0xff]
        %v2558 = vld [vmem:[#allocation10 + $0x38] sm:$0xff]
        %v2559 = vld [vmem:[#allocation10 + $0x40] sm:$0xff]
        %v2560 = vld [vmem:[#allocation10 + $0x48] sm:$0xff]
        %v2561 = vld [vmem:[#allocation10 + $0x50] sm:$0xff]
        %v2562 = vld [vmem:[#allocation10 + $0x58] sm:$0xff]
        %v2563 = vld [vmem:[#allocation10 + $0x60] sm:$0xff]
        %v2564 = vld [vmem:[#allocation10 + $0x68] sm:$0xff]
        %v2565 = vld [vmem:[#allocation10 + $0x70] sm:$0xff]
        %v2566 = vld [vmem:[#allocation10 + $0x78] sm:$0xff]
        %v2567 = vld [vmem:[#allocation10 + $0x80] sm:$0xff]
        %v2568 = vld [vmem:[#allocation10 + $0x88] sm:$0xff]
        %v2569 = vld [vmem:[#allocation10 + $0x90] sm:$0xff]
        %v2570 = vld [vmem:[#allocation10 + $0x98] sm:$0xff]
        %v2571 = vld [vmem:[#allocation10 + $0xa0] sm:$0xff]
        %v2572 = vld [vmem:[#allocation10 + $0xa8] sm:$0xff]
        %v2573 = vld [vmem:[#allocation10 + $0xb0] sm:$0xff]
        %v2574 = vld [vmem:[#allocation10 + $0xb8] sm:$0xff]
        %v2575 = vld [vmem:[#allocation10 + $0xc0] sm:$0xff]
        %v2576 = vld [vmem:[#allocation10 + $0xc8] sm:$0xff]
        %v2577 = vld [vmem:[#allocation10 + $0xd0] sm:$0xff]
        %v2578 = vld [vmem:[#allocation10 + $0xd8] sm:$0xff]
        %v2579 = vld [vmem:[#allocation10 + $0xe0] sm:$0xff]
        %v2580 = vld [vmem:[#allocation10 + $0xe8] sm:$0xff]
        %v2581 = vld [vmem:[#allocation10 + $0xf0] sm:$0xff]
        %v2582 = vld [vmem:[#allocation10 + $0xf8] sm:$0xff]
        %v2615 = vunpack.c.l.b16 %v2551
        %v2616 = vunpack.c.h.b16 %v2551
        %v2617 = vunpack.c.l.b16 %v2552
        %v2618 = vunpack.c.h.b16 %v2552
        %v2619 = vunpack.c.l.b16 %v2553
        %v2620 = vunpack.c.h.b16 %v2553
        %v2621 = vunpack.c.l.b16 %v2554
        %v2622 = vunpack.c.h.b16 %v2554
        %v2623 = vunpack.c.l.b16 %v2555
        %v2624 = vunpack.c.h.b16 %v2555
        %v2625 = vunpack.c.l.b16 %v2556
        %v2626 = vunpack.c.h.b16 %v2556
        %v2627 = vunpack.c.l.b16 %v2557
        %v2628 = vunpack.c.h.b16 %v2557
        %v2629 = vunpack.c.l.b16 %v2558
        %v2630 = vunpack.c.h.b16 %v2558
        %v2631 = vunpack.c.l.b16 %v2559
        %v2632 = vunpack.c.h.b16 %v2559
        %v2633 = vunpack.c.l.b16 %v2560
        %v2634 = vunpack.c.h.b16 %v2560
        %v2635 = vunpack.c.l.b16 %v2561
        %v2636 = vunpack.c.h.b16 %v2561
        %v2637 = vunpack.c.l.b16 %v2562
        %v2638 = vunpack.c.h.b16 %v2562
        %v2639 = vunpack.c.l.b16 %v2563
        %v2640 = vunpack.c.h.b16 %v2563
        %v2641 = vunpack.c.l.b16 %v2564
        %v2642 = vunpack.c.h.b16 %v2564
        %v2643 = vunpack.c.l.b16 %v2565
        %v2644 = vunpack.c.h.b16 %v2565
        %v2645 = vunpack.c.l.b16 %v2566
        %v2646 = vunpack.c.h.b16 %v2566
        %v2647 = vunpack.c.l.b16 %v2567
        %v2648 = vunpack.c.h.b16 %v2567
        %v2649 = vunpack.c.l.b16 %v2568
        %v2650 = vunpack.c.h.b16 %v2568
        %v2651 = vunpack.c.l.b16 %v2569
        %v2652 = vunpack.c.h.b16 %v2569
        %v2653 = vunpack.c.l.b16 %v2570
        %v2654 = vunpack.c.h.b16 %v2570
        %v2655 = vunpack.c.l.b16 %v2571
        %v2656 = vunpack.c.h.b16 %v2571
        %v2657 = vunpack.c.l.b16 %v2572
        %v2658 = vunpack.c.h.b16 %v2572
        %v2659 = vunpack.c.l.b16 %v2573
        %v2660 = vunpack.c.h.b16 %v2573
        %v2661 = vunpack.c.l.b16 %v2574
        %v2662 = vunpack.c.h.b16 %v2574
        %v2663 = vunpack.c.l.b16 %v2575
        %v2664 = vunpack.c.h.b16 %v2575
        %v2665 = vunpack.c.l.b16 %v2576
        %v2666 = vunpack.c.h.b16 %v2576
        %v2667 = vunpack.c.l.b16 %v2577
        %v2668 = vunpack.c.h.b16 %v2577
        %v2669 = vunpack.c.l.b16 %v2578
        %v2670 = vunpack.c.h.b16 %v2578
        %v2671 = vunpack.c.l.b16 %v2579
        %v2672 = vunpack.c.h.b16 %v2579
        %v2673 = vunpack.c.l.b16 %v2580
        %v2674 = vunpack.c.h.b16 %v2580
        %v2675 = vunpack.c.l.b16 %v2581
        %v2676 = vunpack.c.h.b16 %v2581
        %v2677 = vunpack.c.l.b16 %v2582
        %v2678 = vunpack.c.h.b16 %v2582
        %v2679 = vpack.c.b16 %v2619, %v2615
        %v2680 = vpack.c.b16 %v2620, %v2616
        %v2681 = vpack.c.b16 %v2621, %v2617
        %v2682 = vpack.c.b16 %v2622, %v2618
        %v2683 = vpack.c.b16 %v2627, %v2623
        %v2684 = vpack.c.b16 %v2628, %v2624
        %v2685 = vpack.c.b16 %v2629, %v2625
        %v2686 = vpack.c.b16 %v2630, %v2626
        %v2687 = vpack.c.b16 %v2635, %v2631
        %v2688 = vpack.c.b16 %v2636, %v2632
        %v2689 = vpack.c.b16 %v2637, %v2633
        %v2690 = vpack.c.b16 %v2638, %v2634
        %v2691 = vpack.c.b16 %v2643, %v2639
        %v2692 = vpack.c.b16 %v2644, %v2640
        %v2693 = vpack.c.b16 %v2645, %v2641
        %v2694 = vpack.c.b16 %v2646, %v2642
        %v2695 = vpack.c.b16 %v2651, %v2647
        %v2696 = vpack.c.b16 %v2652, %v2648
        %v2697 = vpack.c.b16 %v2653, %v2649
        %v2698 = vpack.c.b16 %v2654, %v2650
        %v2699 = vpack.c.b16 %v2659, %v2655
        %v2700 = vpack.c.b16 %v2660, %v2656
        %v2701 = vpack.c.b16 %v2661, %v2657
        %v2702 = vpack.c.b16 %v2662, %v2658
        %v2703 = vpack.c.b16 %v2667, %v2663
        %v2704 = vpack.c.b16 %v2668, %v2664
        %v2705 = vpack.c.b16 %v2669, %v2665
        %v2706 = vpack.c.b16 %v2670, %v2666
        %v2707 = vpack.c.b16 %v2675, %v2671
        %v2708 = vpack.c.b16 %v2676, %v2672
        %v2709 = vpack.c.b16 %v2677, %v2673
        %v2710 = vpack.c.b16 %v2678, %v2674
        %2743 = vmatprep.subr.bf16.mxu0 %v2708
        %2744 = vmatpush1.bf16.msra.mxu0 %v2707
        %2745 = vmatprep.subr.bf16.mxu0 %v2704
        %2746 = vmatpush1.bf16.msra.mxu0 %v2703
        %2747 = vmatprep.subr.bf16.mxu0 %v2700
        %2748 = vmatpush1.bf16.msra.mxu0 %v2699
        %2749 = vmatprep.subr.bf16.mxu0 %v2696
        %2750 = vmatpush1.bf16.msra.mxu0 %v2695
        %2751 = vmatprep.subr.bf16.mxu0 %v2692
        %2752 = vmatpush1.bf16.msra.mxu0 %v2691
        %2753 = vmatprep.subr.bf16.mxu0 %v2688
        %2754 = vmatpush1.bf16.msra.mxu0 %v2687
        %2755 = vmatprep.subr.bf16.mxu0 %v2684
        %2756 = vmatpush1.bf16.msra.mxu0 %v2683
        %2757 = vmatprep.subr.bf16.mxu0 %v2680
        %2758 = vmatpush1.bf16.msra.mxu0 %v2679
        %2759 = vmatprep.subr.bf16.mxu0 0
        %2760 = vmatpush2.bf16.msra.mxu0 0
        %2761 = vmatprep.subr.bf16.mxu0 0
        %2762 = vmatpush2.bf16.msra.mxu0 0
        %2763 = vmatprep.subr.bf16.mxu0 0
        %2764 = vmatpush2.bf16.msra.mxu0 0
        %2765 = vmatprep.subr.bf16.mxu0 0
        %2766 = vmatpush2.bf16.msra.mxu0 0
        %2767 = vmatprep.subr.bf16.mxu0 0
        %2768 = vmatpush2.bf16.msra.mxu0 0
        %2769 = vmatprep.subr.bf16.mxu0 0
        %2770 = vmatpush2.bf16.msra.mxu0 0
        %2771 = vmatprep.subr.bf16.mxu0 0
        %2772 = vmatpush2.bf16.msra.mxu0 0
        %2773 = vmatprep.subr.bf16.mxu0 0
        %2774 = vmatpush2.bf16.msra.mxu0 0
        %2775 = vmatprep.mubr.bf16.mxu0 0
        %2776 = vmatmul.mubr.bf16.gmra.mxu0 %v2550
        %v2777 = vpop.f32.mrf.mxu0
        %v2778 = vadd.f32 0.0, %v2777
        %v2779 = vpop.f32.mrf.mxu0
        %v2780 = vadd.f32 0.0, %v2779
        %v2781 = vpop.f32.mrf.mxu0
        %v2782 = vpop.f32.mrf.mxu0
        %2783 = vdwg.mxu0
        %2784 = vmatprep.subr.bf16.mxu0 %v2710
        %2785 = vmatpush1.bf16.msra.mxu0 %v2709
        %2786 = vmatprep.subr.bf16.mxu0 %v2706
        %2787 = vmatpush1.bf16.msra.mxu0 %v2705
        %2788 = vmatprep.subr.bf16.mxu0 %v2702
        %2789 = vmatpush1.bf16.msra.mxu0 %v2701
        %2790 = vmatprep.subr.bf16.mxu0 %v2698
        %2791 = vmatpush1.bf16.msra.mxu0 %v2697
        %2792 = vmatprep.subr.bf16.mxu0 %v2694
        %2793 = vmatpush1.bf16.msra.mxu0 %v2693
        %2794 = vmatprep.subr.bf16.mxu0 %v2690
        %2795 = vmatpush1.bf16.msra.mxu0 %v2689
        %2796 = vmatprep.subr.bf16.mxu0 %v2686
        %2797 = vmatpush1.bf16.msra.mxu0 %v2685
        %2798 = vmatprep.subr.bf16.mxu0 %v2682
        %2799 = vmatpush1.bf16.msra.mxu0 %v2681
        %2800 = vmatprep.subr.bf16.mxu0 0
        %2801 = vmatpush2.bf16.msra.mxu0 0
        %2802 = vmatprep.subr.bf16.mxu0 0
        %2803 = vmatpush2.bf16.msra.mxu0 0
        %2804 = vmatprep.subr.bf16.mxu0 0
        %2805 = vmatpush2.bf16.msra.mxu0 0
        %2806 = vmatprep.subr.bf16.mxu0 0
        %2807 = vmatpush2.bf16.msra.mxu0 0
        %2808 = vmatprep.subr.bf16.mxu0 0
        %2809 = vmatpush2.bf16.msra.mxu0 0
        %2810 = vmatprep.subr.bf16.mxu0 0
        %2811 = vmatpush2.bf16.msra.mxu0 0
        %2812 = vmatprep.subr.bf16.mxu0 0
        %2813 = vmatpush2.bf16.msra.mxu0 0
        %2814 = vmatprep.subr.bf16.mxu0 0
        %2815 = vmatpush2.bf16.msra.mxu0 0
        %2816 = vmatprep.mubr.bf16.mxu0 0
        %2817 = vmatmul.mubr.bf16.gmra.mxu0 %v2550
        %v2818 = vpop.f32.mrf.mxu0
        %v2819 = vadd.f32 0.0, %v2818
        %v2820 = vpop.f32.mrf.mxu0
        %v2821 = vadd.f32 0.0, %v2820
        %v2822 = vpop.f32.mrf.mxu0
        %v2823 = vpop.f32.mrf.mxu0
        %2824 = vdwg.mxu0
        %v2857 = vunpack.c.l.b16 %v2518
        %v2858 = vunpack.c.h.b16 %v2518
        %v2859 = vunpack.c.l.b16 %v2519
        %v2860 = vunpack.c.h.b16 %v2519
        %v2861 = vunpack.c.l.b16 %v2520
        %v2862 = vunpack.c.h.b16 %v2520
        %v2863 = vunpack.c.l.b16 %v2521
        %v2864 = vunpack.c.h.b16 %v2521
        %v2865 = vunpack.c.l.b16 %v2522
        %v2866 = vunpack.c.h.b16 %v2522
        %v2867 = vunpack.c.l.b16 %v2523
        %v2868 = vunpack.c.h.b16 %v2523
        %v2869 = vunpack.c.l.b16 %v2524
        %v2870 = vunpack.c.h.b16 %v2524
        %v2871 = vunpack.c.l.b16 %v2525
        %v2872 = vunpack.c.h.b16 %v2525
        %v2873 = vunpack.c.l.b16 %v2526
        %v2874 = vunpack.c.h.b16 %v2526
        %v2875 = vunpack.c.l.b16 %v2527
        %v2876 = vunpack.c.h.b16 %v2527
        %v2877 = vunpack.c.l.b16 %v2528
        %v2878 = vunpack.c.h.b16 %v2528
        %v2879 = vunpack.c.l.b16 %v2529
        %v2880 = vunpack.c.h.b16 %v2529
        %v2881 = vunpack.c.l.b16 %v2530
        %v2882 = vunpack.c.h.b16 %v2530
        %v2883 = vunpack.c.l.b16 %v2531
        %v2884 = vunpack.c.h.b16 %v2531
        %v2885 = vunpack.c.l.b16 %v2532
        %v2886 = vunpack.c.h.b16 %v2532
        %v2887 = vunpack.c.l.b16 %v2533
        %v2888 = vunpack.c.h.b16 %v2533
        %v2889 = vunpack.c.l.b16 %v2534
        %v2890 = vunpack.c.h.b16 %v2534
        %v2891 = vunpack.c.l.b16 %v2535
        %v2892 = vunpack.c.h.b16 %v2535
        %v2893 = vunpack.c.l.b16 %v2536
        %v2894 = vunpack.c.h.b16 %v2536
        %v2895 = vunpack.c.l.b16 %v2537
        %v2896 = vunpack.c.h.b16 %v2537
        %v2897 = vunpack.c.l.b16 %v2538
        %v2898 = vunpack.c.h.b16 %v2538
        %v2899 = vunpack.c.l.b16 %v2539
        %v2900 = vunpack.c.h.b16 %v2539
        %v2901 = vunpack.c.l.b16 %v2540
        %v2902 = vunpack.c.h.b16 %v2540
        %v2903 = vunpack.c.l.b16 %v2541
        %v2904 = vunpack.c.h.b16 %v2541
        %v2905 = vunpack.c.l.b16 %v2542
        %v2906 = vunpack.c.h.b16 %v2542
        %v2907 = vunpack.c.l.b16 %v2543
        %v2908 = vunpack.c.h.b16 %v2543
        %v2909 = vunpack.c.l.b16 %v2544
        %v2910 = vunpack.c.h.b16 %v2544
        %v2911 = vunpack.c.l.b16 %v2545
        %v2912 = vunpack.c.h.b16 %v2545
        %v2913 = vunpack.c.l.b16 %v2546
        %v2914 = vunpack.c.h.b16 %v2546
        %v2915 = vunpack.c.l.b16 %v2547
        %v2916 = vunpack.c.h.b16 %v2547
        %v2917 = vunpack.c.l.b16 %v2548
        %v2918 = vunpack.c.h.b16 %v2548
        %v2919 = vunpack.c.l.b16 %v2549
        %v2920 = vunpack.c.h.b16 %v2549
        %v2921 = vpack.c.b16 %v2861, %v2857
        %v2922 = vpack.c.b16 %v2862, %v2858
        %v2923 = vpack.c.b16 %v2863, %v2859
        %v2924 = vpack.c.b16 %v2864, %v2860
        %v2925 = vpack.c.b16 %v2869, %v2865
        %v2926 = vpack.c.b16 %v2870, %v2866
        %v2927 = vpack.c.b16 %v2871, %v2867
        %v2928 = vpack.c.b16 %v2872, %v2868
        %v2929 = vpack.c.b16 %v2877, %v2873
        %v2930 = vpack.c.b16 %v2878, %v2874
        %v2931 = vpack.c.b16 %v2879, %v2875
        %v2932 = vpack.c.b16 %v2880, %v2876
        %v2933 = vpack.c.b16 %v2885, %v2881
        %v2934 = vpack.c.b16 %v2886, %v2882
        %v2935 = vpack.c.b16 %v2887, %v2883
        %v2936 = vpack.c.b16 %v2888, %v2884
        %v2937 = vpack.c.b16 %v2893, %v2889
        %v2938 = vpack.c.b16 %v2894, %v2890
        %v2939 = vpack.c.b16 %v2895, %v2891
        %v2940 = vpack.c.b16 %v2896, %v2892
        %v2941 = vpack.c.b16 %v2901, %v2897
        %v2942 = vpack.c.b16 %v2902, %v2898
        %v2943 = vpack.c.b16 %v2903, %v2899
        %v2944 = vpack.c.b16 %v2904, %v2900
        %v2945 = vpack.c.b16 %v2909, %v2905
        %v2946 = vpack.c.b16 %v2910, %v2906
        %v2947 = vpack.c.b16 %v2911, %v2907
        %v2948 = vpack.c.b16 %v2912, %v2908
        %v2949 = vpack.c.b16 %v2917, %v2913
        %v2950 = vpack.c.b16 %v2918, %v2914
        %v2951 = vpack.c.b16 %v2919, %v2915
        %v2952 = vpack.c.b16 %v2920, %v2916
        %2985 = vmatprep.subr.bf16.mxu0 %v2950
        %2986 = vmatpush1.bf16.msra.mxu0 %v2949
        %2987 = vmatprep.subr.bf16.mxu0 %v2946
        %2988 = vmatpush1.bf16.msra.mxu0 %v2945
        %2989 = vmatprep.subr.bf16.mxu0 %v2942
        %2990 = vmatpush1.bf16.msra.mxu0 %v2941
        %2991 = vmatprep.subr.bf16.mxu0 %v2938
        %2992 = vmatpush1.bf16.msra.mxu0 %v2937
        %2993 = vmatprep.subr.bf16.mxu0 %v2934
        %2994 = vmatpush1.bf16.msra.mxu0 %v2933
        %2995 = vmatprep.subr.bf16.mxu0 %v2930
        %2996 = vmatpush1.bf16.msra.mxu0 %v2929
        %2997 = vmatprep.subr.bf16.mxu0 %v2926
        %2998 = vmatpush1.bf16.msra.mxu0 %v2925
        %2999 = vmatprep.subr.bf16.mxu0 %v2922
        %3000 = vmatpush1.bf16.msra.mxu0 %v2921
        %3001 = vmatprep.subr.bf16.mxu0 0
        %3002 = vmatpush2.bf16.msra.mxu0 0
        %3003 = vmatprep.subr.bf16.mxu0 0
        %3004 = vmatpush2.bf16.msra.mxu0 0
        %3005 = vmatprep.subr.bf16.mxu0 0
        %3006 = vmatpush2.bf16.msra.mxu0 0
        %3007 = vmatprep.subr.bf16.mxu0 0
        %3008 = vmatpush2.bf16.msra.mxu0 0
        %3009 = vmatprep.subr.bf16.mxu0 0
        %3010 = vmatpush2.bf16.msra.mxu0 0
        %3011 = vmatprep.subr.bf16.mxu0 0
        %3012 = vmatpush2.bf16.msra.mxu0 0
        %3013 = vmatprep.subr.bf16.mxu0 0
        %3014 = vmatpush2.bf16.msra.mxu0 0
        %3015 = vmatprep.subr.bf16.mxu0 0
        %3016 = vmatpush2.bf16.msra.mxu0 0
        %3017 = vmatprep.mubr.bf16.mxu0 0
        %3018 = vmatmul.mubr.bf16.gmra.mxu0 %v2517
        %v3019 = vpop.f32.mrf.mxu0
        %v3020 = vadd.f32 %v2778, %v3019
        %v3021 = vpop.f32.mrf.mxu0
        %v3022 = vadd.f32 %v2780, %v3021
        %v3023 = vpop.f32.mrf.mxu0
        %v3024 = vpop.f32.mrf.mxu0
        %3025 = vdwg.mxu0
        %3026 = vmatprep.subr.bf16.mxu0 %v2952
        %3027 = vmatpush1.bf16.msra.mxu0 %v2951
        %3028 = vmatprep.subr.bf16.mxu0 %v2948
        %3029 = vmatpush1.bf16.msra.mxu0 %v2947
        %3030 = vmatprep.subr.bf16.mxu0 %v2944
        %3031 = vmatpush1.bf16.msra.mxu0 %v2943
        %3032 = vmatprep.subr.bf16.mxu0 %v2940
        %3033 = vmatpush1.bf16.msra.mxu0 %v2939
        %3034 = vmatprep.subr.bf16.mxu0 %v2936
        %3035 = vmatpush1.bf16.msra.mxu0 %v2935
        %3036 = vmatprep.subr.bf16.mxu0 %v2932
        %3037 = vmatpush1.bf16.msra.mxu0 %v2931
        %3038 = vmatprep.subr.bf16.mxu0 %v2928
        %3039 = vmatpush1.bf16.msra.mxu0 %v2927
        %3040 = vmatprep.subr.bf16.mxu0 %v2924
        %3041 = vmatpush1.bf16.msra.mxu0 %v2923
        %3042 = vmatprep.subr.bf16.mxu0 0
        %3043 = vmatpush2.bf16.msra.mxu0 0
        %3044 = vmatprep.subr.bf16.mxu0 0
        %3045 = vmatpush2.bf16.msra.mxu0 0
        %3046 = vmatprep.subr.bf16.mxu0 0
        %3047 = vmatpush2.bf16.msra.mxu0 0
        %3048 = vmatprep.subr.bf16.mxu0 0
        %3049 = vmatpush2.bf16.msra.mxu0 0
        %3050 = vmatprep.subr.bf16.mxu0 0
        %3051 = vmatpush2.bf16.msra.mxu0 0
        %3052 = vmatprep.subr.bf16.mxu0 0
        %3053 = vmatpush2.bf16.msra.mxu0 0
        %3054 = vmatprep.subr.bf16.mxu0 0
        %3055 = vmatpush2.bf16.msra.mxu0 0
        %3056 = vmatprep.subr.bf16.mxu0 0
        %3057 = vmatpush2.bf16.msra.mxu0 0
        %3058 = vmatprep.mubr.bf16.mxu0 0
        %3059 = vmatmul.mubr.bf16.gmra.mxu0 %v2517
        %v3060 = vpop.f32.mrf.mxu0
        %v3061 = vadd.f32 %v2819, %v3060
        %v3062 = vpop.f32.mrf.mxu0
        %v3063 = vadd.f32 %v2821, %v3062
        %v3064 = vpop.f32.mrf.mxu0
        %v3065 = vpop.f32.mrf.mxu0
        %3066 = vdwg.mxu0
        %v3067 = vadd.f32 %v3020, %v358
        %v3068 = vadd.f32 %v3022, %v362
        %v3069 = vadd.f32 %v3061, %v366
        %v3070 = vadd.f32 %v3063, %v370
        %v3071 = vxor.u32 %v3067, 2147483648
        %v3072 = vmul.f32 %v3071, 1.442695
        %v3073 = vpow.pop %v3072
        %v3074 = vadd.f32 %v3073, 1.0
        %v3075 = vrcp.pop %v3074
        %v3076 = vmul.f32 1.0, %v3075
        %v3077 = vxor.u32 %v3068, 2147483648
        %v3078 = vmul.f32 %v3077, 1.442695
        %v3079 = vpow.pop %v3078
        %v3080 = vadd.f32 %v3079, 1.0
        %v3081 = vrcp.pop %v3080
        %v3082 = vmul.f32 1.0, %v3081
        %v3083 = vtanh.pop %v3069
        %v3084 = vxor.u32 %v3070, 2147483648
        %v3085 = vmul.f32 %v3084, 1.442695
        %v3086 = vpow.pop %v3085
        %v3087 = vadd.f32 %v3086, 1.0
        %v3088 = vrcp.pop %v3087
        %v3089 = vmul.f32 1.0, %v3088
        %v3090 = vmul.f32 %v3082, %v2516
        %v3091 = vmul.f32 %v3076, %v3083
        %v3092 = vadd.f32 %v3090, %v3091
        %v3093 = vtanh.pop %v3092
        %v3094 = vmul.f32 %v3089, %v3093
        %v3095 = vsel %vm2510, %v3094, %v2515
        %v3096 = vsel %vm2510, %v3092, %v2516
        %3097 = vst [vmem:[%s696] sm:$0xff] %v3095
        %3098 = vst [vmem:[%s698] sm:$0xff] %v3096
        %v3099 = vsel %vm2510, %v3094, 0.0
        %s3100 = scalar_lea.vmem %s338, 16 [#allocation12]
        %3101 = vst [vmem:[%s3100] sm:$0xff] %v3099
        %s3102 = sadd.s32 %s375, 3
        %v3103 = vstv %s3102
        %vm3104 = vcmp.gt.s32.totalorder %v352, %v3103
        %v3105 = vld [vmem:[#allocation2] sm:$0xff]
        %v3106 = vld [vmem:[#allocation3] sm:$0xff]
        %s3107 = scalar_lea.vmem %s298, 96 [#allocation4]
        %v3108 = vld [vmem:[%s3107] sm:$0xff]
        %v3109 = vld [vmem:[%s3107 + $0x8] sm:$0xff]
        %v3110 = vld [vmem:[%s3107 + $0x10] sm:$0xff]
        %v3111 = vld [vmem:[%s3107 + $0x18] sm:$0xff]
        %v3112 = vpack.c.bf16 %v3105, %v3105
        %v3113 = vld [vmem:[#allocation7] sm:$0xff]
        %v3114 = vld [vmem:[#allocation7 + $0x8] sm:$0xff]
        %v3115 = vld [vmem:[#allocation7 + $0x10] sm:$0xff]
        %v3116 = vld [vmem:[#allocation7 + $0x18] sm:$0xff]
        %v3117 = vld [vmem:[#allocation7 + $0x20] sm:$0xff]
        %v3118 = vld [vmem:[#allocation7 + $0x28] sm:$0xff]
        %v3119 = vld [vmem:[#allocation7 + $0x30] sm:$0xff]
        %v3120 = vld [vmem:[#allocation7 + $0x38] sm:$0xff]
        %v3121 = vld [vmem:[#allocation7 + $0x40] sm:$0xff]
        %v3122 = vld [vmem:[#allocation7 + $0x48] sm:$0xff]
        %v3123 = vld [vmem:[#allocation7 + $0x50] sm:$0xff]
        %v3124 = vld [vmem:[#allocation7 + $0x58] sm:$0xff]
        %v3125 = vld [vmem:[#allocation7 + $0x60] sm:$0xff]
        %v3126 = vld [vmem:[#allocation7 + $0x68] sm:$0xff]
        %v3127 = vld [vmem:[#allocation7 + $0x70] sm:$0xff]
        %v3128 = vld [vmem:[#allocation7 + $0x78] sm:$0xff]
        %v3129 = vld [vmem:[#allocation7 + $0x80] sm:$0xff]
        %v3130 = vld [vmem:[#allocation7 + $0x88] sm:$0xff]
        %v3131 = vld [vmem:[#allocation7 + $0x90] sm:$0xff]
        %v3132 = vld [vmem:[#allocation7 + $0x98] sm:$0xff]
        %v3133 = vld [vmem:[#allocation7 + $0xa0] sm:$0xff]
        %v3134 = vld [vmem:[#allocation7 + $0xa8] sm:$0xff]
        %v3135 = vld [vmem:[#allocation7 + $0xb0] sm:$0xff]
        %v3136 = vld [vmem:[#allocation7 + $0xb8] sm:$0xff]
        %v3137 = vld [vmem:[#allocation7 + $0xc0] sm:$0xff]
        %v3138 = vld [vmem:[#allocation7 + $0xc8] sm:$0xff]
        %v3139 = vld [vmem:[#allocation7 + $0xd0] sm:$0xff]
        %v3140 = vld [vmem:[#allocation7 + $0xd8] sm:$0xff]
        %v3141 = vld [vmem:[#allocation7 + $0xe0] sm:$0xff]
        %v3142 = vld [vmem:[#allocation7 + $0xe8] sm:$0xff]
        %v3143 = vld [vmem:[#allocation7 + $0xf0] sm:$0xff]
        %v3144 = vld [vmem:[#allocation7 + $0xf8] sm:$0xff]
        %v3177 = vunpack.c.l.b16 %v3113
        %v3178 = vunpack.c.h.b16 %v3113
        %v3179 = vunpack.c.l.b16 %v3114
        %v3180 = vunpack.c.h.b16 %v3114
        %v3181 = vunpack.c.l.b16 %v3115
        %v3182 = vunpack.c.h.b16 %v3115
        %v3183 = vunpack.c.l.b16 %v3116
        %v3184 = vunpack.c.h.b16 %v3116
        %v3185 = vunpack.c.l.b16 %v3117
        %v3186 = vunpack.c.h.b16 %v3117
        %v3187 = vunpack.c.l.b16 %v3118
        %v3188 = vunpack.c.h.b16 %v3118
        %v3189 = vunpack.c.l.b16 %v3119
        %v3190 = vunpack.c.h.b16 %v3119
        %v3191 = vunpack.c.l.b16 %v3120
        %v3192 = vunpack.c.h.b16 %v3120
        %v3193 = vunpack.c.l.b16 %v3121
        %v3194 = vunpack.c.h.b16 %v3121
        %v3195 = vunpack.c.l.b16 %v3122
        %v3196 = vunpack.c.h.b16 %v3122
        %v3197 = vunpack.c.l.b16 %v3123
        %v3198 = vunpack.c.h.b16 %v3123
        %v3199 = vunpack.c.l.b16 %v3124
        %v3200 = vunpack.c.h.b16 %v3124
        %v3201 = vunpack.c.l.b16 %v3125
        %v3202 = vunpack.c.h.b16 %v3125
        %v3203 = vunpack.c.l.b16 %v3126
        %v3204 = vunpack.c.h.b16 %v3126
        %v3205 = vunpack.c.l.b16 %v3127
        %v3206 = vunpack.c.h.b16 %v3127
        %v3207 = vunpack.c.l.b16 %v3128
        %v3208 = vunpack.c.h.b16 %v3128
        %v3209 = vunpack.c.l.b16 %v3129
        %v3210 = vunpack.c.h.b16 %v3129
        %v3211 = vunpack.c.l.b16 %v3130
        %v3212 = vunpack.c.h.b16 %v3130
        %v3213 = vunpack.c.l.b16 %v3131
        %v3214 = vunpack.c.h.b16 %v3131
        %v3215 = vunpack.c.l.b16 %v3132
        %v3216 = vunpack.c.h.b16 %v3132
        %v3217 = vunpack.c.l.b16 %v3133
        %v3218 = vunpack.c.h.b16 %v3133
        %v3219 = vunpack.c.l.b16 %v3134
        %v3220 = vunpack.c.h.b16 %v3134
        %v3221 = vunpack.c.l.b16 %v3135
        %v3222 = vunpack.c.h.b16 %v3135
        %v3223 = vunpack.c.l.b16 %v3136
        %v3224 = vunpack.c.h.b16 %v3136
        %v3225 = vunpack.c.l.b16 %v3137
        %v3226 = vunpack.c.h.b16 %v3137
        %v3227 = vunpack.c.l.b16 %v3138
        %v3228 = vunpack.c.h.b16 %v3138
        %v3229 = vunpack.c.l.b16 %v3139
        %v3230 = vunpack.c.h.b16 %v3139
        %v3231 = vunpack.c.l.b16 %v3140
        %v3232 = vunpack.c.h.b16 %v3140
        %v3233 = vunpack.c.l.b16 %v3141
        %v3234 = vunpack.c.h.b16 %v3141
        %v3235 = vunpack.c.l.b16 %v3142
        %v3236 = vunpack.c.h.b16 %v3142
        %v3237 = vunpack.c.l.b16 %v3143
        %v3238 = vunpack.c.h.b16 %v3143
        %v3239 = vunpack.c.l.b16 %v3144
        %v3240 = vunpack.c.h.b16 %v3144
        %v3241 = vpack.c.b16 %v3181, %v3177
        %v3242 = vpack.c.b16 %v3182, %v3178
        %v3243 = vpack.c.b16 %v3183, %v3179
        %v3244 = vpack.c.b16 %v3184, %v3180
        %v3245 = vpack.c.b16 %v3189, %v3185
        %v3246 = vpack.c.b16 %v3190, %v3186
        %v3247 = vpack.c.b16 %v3191, %v3187
        %v3248 = vpack.c.b16 %v3192, %v3188
        %v3249 = vpack.c.b16 %v3197, %v3193
        %v3250 = vpack.c.b16 %v3198, %v3194
        %v3251 = vpack.c.b16 %v3199, %v3195
        %v3252 = vpack.c.b16 %v3200, %v3196
        %v3253 = vpack.c.b16 %v3205, %v3201
        %v3254 = vpack.c.b16 %v3206, %v3202
        %v3255 = vpack.c.b16 %v3207, %v3203
        %v3256 = vpack.c.b16 %v3208, %v3204
        %v3257 = vpack.c.b16 %v3213, %v3209
        %v3258 = vpack.c.b16 %v3214, %v3210
        %v3259 = vpack.c.b16 %v3215, %v3211
        %v3260 = vpack.c.b16 %v3216, %v3212
        %v3261 = vpack.c.b16 %v3221, %v3217
        %v3262 = vpack.c.b16 %v3222, %v3218
        %v3263 = vpack.c.b16 %v3223, %v3219
        %v3264 = vpack.c.b16 %v3224, %v3220
        %v3265 = vpack.c.b16 %v3229, %v3225
        %v3266 = vpack.c.b16 %v3230, %v3226
        %v3267 = vpack.c.b16 %v3231, %v3227
        %v3268 = vpack.c.b16 %v3232, %v3228
        %v3269 = vpack.c.b16 %v3237, %v3233
        %v3270 = vpack.c.b16 %v3238, %v3234
        %v3271 = vpack.c.b16 %v3239, %v3235
        %v3272 = vpack.c.b16 %v3240, %v3236
        %3305 = vmatprep.subr.bf16.mxu0 %v3270
        %3306 = vmatpush1.bf16.msra.mxu0 %v3269
        %3307 = vmatprep.subr.bf16.mxu0 %v3266
        %3308 = vmatpush1.bf16.msra.mxu0 %v3265
        %3309 = vmatprep.subr.bf16.mxu0 %v3262
        %3310 = vmatpush1.bf16.msra.mxu0 %v3261
        %3311 = vmatprep.subr.bf16.mxu0 %v3258
        %3312 = vmatpush1.bf16.msra.mxu0 %v3257
        %3313 = vmatprep.subr.bf16.mxu0 %v3254
        %3314 = vmatpush1.bf16.msra.mxu0 %v3253
        %3315 = vmatprep.subr.bf16.mxu0 %v3250
        %3316 = vmatpush1.bf16.msra.mxu0 %v3249
        %3317 = vmatprep.subr.bf16.mxu0 %v3246
        %3318 = vmatpush1.bf16.msra.mxu0 %v3245
        %3319 = vmatprep.subr.bf16.mxu0 %v3242
        %3320 = vmatpush1.bf16.msra.mxu0 %v3241
        %3321 = vmatprep.subr.bf16.mxu0 0
        %3322 = vmatpush2.bf16.msra.mxu0 0
        %3323 = vmatprep.subr.bf16.mxu0 0
        %3324 = vmatpush2.bf16.msra.mxu0 0
        %3325 = vmatprep.subr.bf16.mxu0 0
        %3326 = vmatpush2.bf16.msra.mxu0 0
        %3327 = vmatprep.subr.bf16.mxu0 0
        %3328 = vmatpush2.bf16.msra.mxu0 0
        %3329 = vmatprep.subr.bf16.mxu0 0
        %3330 = vmatpush2.bf16.msra.mxu0 0
        %3331 = vmatprep.subr.bf16.mxu0 0
        %3332 = vmatpush2.bf16.msra.mxu0 0
        %3333 = vmatprep.subr.bf16.mxu0 0
        %3334 = vmatpush2.bf16.msra.mxu0 0
        %3335 = vmatprep.subr.bf16.mxu0 0
        %3336 = vmatpush2.bf16.msra.mxu0 0
        %3337 = vmatprep.mubr.bf16.mxu0 0
        %3338 = vmatmul.mubr.bf16.gmra.mxu0 %v3112
        %v3339 = vpop.f32.mrf.mxu0
        %v3340 = vadd.f32 0.0, %v3339
        %v3341 = vpop.f32.mrf.mxu0
        %v3342 = vadd.f32 0.0, %v3341
        %v3343 = vpop.f32.mrf.mxu0
        %v3344 = vpop.f32.mrf.mxu0
        %3345 = vdwg.mxu0
        %3346 = vmatprep.subr.bf16.mxu0 %v3272
        %3347 = vmatpush1.bf16.msra.mxu0 %v3271
        %3348 = vmatprep.subr.bf16.mxu0 %v3268
        %3349 = vmatpush1.bf16.msra.mxu0 %v3267
        %3350 = vmatprep.subr.bf16.mxu0 %v3264
        %3351 = vmatpush1.bf16.msra.mxu0 %v3263
        %3352 = vmatprep.subr.bf16.mxu0 %v3260
        %3353 = vmatpush1.bf16.msra.mxu0 %v3259
        %3354 = vmatprep.subr.bf16.mxu0 %v3256
        %3355 = vmatpush1.bf16.msra.mxu0 %v3255
        %3356 = vmatprep.subr.bf16.mxu0 %v3252
        %3357 = vmatpush1.bf16.msra.mxu0 %v3251
        %3358 = vmatprep.subr.bf16.mxu0 %v3248
        %3359 = vmatpush1.bf16.msra.mxu0 %v3247
        %3360 = vmatprep.subr.bf16.mxu0 %v3244
        %3361 = vmatpush1.bf16.msra.mxu0 %v3243
        %3362 = vmatprep.subr.bf16.mxu0 0
        %3363 = vmatpush2.bf16.msra.mxu0 0
        %3364 = vmatprep.subr.bf16.mxu0 0
        %3365 = vmatpush2.bf16.msra.mxu0 0
        %3366 = vmatprep.subr.bf16.mxu0 0
        %3367 = vmatpush2.bf16.msra.mxu0 0
        %3368 = vmatprep.subr.bf16.mxu0 0
        %3369 = vmatpush2.bf16.msra.mxu0 0
        %3370 = vmatprep.subr.bf16.mxu0 0
        %3371 = vmatpush2.bf16.msra.mxu0 0
        %3372 = vmatprep.subr.bf16.mxu0 0
        %3373 = vmatpush2.bf16.msra.mxu0 0
        %3374 = vmatprep.subr.bf16.mxu0 0
        %3375 = vmatpush2.bf16.msra.mxu0 0
        %3376 = vmatprep.subr.bf16.mxu0 0
        %3377 = vmatpush2.bf16.msra.mxu0 0
        %3378 = vmatprep.mubr.bf16.mxu0 0
        %3379 = vmatmul.mubr.bf16.gmra.mxu0 %v3112
        %v3380 = vpop.f32.mrf.mxu0
        %v3381 = vadd.f32 0.0, %v3380
        %v3382 = vpop.f32.mrf.mxu0
        %v3383 = vadd.f32 0.0, %v3382
        %v3384 = vpop.f32.mrf.mxu0
        %v3385 = vpop.f32.mrf.mxu0
        %3386 = vdwg.mxu0
        %v3387 = vadd.f32 %v3108, %v3340
        %v3388 = vadd.f32 %v3109, %v3342
        %v3389 = vadd.f32 %v3110, %v3381
        %v3390 = vadd.f32 %v3111, %v3383
        %v3391 = vxor.u32 %v3387, 2147483648
        %v3392 = vmul.f32 %v3391, 1.442695
        %v3393 = vpow.pop %v3392
        %v3394 = vadd.f32 %v3393, 1.0
        %v3395 = vrcp.pop %v3394
        %v3396 = vmul.f32 1.0, %v3395
        %v3397 = vxor.u32 %v3388, 2147483648
        %v3398 = vmul.f32 %v3397, 1.442695
        %v3399 = vpow.pop %v3398
        %v3400 = vadd.f32 %v3399, 1.0
        %v3401 = vrcp.pop %v3400
        %v3402 = vmul.f32 1.0, %v3401
        %v3403 = vtanh.pop %v3389
        %v3404 = vxor.u32 %v3390, 2147483648
        %v3405 = vmul.f32 %v3404, 1.442695
        %v3406 = vpow.pop %v3405
        %v3407 = vadd.f32 %v3406, 1.0
        %v3408 = vrcp.pop %v3407
        %v3409 = vmul.f32 1.0, %v3408
        %v3410 = vmul.f32 %v3402, %v3106
        %v3411 = vmul.f32 %v3396, %v3403
        %v3412 = vadd.f32 %v3410, %v3411
        %v3413 = vtanh.pop %v3412
        %v3414 = vmul.f32 %v3409, %v3413
        %v3415 = vsel %vm3104, 1, 0
        %3416 = vset.pattern.permute.xlu0 0
        %3417 = vperm.xlu0 %3416, %v3415
        %v3418 = vpop.permute.xlu0 %3417
        %vm3419 = vcmp.eq.s32.totalorder %v3418, 1
        %v3420 = vsel %vm3419, %v3414, %v3105
        %v3421 = vsel %vm3419, %v3412, %v3106
        %3422 = vst [vmem:[#allocation2] sm:$0xff] %v3420
        %3423 = vst [vmem:[#allocation3] sm:$0xff] %v3421
        %v3424 = vld [vmem:[%s696] sm:$0xff]
        %v3425 = vld [vmem:[%s698] sm:$0xff]
        %v3426 = vpack.c.bf16 %v3420, %v3420
        %v3427 = vld [vmem:[#allocation9] sm:$0xff]
        %v3428 = vld [vmem:[#allocation9 + $0x8] sm:$0xff]
        %v3429 = vld [vmem:[#allocation9 + $0x10] sm:$0xff]
        %v3430 = vld [vmem:[#allocation9 + $0x18] sm:$0xff]
        %v3431 = vld [vmem:[#allocation9 + $0x20] sm:$0xff]
        %v3432 = vld [vmem:[#allocation9 + $0x28] sm:$0xff]
        %v3433 = vld [vmem:[#allocation9 + $0x30] sm:$0xff]
        %v3434 = vld [vmem:[#allocation9 + $0x38] sm:$0xff]
        %v3435 = vld [vmem:[#allocation9 + $0x40] sm:$0xff]
        %v3436 = vld [vmem:[#allocation9 + $0x48] sm:$0xff]
        %v3437 = vld [vmem:[#allocation9 + $0x50] sm:$0xff]
        %v3438 = vld [vmem:[#allocation9 + $0x58] sm:$0xff]
        %v3439 = vld [vmem:[#allocation9 + $0x60] sm:$0xff]
        %v3440 = vld [vmem:[#allocation9 + $0x68] sm:$0xff]
        %v3441 = vld [vmem:[#allocation9 + $0x70] sm:$0xff]
        %v3442 = vld [vmem:[#allocation9 + $0x78] sm:$0xff]
        %v3443 = vld [vmem:[#allocation9 + $0x80] sm:$0xff]
        %v3444 = vld [vmem:[#allocation9 + $0x88] sm:$0xff]
        %v3445 = vld [vmem:[#allocation9 + $0x90] sm:$0xff]
        %v3446 = vld [vmem:[#allocation9 + $0x98] sm:$0xff]
        %v3447 = vld [vmem:[#allocation9 + $0xa0] sm:$0xff]
        %v3448 = vld [vmem:[#allocation9 + $0xa8] sm:$0xff]
        %v3449 = vld [vmem:[#allocation9 + $0xb0] sm:$0xff]
        %v3450 = vld [vmem:[#allocation9 + $0xb8] sm:$0xff]
        %v3451 = vld [vmem:[#allocation9 + $0xc0] sm:$0xff]
        %v3452 = vld [vmem:[#allocation9 + $0xc8] sm:$0xff]
        %v3453 = vld [vmem:[#allocation9 + $0xd0] sm:$0xff]
        %v3454 = vld [vmem:[#allocation9 + $0xd8] sm:$0xff]
        %v3455 = vld [vmem:[#allocation9 + $0xe0] sm:$0xff]
        %v3456 = vld [vmem:[#allocation9 + $0xe8] sm:$0xff]
        %v3457 = vld [vmem:[#allocation9 + $0xf0] sm:$0xff]
        %v3458 = vld [vmem:[#allocation9 + $0xf8] sm:$0xff]
        %v3459 = vpack.c.bf16 %v3424, %v3424
        %v3460 = vld [vmem:[#allocation10] sm:$0xff]
        %v3461 = vld [vmem:[#allocation10 + $0x8] sm:$0xff]
        %v3462 = vld [vmem:[#allocation10 + $0x10] sm:$0xff]
        %v3463 = vld [vmem:[#allocation10 + $0x18] sm:$0xff]
        %v3464 = vld [vmem:[#allocation10 + $0x20] sm:$0xff]
        %v3465 = vld [vmem:[#allocation10 + $0x28] sm:$0xff]
        %v3466 = vld [vmem:[#allocation10 + $0x30] sm:$0xff]
        %v3467 = vld [vmem:[#allocation10 + $0x38] sm:$0xff]
        %v3468 = vld [vmem:[#allocation10 + $0x40] sm:$0xff]
        %v3469 = vld [vmem:[#allocation10 + $0x48] sm:$0xff]
        %v3470 = vld [vmem:[#allocation10 + $0x50] sm:$0xff]
        %v3471 = vld [vmem:[#allocation10 + $0x58] sm:$0xff]
        %v3472 = vld [vmem:[#allocation10 + $0x60] sm:$0xff]
        %v3473 = vld [vmem:[#allocation10 + $0x68] sm:$0xff]
        %v3474 = vld [vmem:[#allocation10 + $0x70] sm:$0xff]
        %v3475 = vld [vmem:[#allocation10 + $0x78] sm:$0xff]
        %v3476 = vld [vmem:[#allocation10 + $0x80] sm:$0xff]
        %v3477 = vld [vmem:[#allocation10 + $0x88] sm:$0xff]
        %v3478 = vld [vmem:[#allocation10 + $0x90] sm:$0xff]
        %v3479 = vld [vmem:[#allocation10 + $0x98] sm:$0xff]
        %v3480 = vld [vmem:[#allocation10 + $0xa0] sm:$0xff]
        %v3481 = vld [vmem:[#allocation10 + $0xa8] sm:$0xff]
        %v3482 = vld [vmem:[#allocation10 + $0xb0] sm:$0xff]
        %v3483 = vld [vmem:[#allocation10 + $0xb8] sm:$0xff]
        %v3484 = vld [vmem:[#allocation10 + $0xc0] sm:$0xff]
        %v3485 = vld [vmem:[#allocation10 + $0xc8] sm:$0xff]
        %v3486 = vld [vmem:[#allocation10 + $0xd0] sm:$0xff]
        %v3487 = vld [vmem:[#allocation10 + $0xd8] sm:$0xff]
        %v3488 = vld [vmem:[#allocation10 + $0xe0] sm:$0xff]
        %v3489 = vld [vmem:[#allocation10 + $0xe8] sm:$0xff]
        %v3490 = vld [vmem:[#allocation10 + $0xf0] sm:$0xff]
        %v3491 = vld [vmem:[#allocation10 + $0xf8] sm:$0xff]
        %v3524 = vunpack.c.l.b16 %v3460
        %v3525 = vunpack.c.h.b16 %v3460
        %v3526 = vunpack.c.l.b16 %v3461
        %v3527 = vunpack.c.h.b16 %v3461
        %v3528 = vunpack.c.l.b16 %v3462
        %v3529 = vunpack.c.h.b16 %v3462
        %v3530 = vunpack.c.l.b16 %v3463
        %v3531 = vunpack.c.h.b16 %v3463
        %v3532 = vunpack.c.l.b16 %v3464
        %v3533 = vunpack.c.h.b16 %v3464
        %v3534 = vunpack.c.l.b16 %v3465
        %v3535 = vunpack.c.h.b16 %v3465
        %v3536 = vunpack.c.l.b16 %v3466
        %v3537 = vunpack.c.h.b16 %v3466
        %v3538 = vunpack.c.l.b16 %v3467
        %v3539 = vunpack.c.h.b16 %v3467
        %v3540 = vunpack.c.l.b16 %v3468
        %v3541 = vunpack.c.h.b16 %v3468
        %v3542 = vunpack.c.l.b16 %v3469
        %v3543 = vunpack.c.h.b16 %v3469
        %v3544 = vunpack.c.l.b16 %v3470
        %v3545 = vunpack.c.h.b16 %v3470
        %v3546 = vunpack.c.l.b16 %v3471
        %v3547 = vunpack.c.h.b16 %v3471
        %v3548 = vunpack.c.l.b16 %v3472
        %v3549 = vunpack.c.h.b16 %v3472
        %v3550 = vunpack.c.l.b16 %v3473
        %v3551 = vunpack.c.h.b16 %v3473
        %v3552 = vunpack.c.l.b16 %v3474
        %v3553 = vunpack.c.h.b16 %v3474
        %v3554 = vunpack.c.l.b16 %v3475
        %v3555 = vunpack.c.h.b16 %v3475
        %v3556 = vunpack.c.l.b16 %v3476
        %v3557 = vunpack.c.h.b16 %v3476
        %v3558 = vunpack.c.l.b16 %v3477
        %v3559 = vunpack.c.h.b16 %v3477
        %v3560 = vunpack.c.l.b16 %v3478
        %v3561 = vunpack.c.h.b16 %v3478
        %v3562 = vunpack.c.l.b16 %v3479
        %v3563 = vunpack.c.h.b16 %v3479
        %v3564 = vunpack.c.l.b16 %v3480
        %v3565 = vunpack.c.h.b16 %v3480
        %v3566 = vunpack.c.l.b16 %v3481
        %v3567 = vunpack.c.h.b16 %v3481
        %v3568 = vunpack.c.l.b16 %v3482
        %v3569 = vunpack.c.h.b16 %v3482
        %v3570 = vunpack.c.l.b16 %v3483
        %v3571 = vunpack.c.h.b16 %v3483
        %v3572 = vunpack.c.l.b16 %v3484
        %v3573 = vunpack.c.h.b16 %v3484
        %v3574 = vunpack.c.l.b16 %v3485
        %v3575 = vunpack.c.h.b16 %v3485
        %v3576 = vunpack.c.l.b16 %v3486
        %v3577 = vunpack.c.h.b16 %v3486
        %v3578 = vunpack.c.l.b16 %v3487
        %v3579 = vunpack.c.h.b16 %v3487
        %v3580 = vunpack.c.l.b16 %v3488
        %v3581 = vunpack.c.h.b16 %v3488
        %v3582 = vunpack.c.l.b16 %v3489
        %v3583 = vunpack.c.h.b16 %v3489
        %v3584 = vunpack.c.l.b16 %v3490
        %v3585 = vunpack.c.h.b16 %v3490
        %v3586 = vunpack.c.l.b16 %v3491
        %v3587 = vunpack.c.h.b16 %v3491
        %v3588 = vpack.c.b16 %v3528, %v3524
        %v3589 = vpack.c.b16 %v3529, %v3525
        %v3590 = vpack.c.b16 %v3530, %v3526
        %v3591 = vpack.c.b16 %v3531, %v3527
        %v3592 = vpack.c.b16 %v3536, %v3532
        %v3593 = vpack.c.b16 %v3537, %v3533
        %v3594 = vpack.c.b16 %v3538, %v3534
        %v3595 = vpack.c.b16 %v3539, %v3535
        %v3596 = vpack.c.b16 %v3544, %v3540
        %v3597 = vpack.c.b16 %v3545, %v3541
        %v3598 = vpack.c.b16 %v3546, %v3542
        %v3599 = vpack.c.b16 %v3547, %v3543
        %v3600 = vpack.c.b16 %v3552, %v3548
        %v3601 = vpack.c.b16 %v3553, %v3549
        %v3602 = vpack.c.b16 %v3554, %v3550
        %v3603 = vpack.c.b16 %v3555, %v3551
        %v3604 = vpack.c.b16 %v3560, %v3556
        %v3605 = vpack.c.b16 %v3561, %v3557
        %v3606 = vpack.c.b16 %v3562, %v3558
        %v3607 = vpack.c.b16 %v3563, %v3559
        %v3608 = vpack.c.b16 %v3568, %v3564
        %v3609 = vpack.c.b16 %v3569, %v3565
        %v3610 = vpack.c.b16 %v3570, %v3566
        %v3611 = vpack.c.b16 %v3571, %v3567
        %v3612 = vpack.c.b16 %v3576, %v3572
        %v3613 = vpack.c.b16 %v3577, %v3573
        %v3614 = vpack.c.b16 %v3578, %v3574
        %v3615 = vpack.c.b16 %v3579, %v3575
        %v3616 = vpack.c.b16 %v3584, %v3580
        %v3617 = vpack.c.b16 %v3585, %v3581
        %v3618 = vpack.c.b16 %v3586, %v3582
        %v3619 = vpack.c.b16 %v3587, %v3583
        %3652 = vmatprep.subr.bf16.mxu0 %v3617
        %3653 = vmatpush1.bf16.msra.mxu0 %v3616
        %3654 = vmatprep.subr.bf16.mxu0 %v3613
        %3655 = vmatpush1.bf16.msra.mxu0 %v3612
        %3656 = vmatprep.subr.bf16.mxu0 %v3609
        %3657 = vmatpush1.bf16.msra.mxu0 %v3608
        %3658 = vmatprep.subr.bf16.mxu0 %v3605
        %3659 = vmatpush1.bf16.msra.mxu0 %v3604
        %3660 = vmatprep.subr.bf16.mxu0 %v3601
        %3661 = vmatpush1.bf16.msra.mxu0 %v3600
        %3662 = vmatprep.subr.bf16.mxu0 %v3597
        %3663 = vmatpush1.bf16.msra.mxu0 %v3596
        %3664 = vmatprep.subr.bf16.mxu0 %v3593
        %3665 = vmatpush1.bf16.msra.mxu0 %v3592
        %3666 = vmatprep.subr.bf16.mxu0 %v3589
        %3667 = vmatpush1.bf16.msra.mxu0 %v3588
        %3668 = vmatprep.subr.bf16.mxu0 0
        %3669 = vmatpush2.bf16.msra.mxu0 0
        %3670 = vmatprep.subr.bf16.mxu0 0
        %3671 = vmatpush2.bf16.msra.mxu0 0
        %3672 = vmatprep.subr.bf16.mxu0 0
        %3673 = vmatpush2.bf16.msra.mxu0 0
        %3674 = vmatprep.subr.bf16.mxu0 0
        %3675 = vmatpush2.bf16.msra.mxu0 0
        %3676 = vmatprep.subr.bf16.mxu0 0
        %3677 = vmatpush2.bf16.msra.mxu0 0
        %3678 = vmatprep.subr.bf16.mxu0 0
        %3679 = vmatpush2.bf16.msra.mxu0 0
        %3680 = vmatprep.subr.bf16.mxu0 0
        %3681 = vmatpush2.bf16.msra.mxu0 0
        %3682 = vmatprep.subr.bf16.mxu0 0
        %3683 = vmatpush2.bf16.msra.mxu0 0
        %3684 = vmatprep.mubr.bf16.mxu0 0
        %3685 = vmatmul.mubr.bf16.gmra.mxu0 %v3459
        %v3686 = vpop.f32.mrf.mxu0
        %v3687 = vadd.f32 0.0, %v3686
        %v3688 = vpop.f32.mrf.mxu0
        %v3689 = vadd.f32 0.0, %v3688
        %v3690 = vpop.f32.mrf.mxu0
        %v3691 = vpop.f32.mrf.mxu0
        %3692 = vdwg.mxu0
        %3693 = vmatprep.subr.bf16.mxu0 %v3619
        %3694 = vmatpush1.bf16.msra.mxu0 %v3618
        %3695 = vmatprep.subr.bf16.mxu0 %v3615
        %3696 = vmatpush1.bf16.msra.mxu0 %v3614
        %3697 = vmatprep.subr.bf16.mxu0 %v3611
        %3698 = vmatpush1.bf16.msra.mxu0 %v3610
        %3699 = vmatprep.subr.bf16.mxu0 %v3607
        %3700 = vmatpush1.bf16.msra.mxu0 %v3606
        %3701 = vmatprep.subr.bf16.mxu0 %v3603
        %3702 = vmatpush1.bf16.msra.mxu0 %v3602
        %3703 = vmatprep.subr.bf16.mxu0 %v3599
        %3704 = vmatpush1.bf16.msra.mxu0 %v3598
        %3705 = vmatprep.subr.bf16.mxu0 %v3595
        %3706 = vmatpush1.bf16.msra.mxu0 %v3594
        %3707 = vmatprep.subr.bf16.mxu0 %v3591
        %3708 = vmatpush1.bf16.msra.mxu0 %v3590
        %3709 = vmatprep.subr.bf16.mxu0 0
        %3710 = vmatpush2.bf16.msra.mxu0 0
        %3711 = vmatprep.subr.bf16.mxu0 0
        %3712 = vmatpush2.bf16.msra.mxu0 0
        %3713 = vmatprep.subr.bf16.mxu0 0
        %3714 = vmatpush2.bf16.msra.mxu0 0
        %3715 = vmatprep.subr.bf16.mxu0 0
        %3716 = vmatpush2.bf16.msra.mxu0 0
        %3717 = vmatprep.subr.bf16.mxu0 0
        %3718 = vmatpush2.bf16.msra.mxu0 0
        %3719 = vmatprep.subr.bf16.mxu0 0
        %3720 = vmatpush2.bf16.msra.mxu0 0
        %3721 = vmatprep.subr.bf16.mxu0 0
        %3722 = vmatpush2.bf16.msra.mxu0 0
        %3723 = vmatprep.subr.bf16.mxu0 0
        %3724 = vmatpush2.bf16.msra.mxu0 0
        %3725 = vmatprep.mubr.bf16.mxu0 0
        %3726 = vmatmul.mubr.bf16.gmra.mxu0 %v3459
        %v3727 = vpop.f32.mrf.mxu0
        %v3728 = vadd.f32 0.0, %v3727
        %v3729 = vpop.f32.mrf.mxu0
        %v3730 = vadd.f32 0.0, %v3729
        %v3731 = vpop.f32.mrf.mxu0
        %v3732 = vpop.f32.mrf.mxu0
        %3733 = vdwg.mxu0
        %v3766 = vunpack.c.l.b16 %v3427
        %v3767 = vunpack.c.h.b16 %v3427
        %v3768 = vunpack.c.l.b16 %v3428
        %v3769 = vunpack.c.h.b16 %v3428
        %v3770 = vunpack.c.l.b16 %v3429
        %v3771 = vunpack.c.h.b16 %v3429
        %v3772 = vunpack.c.l.b16 %v3430
        %v3773 = vunpack.c.h.b16 %v3430
        %v3774 = vunpack.c.l.b16 %v3431
        %v3775 = vunpack.c.h.b16 %v3431
        %v3776 = vunpack.c.l.b16 %v3432
        %v3777 = vunpack.c.h.b16 %v3432
        %v3778 = vunpack.c.l.b16 %v3433
        %v3779 = vunpack.c.h.b16 %v3433
        %v3780 = vunpack.c.l.b16 %v3434
        %v3781 = vunpack.c.h.b16 %v3434
        %v3782 = vunpack.c.l.b16 %v3435
        %v3783 = vunpack.c.h.b16 %v3435
        %v3784 = vunpack.c.l.b16 %v3436
        %v3785 = vunpack.c.h.b16 %v3436
        %v3786 = vunpack.c.l.b16 %v3437
        %v3787 = vunpack.c.h.b16 %v3437
        %v3788 = vunpack.c.l.b16 %v3438
        %v3789 = vunpack.c.h.b16 %v3438
        %v3790 = vunpack.c.l.b16 %v3439
        %v3791 = vunpack.c.h.b16 %v3439
        %v3792 = vunpack.c.l.b16 %v3440
        %v3793 = vunpack.c.h.b16 %v3440
        %v3794 = vunpack.c.l.b16 %v3441
        %v3795 = vunpack.c.h.b16 %v3441
        %v3796 = vunpack.c.l.b16 %v3442
        %v3797 = vunpack.c.h.b16 %v3442
        %v3798 = vunpack.c.l.b16 %v3443
        %v3799 = vunpack.c.h.b16 %v3443
        %v3800 = vunpack.c.l.b16 %v3444
        %v3801 = vunpack.c.h.b16 %v3444
        %v3802 = vunpack.c.l.b16 %v3445
        %v3803 = vunpack.c.h.b16 %v3445
        %v3804 = vunpack.c.l.b16 %v3446
        %v3805 = vunpack.c.h.b16 %v3446
        %v3806 = vunpack.c.l.b16 %v3447
        %v3807 = vunpack.c.h.b16 %v3447
        %v3808 = vunpack.c.l.b16 %v3448
        %v3809 = vunpack.c.h.b16 %v3448
        %v3810 = vunpack.c.l.b16 %v3449
        %v3811 = vunpack.c.h.b16 %v3449
        %v3812 = vunpack.c.l.b16 %v3450
        %v3813 = vunpack.c.h.b16 %v3450
        %v3814 = vunpack.c.l.b16 %v3451
        %v3815 = vunpack.c.h.b16 %v3451
        %v3816 = vunpack.c.l.b16 %v3452
        %v3817 = vunpack.c.h.b16 %v3452
        %v3818 = vunpack.c.l.b16 %v3453
        %v3819 = vunpack.c.h.b16 %v3453
        %v3820 = vunpack.c.l.b16 %v3454
        %v3821 = vunpack.c.h.b16 %v3454
        %v3822 = vunpack.c.l.b16 %v3455
        %v3823 = vunpack.c.h.b16 %v3455
        %v3824 = vunpack.c.l.b16 %v3456
        %v3825 = vunpack.c.h.b16 %v3456
        %v3826 = vunpack.c.l.b16 %v3457
        %v3827 = vunpack.c.h.b16 %v3457
        %v3828 = vunpack.c.l.b16 %v3458
        %v3829 = vunpack.c.h.b16 %v3458
        %v3830 = vpack.c.b16 %v3770, %v3766
        %v3831 = vpack.c.b16 %v3771, %v3767
        %v3832 = vpack.c.b16 %v3772, %v3768
        %v3833 = vpack.c.b16 %v3773, %v3769
        %v3834 = vpack.c.b16 %v3778, %v3774
        %v3835 = vpack.c.b16 %v3779, %v3775
        %v3836 = vpack.c.b16 %v3780, %v3776
        %v3837 = vpack.c.b16 %v3781, %v3777
        %v3838 = vpack.c.b16 %v3786, %v3782
        %v3839 = vpack.c.b16 %v3787, %v3783
        %v3840 = vpack.c.b16 %v3788, %v3784
        %v3841 = vpack.c.b16 %v3789, %v3785
        %v3842 = vpack.c.b16 %v3794, %v3790
        %v3843 = vpack.c.b16 %v3795, %v3791
        %v3844 = vpack.c.b16 %v3796, %v3792
        %v3845 = vpack.c.b16 %v3797, %v3793
        %v3846 = vpack.c.b16 %v3802, %v3798
        %v3847 = vpack.c.b16 %v3803, %v3799
        %v3848 = vpack.c.b16 %v3804, %v3800
        %v3849 = vpack.c.b16 %v3805, %v3801
        %v3850 = vpack.c.b16 %v3810, %v3806
        %v3851 = vpack.c.b16 %v3811, %v3807
        %v3852 = vpack.c.b16 %v3812, %v3808
        %v3853 = vpack.c.b16 %v3813, %v3809
        %v3854 = vpack.c.b16 %v3818, %v3814
        %v3855 = vpack.c.b16 %v3819, %v3815
        %v3856 = vpack.c.b16 %v3820, %v3816
        %v3857 = vpack.c.b16 %v3821, %v3817
        %v3858 = vpack.c.b16 %v3826, %v3822
        %v3859 = vpack.c.b16 %v3827, %v3823
        %v3860 = vpack.c.b16 %v3828, %v3824
        %v3861 = vpack.c.b16 %v3829, %v3825
        %3894 = vmatprep.subr.bf16.mxu0 %v3859
        %3895 = vmatpush1.bf16.msra.mxu0 %v3858
        %3896 = vmatprep.subr.bf16.mxu0 %v3855
        %3897 = vmatpush1.bf16.msra.mxu0 %v3854
        %3898 = vmatprep.subr.bf16.mxu0 %v3851
        %3899 = vmatpush1.bf16.msra.mxu0 %v3850
        %3900 = vmatprep.subr.bf16.mxu0 %v3847
        %3901 = vmatpush1.bf16.msra.mxu0 %v3846
        %3902 = vmatprep.subr.bf16.mxu0 %v3843
        %3903 = vmatpush1.bf16.msra.mxu0 %v3842
        %3904 = vmatprep.subr.bf16.mxu0 %v3839
        %3905 = vmatpush1.bf16.msra.mxu0 %v3838
        %3906 = vmatprep.subr.bf16.mxu0 %v3835
        %3907 = vmatpush1.bf16.msra.mxu0 %v3834
        %3908 = vmatprep.subr.bf16.mxu0 %v3831
        %3909 = vmatpush1.bf16.msra.mxu0 %v3830
        %3910 = vmatprep.subr.bf16.mxu0 0
        %3911 = vmatpush2.bf16.msra.mxu0 0
        %3912 = vmatprep.subr.bf16.mxu0 0
        %3913 = vmatpush2.bf16.msra.mxu0 0
        %3914 = vmatprep.subr.bf16.mxu0 0
        %3915 = vmatpush2.bf16.msra.mxu0 0
        %3916 = vmatprep.subr.bf16.mxu0 0
        %3917 = vmatpush2.bf16.msra.mxu0 0
        %3918 = vmatprep.subr.bf16.mxu0 0
        %3919 = vmatpush2.bf16.msra.mxu0 0
        %3920 = vmatprep.subr.bf16.mxu0 0
        %3921 = vmatpush2.bf16.msra.mxu0 0
        %3922 = vmatprep.subr.bf16.mxu0 0
        %3923 = vmatpush2.bf16.msra.mxu0 0
        %3924 = vmatprep.subr.bf16.mxu0 0
        %3925 = vmatpush2.bf16.msra.mxu0 0
        %3926 = vmatprep.mubr.bf16.mxu0 0
        %3927 = vmatmul.mubr.bf16.gmra.mxu0 %v3426
        %v3928 = vpop.f32.mrf.mxu0
        %v3929 = vadd.f32 %v3687, %v3928
        %v3930 = vpop.f32.mrf.mxu0
        %v3931 = vadd.f32 %v3689, %v3930
        %v3932 = vpop.f32.mrf.mxu0
        %v3933 = vpop.f32.mrf.mxu0
        %3934 = vdwg.mxu0
        %3935 = vmatprep.subr.bf16.mxu0 %v3861
        %3936 = vmatpush1.bf16.msra.mxu0 %v3860
        %3937 = vmatprep.subr.bf16.mxu0 %v3857
        %3938 = vmatpush1.bf16.msra.mxu0 %v3856
        %3939 = vmatprep.subr.bf16.mxu0 %v3853
        %3940 = vmatpush1.bf16.msra.mxu0 %v3852
        %3941 = vmatprep.subr.bf16.mxu0 %v3849
        %3942 = vmatpush1.bf16.msra.mxu0 %v3848
        %3943 = vmatprep.subr.bf16.mxu0 %v3845
        %3944 = vmatpush1.bf16.msra.mxu0 %v3844
        %3945 = vmatprep.subr.bf16.mxu0 %v3841
        %3946 = vmatpush1.bf16.msra.mxu0 %v3840
        %3947 = vmatprep.subr.bf16.mxu0 %v3837
        %3948 = vmatpush1.bf16.msra.mxu0 %v3836
        %3949 = vmatprep.subr.bf16.mxu0 %v3833
        %3950 = vmatpush1.bf16.msra.mxu0 %v3832
        %3951 = vmatprep.subr.bf16.mxu0 0
        %3952 = vmatpush2.bf16.msra.mxu0 0
        %3953 = vmatprep.subr.bf16.mxu0 0
        %3954 = vmatpush2.bf16.msra.mxu0 0
        %3955 = vmatprep.subr.bf16.mxu0 0
        %3956 = vmatpush2.bf16.msra.mxu0 0
        %3957 = vmatprep.subr.bf16.mxu0 0
        %3958 = vmatpush2.bf16.msra.mxu0 0
        %3959 = vmatprep.subr.bf16.mxu0 0
        %3960 = vmatpush2.bf16.msra.mxu0 0
        %3961 = vmatprep.subr.bf16.mxu0 0
        %3962 = vmatpush2.bf16.msra.mxu0 0
        %3963 = vmatprep.subr.bf16.mxu0 0
        %3964 = vmatpush2.bf16.msra.mxu0 0
        %3965 = vmatprep.subr.bf16.mxu0 0
        %3966 = vmatpush2.bf16.msra.mxu0 0
        %3967 = vmatprep.mubr.bf16.mxu0 0
        %3968 = vmatmul.mubr.bf16.gmra.mxu0 %v3426
        %v3969 = vpop.f32.mrf.mxu0
        %v3970 = vadd.f32 %v3728, %v3969
        %v3971 = vpop.f32.mrf.mxu0
        %v3972 = vadd.f32 %v3730, %v3971
        %v3973 = vpop.f32.mrf.mxu0
        %v3974 = vpop.f32.mrf.mxu0
        %3975 = vdwg.mxu0
        %v3976 = vadd.f32 %v3929, %v358
        %v3977 = vadd.f32 %v3931, %v362
        %v3978 = vadd.f32 %v3970, %v366
        %v3979 = vadd.f32 %v3972, %v370
        %v3980 = vxor.u32 %v3976, 2147483648
        %v3981 = vmul.f32 %v3980, 1.442695
        %v3982 = vpow.pop %v3981
        %v3983 = vadd.f32 %v3982, 1.0
        %v3984 = vrcp.pop %v3983
        %v3985 = vmul.f32 1.0, %v3984
        %v3986 = vxor.u32 %v3977, 2147483648
        %v3987 = vmul.f32 %v3986, 1.442695
        %v3988 = vpow.pop %v3987
        %v3989 = vadd.f32 %v3988, 1.0
        %v3990 = vrcp.pop %v3989
        %v3991 = vmul.f32 1.0, %v3990
        %v3992 = vtanh.pop %v3978
        %v3993 = vxor.u32 %v3979, 2147483648
        %v3994 = vmul.f32 %v3993, 1.442695
        %v3995 = vpow.pop %v3994
        %v3996 = vadd.f32 %v3995, 1.0
        %v3997 = vrcp.pop %v3996
        %v3998 = vmul.f32 1.0, %v3997
        %v3999 = vmul.f32 %v3991, %v3425
        %v4000 = vmul.f32 %v3985, %v3992
        %v4001 = vadd.f32 %v3999, %v4000
        %v4002 = vtanh.pop %v4001
        %v4003 = vmul.f32 %v3998, %v4002
        %v4004 = vsel %vm3419, %v4003, %v3424
        %v4005 = vsel %vm3419, %v4001, %v3425
        %4006 = vst [vmem:[%s696] sm:$0xff] %v4004
        %4007 = vst [vmem:[%s698] sm:$0xff] %v4005
        %v4008 = vsel %vm3419, %v4003, 0.0
        %s4009 = scalar_lea.vmem %s338, 24 [#allocation12]
        %4010 = vst [vmem:[%s4009] sm:$0xff] %v4008
        %s4011 = sadd.s32 %s375, 4
        %v4012 = vstv %s4011
        %vm4013 = vcmp.gt.s32.totalorder %v352, %v4012
        %v4014 = vld [vmem:[#allocation2] sm:$0xff]
        %v4015 = vld [vmem:[#allocation3] sm:$0xff]
        %s4016 = scalar_lea.vmem %s298, 128 [#allocation4]
        %v4017 = vld [vmem:[%s4016] sm:$0xff]
        %v4018 = vld [vmem:[%s4016 + $0x8] sm:$0xff]
        %v4019 = vld [vmem:[%s4016 + $0x10] sm:$0xff]
        %v4020 = vld [vmem:[%s4016 + $0x18] sm:$0xff]
        %v4021 = vpack.c.bf16 %v4014, %v4014
        %v4022 = vld [vmem:[#allocation7] sm:$0xff]
        %v4023 = vld [vmem:[#allocation7 + $0x8] sm:$0xff]
        %v4024 = vld [vmem:[#allocation7 + $0x10] sm:$0xff]
        %v4025 = vld [vmem:[#allocation7 + $0x18] sm:$0xff]
        %v4026 = vld [vmem:[#allocation7 + $0x20] sm:$0xff]
        %v4027 = vld [vmem:[#allocation7 + $0x28] sm:$0xff]
        %v4028 = vld [vmem:[#allocation7 + $0x30] sm:$0xff]
        %v4029 = vld [vmem:[#allocation7 + $0x38] sm:$0xff]
        %v4030 = vld [vmem:[#allocation7 + $0x40] sm:$0xff]
        %v4031 = vld [vmem:[#allocation7 + $0x48] sm:$0xff]
        %v4032 = vld [vmem:[#allocation7 + $0x50] sm:$0xff]
        %v4033 = vld [vmem:[#allocation7 + $0x58] sm:$0xff]
        %v4034 = vld [vmem:[#allocation7 + $0x60] sm:$0xff]
        %v4035 = vld [vmem:[#allocation7 + $0x68] sm:$0xff]
        %v4036 = vld [vmem:[#allocation7 + $0x70] sm:$0xff]
        %v4037 = vld [vmem:[#allocation7 + $0x78] sm:$0xff]
        %v4038 = vld [vmem:[#allocation7 + $0x80] sm:$0xff]
        %v4039 = vld [vmem:[#allocation7 + $0x88] sm:$0xff]
        %v4040 = vld [vmem:[#allocation7 + $0x90] sm:$0xff]
        %v4041 = vld [vmem:[#allocation7 + $0x98] sm:$0xff]
        %v4042 = vld [vmem:[#allocation7 + $0xa0] sm:$0xff]
        %v4043 = vld [vmem:[#allocation7 + $0xa8] sm:$0xff]
        %v4044 = vld [vmem:[#allocation7 + $0xb0] sm:$0xff]
        %v4045 = vld [vmem:[#allocation7 + $0xb8] sm:$0xff]
        %v4046 = vld [vmem:[#allocation7 + $0xc0] sm:$0xff]
        %v4047 = vld [vmem:[#allocation7 + $0xc8] sm:$0xff]
        %v4048 = vld [vmem:[#allocation7 + $0xd0] sm:$0xff]
        %v4049 = vld [vmem:[#allocation7 + $0xd8] sm:$0xff]
        %v4050 = vld [vmem:[#allocation7 + $0xe0] sm:$0xff]
        %v4051 = vld [vmem:[#allocation7 + $0xe8] sm:$0xff]
        %v4052 = vld [vmem:[#allocation7 + $0xf0] sm:$0xff]
        %v4053 = vld [vmem:[#allocation7 + $0xf8] sm:$0xff]
        %v4086 = vunpack.c.l.b16 %v4022
        %v4087 = vunpack.c.h.b16 %v4022
        %v4088 = vunpack.c.l.b16 %v4023
        %v4089 = vunpack.c.h.b16 %v4023
        %v4090 = vunpack.c.l.b16 %v4024
        %v4091 = vunpack.c.h.b16 %v4024
        %v4092 = vunpack.c.l.b16 %v4025
        %v4093 = vunpack.c.h.b16 %v4025
        %v4094 = vunpack.c.l.b16 %v4026
        %v4095 = vunpack.c.h.b16 %v4026
        %v4096 = vunpack.c.l.b16 %v4027
        %v4097 = vunpack.c.h.b16 %v4027
        %v4098 = vunpack.c.l.b16 %v4028
        %v4099 = vunpack.c.h.b16 %v4028
        %v4100 = vunpack.c.l.b16 %v4029
        %v4101 = vunpack.c.h.b16 %v4029
        %v4102 = vunpack.c.l.b16 %v4030
        %v4103 = vunpack.c.h.b16 %v4030
        %v4104 = vunpack.c.l.b16 %v4031
        %v4105 = vunpack.c.h.b16 %v4031
        %v4106 = vunpack.c.l.b16 %v4032
        %v4107 = vunpack.c.h.b16 %v4032
        %v4108 = vunpack.c.l.b16 %v4033
        %v4109 = vunpack.c.h.b16 %v4033
        %v4110 = vunpack.c.l.b16 %v4034
        %v4111 = vunpack.c.h.b16 %v4034
        %v4112 = vunpack.c.l.b16 %v4035
        %v4113 = vunpack.c.h.b16 %v4035
        %v4114 = vunpack.c.l.b16 %v4036
        %v4115 = vunpack.c.h.b16 %v4036
        %v4116 = vunpack.c.l.b16 %v4037
        %v4117 = vunpack.c.h.b16 %v4037
        %v4118 = vunpack.c.l.b16 %v4038
        %v4119 = vunpack.c.h.b16 %v4038
        %v4120 = vunpack.c.l.b16 %v4039
        %v4121 = vunpack.c.h.b16 %v4039
        %v4122 = vunpack.c.l.b16 %v4040
        %v4123 = vunpack.c.h.b16 %v4040
        %v4124 = vunpack.c.l.b16 %v4041
        %v4125 = vunpack.c.h.b16 %v4041
        %v4126 = vunpack.c.l.b16 %v4042
        %v4127 = vunpack.c.h.b16 %v4042
        %v4128 = vunpack.c.l.b16 %v4043
        %v4129 = vunpack.c.h.b16 %v4043
        %v4130 = vunpack.c.l.b16 %v4044
        %v4131 = vunpack.c.h.b16 %v4044
        %v4132 = vunpack.c.l.b16 %v4045
        %v4133 = vunpack.c.h.b16 %v4045
        %v4134 = vunpack.c.l.b16 %v4046
        %v4135 = vunpack.c.h.b16 %v4046
        %v4136 = vunpack.c.l.b16 %v4047
        %v4137 = vunpack.c.h.b16 %v4047
        %v4138 = vunpack.c.l.b16 %v4048
        %v4139 = vunpack.c.h.b16 %v4048
        %v4140 = vunpack.c.l.b16 %v4049
        %v4141 = vunpack.c.h.b16 %v4049
        %v4142 = vunpack.c.l.b16 %v4050
        %v4143 = vunpack.c.h.b16 %v4050
        %v4144 = vunpack.c.l.b16 %v4051
        %v4145 = vunpack.c.h.b16 %v4051
        %v4146 = vunpack.c.l.b16 %v4052
        %v4147 = vunpack.c.h.b16 %v4052
        %v4148 = vunpack.c.l.b16 %v4053
        %v4149 = vunpack.c.h.b16 %v4053
        %v4150 = vpack.c.b16 %v4090, %v4086
        %v4151 = vpack.c.b16 %v4091, %v4087
        %v4152 = vpack.c.b16 %v4092, %v4088
        %v4153 = vpack.c.b16 %v4093, %v4089
        %v4154 = vpack.c.b16 %v4098, %v4094
        %v4155 = vpack.c.b16 %v4099, %v4095
        %v4156 = vpack.c.b16 %v4100, %v4096
        %v4157 = vpack.c.b16 %v4101, %v4097
        %v4158 = vpack.c.b16 %v4106, %v4102
        %v4159 = vpack.c.b16 %v4107, %v4103
        %v4160 = vpack.c.b16 %v4108, %v4104
        %v4161 = vpack.c.b16 %v4109, %v4105
        %v4162 = vpack.c.b16 %v4114, %v4110
        %v4163 = vpack.c.b16 %v4115, %v4111
        %v4164 = vpack.c.b16 %v4116, %v4112
        %v4165 = vpack.c.b16 %v4117, %v4113
        %v4166 = vpack.c.b16 %v4122, %v4118
        %v4167 = vpack.c.b16 %v4123, %v4119
        %v4168 = vpack.c.b16 %v4124, %v4120
        %v4169 = vpack.c.b16 %v4125, %v4121
        %v4170 = vpack.c.b16 %v4130, %v4126
        %v4171 = vpack.c.b16 %v4131, %v4127
        %v4172 = vpack.c.b16 %v4132, %v4128
        %v4173 = vpack.c.b16 %v4133, %v4129
        %v4174 = vpack.c.b16 %v4138, %v4134
        %v4175 = vpack.c.b16 %v4139, %v4135
        %v4176 = vpack.c.b16 %v4140, %v4136
        %v4177 = vpack.c.b16 %v4141, %v4137
        %v4178 = vpack.c.b16 %v4146, %v4142
        %v4179 = vpack.c.b16 %v4147, %v4143
        %v4180 = vpack.c.b16 %v4148, %v4144
        %v4181 = vpack.c.b16 %v4149, %v4145
        %4214 = vmatprep.subr.bf16.mxu0 %v4179
        %4215 = vmatpush1.bf16.msra.mxu0 %v4178
        %4216 = vmatprep.subr.bf16.mxu0 %v4175
        %4217 = vmatpush1.bf16.msra.mxu0 %v4174
        %4218 = vmatprep.subr.bf16.mxu0 %v4171
        %4219 = vmatpush1.bf16.msra.mxu0 %v4170
        %4220 = vmatprep.subr.bf16.mxu0 %v4167
        %4221 = vmatpush1.bf16.msra.mxu0 %v4166
        %4222 = vmatprep.subr.bf16.mxu0 %v4163
        %4223 = vmatpush1.bf16.msra.mxu0 %v4162
        %4224 = vmatprep.subr.bf16.mxu0 %v4159
        %4225 = vmatpush1.bf16.msra.mxu0 %v4158
        %4226 = vmatprep.subr.bf16.mxu0 %v4155
        %4227 = vmatpush1.bf16.msra.mxu0 %v4154
        %4228 = vmatprep.subr.bf16.mxu0 %v4151
        %4229 = vmatpush1.bf16.msra.mxu0 %v4150
        %4230 = vmatprep.subr.bf16.mxu0 0
        %4231 = vmatpush2.bf16.msra.mxu0 0
        %4232 = vmatprep.subr.bf16.mxu0 0
        %4233 = vmatpush2.bf16.msra.mxu0 0
        %4234 = vmatprep.subr.bf16.mxu0 0
        %4235 = vmatpush2.bf16.msra.mxu0 0
        %4236 = vmatprep.subr.bf16.mxu0 0
        %4237 = vmatpush2.bf16.msra.mxu0 0
        %4238 = vmatprep.subr.bf16.mxu0 0
        %4239 = vmatpush2.bf16.msra.mxu0 0
        %4240 = vmatprep.subr.bf16.mxu0 0
        %4241 = vmatpush2.bf16.msra.mxu0 0
        %4242 = vmatprep.subr.bf16.mxu0 0
        %4243 = vmatpush2.bf16.msra.mxu0 0
        %4244 = vmatprep.subr.bf16.mxu0 0
        %4245 = vmatpush2.bf16.msra.mxu0 0
        %4246 = vmatprep.mubr.bf16.mxu0 0
        %4247 = vmatmul.mubr.bf16.gmra.mxu0 %v4021
        %v4248 = vpop.f32.mrf.mxu0
        %v4249 = vadd.f32 0.0, %v4248
        %v4250 = vpop.f32.mrf.mxu0
        %v4251 = vadd.f32 0.0, %v4250
        %v4252 = vpop.f32.mrf.mxu0
        %v4253 = vpop.f32.mrf.mxu0
        %4254 = vdwg.mxu0
        %4255 = vmatprep.subr.bf16.mxu0 %v4181
        %4256 = vmatpush1.bf16.msra.mxu0 %v4180
        %4257 = vmatprep.subr.bf16.mxu0 %v4177
        %4258 = vmatpush1.bf16.msra.mxu0 %v4176
        %4259 = vmatprep.subr.bf16.mxu0 %v4173
        %4260 = vmatpush1.bf16.msra.mxu0 %v4172
        %4261 = vmatprep.subr.bf16.mxu0 %v4169
        %4262 = vmatpush1.bf16.msra.mxu0 %v4168
        %4263 = vmatprep.subr.bf16.mxu0 %v4165
        %4264 = vmatpush1.bf16.msra.mxu0 %v4164
        %4265 = vmatprep.subr.bf16.mxu0 %v4161
        %4266 = vmatpush1.bf16.msra.mxu0 %v4160
        %4267 = vmatprep.subr.bf16.mxu0 %v4157
        %4268 = vmatpush1.bf16.msra.mxu0 %v4156
        %4269 = vmatprep.subr.bf16.mxu0 %v4153
        %4270 = vmatpush1.bf16.msra.mxu0 %v4152
        %4271 = vmatprep.subr.bf16.mxu0 0
        %4272 = vmatpush2.bf16.msra.mxu0 0
        %4273 = vmatprep.subr.bf16.mxu0 0
        %4274 = vmatpush2.bf16.msra.mxu0 0
        %4275 = vmatprep.subr.bf16.mxu0 0
        %4276 = vmatpush2.bf16.msra.mxu0 0
        %4277 = vmatprep.subr.bf16.mxu0 0
        %4278 = vmatpush2.bf16.msra.mxu0 0
        %4279 = vmatprep.subr.bf16.mxu0 0
        %4280 = vmatpush2.bf16.msra.mxu0 0
        %4281 = vmatprep.subr.bf16.mxu0 0
        %4282 = vmatpush2.bf16.msra.mxu0 0
        %4283 = vmatprep.subr.bf16.mxu0 0
        %4284 = vmatpush2.bf16.msra.mxu0 0
        %4285 = vmatprep.subr.bf16.mxu0 0
        %4286 = vmatpush2.bf16.msra.mxu0 0
        %4287 = vmatprep.mubr.bf16.mxu0 0
        %4288 = vmatmul.mubr.bf16.gmra.mxu0 %v4021
        %v4289 = vpop.f32.mrf.mxu0
        %v4290 = vadd.f32 0.0, %v4289
        %v4291 = vpop.f32.mrf.mxu0
        %v4292 = vadd.f32 0.0, %v4291
        %v4293 = vpop.f32.mrf.mxu0
        %v4294 = vpop.f32.mrf.mxu0
        %4295 = vdwg.mxu0
        %v4296 = vadd.f32 %v4017, %v4249
        %v4297 = vadd.f32 %v4018, %v4251
        %v4298 = vadd.f32 %v4019, %v4290
        %v4299 = vadd.f32 %v4020, %v4292
        %v4300 = vxor.u32 %v4296, 2147483648
        %v4301 = vmul.f32 %v4300, 1.442695
        %v4302 = vpow.pop %v4301
        %v4303 = vadd.f32 %v4302, 1.0
        %v4304 = vrcp.pop %v4303
        %v4305 = vmul.f32 1.0, %v4304
        %v4306 = vxor.u32 %v4297, 2147483648
        %v4307 = vmul.f32 %v4306, 1.442695
        %v4308 = vpow.pop %v4307
        %v4309 = vadd.f32 %v4308, 1.0
        %v4310 = vrcp.pop %v4309
        %v4311 = vmul.f32 1.0, %v4310
        %v4312 = vtanh.pop %v4298
        %v4313 = vxor.u32 %v4299, 2147483648
        %v4314 = vmul.f32 %v4313, 1.442695
        %v4315 = vpow.pop %v4314
        %v4316 = vadd.f32 %v4315, 1.0
        %v4317 = vrcp.pop %v4316
        %v4318 = vmul.f32 1.0, %v4317
        %v4319 = vmul.f32 %v4311, %v4015
        %v4320 = vmul.f32 %v4305, %v4312
        %v4321 = vadd.f32 %v4319, %v4320
        %v4322 = vtanh.pop %v4321
        %v4323 = vmul.f32 %v4318, %v4322
        %v4324 = vsel %vm4013, 1, 0
        %4325 = vset.pattern.permute.xlu0 0
        %4326 = vperm.xlu0 %4325, %v4324
        %v4327 = vpop.permute.xlu0 %4326
        %vm4328 = vcmp.eq.s32.totalorder %v4327, 1
        %v4329 = vsel %vm4328, %v4323, %v4014
        %v4330 = vsel %vm4328, %v4321, %v4015
        %4331 = vst [vmem:[#allocation2] sm:$0xff] %v4329
        %4332 = vst [vmem:[#allocation3] sm:$0xff] %v4330
        %v4333 = vld [vmem:[%s696] sm:$0xff]
        %v4334 = vld [vmem:[%s698] sm:$0xff]
        %v4335 = vpack.c.bf16 %v4329, %v4329
        %v4336 = vld [vmem:[#allocation9] sm:$0xff]
        %v4337 = vld [vmem:[#allocation9 + $0x8] sm:$0xff]
        %v4338 = vld [vmem:[#allocation9 + $0x10] sm:$0xff]
        %v4339 = vld [vmem:[#allocation9 + $0x18] sm:$0xff]
        %v4340 = vld [vmem:[#allocation9 + $0x20] sm:$0xff]
        %v4341 = vld [vmem:[#allocation9 + $0x28] sm:$0xff]
        %v4342 = vld [vmem:[#allocation9 + $0x30] sm:$0xff]
        %v4343 = vld [vmem:[#allocation9 + $0x38] sm:$0xff]
        %v4344 = vld [vmem:[#allocation9 + $0x40] sm:$0xff]
        %v4345 = vld [vmem:[#allocation9 + $0x48] sm:$0xff]
        %v4346 = vld [vmem:[#allocation9 + $0x50] sm:$0xff]
        %v4347 = vld [vmem:[#allocation9 + $0x58] sm:$0xff]
        %v4348 = vld [vmem:[#allocation9 + $0x60] sm:$0xff]
        %v4349 = vld [vmem:[#allocation9 + $0x68] sm:$0xff]
        %v4350 = vld [vmem:[#allocation9 + $0x70] sm:$0xff]
        %v4351 = vld [vmem:[#allocation9 + $0x78] sm:$0xff]
        %v4352 = vld [vmem:[#allocation9 + $0x80] sm:$0xff]
        %v4353 = vld [vmem:[#allocation9 + $0x88] sm:$0xff]
        %v4354 = vld [vmem:[#allocation9 + $0x90] sm:$0xff]
        %v4355 = vld [vmem:[#allocation9 + $0x98] sm:$0xff]
        %v4356 = vld [vmem:[#allocation9 + $0xa0] sm:$0xff]
        %v4357 = vld [vmem:[#allocation9 + $0xa8] sm:$0xff]
        %v4358 = vld [vmem:[#allocation9 + $0xb0] sm:$0xff]
        %v4359 = vld [vmem:[#allocation9 + $0xb8] sm:$0xff]
        %v4360 = vld [vmem:[#allocation9 + $0xc0] sm:$0xff]
        %v4361 = vld [vmem:[#allocation9 + $0xc8] sm:$0xff]
        %v4362 = vld [vmem:[#allocation9 + $0xd0] sm:$0xff]
        %v4363 = vld [vmem:[#allocation9 + $0xd8] sm:$0xff]
        %v4364 = vld [vmem:[#allocation9 + $0xe0] sm:$0xff]
        %v4365 = vld [vmem:[#allocation9 + $0xe8] sm:$0xff]
        %v4366 = vld [vmem:[#allocation9 + $0xf0] sm:$0xff]
        %v4367 = vld [vmem:[#allocation9 + $0xf8] sm:$0xff]
        %v4368 = vpack.c.bf16 %v4333, %v4333
        %v4369 = vld [vmem:[#allocation10] sm:$0xff]
        %v4370 = vld [vmem:[#allocation10 + $0x8] sm:$0xff]
        %v4371 = vld [vmem:[#allocation10 + $0x10] sm:$0xff]
        %v4372 = vld [vmem:[#allocation10 + $0x18] sm:$0xff]
        %v4373 = vld [vmem:[#allocation10 + $0x20] sm:$0xff]
        %v4374 = vld [vmem:[#allocation10 + $0x28] sm:$0xff]
        %v4375 = vld [vmem:[#allocation10 + $0x30] sm:$0xff]
        %v4376 = vld [vmem:[#allocation10 + $0x38] sm:$0xff]
        %v4377 = vld [vmem:[#allocation10 + $0x40] sm:$0xff]
        %v4378 = vld [vmem:[#allocation10 + $0x48] sm:$0xff]
        %v4379 = vld [vmem:[#allocation10 + $0x50] sm:$0xff]
        %v4380 = vld [vmem:[#allocation10 + $0x58] sm:$0xff]
        %v4381 = vld [vmem:[#allocation10 + $0x60] sm:$0xff]
        %v4382 = vld [vmem:[#allocation10 + $0x68] sm:$0xff]
        %v4383 = vld [vmem:[#allocation10 + $0x70] sm:$0xff]
        %v4384 = vld [vmem:[#allocation10 + $0x78] sm:$0xff]
        %v4385 = vld [vmem:[#allocation10 + $0x80] sm:$0xff]
        %v4386 = vld [vmem:[#allocation10 + $0x88] sm:$0xff]
        %v4387 = vld [vmem:[#allocation10 + $0x90] sm:$0xff]
        %v4388 = vld [vmem:[#allocation10 + $0x98] sm:$0xff]
        %v4389 = vld [vmem:[#allocation10 + $0xa0] sm:$0xff]
        %v4390 = vld [vmem:[#allocation10 + $0xa8] sm:$0xff]
        %v4391 = vld [vmem:[#allocation10 + $0xb0] sm:$0xff]
        %v4392 = vld [vmem:[#allocation10 + $0xb8] sm:$0xff]
        %v4393 = vld [vmem:[#allocation10 + $0xc0] sm:$0xff]
        %v4394 = vld [vmem:[#allocation10 + $0xc8] sm:$0xff]
        %v4395 = vld [vmem:[#allocation10 + $0xd0] sm:$0xff]
        %v4396 = vld [vmem:[#allocation10 + $0xd8] sm:$0xff]
        %v4397 = vld [vmem:[#allocation10 + $0xe0] sm:$0xff]
        %v4398 = vld [vmem:[#allocation10 + $0xe8] sm:$0xff]
        %v4399 = vld [vmem:[#allocation10 + $0xf0] sm:$0xff]
        %v4400 = vld [vmem:[#allocation10 + $0xf8] sm:$0xff]
        %v4433 = vunpack.c.l.b16 %v4369
        %v4434 = vunpack.c.h.b16 %v4369
        %v4435 = vunpack.c.l.b16 %v4370
        %v4436 = vunpack.c.h.b16 %v4370
        %v4437 = vunpack.c.l.b16 %v4371
        %v4438 = vunpack.c.h.b16 %v4371
        %v4439 = vunpack.c.l.b16 %v4372
        %v4440 = vunpack.c.h.b16 %v4372
        %v4441 = vunpack.c.l.b16 %v4373
        %v4442 = vunpack.c.h.b16 %v4373
        %v4443 = vunpack.c.l.b16 %v4374
        %v4444 = vunpack.c.h.b16 %v4374
        %v4445 = vunpack.c.l.b16 %v4375
        %v4446 = vunpack.c.h.b16 %v4375
        %v4447 = vunpack.c.l.b16 %v4376
        %v4448 = vunpack.c.h.b16 %v4376
        %v4449 = vunpack.c.l.b16 %v4377
        %v4450 = vunpack.c.h.b16 %v4377
        %v4451 = vunpack.c.l.b16 %v4378
        %v4452 = vunpack.c.h.b16 %v4378
        %v4453 = vunpack.c.l.b16 %v4379
        %v4454 = vunpack.c.h.b16 %v4379
        %v4455 = vunpack.c.l.b16 %v4380
        %v4456 = vunpack.c.h.b16 %v4380
        %v4457 = vunpack.c.l.b16 %v4381
        %v4458 = vunpack.c.h.b16 %v4381
        %v4459 = vunpack.c.l.b16 %v4382
        %v4460 = vunpack.c.h.b16 %v4382
        %v4461 = vunpack.c.l.b16 %v4383
        %v4462 = vunpack.c.h.b16 %v4383
        %v4463 = vunpack.c.l.b16 %v4384
        %v4464 = vunpack.c.h.b16 %v4384
        %v4465 = vunpack.c.l.b16 %v4385
        %v4466 = vunpack.c.h.b16 %v4385
        %v4467 = vunpack.c.l.b16 %v4386
        %v4468 = vunpack.c.h.b16 %v4386
        %v4469 = vunpack.c.l.b16 %v4387
        %v4470 = vunpack.c.h.b16 %v4387
        %v4471 = vunpack.c.l.b16 %v4388
        %v4472 = vunpack.c.h.b16 %v4388
        %v4473 = vunpack.c.l.b16 %v4389
        %v4474 = vunpack.c.h.b16 %v4389
        %v4475 = vunpack.c.l.b16 %v4390
        %v4476 = vunpack.c.h.b16 %v4390
        %v4477 = vunpack.c.l.b16 %v4391
        %v4478 = vunpack.c.h.b16 %v4391
        %v4479 = vunpack.c.l.b16 %v4392
        %v4480 = vunpack.c.h.b16 %v4392
        %v4481 = vunpack.c.l.b16 %v4393
        %v4482 = vunpack.c.h.b16 %v4393
        %v4483 = vunpack.c.l.b16 %v4394
        %v4484 = vunpack.c.h.b16 %v4394
        %v4485 = vunpack.c.l.b16 %v4395
        %v4486 = vunpack.c.h.b16 %v4395
        %v4487 = vunpack.c.l.b16 %v4396
        %v4488 = vunpack.c.h.b16 %v4396
        %v4489 = vunpack.c.l.b16 %v4397
        %v4490 = vunpack.c.h.b16 %v4397
        %v4491 = vunpack.c.l.b16 %v4398
        %v4492 = vunpack.c.h.b16 %v4398
        %v4493 = vunpack.c.l.b16 %v4399
        %v4494 = vunpack.c.h.b16 %v4399
        %v4495 = vunpack.c.l.b16 %v4400
        %v4496 = vunpack.c.h.b16 %v4400
        %v4497 = vpack.c.b16 %v4437, %v4433
        %v4498 = vpack.c.b16 %v4438, %v4434
        %v4499 = vpack.c.b16 %v4439, %v4435
        %v4500 = vpack.c.b16 %v4440, %v4436
        %v4501 = vpack.c.b16 %v4445, %v4441
        %v4502 = vpack.c.b16 %v4446, %v4442
        %v4503 = vpack.c.b16 %v4447, %v4443
        %v4504 = vpack.c.b16 %v4448, %v4444
        %v4505 = vpack.c.b16 %v4453, %v4449
        %v4506 = vpack.c.b16 %v4454, %v4450
        %v4507 = vpack.c.b16 %v4455, %v4451
        %v4508 = vpack.c.b16 %v4456, %v4452
        %v4509 = vpack.c.b16 %v4461, %v4457
        %v4510 = vpack.c.b16 %v4462, %v4458
        %v4511 = vpack.c.b16 %v4463, %v4459
        %v4512 = vpack.c.b16 %v4464, %v4460
        %v4513 = vpack.c.b16 %v4469, %v4465
        %v4514 = vpack.c.b16 %v4470, %v4466
        %v4515 = vpack.c.b16 %v4471, %v4467
        %v4516 = vpack.c.b16 %v4472, %v4468
        %v4517 = vpack.c.b16 %v4477, %v4473
        %v4518 = vpack.c.b16 %v4478, %v4474
        %v4519 = vpack.c.b16 %v4479, %v4475
        %v4520 = vpack.c.b16 %v4480, %v4476
        %v4521 = vpack.c.b16 %v4485, %v4481
        %v4522 = vpack.c.b16 %v4486, %v4482
        %v4523 = vpack.c.b16 %v4487, %v4483
        %v4524 = vpack.c.b16 %v4488, %v4484
        %v4525 = vpack.c.b16 %v4493, %v4489
        %v4526 = vpack.c.b16 %v4494, %v4490
        %v4527 = vpack.c.b16 %v4495, %v4491
        %v4528 = vpack.c.b16 %v4496, %v4492
        %4561 = vmatprep.subr.bf16.mxu0 %v4526
        %4562 = vmatpush1.bf16.msra.mxu0 %v4525
        %4563 = vmatprep.subr.bf16.mxu0 %v4522
        %4564 = vmatpush1.bf16.msra.mxu0 %v4521
        %4565 = vmatprep.subr.bf16.mxu0 %v4518
        %4566 = vmatpush1.bf16.msra.mxu0 %v4517
        %4567 = vmatprep.subr.bf16.mxu0 %v4514
        %4568 = vmatpush1.bf16.msra.mxu0 %v4513
        %4569 = vmatprep.subr.bf16.mxu0 %v4510
        %4570 = vmatpush1.bf16.msra.mxu0 %v4509
        %4571 = vmatprep.subr.bf16.mxu0 %v4506
        %4572 = vmatpush1.bf16.msra.mxu0 %v4505
        %4573 = vmatprep.subr.bf16.mxu0 %v4502
        %4574 = vmatpush1.bf16.msra.mxu0 %v4501
        %4575 = vmatprep.subr.bf16.mxu0 %v4498
        %4576 = vmatpush1.bf16.msra.mxu0 %v4497
        %4577 = vmatprep.subr.bf16.mxu0 0
        %4578 = vmatpush2.bf16.msra.mxu0 0
        %4579 = vmatprep.subr.bf16.mxu0 0
        %4580 = vmatpush2.bf16.msra.mxu0 0
        %4581 = vmatprep.subr.bf16.mxu0 0
        %4582 = vmatpush2.bf16.msra.mxu0 0
        %4583 = vmatprep.subr.bf16.mxu0 0
        %4584 = vmatpush2.bf16.msra.mxu0 0
        %4585 = vmatprep.subr.bf16.mxu0 0
        %4586 = vmatpush2.bf16.msra.mxu0 0
        %4587 = vmatprep.subr.bf16.mxu0 0
        %4588 = vmatpush2.bf16.msra.mxu0 0
        %4589 = vmatprep.subr.bf16.mxu0 0
        %4590 = vmatpush2.bf16.msra.mxu0 0
        %4591 = vmatprep.subr.bf16.mxu0 0
        %4592 = vmatpush2.bf16.msra.mxu0 0
        %4593 = vmatprep.mubr.bf16.mxu0 0
        %4594 = vmatmul.mubr.bf16.gmra.mxu0 %v4368
        %v4595 = vpop.f32.mrf.mxu0
        %v4596 = vadd.f32 0.0, %v4595
        %v4597 = vpop.f32.mrf.mxu0
        %v4598 = vadd.f32 0.0, %v4597
        %v4599 = vpop.f32.mrf.mxu0
        %v4600 = vpop.f32.mrf.mxu0
        %4601 = vdwg.mxu0
        %4602 = vmatprep.subr.bf16.mxu0 %v4528
        %4603 = vmatpush1.bf16.msra.mxu0 %v4527
        %4604 = vmatprep.subr.bf16.mxu0 %v4524
        %4605 = vmatpush1.bf16.msra.mxu0 %v4523
        %4606 = vmatprep.subr.bf16.mxu0 %v4520
        %4607 = vmatpush1.bf16.msra.mxu0 %v4519
        %4608 = vmatprep.subr.bf16.mxu0 %v4516
        %4609 = vmatpush1.bf16.msra.mxu0 %v4515
        %4610 = vmatprep.subr.bf16.mxu0 %v4512
        %4611 = vmatpush1.bf16.msra.mxu0 %v4511
        %4612 = vmatprep.subr.bf16.mxu0 %v4508
        %4613 = vmatpush1.bf16.msra.mxu0 %v4507
        %4614 = vmatprep.subr.bf16.mxu0 %v4504
        %4615 = vmatpush1.bf16.msra.mxu0 %v4503
        %4616 = vmatprep.subr.bf16.mxu0 %v4500
        %4617 = vmatpush1.bf16.msra.mxu0 %v4499
        %4618 = vmatprep.subr.bf16.mxu0 0
        %4619 = vmatpush2.bf16.msra.mxu0 0
        %4620 = vmatprep.subr.bf16.mxu0 0
        %4621 = vmatpush2.bf16.msra.mxu0 0
        %4622 = vmatprep.subr.bf16.mxu0 0
        %4623 = vmatpush2.bf16.msra.mxu0 0
        %4624 = vmatprep.subr.bf16.mxu0 0
        %4625 = vmatpush2.bf16.msra.mxu0 0
        %4626 = vmatprep.subr.bf16.mxu0 0
        %4627 = vmatpush2.bf16.msra.mxu0 0
        %4628 = vmatprep.subr.bf16.mxu0 0
        %4629 = vmatpush2.bf16.msra.mxu0 0
        %4630 = vmatprep.subr.bf16.mxu0 0
        %4631 = vmatpush2.bf16.msra.mxu0 0
        %4632 = vmatprep.subr.bf16.mxu0 0
        %4633 = vmatpush2.bf16.msra.mxu0 0
        %4634 = vmatprep.mubr.bf16.mxu0 0
        %4635 = vmatmul.mubr.bf16.gmra.mxu0 %v4368
        %v4636 = vpop.f32.mrf.mxu0
        %v4637 = vadd.f32 0.0, %v4636
        %v4638 = vpop.f32.mrf.mxu0
        %v4639 = vadd.f32 0.0, %v4638
        %v4640 = vpop.f32.mrf.mxu0
        %v4641 = vpop.f32.mrf.mxu0
        %4642 = vdwg.mxu0
        %v4675 = vunpack.c.l.b16 %v4336
        %v4676 = vunpack.c.h.b16 %v4336
        %v4677 = vunpack.c.l.b16 %v4337
        %v4678 = vunpack.c.h.b16 %v4337
        %v4679 = vunpack.c.l.b16 %v4338
        %v4680 = vunpack.c.h.b16 %v4338
        %v4681 = vunpack.c.l.b16 %v4339
        %v4682 = vunpack.c.h.b16 %v4339
        %v4683 = vunpack.c.l.b16 %v4340
        %v4684 = vunpack.c.h.b16 %v4340
        %v4685 = vunpack.c.l.b16 %v4341
        %v4686 = vunpack.c.h.b16 %v4341
        %v4687 = vunpack.c.l.b16 %v4342
        %v4688 = vunpack.c.h.b16 %v4342
        %v4689 = vunpack.c.l.b16 %v4343
        %v4690 = vunpack.c.h.b16 %v4343
        %v4691 = vunpack.c.l.b16 %v4344
        %v4692 = vunpack.c.h.b16 %v4344
        %v4693 = vunpack.c.l.b16 %v4345
        %v4694 = vunpack.c.h.b16 %v4345
        %v4695 = vunpack.c.l.b16 %v4346
        %v4696 = vunpack.c.h.b16 %v4346
        %v4697 = vunpack.c.l.b16 %v4347
        %v4698 = vunpack.c.h.b16 %v4347
        %v4699 = vunpack.c.l.b16 %v4348
        %v4700 = vunpack.c.h.b16 %v4348
        %v4701 = vunpack.c.l.b16 %v4349
        %v4702 = vunpack.c.h.b16 %v4349
        %v4703 = vunpack.c.l.b16 %v4350
        %v4704 = vunpack.c.h.b16 %v4350
        %v4705 = vunpack.c.l.b16 %v4351
        %v4706 = vunpack.c.h.b16 %v4351
        %v4707 = vunpack.c.l.b16 %v4352
        %v4708 = vunpack.c.h.b16 %v4352
        %v4709 = vunpack.c.l.b16 %v4353
        %v4710 = vunpack.c.h.b16 %v4353
        %v4711 = vunpack.c.l.b16 %v4354
        %v4712 = vunpack.c.h.b16 %v4354
        %v4713 = vunpack.c.l.b16 %v4355
        %v4714 = vunpack.c.h.b16 %v4355
        %v4715 = vunpack.c.l.b16 %v4356
        %v4716 = vunpack.c.h.b16 %v4356
        %v4717 = vunpack.c.l.b16 %v4357
        %v4718 = vunpack.c.h.b16 %v4357
        %v4719 = vunpack.c.l.b16 %v4358
        %v4720 = vunpack.c.h.b16 %v4358
        %v4721 = vunpack.c.l.b16 %v4359
        %v4722 = vunpack.c.h.b16 %v4359
        %v4723 = vunpack.c.l.b16 %v4360
        %v4724 = vunpack.c.h.b16 %v4360
        %v4725 = vunpack.c.l.b16 %v4361
        %v4726 = vunpack.c.h.b16 %v4361
        %v4727 = vunpack.c.l.b16 %v4362
        %v4728 = vunpack.c.h.b16 %v4362
        %v4729 = vunpack.c.l.b16 %v4363
        %v4730 = vunpack.c.h.b16 %v4363
        %v4731 = vunpack.c.l.b16 %v4364
        %v4732 = vunpack.c.h.b16 %v4364
        %v4733 = vunpack.c.l.b16 %v4365
        %v4734 = vunpack.c.h.b16 %v4365
        %v4735 = vunpack.c.l.b16 %v4366
        %v4736 = vunpack.c.h.b16 %v4366
        %v4737 = vunpack.c.l.b16 %v4367
        %v4738 = vunpack.c.h.b16 %v4367
        %v4739 = vpack.c.b16 %v4679, %v4675
        %v4740 = vpack.c.b16 %v4680, %v4676
        %v4741 = vpack.c.b16 %v4681, %v4677
        %v4742 = vpack.c.b16 %v4682, %v4678
        %v4743 = vpack.c.b16 %v4687, %v4683
        %v4744 = vpack.c.b16 %v4688, %v4684
        %v4745 = vpack.c.b16 %v4689, %v4685
        %v4746 = vpack.c.b16 %v4690, %v4686
        %v4747 = vpack.c.b16 %v4695, %v4691
        %v4748 = vpack.c.b16 %v4696, %v4692
        %v4749 = vpack.c.b16 %v4697, %v4693
        %v4750 = vpack.c.b16 %v4698, %v4694
        %v4751 = vpack.c.b16 %v4703, %v4699
        %v4752 = vpack.c.b16 %v4704, %v4700
        %v4753 = vpack.c.b16 %v4705, %v4701
        %v4754 = vpack.c.b16 %v4706, %v4702
        %v4755 = vpack.c.b16 %v4711, %v4707
        %v4756 = vpack.c.b16 %v4712, %v4708
        %v4757 = vpack.c.b16 %v4713, %v4709
        %v4758 = vpack.c.b16 %v4714, %v4710
        %v4759 = vpack.c.b16 %v4719, %v4715
        %v4760 = vpack.c.b16 %v4720, %v4716
        %v4761 = vpack.c.b16 %v4721, %v4717
        %v4762 = vpack.c.b16 %v4722, %v4718
        %v4763 = vpack.c.b16 %v4727, %v4723
        %v4764 = vpack.c.b16 %v4728, %v4724
        %v4765 = vpack.c.b16 %v4729, %v4725
        %v4766 = vpack.c.b16 %v4730, %v4726
        %v4767 = vpack.c.b16 %v4735, %v4731
        %v4768 = vpack.c.b16 %v4736, %v4732
        %v4769 = vpack.c.b16 %v4737, %v4733
        %v4770 = vpack.c.b16 %v4738, %v4734
        %4803 = vmatprep.subr.bf16.mxu0 %v4768
        %4804 = vmatpush1.bf16.msra.mxu0 %v4767
        %4805 = vmatprep.subr.bf16.mxu0 %v4764
        %4806 = vmatpush1.bf16.msra.mxu0 %v4763
        %4807 = vmatprep.subr.bf16.mxu0 %v4760
        %4808 = vmatpush1.bf16.msra.mxu0 %v4759
        %4809 = vmatprep.subr.bf16.mxu0 %v4756
        %4810 = vmatpush1.bf16.msra.mxu0 %v4755
        %4811 = vmatprep.subr.bf16.mxu0 %v4752
        %4812 = vmatpush1.bf16.msra.mxu0 %v4751
        %4813 = vmatprep.subr.bf16.mxu0 %v4748
        %4814 = vmatpush1.bf16.msra.mxu0 %v4747
        %4815 = vmatprep.subr.bf16.mxu0 %v4744
        %4816 = vmatpush1.bf16.msra.mxu0 %v4743
        %4817 = vmatprep.subr.bf16.mxu0 %v4740
        %4818 = vmatpush1.bf16.msra.mxu0 %v4739
        %4819 = vmatprep.subr.bf16.mxu0 0
        %4820 = vmatpush2.bf16.msra.mxu0 0
        %4821 = vmatprep.subr.bf16.mxu0 0
        %4822 = vmatpush2.bf16.msra.mxu0 0
        %4823 = vmatprep.subr.bf16.mxu0 0
        %4824 = vmatpush2.bf16.msra.mxu0 0
        %4825 = vmatprep.subr.bf16.mxu0 0
        %4826 = vmatpush2.bf16.msra.mxu0 0
        %4827 = vmatprep.subr.bf16.mxu0 0
        %4828 = vmatpush2.bf16.msra.mxu0 0
        %4829 = vmatprep.subr.bf16.mxu0 0
        %4830 = vmatpush2.bf16.msra.mxu0 0
        %4831 = vmatprep.subr.bf16.mxu0 0
        %4832 = vmatpush2.bf16.msra.mxu0 0
        %4833 = vmatprep.subr.bf16.mxu0 0
        %4834 = vmatpush2.bf16.msra.mxu0 0
        %4835 = vmatprep.mubr.bf16.mxu0 0
        %4836 = vmatmul.mubr.bf16.gmra.mxu0 %v4335
        %v4837 = vpop.f32.mrf.mxu0
        %v4838 = vadd.f32 %v4596, %v4837
        %v4839 = vpop.f32.mrf.mxu0
        %v4840 = vadd.f32 %v4598, %v4839
        %v4841 = vpop.f32.mrf.mxu0
        %v4842 = vpop.f32.mrf.mxu0
        %4843 = vdwg.mxu0
        %4844 = vmatprep.subr.bf16.mxu0 %v4770
        %4845 = vmatpush1.bf16.msra.mxu0 %v4769
        %4846 = vmatprep.subr.bf16.mxu0 %v4766
        %4847 = vmatpush1.bf16.msra.mxu0 %v4765
        %4848 = vmatprep.subr.bf16.mxu0 %v4762
        %4849 = vmatpush1.bf16.msra.mxu0 %v4761
        %4850 = vmatprep.subr.bf16.mxu0 %v4758
        %4851 = vmatpush1.bf16.msra.mxu0 %v4757
        %4852 = vmatprep.subr.bf16.mxu0 %v4754
        %4853 = vmatpush1.bf16.msra.mxu0 %v4753
        %4854 = vmatprep.subr.bf16.mxu0 %v4750
        %4855 = vmatpush1.bf16.msra.mxu0 %v4749
        %4856 = vmatprep.subr.bf16.mxu0 %v4746
        %4857 = vmatpush1.bf16.msra.mxu0 %v4745
        %4858 = vmatprep.subr.bf16.mxu0 %v4742
        %4859 = vmatpush1.bf16.msra.mxu0 %v4741
        %4860 = vmatprep.subr.bf16.mxu0 0
        %4861 = vmatpush2.bf16.msra.mxu0 0
        %4862 = vmatprep.subr.bf16.mxu0 0
        %4863 = vmatpush2.bf16.msra.mxu0 0
        %4864 = vmatprep.subr.bf16.mxu0 0
        %4865 = vmatpush2.bf16.msra.mxu0 0
        %4866 = vmatprep.subr.bf16.mxu0 0
        %4867 = vmatpush2.bf16.msra.mxu0 0
        %4868 = vmatprep.subr.bf16.mxu0 0
        %4869 = vmatpush2.bf16.msra.mxu0 0
        %4870 = vmatprep.subr.bf16.mxu0 0
        %4871 = vmatpush2.bf16.msra.mxu0 0
        %4872 = vmatprep.subr.bf16.mxu0 0
        %4873 = vmatpush2.bf16.msra.mxu0 0
        %4874 = vmatprep.subr.bf16.mxu0 0
        %4875 = vmatpush2.bf16.msra.mxu0 0
        %4876 = vmatprep.mubr.bf16.mxu0 0
        %4877 = vmatmul.mubr.bf16.gmra.mxu0 %v4335
        %v4878 = vpop.f32.mrf.mxu0
        %v4879 = vadd.f32 %v4637, %v4878
        %v4880 = vpop.f32.mrf.mxu0
        %v4881 = vadd.f32 %v4639, %v4880
        %v4882 = vpop.f32.mrf.mxu0
        %v4883 = vpop.f32.mrf.mxu0
        %4884 = vdwg.mxu0
        %v4885 = vadd.f32 %v4838, %v358
        %v4886 = vadd.f32 %v4840, %v362
        %v4887 = vadd.f32 %v4879, %v366
        %v4888 = vadd.f32 %v4881, %v370
        %v4889 = vxor.u32 %v4885, 2147483648
        %v4890 = vmul.f32 %v4889, 1.442695
        %v4891 = vpow.pop %v4890
        %v4892 = vadd.f32 %v4891, 1.0
        %v4893 = vrcp.pop %v4892
        %v4894 = vmul.f32 1.0, %v4893
        %v4895 = vxor.u32 %v4886, 2147483648
        %v4896 = vmul.f32 %v4895, 1.442695
        %v4897 = vpow.pop %v4896
        %v4898 = vadd.f32 %v4897, 1.0
        %v4899 = vrcp.pop %v4898
        %v4900 = vmul.f32 1.0, %v4899
        %v4901 = vtanh.pop %v4887
        %v4902 = vxor.u32 %v4888, 2147483648
        %v4903 = vmul.f32 %v4902, 1.442695
        %v4904 = vpow.pop %v4903
        %v4905 = vadd.f32 %v4904, 1.0
        %v4906 = vrcp.pop %v4905
        %v4907 = vmul.f32 1.0, %v4906
        %v4908 = vmul.f32 %v4900, %v4334
        %v4909 = vmul.f32 %v4894, %v4901
        %v4910 = vadd.f32 %v4908, %v4909
        %v4911 = vtanh.pop %v4910
        %v4912 = vmul.f32 %v4907, %v4911
        %v4913 = vsel %vm4328, %v4912, %v4333
        %v4914 = vsel %vm4328, %v4910, %v4334
        %4915 = vst [vmem:[%s696] sm:$0xff] %v4913
        %4916 = vst [vmem:[%s698] sm:$0xff] %v4914
        %v4917 = vsel %vm4328, %v4912, 0.0
        %s4918 = scalar_lea.vmem %s338, 32 [#allocation12]
        %4919 = vst [vmem:[%s4918] sm:$0xff] %v4917
        %s4920 = sadd.s32 %s375, 5
        %v4921 = vstv %s4920
        %vm4922 = vcmp.gt.s32.totalorder %v352, %v4921
        %v4923 = vld [vmem:[#allocation2] sm:$0xff]
        %v4924 = vld [vmem:[#allocation3] sm:$0xff]
        %s4925 = scalar_lea.vmem %s298, 160 [#allocation4]
        %v4926 = vld [vmem:[%s4925] sm:$0xff]
        %v4927 = vld [vmem:[%s4925 + $0x8] sm:$0xff]
        %v4928 = vld [vmem:[%s4925 + $0x10] sm:$0xff]
        %v4929 = vld [vmem:[%s4925 + $0x18] sm:$0xff]
        %v4930 = vpack.c.bf16 %v4923, %v4923
        %v4931 = vld [vmem:[#allocation7] sm:$0xff]
        %v4932 = vld [vmem:[#allocation7 + $0x8] sm:$0xff]
        %v4933 = vld [vmem:[#allocation7 + $0x10] sm:$0xff]
        %v4934 = vld [vmem:[#allocation7 + $0x18] sm:$0xff]
        %v4935 = vld [vmem:[#allocation7 + $0x20] sm:$0xff]
        %v4936 = vld [vmem:[#allocation7 + $0x28] sm:$0xff]
        %v4937 = vld [vmem:[#allocation7 + $0x30] sm:$0xff]
        %v4938 = vld [vmem:[#allocation7 + $0x38] sm:$0xff]
        %v4939 = vld [vmem:[#allocation7 + $0x40] sm:$0xff]
        %v4940 = vld [vmem:[#allocation7 + $0x48] sm:$0xff]
        %v4941 = vld [vmem:[#allocation7 + $0x50] sm:$0xff]
        %v4942 = vld [vmem:[#allocation7 + $0x58] sm:$0xff]
        %v4943 = vld [vmem:[#allocation7 + $0x60] sm:$0xff]
        %v4944 = vld [vmem:[#allocation7 + $0x68] sm:$0xff]
        %v4945 = vld [vmem:[#allocation7 + $0x70] sm:$0xff]
        %v4946 = vld [vmem:[#allocation7 + $0x78] sm:$0xff]
        %v4947 = vld [vmem:[#allocation7 + $0x80] sm:$0xff]
        %v4948 = vld [vmem:[#allocation7 + $0x88] sm:$0xff]
        %v4949 = vld [vmem:[#allocation7 + $0x90] sm:$0xff]
        %v4950 = vld [vmem:[#allocation7 + $0x98] sm:$0xff]
        %v4951 = vld [vmem:[#allocation7 + $0xa0] sm:$0xff]
        %v4952 = vld [vmem:[#allocation7 + $0xa8] sm:$0xff]
        %v4953 = vld [vmem:[#allocation7 + $0xb0] sm:$0xff]
        %v4954 = vld [vmem:[#allocation7 + $0xb8] sm:$0xff]
        %v4955 = vld [vmem:[#allocation7 + $0xc0] sm:$0xff]
        %v4956 = vld [vmem:[#allocation7 + $0xc8] sm:$0xff]
        %v4957 = vld [vmem:[#allocation7 + $0xd0] sm:$0xff]
        %v4958 = vld [vmem:[#allocation7 + $0xd8] sm:$0xff]
        %v4959 = vld [vmem:[#allocation7 + $0xe0] sm:$0xff]
        %v4960 = vld [vmem:[#allocation7 + $0xe8] sm:$0xff]
        %v4961 = vld [vmem:[#allocation7 + $0xf0] sm:$0xff]
        %v4962 = vld [vmem:[#allocation7 + $0xf8] sm:$0xff]
        %v4995 = vunpack.c.l.b16 %v4931
        %v4996 = vunpack.c.h.b16 %v4931
        %v4997 = vunpack.c.l.b16 %v4932
        %v4998 = vunpack.c.h.b16 %v4932
        %v4999 = vunpack.c.l.b16 %v4933
        %v5000 = vunpack.c.h.b16 %v4933
        %v5001 = vunpack.c.l.b16 %v4934
        %v5002 = vunpack.c.h.b16 %v4934
        %v5003 = vunpack.c.l.b16 %v4935
        %v5004 = vunpack.c.h.b16 %v4935
        %v5005 = vunpack.c.l.b16 %v4936
        %v5006 = vunpack.c.h.b16 %v4936
        %v5007 = vunpack.c.l.b16 %v4937
        %v5008 = vunpack.c.h.b16 %v4937
        %v5009 = vunpack.c.l.b16 %v4938
        %v5010 = vunpack.c.h.b16 %v4938
        %v5011 = vunpack.c.l.b16 %v4939
        %v5012 = vunpack.c.h.b16 %v4939
        %v5013 = vunpack.c.l.b16 %v4940
        %v5014 = vunpack.c.h.b16 %v4940
        %v5015 = vunpack.c.l.b16 %v4941
        %v5016 = vunpack.c.h.b16 %v4941
        %v5017 = vunpack.c.l.b16 %v4942
        %v5018 = vunpack.c.h.b16 %v4942
        %v5019 = vunpack.c.l.b16 %v4943
        %v5020 = vunpack.c.h.b16 %v4943
        %v5021 = vunpack.c.l.b16 %v4944
        %v5022 = vunpack.c.h.b16 %v4944
        %v5023 = vunpack.c.l.b16 %v4945
        %v5024 = vunpack.c.h.b16 %v4945
        %v5025 = vunpack.c.l.b16 %v4946
        %v5026 = vunpack.c.h.b16 %v4946
        %v5027 = vunpack.c.l.b16 %v4947
        %v5028 = vunpack.c.h.b16 %v4947
        %v5029 = vunpack.c.l.b16 %v4948
        %v5030 = vunpack.c.h.b16 %v4948
        %v5031 = vunpack.c.l.b16 %v4949
        %v5032 = vunpack.c.h.b16 %v4949
        %v5033 = vunpack.c.l.b16 %v4950
        %v5034 = vunpack.c.h.b16 %v4950
        %v5035 = vunpack.c.l.b16 %v4951
        %v5036 = vunpack.c.h.b16 %v4951
        %v5037 = vunpack.c.l.b16 %v4952
        %v5038 = vunpack.c.h.b16 %v4952
        %v5039 = vunpack.c.l.b16 %v4953
        %v5040 = vunpack.c.h.b16 %v4953
        %v5041 = vunpack.c.l.b16 %v4954
        %v5042 = vunpack.c.h.b16 %v4954
        %v5043 = vunpack.c.l.b16 %v4955
        %v5044 = vunpack.c.h.b16 %v4955
        %v5045 = vunpack.c.l.b16 %v4956
        %v5046 = vunpack.c.h.b16 %v4956
        %v5047 = vunpack.c.l.b16 %v4957
        %v5048 = vunpack.c.h.b16 %v4957
        %v5049 = vunpack.c.l.b16 %v4958
        %v5050 = vunpack.c.h.b16 %v4958
        %v5051 = vunpack.c.l.b16 %v4959
        %v5052 = vunpack.c.h.b16 %v4959
        %v5053 = vunpack.c.l.b16 %v4960
        %v5054 = vunpack.c.h.b16 %v4960
        %v5055 = vunpack.c.l.b16 %v4961
        %v5056 = vunpack.c.h.b16 %v4961
        %v5057 = vunpack.c.l.b16 %v4962
        %v5058 = vunpack.c.h.b16 %v4962
        %v5059 = vpack.c.b16 %v4999, %v4995
        %v5060 = vpack.c.b16 %v5000, %v4996
        %v5061 = vpack.c.b16 %v5001, %v4997
        %v5062 = vpack.c.b16 %v5002, %v4998
        %v5063 = vpack.c.b16 %v5007, %v5003
        %v5064 = vpack.c.b16 %v5008, %v5004
        %v5065 = vpack.c.b16 %v5009, %v5005
        %v5066 = vpack.c.b16 %v5010, %v5006
        %v5067 = vpack.c.b16 %v5015, %v5011
        %v5068 = vpack.c.b16 %v5016, %v5012
        %v5069 = vpack.c.b16 %v5017, %v5013
        %v5070 = vpack.c.b16 %v5018, %v5014
        %v5071 = vpack.c.b16 %v5023, %v5019
        %v5072 = vpack.c.b16 %v5024, %v5020
        %v5073 = vpack.c.b16 %v5025, %v5021
        %v5074 = vpack.c.b16 %v5026, %v5022
        %v5075 = vpack.c.b16 %v5031, %v5027
        %v5076 = vpack.c.b16 %v5032, %v5028
        %v5077 = vpack.c.b16 %v5033, %v5029
        %v5078 = vpack.c.b16 %v5034, %v5030
        %v5079 = vpack.c.b16 %v5039, %v5035
        %v5080 = vpack.c.b16 %v5040, %v5036
        %v5081 = vpack.c.b16 %v5041, %v5037
        %v5082 = vpack.c.b16 %v5042, %v5038
        %v5083 = vpack.c.b16 %v5047, %v5043
        %v5084 = vpack.c.b16 %v5048, %v5044
        %v5085 = vpack.c.b16 %v5049, %v5045
        %v5086 = vpack.c.b16 %v5050, %v5046
        %v5087 = vpack.c.b16 %v5055, %v5051
        %v5088 = vpack.c.b16 %v5056, %v5052
        %v5089 = vpack.c.b16 %v5057, %v5053
        %v5090 = vpack.c.b16 %v5058, %v5054
        %5123 = vmatprep.subr.bf16.mxu0 %v5088
        %5124 = vmatpush1.bf16.msra.mxu0 %v5087
        %5125 = vmatprep.subr.bf16.mxu0 %v5084
        %5126 = vmatpush1.bf16.msra.mxu0 %v5083
        %5127 = vmatprep.subr.bf16.mxu0 %v5080
        %5128 = vmatpush1.bf16.msra.mxu0 %v5079
        %5129 = vmatprep.subr.bf16.mxu0 %v5076
        %5130 = vmatpush1.bf16.msra.mxu0 %v5075
        %5131 = vmatprep.subr.bf16.mxu0 %v5072
        %5132 = vmatpush1.bf16.msra.mxu0 %v5071
        %5133 = vmatprep.subr.bf16.mxu0 %v5068
        %5134 = vmatpush1.bf16.msra.mxu0 %v5067
        %5135 = vmatprep.subr.bf16.mxu0 %v5064
        %5136 = vmatpush1.bf16.msra.mxu0 %v5063
        %5137 = vmatprep.subr.bf16.mxu0 %v5060
        %5138 = vmatpush1.bf16.msra.mxu0 %v5059
        %5139 = vmatprep.subr.bf16.mxu0 0
        %5140 = vmatpush2.bf16.msra.mxu0 0
        %5141 = vmatprep.subr.bf16.mxu0 0
        %5142 = vmatpush2.bf16.msra.mxu0 0
        %5143 = vmatprep.subr.bf16.mxu0 0
        %5144 = vmatpush2.bf16.msra.mxu0 0
        %5145 = vmatprep.subr.bf16.mxu0 0
        %5146 = vmatpush2.bf16.msra.mxu0 0
        %5147 = vmatprep.subr.bf16.mxu0 0
        %5148 = vmatpush2.bf16.msra.mxu0 0
        %5149 = vmatprep.subr.bf16.mxu0 0
        %5150 = vmatpush2.bf16.msra.mxu0 0
        %5151 = vmatprep.subr.bf16.mxu0 0
        %5152 = vmatpush2.bf16.msra.mxu0 0
        %5153 = vmatprep.subr.bf16.mxu0 0
        %5154 = vmatpush2.bf16.msra.mxu0 0
        %5155 = vmatprep.mubr.bf16.mxu0 0
        %5156 = vmatmul.mubr.bf16.gmra.mxu0 %v4930
        %v5157 = vpop.f32.mrf.mxu0
        %v5158 = vadd.f32 0.0, %v5157
        %v5159 = vpop.f32.mrf.mxu0
        %v5160 = vadd.f32 0.0, %v5159
        %v5161 = vpop.f32.mrf.mxu0
        %v5162 = vpop.f32.mrf.mxu0
        %5163 = vdwg.mxu0
        %5164 = vmatprep.subr.bf16.mxu0 %v5090
        %5165 = vmatpush1.bf16.msra.mxu0 %v5089
        %5166 = vmatprep.subr.bf16.mxu0 %v5086
        %5167 = vmatpush1.bf16.msra.mxu0 %v5085
        %5168 = vmatprep.subr.bf16.mxu0 %v5082
        %5169 = vmatpush1.bf16.msra.mxu0 %v5081
        %5170 = vmatprep.subr.bf16.mxu0 %v5078
        %5171 = vmatpush1.bf16.msra.mxu0 %v5077
        %5172 = vmatprep.subr.bf16.mxu0 %v5074
        %5173 = vmatpush1.bf16.msra.mxu0 %v5073
        %5174 = vmatprep.subr.bf16.mxu0 %v5070
        %5175 = vmatpush1.bf16.msra.mxu0 %v5069
        %5176 = vmatprep.subr.bf16.mxu0 %v5066
        %5177 = vmatpush1.bf16.msra.mxu0 %v5065
        %5178 = vmatprep.subr.bf16.mxu0 %v5062
        %5179 = vmatpush1.bf16.msra.mxu0 %v5061
        %5180 = vmatprep.subr.bf16.mxu0 0
        %5181 = vmatpush2.bf16.msra.mxu0 0
        %5182 = vmatprep.subr.bf16.mxu0 0
        %5183 = vmatpush2.bf16.msra.mxu0 0
        %5184 = vmatprep.subr.bf16.mxu0 0
        %5185 = vmatpush2.bf16.msra.mxu0 0
        %5186 = vmatprep.subr.bf16.mxu0 0
        %5187 = vmatpush2.bf16.msra.mxu0 0
        %5188 = vmatprep.subr.bf16.mxu0 0
        %5189 = vmatpush2.bf16.msra.mxu0 0
        %5190 = vmatprep.subr.bf16.mxu0 0
        %5191 = vmatpush2.bf16.msra.mxu0 0
        %5192 = vmatprep.subr.bf16.mxu0 0
        %5193 = vmatpush2.bf16.msra.mxu0 0
        %5194 = vmatprep.subr.bf16.mxu0 0
        %5195 = vmatpush2.bf16.msra.mxu0 0
        %5196 = vmatprep.mubr.bf16.mxu0 0
        %5197 = vmatmul.mubr.bf16.gmra.mxu0 %v4930
        %v5198 = vpop.f32.mrf.mxu0
        %v5199 = vadd.f32 0.0, %v5198
        %v5200 = vpop.f32.mrf.mxu0
        %v5201 = vadd.f32 0.0, %v5200
        %v5202 = vpop.f32.mrf.mxu0
        %v5203 = vpop.f32.mrf.mxu0
        %5204 = vdwg.mxu0
        %v5205 = vadd.f32 %v4926, %v5158
        %v5206 = vadd.f32 %v4927, %v5160
        %v5207 = vadd.f32 %v4928, %v5199
        %v5208 = vadd.f32 %v4929, %v5201
        %v5209 = vxor.u32 %v5205, 2147483648
        %v5210 = vmul.f32 %v5209, 1.442695
        %v5211 = vpow.pop %v5210
        %v5212 = vadd.f32 %v5211, 1.0
        %v5213 = vrcp.pop %v5212
        %v5214 = vmul.f32 1.0, %v5213
        %v5215 = vxor.u32 %v5206, 2147483648
        %v5216 = vmul.f32 %v5215, 1.442695
        %v5217 = vpow.pop %v5216
        %v5218 = vadd.f32 %v5217, 1.0
        %v5219 = vrcp.pop %v5218
        %v5220 = vmul.f32 1.0, %v5219
        %v5221 = vtanh.pop %v5207
        %v5222 = vxor.u32 %v5208, 2147483648
        %v5223 = vmul.f32 %v5222, 1.442695
        %v5224 = vpow.pop %v5223
        %v5225 = vadd.f32 %v5224, 1.0
        %v5226 = vrcp.pop %v5225
        %v5227 = vmul.f32 1.0, %v5226
        %v5228 = vmul.f32 %v5220, %v4924
        %v5229 = vmul.f32 %v5214, %v5221
        %v5230 = vadd.f32 %v5228, %v5229
        %v5231 = vtanh.pop %v5230
        %v5232 = vmul.f32 %v5227, %v5231
        %v5233 = vsel %vm4922, 1, 0
        %5234 = vset.pattern.permute.xlu0 0
        %5235 = vperm.xlu0 %5234, %v5233
        %v5236 = vpop.permute.xlu0 %5235
        %vm5237 = vcmp.eq.s32.totalorder %v5236, 1
        %v5238 = vsel %vm5237, %v5232, %v4923
        %v5239 = vsel %vm5237, %v5230, %v4924
        %5240 = vst [vmem:[#allocation2] sm:$0xff] %v5238
        %5241 = vst [vmem:[#allocation3] sm:$0xff] %v5239
        %v5242 = vld [vmem:[%s696] sm:$0xff]
        %v5243 = vld [vmem:[%s698] sm:$0xff]
        %v5244 = vpack.c.bf16 %v5238, %v5238
        %v5245 = vld [vmem:[#allocation9] sm:$0xff]
        %v5246 = vld [vmem:[#allocation9 + $0x8] sm:$0xff]
        %v5247 = vld [vmem:[#allocation9 + $0x10] sm:$0xff]
        %v5248 = vld [vmem:[#allocation9 + $0x18] sm:$0xff]
        %v5249 = vld [vmem:[#allocation9 + $0x20] sm:$0xff]
        %v5250 = vld [vmem:[#allocation9 + $0x28] sm:$0xff]
        %v5251 = vld [vmem:[#allocation9 + $0x30] sm:$0xff]
        %v5252 = vld [vmem:[#allocation9 + $0x38] sm:$0xff]
        %v5253 = vld [vmem:[#allocation9 + $0x40] sm:$0xff]
        %v5254 = vld [vmem:[#allocation9 + $0x48] sm:$0xff]
        %v5255 = vld [vmem:[#allocation9 + $0x50] sm:$0xff]
        %v5256 = vld [vmem:[#allocation9 + $0x58] sm:$0xff]
        %v5257 = vld [vmem:[#allocation9 + $0x60] sm:$0xff]
        %v5258 = vld [vmem:[#allocation9 + $0x68] sm:$0xff]
        %v5259 = vld [vmem:[#allocation9 + $0x70] sm:$0xff]
        %v5260 = vld [vmem:[#allocation9 + $0x78] sm:$0xff]
        %v5261 = vld [vmem:[#allocation9 + $0x80] sm:$0xff]
        %v5262 = vld [vmem:[#allocation9 + $0x88] sm:$0xff]
        %v5263 = vld [vmem:[#allocation9 + $0x90] sm:$0xff]
        %v5264 = vld [vmem:[#allocation9 + $0x98] sm:$0xff]
        %v5265 = vld [vmem:[#allocation9 + $0xa0] sm:$0xff]
        %v5266 = vld [vmem:[#allocation9 + $0xa8] sm:$0xff]
        %v5267 = vld [vmem:[#allocation9 + $0xb0] sm:$0xff]
        %v5268 = vld [vmem:[#allocation9 + $0xb8] sm:$0xff]
        %v5269 = vld [vmem:[#allocation9 + $0xc0] sm:$0xff]
        %v5270 = vld [vmem:[#allocation9 + $0xc8] sm:$0xff]
        %v5271 = vld [vmem:[#allocation9 + $0xd0] sm:$0xff]
        %v5272 = vld [vmem:[#allocation9 + $0xd8] sm:$0xff]
        %v5273 = vld [vmem:[#allocation9 + $0xe0] sm:$0xff]
        %v5274 = vld [vmem:[#allocation9 + $0xe8] sm:$0xff]
        %v5275 = vld [vmem:[#allocation9 + $0xf0] sm:$0xff]
        %v5276 = vld [vmem:[#allocation9 + $0xf8] sm:$0xff]
        %v5277 = vpack.c.bf16 %v5242, %v5242
        %v5278 = vld [vmem:[#allocation10] sm:$0xff]
        %v5279 = vld [vmem:[#allocation10 + $0x8] sm:$0xff]
        %v5280 = vld [vmem:[#allocation10 + $0x10] sm:$0xff]
        %v5281 = vld [vmem:[#allocation10 + $0x18] sm:$0xff]
        %v5282 = vld [vmem:[#allocation10 + $0x20] sm:$0xff]
        %v5283 = vld [vmem:[#allocation10 + $0x28] sm:$0xff]
        %v5284 = vld [vmem:[#allocation10 + $0x30] sm:$0xff]
        %v5285 = vld [vmem:[#allocation10 + $0x38] sm:$0xff]
        %v5286 = vld [vmem:[#allocation10 + $0x40] sm:$0xff]
        %v5287 = vld [vmem:[#allocation10 + $0x48] sm:$0xff]
        %v5288 = vld [vmem:[#allocation10 + $0x50] sm:$0xff]
        %v5289 = vld [vmem:[#allocation10 + $0x58] sm:$0xff]
        %v5290 = vld [vmem:[#allocation10 + $0x60] sm:$0xff]
        %v5291 = vld [vmem:[#allocation10 + $0x68] sm:$0xff]
        %v5292 = vld [vmem:[#allocation10 + $0x70] sm:$0xff]
        %v5293 = vld [vmem:[#allocation10 + $0x78] sm:$0xff]
        %v5294 = vld [vmem:[#allocation10 + $0x80] sm:$0xff]
        %v5295 = vld [vmem:[#allocation10 + $0x88] sm:$0xff]
        %v5296 = vld [vmem:[#allocation10 + $0x90] sm:$0xff]
        %v5297 = vld [vmem:[#allocation10 + $0x98] sm:$0xff]
        %v5298 = vld [vmem:[#allocation10 + $0xa0] sm:$0xff]
        %v5299 = vld [vmem:[#allocation10 + $0xa8] sm:$0xff]
        %v5300 = vld [vmem:[#allocation10 + $0xb0] sm:$0xff]
        %v5301 = vld [vmem:[#allocation10 + $0xb8] sm:$0xff]
        %v5302 = vld [vmem:[#allocation10 + $0xc0] sm:$0xff]
        %v5303 = vld [vmem:[#allocation10 + $0xc8] sm:$0xff]
        %v5304 = vld [vmem:[#allocation10 + $0xd0] sm:$0xff]
        %v5305 = vld [vmem:[#allocation10 + $0xd8] sm:$0xff]
        %v5306 = vld [vmem:[#allocation10 + $0xe0] sm:$0xff]
        %v5307 = vld [vmem:[#allocation10 + $0xe8] sm:$0xff]
        %v5308 = vld [vmem:[#allocation10 + $0xf0] sm:$0xff]
        %v5309 = vld [vmem:[#allocation10 + $0xf8] sm:$0xff]
        %v5342 = vunpack.c.l.b16 %v5278
        %v5343 = vunpack.c.h.b16 %v5278
        %v5344 = vunpack.c.l.b16 %v5279
        %v5345 = vunpack.c.h.b16 %v5279
        %v5346 = vunpack.c.l.b16 %v5280
        %v5347 = vunpack.c.h.b16 %v5280
        %v5348 = vunpack.c.l.b16 %v5281
        %v5349 = vunpack.c.h.b16 %v5281
        %v5350 = vunpack.c.l.b16 %v5282
        %v5351 = vunpack.c.h.b16 %v5282
        %v5352 = vunpack.c.l.b16 %v5283
        %v5353 = vunpack.c.h.b16 %v5283
        %v5354 = vunpack.c.l.b16 %v5284
        %v5355 = vunpack.c.h.b16 %v5284
        %v5356 = vunpack.c.l.b16 %v5285
        %v5357 = vunpack.c.h.b16 %v5285
        %v5358 = vunpack.c.l.b16 %v5286
        %v5359 = vunpack.c.h.b16 %v5286
        %v5360 = vunpack.c.l.b16 %v5287
        %v5361 = vunpack.c.h.b16 %v5287
        %v5362 = vunpack.c.l.b16 %v5288
        %v5363 = vunpack.c.h.b16 %v5288
        %v5364 = vunpack.c.l.b16 %v5289
        %v5365 = vunpack.c.h.b16 %v5289
        %v5366 = vunpack.c.l.b16 %v5290
        %v5367 = vunpack.c.h.b16 %v5290
        %v5368 = vunpack.c.l.b16 %v5291
        %v5369 = vunpack.c.h.b16 %v5291
        %v5370 = vunpack.c.l.b16 %v5292
        %v5371 = vunpack.c.h.b16 %v5292
        %v5372 = vunpack.c.l.b16 %v5293
        %v5373 = vunpack.c.h.b16 %v5293
        %v5374 = vunpack.c.l.b16 %v5294
        %v5375 = vunpack.c.h.b16 %v5294
        %v5376 = vunpack.c.l.b16 %v5295
        %v5377 = vunpack.c.h.b16 %v5295
        %v5378 = vunpack.c.l.b16 %v5296
        %v5379 = vunpack.c.h.b16 %v5296
        %v5380 = vunpack.c.l.b16 %v5297
        %v5381 = vunpack.c.h.b16 %v5297
        %v5382 = vunpack.c.l.b16 %v5298
        %v5383 = vunpack.c.h.b16 %v5298
        %v5384 = vunpack.c.l.b16 %v5299
        %v5385 = vunpack.c.h.b16 %v5299
        %v5386 = vunpack.c.l.b16 %v5300
        %v5387 = vunpack.c.h.b16 %v5300
        %v5388 = vunpack.c.l.b16 %v5301
        %v5389 = vunpack.c.h.b16 %v5301
        %v5390 = vunpack.c.l.b16 %v5302
        %v5391 = vunpack.c.h.b16 %v5302
        %v5392 = vunpack.c.l.b16 %v5303
        %v5393 = vunpack.c.h.b16 %v5303
        %v5394 = vunpack.c.l.b16 %v5304
        %v5395 = vunpack.c.h.b16 %v5304
        %v5396 = vunpack.c.l.b16 %v5305
        %v5397 = vunpack.c.h.b16 %v5305
        %v5398 = vunpack.c.l.b16 %v5306
        %v5399 = vunpack.c.h.b16 %v5306
        %v5400 = vunpack.c.l.b16 %v5307
        %v5401 = vunpack.c.h.b16 %v5307
        %v5402 = vunpack.c.l.b16 %v5308
        %v5403 = vunpack.c.h.b16 %v5308
        %v5404 = vunpack.c.l.b16 %v5309
        %v5405 = vunpack.c.h.b16 %v5309
        %v5406 = vpack.c.b16 %v5346, %v5342
        %v5407 = vpack.c.b16 %v5347, %v5343
        %v5408 = vpack.c.b16 %v5348, %v5344
        %v5409 = vpack.c.b16 %v5349, %v5345
        %v5410 = vpack.c.b16 %v5354, %v5350
        %v5411 = vpack.c.b16 %v5355, %v5351
        %v5412 = vpack.c.b16 %v5356, %v5352
        %v5413 = vpack.c.b16 %v5357, %v5353
        %v5414 = vpack.c.b16 %v5362, %v5358
        %v5415 = vpack.c.b16 %v5363, %v5359
        %v5416 = vpack.c.b16 %v5364, %v5360
        %v5417 = vpack.c.b16 %v5365, %v5361
        %v5418 = vpack.c.b16 %v5370, %v5366
        %v5419 = vpack.c.b16 %v5371, %v5367
        %v5420 = vpack.c.b16 %v5372, %v5368
        %v5421 = vpack.c.b16 %v5373, %v5369
        %v5422 = vpack.c.b16 %v5378, %v5374
        %v5423 = vpack.c.b16 %v5379, %v5375
        %v5424 = vpack.c.b16 %v5380, %v5376
        %v5425 = vpack.c.b16 %v5381, %v5377
        %v5426 = vpack.c.b16 %v5386, %v5382
        %v5427 = vpack.c.b16 %v5387, %v5383
        %v5428 = vpack.c.b16 %v5388, %v5384
        %v5429 = vpack.c.b16 %v5389, %v5385
        %v5430 = vpack.c.b16 %v5394, %v5390
        %v5431 = vpack.c.b16 %v5395, %v5391
        %v5432 = vpack.c.b16 %v5396, %v5392
        %v5433 = vpack.c.b16 %v5397, %v5393
        %v5434 = vpack.c.b16 %v5402, %v5398
        %v5435 = vpack.c.b16 %v5403, %v5399
        %v5436 = vpack.c.b16 %v5404, %v5400
        %v5437 = vpack.c.b16 %v5405, %v5401
        %5470 = vmatprep.subr.bf16.mxu0 %v5435
        %5471 = vmatpush1.bf16.msra.mxu0 %v5434
        %5472 = vmatprep.subr.bf16.mxu0 %v5431
        %5473 = vmatpush1.bf16.msra.mxu0 %v5430
        %5474 = vmatprep.subr.bf16.mxu0 %v5427
        %5475 = vmatpush1.bf16.msra.mxu0 %v5426
        %5476 = vmatprep.subr.bf16.mxu0 %v5423
        %5477 = vmatpush1.bf16.msra.mxu0 %v5422
        %5478 = vmatprep.subr.bf16.mxu0 %v5419
        %5479 = vmatpush1.bf16.msra.mxu0 %v5418
        %5480 = vmatprep.subr.bf16.mxu0 %v5415
        %5481 = vmatpush1.bf16.msra.mxu0 %v5414
        %5482 = vmatprep.subr.bf16.mxu0 %v5411
        %5483 = vmatpush1.bf16.msra.mxu0 %v5410
        %5484 = vmatprep.subr.bf16.mxu0 %v5407
        %5485 = vmatpush1.bf16.msra.mxu0 %v5406
        %5486 = vmatprep.subr.bf16.mxu0 0
        %5487 = vmatpush2.bf16.msra.mxu0 0
        %5488 = vmatprep.subr.bf16.mxu0 0
        %5489 = vmatpush2.bf16.msra.mxu0 0
        %5490 = vmatprep.subr.bf16.mxu0 0
        %5491 = vmatpush2.bf16.msra.mxu0 0
        %5492 = vmatprep.subr.bf16.mxu0 0
        %5493 = vmatpush2.bf16.msra.mxu0 0
        %5494 = vmatprep.subr.bf16.mxu0 0
        %5495 = vmatpush2.bf16.msra.mxu0 0
        %5496 = vmatprep.subr.bf16.mxu0 0
        %5497 = vmatpush2.bf16.msra.mxu0 0
        %5498 = vmatprep.subr.bf16.mxu0 0
        %5499 = vmatpush2.bf16.msra.mxu0 0
        %5500 = vmatprep.subr.bf16.mxu0 0
        %5501 = vmatpush2.bf16.msra.mxu0 0
        %5502 = vmatprep.mubr.bf16.mxu0 0
        %5503 = vmatmul.mubr.bf16.gmra.mxu0 %v5277
        %v5504 = vpop.f32.mrf.mxu0
        %v5505 = vadd.f32 0.0, %v5504
        %v5506 = vpop.f32.mrf.mxu0
        %v5507 = vadd.f32 0.0, %v5506
        %v5508 = vpop.f32.mrf.mxu0
        %v5509 = vpop.f32.mrf.mxu0
        %5510 = vdwg.mxu0
        %5511 = vmatprep.subr.bf16.mxu0 %v5437
        %5512 = vmatpush1.bf16.msra.mxu0 %v5436
        %5513 = vmatprep.subr.bf16.mxu0 %v5433
        %5514 = vmatpush1.bf16.msra.mxu0 %v5432
        %5515 = vmatprep.subr.bf16.mxu0 %v5429
        %5516 = vmatpush1.bf16.msra.mxu0 %v5428
        %5517 = vmatprep.subr.bf16.mxu0 %v5425
        %5518 = vmatpush1.bf16.msra.mxu0 %v5424
        %5519 = vmatprep.subr.bf16.mxu0 %v5421
        %5520 = vmatpush1.bf16.msra.mxu0 %v5420
        %5521 = vmatprep.subr.bf16.mxu0 %v5417
        %5522 = vmatpush1.bf16.msra.mxu0 %v5416
        %5523 = vmatprep.subr.bf16.mxu0 %v5413
        %5524 = vmatpush1.bf16.msra.mxu0 %v5412
        %5525 = vmatprep.subr.bf16.mxu0 %v5409
        %5526 = vmatpush1.bf16.msra.mxu0 %v5408
        %5527 = vmatprep.subr.bf16.mxu0 0
        %5528 = vmatpush2.bf16.msra.mxu0 0
        %5529 = vmatprep.subr.bf16.mxu0 0
        %5530 = vmatpush2.bf16.msra.mxu0 0
        %5531 = vmatprep.subr.bf16.mxu0 0
        %5532 = vmatpush2.bf16.msra.mxu0 0
        %5533 = vmatprep.subr.bf16.mxu0 0
        %5534 = vmatpush2.bf16.msra.mxu0 0
        %5535 = vmatprep.subr.bf16.mxu0 0
        %5536 = vmatpush2.bf16.msra.mxu0 0
        %5537 = vmatprep.subr.bf16.mxu0 0
        %5538 = vmatpush2.bf16.msra.mxu0 0
        %5539 = vmatprep.subr.bf16.mxu0 0
        %5540 = vmatpush2.bf16.msra.mxu0 0
        %5541 = vmatprep.subr.bf16.mxu0 0
        %5542 = vmatpush2.bf16.msra.mxu0 0
        %5543 = vmatprep.mubr.bf16.mxu0 0
        %5544 = vmatmul.mubr.bf16.gmra.mxu0 %v5277
        %v5545 = vpop.f32.mrf.mxu0
        %v5546 = vadd.f32 0.0, %v5545
        %v5547 = vpop.f32.mrf.mxu0
        %v5548 = vadd.f32 0.0, %v5547
        %v5549 = vpop.f32.mrf.mxu0
        %v5550 = vpop.f32.mrf.mxu0
        %5551 = vdwg.mxu0
        %v5584 = vunpack.c.l.b16 %v5245
        %v5585 = vunpack.c.h.b16 %v5245
        %v5586 = vunpack.c.l.b16 %v5246
        %v5587 = vunpack.c.h.b16 %v5246
        %v5588 = vunpack.c.l.b16 %v5247
        %v5589 = vunpack.c.h.b16 %v5247
        %v5590 = vunpack.c.l.b16 %v5248
        %v5591 = vunpack.c.h.b16 %v5248
        %v5592 = vunpack.c.l.b16 %v5249
        %v5593 = vunpack.c.h.b16 %v5249
        %v5594 = vunpack.c.l.b16 %v5250
        %v5595 = vunpack.c.h.b16 %v5250
        %v5596 = vunpack.c.l.b16 %v5251
        %v5597 = vunpack.c.h.b16 %v5251
        %v5598 = vunpack.c.l.b16 %v5252
        %v5599 = vunpack.c.h.b16 %v5252
        %v5600 = vunpack.c.l.b16 %v5253
        %v5601 = vunpack.c.h.b16 %v5253
        %v5602 = vunpack.c.l.b16 %v5254
        %v5603 = vunpack.c.h.b16 %v5254
        %v5604 = vunpack.c.l.b16 %v5255
        %v5605 = vunpack.c.h.b16 %v5255
        %v5606 = vunpack.c.l.b16 %v5256
        %v5607 = vunpack.c.h.b16 %v5256
        %v5608 = vunpack.c.l.b16 %v5257
        %v5609 = vunpack.c.h.b16 %v5257
        %v5610 = vunpack.c.l.b16 %v5258
        %v5611 = vunpack.c.h.b16 %v5258
        %v5612 = vunpack.c.l.b16 %v5259
        %v5613 = vunpack.c.h.b16 %v5259
        %v5614 = vunpack.c.l.b16 %v5260
        %v5615 = vunpack.c.h.b16 %v5260
        %v5616 = vunpack.c.l.b16 %v5261
        %v5617 = vunpack.c.h.b16 %v5261
        %v5618 = vunpack.c.l.b16 %v5262
        %v5619 = vunpack.c.h.b16 %v5262
        %v5620 = vunpack.c.l.b16 %v5263
        %v5621 = vunpack.c.h.b16 %v5263
        %v5622 = vunpack.c.l.b16 %v5264
        %v5623 = vunpack.c.h.b16 %v5264
        %v5624 = vunpack.c.l.b16 %v5265
        %v5625 = vunpack.c.h.b16 %v5265
        %v5626 = vunpack.c.l.b16 %v5266
        %v5627 = vunpack.c.h.b16 %v5266
        %v5628 = vunpack.c.l.b16 %v5267
        %v5629 = vunpack.c.h.b16 %v5267
        %v5630 = vunpack.c.l.b16 %v5268
        %v5631 = vunpack.c.h.b16 %v5268
        %v5632 = vunpack.c.l.b16 %v5269
        %v5633 = vunpack.c.h.b16 %v5269
        %v5634 = vunpack.c.l.b16 %v5270
        %v5635 = vunpack.c.h.b16 %v5270
        %v5636 = vunpack.c.l.b16 %v5271
        %v5637 = vunpack.c.h.b16 %v5271
        %v5638 = vunpack.c.l.b16 %v5272
        %v5639 = vunpack.c.h.b16 %v5272
        %v5640 = vunpack.c.l.b16 %v5273
        %v5641 = vunpack.c.h.b16 %v5273
        %v5642 = vunpack.c.l.b16 %v5274
        %v5643 = vunpack.c.h.b16 %v5274
        %v5644 = vunpack.c.l.b16 %v5275
        %v5645 = vunpack.c.h.b16 %v5275
        %v5646 = vunpack.c.l.b16 %v5276
        %v5647 = vunpack.c.h.b16 %v5276
        %v5648 = vpack.c.b16 %v5588, %v5584
        %v5649 = vpack.c.b16 %v5589, %v5585
        %v5650 = vpack.c.b16 %v5590, %v5586
        %v5651 = vpack.c.b16 %v5591, %v5587
        %v5652 = vpack.c.b16 %v5596, %v5592
        %v5653 = vpack.c.b16 %v5597, %v5593
        %v5654 = vpack.c.b16 %v5598, %v5594
        %v5655 = vpack.c.b16 %v5599, %v5595
        %v5656 = vpack.c.b16 %v5604, %v5600
        %v5657 = vpack.c.b16 %v5605, %v5601
        %v5658 = vpack.c.b16 %v5606, %v5602
        %v5659 = vpack.c.b16 %v5607, %v5603
        %v5660 = vpack.c.b16 %v5612, %v5608
        %v5661 = vpack.c.b16 %v5613, %v5609
        %v5662 = vpack.c.b16 %v5614, %v5610
        %v5663 = vpack.c.b16 %v5615, %v5611
        %v5664 = vpack.c.b16 %v5620, %v5616
        %v5665 = vpack.c.b16 %v5621, %v5617
        %v5666 = vpack.c.b16 %v5622, %v5618
        %v5667 = vpack.c.b16 %v5623, %v5619
        %v5668 = vpack.c.b16 %v5628, %v5624
        %v5669 = vpack.c.b16 %v5629, %v5625
        %v5670 = vpack.c.b16 %v5630, %v5626
        %v5671 = vpack.c.b16 %v5631, %v5627
        %v5672 = vpack.c.b16 %v5636, %v5632
        %v5673 = vpack.c.b16 %v5637, %v5633
        %v5674 = vpack.c.b16 %v5638, %v5634
        %v5675 = vpack.c.b16 %v5639, %v5635
        %v5676 = vpack.c.b16 %v5644, %v5640
        %v5677 = vpack.c.b16 %v5645, %v5641
        %v5678 = vpack.c.b16 %v5646, %v5642
        %v5679 = vpack.c.b16 %v5647, %v5643
        %5712 = vmatprep.subr.bf16.mxu0 %v5677
        %5713 = vmatpush1.bf16.msra.mxu0 %v5676
        %5714 = vmatprep.subr.bf16.mxu0 %v5673
        %5715 = vmatpush1.bf16.msra.mxu0 %v5672
        %5716 = vmatprep.subr.bf16.mxu0 %v5669
        %5717 = vmatpush1.bf16.msra.mxu0 %v5668
        %5718 = vmatprep.subr.bf16.mxu0 %v5665
        %5719 = vmatpush1.bf16.msra.mxu0 %v5664
        %5720 = vmatprep.subr.bf16.mxu0 %v5661
        %5721 = vmatpush1.bf16.msra.mxu0 %v5660
        %5722 = vmatprep.subr.bf16.mxu0 %v5657
        %5723 = vmatpush1.bf16.msra.mxu0 %v5656
        %5724 = vmatprep.subr.bf16.mxu0 %v5653
        %5725 = vmatpush1.bf16.msra.mxu0 %v5652
        %5726 = vmatprep.subr.bf16.mxu0 %v5649
        %5727 = vmatpush1.bf16.msra.mxu0 %v5648
        %5728 = vmatprep.subr.bf16.mxu0 0
        %5729 = vmatpush2.bf16.msra.mxu0 0
        %5730 = vmatprep.subr.bf16.mxu0 0
        %5731 = vmatpush2.bf16.msra.mxu0 0
        %5732 = vmatprep.subr.bf16.mxu0 0
        %5733 = vmatpush2.bf16.msra.mxu0 0
        %5734 = vmatprep.subr.bf16.mxu0 0
        %5735 = vmatpush2.bf16.msra.mxu0 0
        %5736 = vmatprep.subr.bf16.mxu0 0
        %5737 = vmatpush2.bf16.msra.mxu0 0
        %5738 = vmatprep.subr.bf16.mxu0 0
        %5739 = vmatpush2.bf16.msra.mxu0 0
        %5740 = vmatprep.subr.bf16.mxu0 0
        %5741 = vmatpush2.bf16.msra.mxu0 0
        %5742 = vmatprep.subr.bf16.mxu0 0
        %5743 = vmatpush2.bf16.msra.mxu0 0
        %5744 = vmatprep.mubr.bf16.mxu0 0
        %5745 = vmatmul.mubr.bf16.gmra.mxu0 %v5244
        %v5746 = vpop.f32.mrf.mxu0
        %v5747 = vadd.f32 %v5505, %v5746
        %v5748 = vpop.f32.mrf.mxu0
        %v5749 = vadd.f32 %v5507, %v5748
        %v5750 = vpop.f32.mrf.mxu0
        %v5751 = vpop.f32.mrf.mxu0
        %5752 = vdwg.mxu0
        %5753 = vmatprep.subr.bf16.mxu0 %v5679
        %5754 = vmatpush1.bf16.msra.mxu0 %v5678
        %5755 = vmatprep.subr.bf16.mxu0 %v5675
        %5756 = vmatpush1.bf16.msra.mxu0 %v5674
        %5757 = vmatprep.subr.bf16.mxu0 %v5671
        %5758 = vmatpush1.bf16.msra.mxu0 %v5670
        %5759 = vmatprep.subr.bf16.mxu0 %v5667
        %5760 = vmatpush1.bf16.msra.mxu0 %v5666
        %5761 = vmatprep.subr.bf16.mxu0 %v5663
        %5762 = vmatpush1.bf16.msra.mxu0 %v5662
        %5763 = vmatprep.subr.bf16.mxu0 %v5659
        %5764 = vmatpush1.bf16.msra.mxu0 %v5658
        %5765 = vmatprep.subr.bf16.mxu0 %v5655
        %5766 = vmatpush1.bf16.msra.mxu0 %v5654
        %5767 = vmatprep.subr.bf16.mxu0 %v5651
        %5768 = vmatpush1.bf16.msra.mxu0 %v5650
        %5769 = vmatprep.subr.bf16.mxu0 0
        %5770 = vmatpush2.bf16.msra.mxu0 0
        %5771 = vmatprep.subr.bf16.mxu0 0
        %5772 = vmatpush2.bf16.msra.mxu0 0
        %5773 = vmatprep.subr.bf16.mxu0 0
        %5774 = vmatpush2.bf16.msra.mxu0 0
        %5775 = vmatprep.subr.bf16.mxu0 0
        %5776 = vmatpush2.bf16.msra.mxu0 0
        %5777 = vmatprep.subr.bf16.mxu0 0
        %5778 = vmatpush2.bf16.msra.mxu0 0
        %5779 = vmatprep.subr.bf16.mxu0 0
        %5780 = vmatpush2.bf16.msra.mxu0 0
        %5781 = vmatprep.subr.bf16.mxu0 0
        %5782 = vmatpush2.bf16.msra.mxu0 0
        %5783 = vmatprep.subr.bf16.mxu0 0
        %5784 = vmatpush2.bf16.msra.mxu0 0
        %5785 = vmatprep.mubr.bf16.mxu0 0
        %5786 = vmatmul.mubr.bf16.gmra.mxu0 %v5244
        %v5787 = vpop.f32.mrf.mxu0
        %v5788 = vadd.f32 %v5546, %v5787
        %v5789 = vpop.f32.mrf.mxu0
        %v5790 = vadd.f32 %v5548, %v5789
        %v5791 = vpop.f32.mrf.mxu0
        %v5792 = vpop.f32.mrf.mxu0
        %5793 = vdwg.mxu0
        %v5794 = vadd.f32 %v5747, %v358
        %v5795 = vadd.f32 %v5749, %v362
        %v5796 = vadd.f32 %v5788, %v366
        %v5797 = vadd.f32 %v5790, %v370
        %v5798 = vxor.u32 %v5794, 2147483648
        %v5799 = vmul.f32 %v5798, 1.442695
        %v5800 = vpow.pop %v5799
        %v5801 = vadd.f32 %v5800, 1.0
        %v5802 = vrcp.pop %v5801
        %v5803 = vmul.f32 1.0, %v5802
        %v5804 = vxor.u32 %v5795, 2147483648
        %v5805 = vmul.f32 %v5804, 1.442695
        %v5806 = vpow.pop %v5805
        %v5807 = vadd.f32 %v5806, 1.0
        %v5808 = vrcp.pop %v5807
        %v5809 = vmul.f32 1.0, %v5808
        %v5810 = vtanh.pop %v5796
        %v5811 = vxor.u32 %v5797, 2147483648
        %v5812 = vmul.f32 %v5811, 1.442695
        %v5813 = vpow.pop %v5812
        %v5814 = vadd.f32 %v5813, 1.0
        %v5815 = vrcp.pop %v5814
        %v5816 = vmul.f32 1.0, %v5815
        %v5817 = vmul.f32 %v5809, %v5243
        %v5818 = vmul.f32 %v5803, %v5810
        %v5819 = vadd.f32 %v5817, %v5818
        %v5820 = vtanh.pop %v5819
        %v5821 = vmul.f32 %v5816, %v5820
        %v5822 = vsel %vm5237, %v5821, %v5242
        %v5823 = vsel %vm5237, %v5819, %v5243
        %5824 = vst [vmem:[%s696] sm:$0xff] %v5822
        %5825 = vst [vmem:[%s698] sm:$0xff] %v5823
        %v5826 = vsel %vm5237, %v5821, 0.0
        %s5827 = scalar_lea.vmem %s338, 40 [#allocation12]
        %5828 = vst [vmem:[%s5827] sm:$0xff] %v5826
        %s5829 = sadd.s32 %s375, 6
        %v5830 = vstv %s5829
        %vm5831 = vcmp.gt.s32.totalorder %v352, %v5830
        %v5832 = vld [vmem:[#allocation2] sm:$0xff]
        %v5833 = vld [vmem:[#allocation3] sm:$0xff]
        %s5834 = scalar_lea.vmem %s298, 192 [#allocation4]
        %v5835 = vld [vmem:[%s5834] sm:$0xff]
        %v5836 = vld [vmem:[%s5834 + $0x8] sm:$0xff]
        %v5837 = vld [vmem:[%s5834 + $0x10] sm:$0xff]
        %v5838 = vld [vmem:[%s5834 + $0x18] sm:$0xff]
        %v5839 = vpack.c.bf16 %v5832, %v5832
        %v5840 = vld [vmem:[#allocation7] sm:$0xff]
        %v5841 = vld [vmem:[#allocation7 + $0x8] sm:$0xff]
        %v5842 = vld [vmem:[#allocation7 + $0x10] sm:$0xff]
        %v5843 = vld [vmem:[#allocation7 + $0x18] sm:$0xff]
        %v5844 = vld [vmem:[#allocation7 + $0x20] sm:$0xff]
        %v5845 = vld [vmem:[#allocation7 + $0x28] sm:$0xff]
        %v5846 = vld [vmem:[#allocation7 + $0x30] sm:$0xff]
        %v5847 = vld [vmem:[#allocation7 + $0x38] sm:$0xff]
        %v5848 = vld [vmem:[#allocation7 + $0x40] sm:$0xff]
        %v5849 = vld [vmem:[#allocation7 + $0x48] sm:$0xff]
        %v5850 = vld [vmem:[#allocation7 + $0x50] sm:$0xff]
        %v5851 = vld [vmem:[#allocation7 + $0x58] sm:$0xff]
        %v5852 = vld [vmem:[#allocation7 + $0x60] sm:$0xff]
        %v5853 = vld [vmem:[#allocation7 + $0x68] sm:$0xff]
        %v5854 = vld [vmem:[#allocation7 + $0x70] sm:$0xff]
        %v5855 = vld [vmem:[#allocation7 + $0x78] sm:$0xff]
        %v5856 = vld [vmem:[#allocation7 + $0x80] sm:$0xff]
        %v5857 = vld [vmem:[#allocation7 + $0x88] sm:$0xff]
        %v5858 = vld [vmem:[#allocation7 + $0x90] sm:$0xff]
        %v5859 = vld [vmem:[#allocation7 + $0x98] sm:$0xff]
        %v5860 = vld [vmem:[#allocation7 + $0xa0] sm:$0xff]
        %v5861 = vld [vmem:[#allocation7 + $0xa8] sm:$0xff]
        %v5862 = vld [vmem:[#allocation7 + $0xb0] sm:$0xff]
        %v5863 = vld [vmem:[#allocation7 + $0xb8] sm:$0xff]
        %v5864 = vld [vmem:[#allocation7 + $0xc0] sm:$0xff]
        %v5865 = vld [vmem:[#allocation7 + $0xc8] sm:$0xff]
        %v5866 = vld [vmem:[#allocation7 + $0xd0] sm:$0xff]
        %v5867 = vld [vmem:[#allocation7 + $0xd8] sm:$0xff]
        %v5868 = vld [vmem:[#allocation7 + $0xe0] sm:$0xff]
        %v5869 = vld [vmem:[#allocation7 + $0xe8] sm:$0xff]
        %v5870 = vld [vmem:[#allocation7 + $0xf0] sm:$0xff]
        %v5871 = vld [vmem:[#allocation7 + $0xf8] sm:$0xff]
        %v5904 = vunpack.c.l.b16 %v5840
        %v5905 = vunpack.c.h.b16 %v5840
        %v5906 = vunpack.c.l.b16 %v5841
        %v5907 = vunpack.c.h.b16 %v5841
        %v5908 = vunpack.c.l.b16 %v5842
        %v5909 = vunpack.c.h.b16 %v5842
        %v5910 = vunpack.c.l.b16 %v5843
        %v5911 = vunpack.c.h.b16 %v5843
        %v5912 = vunpack.c.l.b16 %v5844
        %v5913 = vunpack.c.h.b16 %v5844
        %v5914 = vunpack.c.l.b16 %v5845
        %v5915 = vunpack.c.h.b16 %v5845
        %v5916 = vunpack.c.l.b16 %v5846
        %v5917 = vunpack.c.h.b16 %v5846
        %v5918 = vunpack.c.l.b16 %v5847
        %v5919 = vunpack.c.h.b16 %v5847
        %v5920 = vunpack.c.l.b16 %v5848
        %v5921 = vunpack.c.h.b16 %v5848
        %v5922 = vunpack.c.l.b16 %v5849
        %v5923 = vunpack.c.h.b16 %v5849
        %v5924 = vunpack.c.l.b16 %v5850
        %v5925 = vunpack.c.h.b16 %v5850
        %v5926 = vunpack.c.l.b16 %v5851
        %v5927 = vunpack.c.h.b16 %v5851
        %v5928 = vunpack.c.l.b16 %v5852
        %v5929 = vunpack.c.h.b16 %v5852
        %v5930 = vunpack.c.l.b16 %v5853
        %v5931 = vunpack.c.h.b16 %v5853
        %v5932 = vunpack.c.l.b16 %v5854
        %v5933 = vunpack.c.h.b16 %v5854
        %v5934 = vunpack.c.l.b16 %v5855
        %v5935 = vunpack.c.h.b16 %v5855
        %v5936 = vunpack.c.l.b16 %v5856
        %v5937 = vunpack.c.h.b16 %v5856
        %v5938 = vunpack.c.l.b16 %v5857
        %v5939 = vunpack.c.h.b16 %v5857
        %v5940 = vunpack.c.l.b16 %v5858
        %v5941 = vunpack.c.h.b16 %v5858
        %v5942 = vunpack.c.l.b16 %v5859
        %v5943 = vunpack.c.h.b16 %v5859
        %v5944 = vunpack.c.l.b16 %v5860
        %v5945 = vunpack.c.h.b16 %v5860
        %v5946 = vunpack.c.l.b16 %v5861
        %v5947 = vunpack.c.h.b16 %v5861
        %v5948 = vunpack.c.l.b16 %v5862
        %v5949 = vunpack.c.h.b16 %v5862
        %v5950 = vunpack.c.l.b16 %v5863
        %v5951 = vunpack.c.h.b16 %v5863
        %v5952 = vunpack.c.l.b16 %v5864
        %v5953 = vunpack.c.h.b16 %v5864
        %v5954 = vunpack.c.l.b16 %v5865
        %v5955 = vunpack.c.h.b16 %v5865
        %v5956 = vunpack.c.l.b16 %v5866
        %v5957 = vunpack.c.h.b16 %v5866
        %v5958 = vunpack.c.l.b16 %v5867
        %v5959 = vunpack.c.h.b16 %v5867
        %v5960 = vunpack.c.l.b16 %v5868
        %v5961 = vunpack.c.h.b16 %v5868
        %v5962 = vunpack.c.l.b16 %v5869
        %v5963 = vunpack.c.h.b16 %v5869
        %v5964 = vunpack.c.l.b16 %v5870
        %v5965 = vunpack.c.h.b16 %v5870
        %v5966 = vunpack.c.l.b16 %v5871
        %v5967 = vunpack.c.h.b16 %v5871
        %v5968 = vpack.c.b16 %v5908, %v5904
        %v5969 = vpack.c.b16 %v5909, %v5905
        %v5970 = vpack.c.b16 %v5910, %v5906
        %v5971 = vpack.c.b16 %v5911, %v5907
        %v5972 = vpack.c.b16 %v5916, %v5912
        %v5973 = vpack.c.b16 %v5917, %v5913
        %v5974 = vpack.c.b16 %v5918, %v5914
        %v5975 = vpack.c.b16 %v5919, %v5915
        %v5976 = vpack.c.b16 %v5924, %v5920
        %v5977 = vpack.c.b16 %v5925, %v5921
        %v5978 = vpack.c.b16 %v5926, %v5922
        %v5979 = vpack.c.b16 %v5927, %v5923
        %v5980 = vpack.c.b16 %v5932, %v5928
        %v5981 = vpack.c.b16 %v5933, %v5929
        %v5982 = vpack.c.b16 %v5934, %v5930
        %v5983 = vpack.c.b16 %v5935, %v5931
        %v5984 = vpack.c.b16 %v5940, %v5936
        %v5985 = vpack.c.b16 %v5941, %v5937
        %v5986 = vpack.c.b16 %v5942, %v5938
        %v5987 = vpack.c.b16 %v5943, %v5939
        %v5988 = vpack.c.b16 %v5948, %v5944
        %v5989 = vpack.c.b16 %v5949, %v5945
        %v5990 = vpack.c.b16 %v5950, %v5946
        %v5991 = vpack.c.b16 %v5951, %v5947
        %v5992 = vpack.c.b16 %v5956, %v5952
        %v5993 = vpack.c.b16 %v5957, %v5953
        %v5994 = vpack.c.b16 %v5958, %v5954
        %v5995 = vpack.c.b16 %v5959, %v5955
        %v5996 = vpack.c.b16 %v5964, %v5960
        %v5997 = vpack.c.b16 %v5965, %v5961
        %v5998 = vpack.c.b16 %v5966, %v5962
        %v5999 = vpack.c.b16 %v5967, %v5963
        %6032 = vmatprep.subr.bf16.mxu0 %v5997
        %6033 = vmatpush1.bf16.msra.mxu0 %v5996
        %6034 = vmatprep.subr.bf16.mxu0 %v5993
        %6035 = vmatpush1.bf16.msra.mxu0 %v5992
        %6036 = vmatprep.subr.bf16.mxu0 %v5989
        %6037 = vmatpush1.bf16.msra.mxu0 %v5988
        %6038 = vmatprep.subr.bf16.mxu0 %v5985
        %6039 = vmatpush1.bf16.msra.mxu0 %v5984
        %6040 = vmatprep.subr.bf16.mxu0 %v5981
        %6041 = vmatpush1.bf16.msra.mxu0 %v5980
        %6042 = vmatprep.subr.bf16.mxu0 %v5977
        %6043 = vmatpush1.bf16.msra.mxu0 %v5976
        %6044 = vmatprep.subr.bf16.mxu0 %v5973
        %6045 = vmatpush1.bf16.msra.mxu0 %v5972
        %6046 = vmatprep.subr.bf16.mxu0 %v5969
        %6047 = vmatpush1.bf16.msra.mxu0 %v5968
        %6048 = vmatprep.subr.bf16.mxu0 0
        %6049 = vmatpush2.bf16.msra.mxu0 0
        %6050 = vmatprep.subr.bf16.mxu0 0
        %6051 = vmatpush2.bf16.msra.mxu0 0
        %6052 = vmatprep.subr.bf16.mxu0 0
        %6053 = vmatpush2.bf16.msra.mxu0 0
        %6054 = vmatprep.subr.bf16.mxu0 0
        %6055 = vmatpush2.bf16.msra.mxu0 0
        %6056 = vmatprep.subr.bf16.mxu0 0
        %6057 = vmatpush2.bf16.msra.mxu0 0
        %6058 = vmatprep.subr.bf16.mxu0 0
        %6059 = vmatpush2.bf16.msra.mxu0 0
        %6060 = vmatprep.subr.bf16.mxu0 0
        %6061 = vmatpush2.bf16.msra.mxu0 0
        %6062 = vmatprep.subr.bf16.mxu0 0
        %6063 = vmatpush2.bf16.msra.mxu0 0
        %6064 = vmatprep.mubr.bf16.mxu0 0
        %6065 = vmatmul.mubr.bf16.gmra.mxu0 %v5839
        %v6066 = vpop.f32.mrf.mxu0
        %v6067 = vadd.f32 0.0, %v6066
        %v6068 = vpop.f32.mrf.mxu0
        %v6069 = vadd.f32 0.0, %v6068
        %v6070 = vpop.f32.mrf.mxu0
        %v6071 = vpop.f32.mrf.mxu0
        %6072 = vdwg.mxu0
        %6073 = vmatprep.subr.bf16.mxu0 %v5999
        %6074 = vmatpush1.bf16.msra.mxu0 %v5998
        %6075 = vmatprep.subr.bf16.mxu0 %v5995
        %6076 = vmatpush1.bf16.msra.mxu0 %v5994
        %6077 = vmatprep.subr.bf16.mxu0 %v5991
        %6078 = vmatpush1.bf16.msra.mxu0 %v5990
        %6079 = vmatprep.subr.bf16.mxu0 %v5987
        %6080 = vmatpush1.bf16.msra.mxu0 %v5986
        %6081 = vmatprep.subr.bf16.mxu0 %v5983
        %6082 = vmatpush1.bf16.msra.mxu0 %v5982
        %6083 = vmatprep.subr.bf16.mxu0 %v5979
        %6084 = vmatpush1.bf16.msra.mxu0 %v5978
        %6085 = vmatprep.subr.bf16.mxu0 %v5975
        %6086 = vmatpush1.bf16.msra.mxu0 %v5974
        %6087 = vmatprep.subr.bf16.mxu0 %v5971
        %6088 = vmatpush1.bf16.msra.mxu0 %v5970
        %6089 = vmatprep.subr.bf16.mxu0 0
        %6090 = vmatpush2.bf16.msra.mxu0 0
        %6091 = vmatprep.subr.bf16.mxu0 0
        %6092 = vmatpush2.bf16.msra.mxu0 0
        %6093 = vmatprep.subr.bf16.mxu0 0
        %6094 = vmatpush2.bf16.msra.mxu0 0
        %6095 = vmatprep.subr.bf16.mxu0 0
        %6096 = vmatpush2.bf16.msra.mxu0 0
        %6097 = vmatprep.subr.bf16.mxu0 0
        %6098 = vmatpush2.bf16.msra.mxu0 0
        %6099 = vmatprep.subr.bf16.mxu0 0
        %6100 = vmatpush2.bf16.msra.mxu0 0
        %6101 = vmatprep.subr.bf16.mxu0 0
        %6102 = vmatpush2.bf16.msra.mxu0 0
        %6103 = vmatprep.subr.bf16.mxu0 0
        %6104 = vmatpush2.bf16.msra.mxu0 0
        %6105 = vmatprep.mubr.bf16.mxu0 0
        %6106 = vmatmul.mubr.bf16.gmra.mxu0 %v5839
        %v6107 = vpop.f32.mrf.mxu0
        %v6108 = vadd.f32 0.0, %v6107
        %v6109 = vpop.f32.mrf.mxu0
        %v6110 = vadd.f32 0.0, %v6109
        %v6111 = vpop.f32.mrf.mxu0
        %v6112 = vpop.f32.mrf.mxu0
        %6113 = vdwg.mxu0
        %v6114 = vadd.f32 %v5835, %v6067
        %v6115 = vadd.f32 %v5836, %v6069
        %v6116 = vadd.f32 %v5837, %v6108
        %v6117 = vadd.f32 %v5838, %v6110
        %v6118 = vxor.u32 %v6114, 2147483648
        %v6119 = vmul.f32 %v6118, 1.442695
        %v6120 = vpow.pop %v6119
        %v6121 = vadd.f32 %v6120, 1.0
        %v6122 = vrcp.pop %v6121
        %v6123 = vmul.f32 1.0, %v6122
        %v6124 = vxor.u32 %v6115, 2147483648
        %v6125 = vmul.f32 %v6124, 1.442695
        %v6126 = vpow.pop %v6125
        %v6127 = vadd.f32 %v6126, 1.0
        %v6128 = vrcp.pop %v6127
        %v6129 = vmul.f32 1.0, %v6128
        %v6130 = vtanh.pop %v6116
        %v6131 = vxor.u32 %v6117, 2147483648
        %v6132 = vmul.f32 %v6131, 1.442695
        %v6133 = vpow.pop %v6132
        %v6134 = vadd.f32 %v6133, 1.0
        %v6135 = vrcp.pop %v6134
        %v6136 = vmul.f32 1.0, %v6135
        %v6137 = vmul.f32 %v6129, %v5833
        %v6138 = vmul.f32 %v6123, %v6130
        %v6139 = vadd.f32 %v6137, %v6138
        %v6140 = vtanh.pop %v6139
        %v6141 = vmul.f32 %v6136, %v6140
        %v6142 = vsel %vm5831, 1, 0
        %6143 = vset.pattern.permute.xlu0 0
        %6144 = vperm.xlu0 %6143, %v6142
        %v6145 = vpop.permute.xlu0 %6144
        %vm6146 = vcmp.eq.s32.totalorder %v6145, 1
        %v6147 = vsel %vm6146, %v6141, %v5832
        %v6148 = vsel %vm6146, %v6139, %v5833
        %6149 = vst [vmem:[#allocation2] sm:$0xff] %v6147
        %6150 = vst [vmem:[#allocation3] sm:$0xff] %v6148
        %v6151 = vld [vmem:[%s696] sm:$0xff]
        %v6152 = vld [vmem:[%s698] sm:$0xff]
        %v6153 = vpack.c.bf16 %v6147, %v6147
        %v6154 = vld [vmem:[#allocation9] sm:$0xff]
        %v6155 = vld [vmem:[#allocation9 + $0x8] sm:$0xff]
        %v6156 = vld [vmem:[#allocation9 + $0x10] sm:$0xff]
        %v6157 = vld [vmem:[#allocation9 + $0x18] sm:$0xff]
        %v6158 = vld [vmem:[#allocation9 + $0x20] sm:$0xff]
        %v6159 = vld [vmem:[#allocation9 + $0x28] sm:$0xff]
        %v6160 = vld [vmem:[#allocation9 + $0x30] sm:$0xff]
        %v6161 = vld [vmem:[#allocation9 + $0x38] sm:$0xff]
        %v6162 = vld [vmem:[#allocation9 + $0x40] sm:$0xff]
        %v6163 = vld [vmem:[#allocation9 + $0x48] sm:$0xff]
        %v6164 = vld [vmem:[#allocation9 + $0x50] sm:$0xff]
        %v6165 = vld [vmem:[#allocation9 + $0x58] sm:$0xff]
        %v6166 = vld [vmem:[#allocation9 + $0x60] sm:$0xff]
        %v6167 = vld [vmem:[#allocation9 + $0x68] sm:$0xff]
        %v6168 = vld [vmem:[#allocation9 + $0x70] sm:$0xff]
        %v6169 = vld [vmem:[#allocation9 + $0x78] sm:$0xff]
        %v6170 = vld [vmem:[#allocation9 + $0x80] sm:$0xff]
        %v6171 = vld [vmem:[#allocation9 + $0x88] sm:$0xff]
        %v6172 = vld [vmem:[#allocation9 + $0x90] sm:$0xff]
        %v6173 = vld [vmem:[#allocation9 + $0x98] sm:$0xff]
        %v6174 = vld [vmem:[#allocation9 + $0xa0] sm:$0xff]
        %v6175 = vld [vmem:[#allocation9 + $0xa8] sm:$0xff]
        %v6176 = vld [vmem:[#allocation9 + $0xb0] sm:$0xff]
        %v6177 = vld [vmem:[#allocation9 + $0xb8] sm:$0xff]
        %v6178 = vld [vmem:[#allocation9 + $0xc0] sm:$0xff]
        %v6179 = vld [vmem:[#allocation9 + $0xc8] sm:$0xff]
        %v6180 = vld [vmem:[#allocation9 + $0xd0] sm:$0xff]
        %v6181 = vld [vmem:[#allocation9 + $0xd8] sm:$0xff]
        %v6182 = vld [vmem:[#allocation9 + $0xe0] sm:$0xff]
        %v6183 = vld [vmem:[#allocation9 + $0xe8] sm:$0xff]
        %v6184 = vld [vmem:[#allocation9 + $0xf0] sm:$0xff]
        %v6185 = vld [vmem:[#allocation9 + $0xf8] sm:$0xff]
        %v6186 = vpack.c.bf16 %v6151, %v6151
        %v6187 = vld [vmem:[#allocation10] sm:$0xff]
        %v6188 = vld [vmem:[#allocation10 + $0x8] sm:$0xff]
        %v6189 = vld [vmem:[#allocation10 + $0x10] sm:$0xff]
        %v6190 = vld [vmem:[#allocation10 + $0x18] sm:$0xff]
        %v6191 = vld [vmem:[#allocation10 + $0x20] sm:$0xff]
        %v6192 = vld [vmem:[#allocation10 + $0x28] sm:$0xff]
        %v6193 = vld [vmem:[#allocation10 + $0x30] sm:$0xff]
        %v6194 = vld [vmem:[#allocation10 + $0x38] sm:$0xff]
        %v6195 = vld [vmem:[#allocation10 + $0x40] sm:$0xff]
        %v6196 = vld [vmem:[#allocation10 + $0x48] sm:$0xff]
        %v6197 = vld [vmem:[#allocation10 + $0x50] sm:$0xff]
        %v6198 = vld [vmem:[#allocation10 + $0x58] sm:$0xff]
        %v6199 = vld [vmem:[#allocation10 + $0x60] sm:$0xff]
        %v6200 = vld [vmem:[#allocation10 + $0x68] sm:$0xff]
        %v6201 = vld [vmem:[#allocation10 + $0x70] sm:$0xff]
        %v6202 = vld [vmem:[#allocation10 + $0x78] sm:$0xff]
        %v6203 = vld [vmem:[#allocation10 + $0x80] sm:$0xff]
        %v6204 = vld [vmem:[#allocation10 + $0x88] sm:$0xff]
        %v6205 = vld [vmem:[#allocation10 + $0x90] sm:$0xff]
        %v6206 = vld [vmem:[#allocation10 + $0x98] sm:$0xff]
        %v6207 = vld [vmem:[#allocation10 + $0xa0] sm:$0xff]
        %v6208 = vld [vmem:[#allocation10 + $0xa8] sm:$0xff]
        %v6209 = vld [vmem:[#allocation10 + $0xb0] sm:$0xff]
        %v6210 = vld [vmem:[#allocation10 + $0xb8] sm:$0xff]
        %v6211 = vld [vmem:[#allocation10 + $0xc0] sm:$0xff]
        %v6212 = vld [vmem:[#allocation10 + $0xc8] sm:$0xff]
        %v6213 = vld [vmem:[#allocation10 + $0xd0] sm:$0xff]
        %v6214 = vld [vmem:[#allocation10 + $0xd8] sm:$0xff]
        %v6215 = vld [vmem:[#allocation10 + $0xe0] sm:$0xff]
        %v6216 = vld [vmem:[#allocation10 + $0xe8] sm:$0xff]
        %v6217 = vld [vmem:[#allocation10 + $0xf0] sm:$0xff]
        %v6218 = vld [vmem:[#allocation10 + $0xf8] sm:$0xff]
        %v6251 = vunpack.c.l.b16 %v6187
        %v6252 = vunpack.c.h.b16 %v6187
        %v6253 = vunpack.c.l.b16 %v6188
        %v6254 = vunpack.c.h.b16 %v6188
        %v6255 = vunpack.c.l.b16 %v6189
        %v6256 = vunpack.c.h.b16 %v6189
        %v6257 = vunpack.c.l.b16 %v6190
        %v6258 = vunpack.c.h.b16 %v6190
        %v6259 = vunpack.c.l.b16 %v6191
        %v6260 = vunpack.c.h.b16 %v6191
        %v6261 = vunpack.c.l.b16 %v6192
        %v6262 = vunpack.c.h.b16 %v6192
        %v6263 = vunpack.c.l.b16 %v6193
        %v6264 = vunpack.c.h.b16 %v6193
        %v6265 = vunpack.c.l.b16 %v6194
        %v6266 = vunpack.c.h.b16 %v6194
        %v6267 = vunpack.c.l.b16 %v6195
        %v6268 = vunpack.c.h.b16 %v6195
        %v6269 = vunpack.c.l.b16 %v6196
        %v6270 = vunpack.c.h.b16 %v6196
        %v6271 = vunpack.c.l.b16 %v6197
        %v6272 = vunpack.c.h.b16 %v6197
        %v6273 = vunpack.c.l.b16 %v6198
        %v6274 = vunpack.c.h.b16 %v6198
        %v6275 = vunpack.c.l.b16 %v6199
        %v6276 = vunpack.c.h.b16 %v6199
        %v6277 = vunpack.c.l.b16 %v6200
        %v6278 = vunpack.c.h.b16 %v6200
        %v6279 = vunpack.c.l.b16 %v6201
        %v6280 = vunpack.c.h.b16 %v6201
        %v6281 = vunpack.c.l.b16 %v6202
        %v6282 = vunpack.c.h.b16 %v6202
        %v6283 = vunpack.c.l.b16 %v6203
        %v6284 = vunpack.c.h.b16 %v6203
        %v6285 = vunpack.c.l.b16 %v6204
        %v6286 = vunpack.c.h.b16 %v6204
        %v6287 = vunpack.c.l.b16 %v6205
        %v6288 = vunpack.c.h.b16 %v6205
        %v6289 = vunpack.c.l.b16 %v6206
        %v6290 = vunpack.c.h.b16 %v6206
        %v6291 = vunpack.c.l.b16 %v6207
        %v6292 = vunpack.c.h.b16 %v6207
        %v6293 = vunpack.c.l.b16 %v6208
        %v6294 = vunpack.c.h.b16 %v6208
        %v6295 = vunpack.c.l.b16 %v6209
        %v6296 = vunpack.c.h.b16 %v6209
        %v6297 = vunpack.c.l.b16 %v6210
        %v6298 = vunpack.c.h.b16 %v6210
        %v6299 = vunpack.c.l.b16 %v6211
        %v6300 = vunpack.c.h.b16 %v6211
        %v6301 = vunpack.c.l.b16 %v6212
        %v6302 = vunpack.c.h.b16 %v6212
        %v6303 = vunpack.c.l.b16 %v6213
        %v6304 = vunpack.c.h.b16 %v6213
        %v6305 = vunpack.c.l.b16 %v6214
        %v6306 = vunpack.c.h.b16 %v6214
        %v6307 = vunpack.c.l.b16 %v6215
        %v6308 = vunpack.c.h.b16 %v6215
        %v6309 = vunpack.c.l.b16 %v6216
        %v6310 = vunpack.c.h.b16 %v6216
        %v6311 = vunpack.c.l.b16 %v6217
        %v6312 = vunpack.c.h.b16 %v6217
        %v6313 = vunpack.c.l.b16 %v6218
        %v6314 = vunpack.c.h.b16 %v6218
        %v6315 = vpack.c.b16 %v6255, %v6251
        %v6316 = vpack.c.b16 %v6256, %v6252
        %v6317 = vpack.c.b16 %v6257, %v6253
        %v6318 = vpack.c.b16 %v6258, %v6254
        %v6319 = vpack.c.b16 %v6263, %v6259
        %v6320 = vpack.c.b16 %v6264, %v6260
        %v6321 = vpack.c.b16 %v6265, %v6261
        %v6322 = vpack.c.b16 %v6266, %v6262
        %v6323 = vpack.c.b16 %v6271, %v6267
        %v6324 = vpack.c.b16 %v6272, %v6268
        %v6325 = vpack.c.b16 %v6273, %v6269
        %v6326 = vpack.c.b16 %v6274, %v6270
        %v6327 = vpack.c.b16 %v6279, %v6275
        %v6328 = vpack.c.b16 %v6280, %v6276
        %v6329 = vpack.c.b16 %v6281, %v6277
        %v6330 = vpack.c.b16 %v6282, %v6278
        %v6331 = vpack.c.b16 %v6287, %v6283
        %v6332 = vpack.c.b16 %v6288, %v6284
        %v6333 = vpack.c.b16 %v6289, %v6285
        %v6334 = vpack.c.b16 %v6290, %v6286
        %v6335 = vpack.c.b16 %v6295, %v6291
        %v6336 = vpack.c.b16 %v6296, %v6292
        %v6337 = vpack.c.b16 %v6297, %v6293
        %v6338 = vpack.c.b16 %v6298, %v6294
        %v6339 = vpack.c.b16 %v6303, %v6299
        %v6340 = vpack.c.b16 %v6304, %v6300
        %v6341 = vpack.c.b16 %v6305, %v6301
        %v6342 = vpack.c.b16 %v6306, %v6302
        %v6343 = vpack.c.b16 %v6311, %v6307
        %v6344 = vpack.c.b16 %v6312, %v6308
        %v6345 = vpack.c.b16 %v6313, %v6309
        %v6346 = vpack.c.b16 %v6314, %v6310
        %6379 = vmatprep.subr.bf16.mxu0 %v6344
        %6380 = vmatpush1.bf16.msra.mxu0 %v6343
        %6381 = vmatprep.subr.bf16.mxu0 %v6340
        %6382 = vmatpush1.bf16.msra.mxu0 %v6339
        %6383 = vmatprep.subr.bf16.mxu0 %v6336
        %6384 = vmatpush1.bf16.msra.mxu0 %v6335
        %6385 = vmatprep.subr.bf16.mxu0 %v6332
        %6386 = vmatpush1.bf16.msra.mxu0 %v6331
        %6387 = vmatprep.subr.bf16.mxu0 %v6328
        %6388 = vmatpush1.bf16.msra.mxu0 %v6327
        %6389 = vmatprep.subr.bf16.mxu0 %v6324
        %6390 = vmatpush1.bf16.msra.mxu0 %v6323
        %6391 = vmatprep.subr.bf16.mxu0 %v6320
        %6392 = vmatpush1.bf16.msra.mxu0 %v6319
        %6393 = vmatprep.subr.bf16.mxu0 %v6316
        %6394 = vmatpush1.bf16.msra.mxu0 %v6315
        %6395 = vmatprep.subr.bf16.mxu0 0
        %6396 = vmatpush2.bf16.msra.mxu0 0
        %6397 = vmatprep.subr.bf16.mxu0 0
        %6398 = vmatpush2.bf16.msra.mxu0 0
        %6399 = vmatprep.subr.bf16.mxu0 0
        %6400 = vmatpush2.bf16.msra.mxu0 0
        %6401 = vmatprep.subr.bf16.mxu0 0
        %6402 = vmatpush2.bf16.msra.mxu0 0
        %6403 = vmatprep.subr.bf16.mxu0 0
        %6404 = vmatpush2.bf16.msra.mxu0 0
        %6405 = vmatprep.subr.bf16.mxu0 0
        %6406 = vmatpush2.bf16.msra.mxu0 0
        %6407 = vmatprep.subr.bf16.mxu0 0
        %6408 = vmatpush2.bf16.msra.mxu0 0
        %6409 = vmatprep.subr.bf16.mxu0 0
        %6410 = vmatpush2.bf16.msra.mxu0 0
        %6411 = vmatprep.mubr.bf16.mxu0 0
        %6412 = vmatmul.mubr.bf16.gmra.mxu0 %v6186
        %v6413 = vpop.f32.mrf.mxu0
        %v6414 = vadd.f32 0.0, %v6413
        %v6415 = vpop.f32.mrf.mxu0
        %v6416 = vadd.f32 0.0, %v6415
        %v6417 = vpop.f32.mrf.mxu0
        %v6418 = vpop.f32.mrf.mxu0
        %6419 = vdwg.mxu0
        %6420 = vmatprep.subr.bf16.mxu0 %v6346
        %6421 = vmatpush1.bf16.msra.mxu0 %v6345
        %6422 = vmatprep.subr.bf16.mxu0 %v6342
        %6423 = vmatpush1.bf16.msra.mxu0 %v6341
        %6424 = vmatprep.subr.bf16.mxu0 %v6338
        %6425 = vmatpush1.bf16.msra.mxu0 %v6337
        %6426 = vmatprep.subr.bf16.mxu0 %v6334
        %6427 = vmatpush1.bf16.msra.mxu0 %v6333
        %6428 = vmatprep.subr.bf16.mxu0 %v6330
        %6429 = vmatpush1.bf16.msra.mxu0 %v6329
        %6430 = vmatprep.subr.bf16.mxu0 %v6326
        %6431 = vmatpush1.bf16.msra.mxu0 %v6325
        %6432 = vmatprep.subr.bf16.mxu0 %v6322
        %6433 = vmatpush1.bf16.msra.mxu0 %v6321
        %6434 = vmatprep.subr.bf16.mxu0 %v6318
        %6435 = vmatpush1.bf16.msra.mxu0 %v6317
        %6436 = vmatprep.subr.bf16.mxu0 0
        %6437 = vmatpush2.bf16.msra.mxu0 0
        %6438 = vmatprep.subr.bf16.mxu0 0
        %6439 = vmatpush2.bf16.msra.mxu0 0
        %6440 = vmatprep.subr.bf16.mxu0 0
        %6441 = vmatpush2.bf16.msra.mxu0 0
        %6442 = vmatprep.subr.bf16.mxu0 0
        %6443 = vmatpush2.bf16.msra.mxu0 0
        %6444 = vmatprep.subr.bf16.mxu0 0
        %6445 = vmatpush2.bf16.msra.mxu0 0
        %6446 = vmatprep.subr.bf16.mxu0 0
        %6447 = vmatpush2.bf16.msra.mxu0 0
        %6448 = vmatprep.subr.bf16.mxu0 0
        %6449 = vmatpush2.bf16.msra.mxu0 0
        %6450 = vmatprep.subr.bf16.mxu0 0
        %6451 = vmatpush2.bf16.msra.mxu0 0
        %6452 = vmatprep.mubr.bf16.mxu0 0
        %6453 = vmatmul.mubr.bf16.gmra.mxu0 %v6186
        %v6454 = vpop.f32.mrf.mxu0
        %v6455 = vadd.f32 0.0, %v6454
        %v6456 = vpop.f32.mrf.mxu0
        %v6457 = vadd.f32 0.0, %v6456
        %v6458 = vpop.f32.mrf.mxu0
        %v6459 = vpop.f32.mrf.mxu0
        %6460 = vdwg.mxu0
        %v6493 = vunpack.c.l.b16 %v6154
        %v6494 = vunpack.c.h.b16 %v6154
        %v6495 = vunpack.c.l.b16 %v6155
        %v6496 = vunpack.c.h.b16 %v6155
        %v6497 = vunpack.c.l.b16 %v6156
        %v6498 = vunpack.c.h.b16 %v6156
        %v6499 = vunpack.c.l.b16 %v6157
        %v6500 = vunpack.c.h.b16 %v6157
        %v6501 = vunpack.c.l.b16 %v6158
        %v6502 = vunpack.c.h.b16 %v6158
        %v6503 = vunpack.c.l.b16 %v6159
        %v6504 = vunpack.c.h.b16 %v6159
        %v6505 = vunpack.c.l.b16 %v6160
        %v6506 = vunpack.c.h.b16 %v6160
        %v6507 = vunpack.c.l.b16 %v6161
        %v6508 = vunpack.c.h.b16 %v6161
        %v6509 = vunpack.c.l.b16 %v6162
        %v6510 = vunpack.c.h.b16 %v6162
        %v6511 = vunpack.c.l.b16 %v6163
        %v6512 = vunpack.c.h.b16 %v6163
        %v6513 = vunpack.c.l.b16 %v6164
        %v6514 = vunpack.c.h.b16 %v6164
        %v6515 = vunpack.c.l.b16 %v6165
        %v6516 = vunpack.c.h.b16 %v6165
        %v6517 = vunpack.c.l.b16 %v6166
        %v6518 = vunpack.c.h.b16 %v6166
        %v6519 = vunpack.c.l.b16 %v6167
        %v6520 = vunpack.c.h.b16 %v6167
        %v6521 = vunpack.c.l.b16 %v6168
        %v6522 = vunpack.c.h.b16 %v6168
        %v6523 = vunpack.c.l.b16 %v6169
        %v6524 = vunpack.c.h.b16 %v6169
        %v6525 = vunpack.c.l.b16 %v6170
        %v6526 = vunpack.c.h.b16 %v6170
        %v6527 = vunpack.c.l.b16 %v6171
        %v6528 = vunpack.c.h.b16 %v6171
        %v6529 = vunpack.c.l.b16 %v6172
        %v6530 = vunpack.c.h.b16 %v6172
        %v6531 = vunpack.c.l.b16 %v6173
        %v6532 = vunpack.c.h.b16 %v6173
        %v6533 = vunpack.c.l.b16 %v6174
        %v6534 = vunpack.c.h.b16 %v6174
        %v6535 = vunpack.c.l.b16 %v6175
        %v6536 = vunpack.c.h.b16 %v6175
        %v6537 = vunpack.c.l.b16 %v6176
        %v6538 = vunpack.c.h.b16 %v6176
        %v6539 = vunpack.c.l.b16 %v6177
        %v6540 = vunpack.c.h.b16 %v6177
        %v6541 = vunpack.c.l.b16 %v6178
        %v6542 = vunpack.c.h.b16 %v6178
        %v6543 = vunpack.c.l.b16 %v6179
        %v6544 = vunpack.c.h.b16 %v6179
        %v6545 = vunpack.c.l.b16 %v6180
        %v6546 = vunpack.c.h.b16 %v6180
        %v6547 = vunpack.c.l.b16 %v6181
        %v6548 = vunpack.c.h.b16 %v6181
        %v6549 = vunpack.c.l.b16 %v6182
        %v6550 = vunpack.c.h.b16 %v6182
        %v6551 = vunpack.c.l.b16 %v6183
        %v6552 = vunpack.c.h.b16 %v6183
        %v6553 = vunpack.c.l.b16 %v6184
        %v6554 = vunpack.c.h.b16 %v6184
        %v6555 = vunpack.c.l.b16 %v6185
        %v6556 = vunpack.c.h.b16 %v6185
        %v6557 = vpack.c.b16 %v6497, %v6493
        %v6558 = vpack.c.b16 %v6498, %v6494
        %v6559 = vpack.c.b16 %v6499, %v6495
        %v6560 = vpack.c.b16 %v6500, %v6496
        %v6561 = vpack.c.b16 %v6505, %v6501
        %v6562 = vpack.c.b16 %v6506, %v6502
        %v6563 = vpack.c.b16 %v6507, %v6503
        %v6564 = vpack.c.b16 %v6508, %v6504
        %v6565 = vpack.c.b16 %v6513, %v6509
        %v6566 = vpack.c.b16 %v6514, %v6510
        %v6567 = vpack.c.b16 %v6515, %v6511
        %v6568 = vpack.c.b16 %v6516, %v6512
        %v6569 = vpack.c.b16 %v6521, %v6517
        %v6570 = vpack.c.b16 %v6522, %v6518
        %v6571 = vpack.c.b16 %v6523, %v6519
        %v6572 = vpack.c.b16 %v6524, %v6520
        %v6573 = vpack.c.b16 %v6529, %v6525
        %v6574 = vpack.c.b16 %v6530, %v6526
        %v6575 = vpack.c.b16 %v6531, %v6527
        %v6576 = vpack.c.b16 %v6532, %v6528
        %v6577 = vpack.c.b16 %v6537, %v6533
        %v6578 = vpack.c.b16 %v6538, %v6534
        %v6579 = vpack.c.b16 %v6539, %v6535
        %v6580 = vpack.c.b16 %v6540, %v6536
        %v6581 = vpack.c.b16 %v6545, %v6541
        %v6582 = vpack.c.b16 %v6546, %v6542
        %v6583 = vpack.c.b16 %v6547, %v6543
        %v6584 = vpack.c.b16 %v6548, %v6544
        %v6585 = vpack.c.b16 %v6553, %v6549
        %v6586 = vpack.c.b16 %v6554, %v6550
        %v6587 = vpack.c.b16 %v6555, %v6551
        %v6588 = vpack.c.b16 %v6556, %v6552
        %6621 = vmatprep.subr.bf16.mxu0 %v6586
        %6622 = vmatpush1.bf16.msra.mxu0 %v6585
        %6623 = vmatprep.subr.bf16.mxu0 %v6582
        %6624 = vmatpush1.bf16.msra.mxu0 %v6581
        %6625 = vmatprep.subr.bf16.mxu0 %v6578
        %6626 = vmatpush1.bf16.msra.mxu0 %v6577
        %6627 = vmatprep.subr.bf16.mxu0 %v6574
        %6628 = vmatpush1.bf16.msra.mxu0 %v6573
        %6629 = vmatprep.subr.bf16.mxu0 %v6570
        %6630 = vmatpush1.bf16.msra.mxu0 %v6569
        %6631 = vmatprep.subr.bf16.mxu0 %v6566
        %6632 = vmatpush1.bf16.msra.mxu0 %v6565
        %6633 = vmatprep.subr.bf16.mxu0 %v6562
        %6634 = vmatpush1.bf16.msra.mxu0 %v6561
        %6635 = vmatprep.subr.bf16.mxu0 %v6558
        %6636 = vmatpush1.bf16.msra.mxu0 %v6557
        %6637 = vmatprep.subr.bf16.mxu0 0
        %6638 = vmatpush2.bf16.msra.mxu0 0
        %6639 = vmatprep.subr.bf16.mxu0 0
        %6640 = vmatpush2.bf16.msra.mxu0 0
        %6641 = vmatprep.subr.bf16.mxu0 0
        %6642 = vmatpush2.bf16.msra.mxu0 0
        %6643 = vmatprep.subr.bf16.mxu0 0
        %6644 = vmatpush2.bf16.msra.mxu0 0
        %6645 = vmatprep.subr.bf16.mxu0 0
        %6646 = vmatpush2.bf16.msra.mxu0 0
        %6647 = vmatprep.subr.bf16.mxu0 0
        %6648 = vmatpush2.bf16.msra.mxu0 0
        %6649 = vmatprep.subr.bf16.mxu0 0
        %6650 = vmatpush2.bf16.msra.mxu0 0
        %6651 = vmatprep.subr.bf16.mxu0 0
        %6652 = vmatpush2.bf16.msra.mxu0 0
        %6653 = vmatprep.mubr.bf16.mxu0 0
        %6654 = vmatmul.mubr.bf16.gmra.mxu0 %v6153
        %v6655 = vpop.f32.mrf.mxu0
        %v6656 = vadd.f32 %v6414, %v6655
        %v6657 = vpop.f32.mrf.mxu0
        %v6658 = vadd.f32 %v6416, %v6657
        %v6659 = vpop.f32.mrf.mxu0
        %v6660 = vpop.f32.mrf.mxu0
        %6661 = vdwg.mxu0
        %6662 = vmatprep.subr.bf16.mxu0 %v6588
        %6663 = vmatpush1.bf16.msra.mxu0 %v6587
        %6664 = vmatprep.subr.bf16.mxu0 %v6584
        %6665 = vmatpush1.bf16.msra.mxu0 %v6583
        %6666 = vmatprep.subr.bf16.mxu0 %v6580
        %6667 = vmatpush1.bf16.msra.mxu0 %v6579
        %6668 = vmatprep.subr.bf16.mxu0 %v6576
        %6669 = vmatpush1.bf16.msra.mxu0 %v6575
        %6670 = vmatprep.subr.bf16.mxu0 %v6572
        %6671 = vmatpush1.bf16.msra.mxu0 %v6571
        %6672 = vmatprep.subr.bf16.mxu0 %v6568
        %6673 = vmatpush1.bf16.msra.mxu0 %v6567
        %6674 = vmatprep.subr.bf16.mxu0 %v6564
        %6675 = vmatpush1.bf16.msra.mxu0 %v6563
        %6676 = vmatprep.subr.bf16.mxu0 %v6560
        %6677 = vmatpush1.bf16.msra.mxu0 %v6559
        %6678 = vmatprep.subr.bf16.mxu0 0
        %6679 = vmatpush2.bf16.msra.mxu0 0
        %6680 = vmatprep.subr.bf16.mxu0 0
        %6681 = vmatpush2.bf16.msra.mxu0 0
        %6682 = vmatprep.subr.bf16.mxu0 0
        %6683 = vmatpush2.bf16.msra.mxu0 0
        %6684 = vmatprep.subr.bf16.mxu0 0
        %6685 = vmatpush2.bf16.msra.mxu0 0
        %6686 = vmatprep.subr.bf16.mxu0 0
        %6687 = vmatpush2.bf16.msra.mxu0 0
        %6688 = vmatprep.subr.bf16.mxu0 0
        %6689 = vmatpush2.bf16.msra.mxu0 0
        %6690 = vmatprep.subr.bf16.mxu0 0
        %6691 = vmatpush2.bf16.msra.mxu0 0
        %6692 = vmatprep.subr.bf16.mxu0 0
        %6693 = vmatpush2.bf16.msra.mxu0 0
        %6694 = vmatprep.mubr.bf16.mxu0 0
        %6695 = vmatmul.mubr.bf16.gmra.mxu0 %v6153
        %v6696 = vpop.f32.mrf.mxu0
        %v6697 = vadd.f32 %v6455, %v6696
        %v6698 = vpop.f32.mrf.mxu0
        %v6699 = vadd.f32 %v6457, %v6698
        %v6700 = vpop.f32.mrf.mxu0
        %v6701 = vpop.f32.mrf.mxu0
        %6702 = vdwg.mxu0
        %v6703 = vadd.f32 %v6656, %v358
        %v6704 = vadd.f32 %v6658, %v362
        %v6705 = vadd.f32 %v6697, %v366
        %v6706 = vadd.f32 %v6699, %v370
        %v6707 = vxor.u32 %v6703, 2147483648
        %v6708 = vmul.f32 %v6707, 1.442695
        %v6709 = vpow.pop %v6708
        %v6710 = vadd.f32 %v6709, 1.0
        %v6711 = vrcp.pop %v6710
        %v6712 = vmul.f32 1.0, %v6711
        %v6713 = vxor.u32 %v6704, 2147483648
        %v6714 = vmul.f32 %v6713, 1.442695
        %v6715 = vpow.pop %v6714
        %v6716 = vadd.f32 %v6715, 1.0
        %v6717 = vrcp.pop %v6716
        %v6718 = vmul.f32 1.0, %v6717
        %v6719 = vtanh.pop %v6705
        %v6720 = vxor.u32 %v6706, 2147483648
        %v6721 = vmul.f32 %v6720, 1.442695
        %v6722 = vpow.pop %v6721
        %v6723 = vadd.f32 %v6722, 1.0
        %v6724 = vrcp.pop %v6723
        %v6725 = vmul.f32 1.0, %v6724
        %v6726 = vmul.f32 %v6718, %v6152
        %v6727 = vmul.f32 %v6712, %v6719
        %v6728 = vadd.f32 %v6726, %v6727
        %v6729 = vtanh.pop %v6728
        %v6730 = vmul.f32 %v6725, %v6729
        %v6731 = vsel %vm6146, %v6730, %v6151
        %v6732 = vsel %vm6146, %v6728, %v6152
        %6733 = vst [vmem:[%s696] sm:$0xff] %v6731
        %6734 = vst [vmem:[%s698] sm:$0xff] %v6732
        %v6735 = vsel %vm6146, %v6730, 0.0
        %s6736 = scalar_lea.vmem %s338, 48 [#allocation12]
        %6737 = vst [vmem:[%s6736] sm:$0xff] %v6735
        %s6738 = sadd.s32 %s375, 7
        %v6739 = vstv %s6738
        %vm6740 = vcmp.gt.s32.totalorder %v352, %v6739
        %v6741 = vld [vmem:[#allocation2] sm:$0xff]
        %v6742 = vld [vmem:[#allocation3] sm:$0xff]
        %s6743 = scalar_lea.vmem %s298, 224 [#allocation4]
        %v6744 = vld [vmem:[%s6743] sm:$0xff]
        %v6745 = vld [vmem:[%s6743 + $0x8] sm:$0xff]
        %v6746 = vld [vmem:[%s6743 + $0x10] sm:$0xff]
        %v6747 = vld [vmem:[%s6743 + $0x18] sm:$0xff]
        %v6748 = vpack.c.bf16 %v6741, %v6741
        %v6749 = vld [vmem:[#allocation7] sm:$0xff]
        %v6750 = vld [vmem:[#allocation7 + $0x8] sm:$0xff]
        %v6751 = vld [vmem:[#allocation7 + $0x10] sm:$0xff]
        %v6752 = vld [vmem:[#allocation7 + $0x18] sm:$0xff]
        %v6753 = vld [vmem:[#allocation7 + $0x20] sm:$0xff]
        %v6754 = vld [vmem:[#allocation7 + $0x28] sm:$0xff]
        %v6755 = vld [vmem:[#allocation7 + $0x30] sm:$0xff]
        %v6756 = vld [vmem:[#allocation7 + $0x38] sm:$0xff]
        %v6757 = vld [vmem:[#allocation7 + $0x40] sm:$0xff]
        %v6758 = vld [vmem:[#allocation7 + $0x48] sm:$0xff]
        %v6759 = vld [vmem:[#allocation7 + $0x50] sm:$0xff]
        %v6760 = vld [vmem:[#allocation7 + $0x58] sm:$0xff]
        %v6761 = vld [vmem:[#allocation7 + $0x60] sm:$0xff]
        %v6762 = vld [vmem:[#allocation7 + $0x68] sm:$0xff]
        %v6763 = vld [vmem:[#allocation7 + $0x70] sm:$0xff]
        %v6764 = vld [vmem:[#allocation7 + $0x78] sm:$0xff]
        %v6765 = vld [vmem:[#allocation7 + $0x80] sm:$0xff]
        %v6766 = vld [vmem:[#allocation7 + $0x88] sm:$0xff]
        %v6767 = vld [vmem:[#allocation7 + $0x90] sm:$0xff]
        %v6768 = vld [vmem:[#allocation7 + $0x98] sm:$0xff]
        %v6769 = vld [vmem:[#allocation7 + $0xa0] sm:$0xff]
        %v6770 = vld [vmem:[#allocation7 + $0xa8] sm:$0xff]
        %v6771 = vld [vmem:[#allocation7 + $0xb0] sm:$0xff]
        %v6772 = vld [vmem:[#allocation7 + $0xb8] sm:$0xff]
        %v6773 = vld [vmem:[#allocation7 + $0xc0] sm:$0xff]
        %v6774 = vld [vmem:[#allocation7 + $0xc8] sm:$0xff]
        %v6775 = vld [vmem:[#allocation7 + $0xd0] sm:$0xff]
        %v6776 = vld [vmem:[#allocation7 + $0xd8] sm:$0xff]
        %v6777 = vld [vmem:[#allocation7 + $0xe0] sm:$0xff]
        %v6778 = vld [vmem:[#allocation7 + $0xe8] sm:$0xff]
        %v6779 = vld [vmem:[#allocation7 + $0xf0] sm:$0xff]
        %v6780 = vld [vmem:[#allocation7 + $0xf8] sm:$0xff]
        %v6813 = vunpack.c.l.b16 %v6749
        %v6814 = vunpack.c.h.b16 %v6749
        %v6815 = vunpack.c.l.b16 %v6750
        %v6816 = vunpack.c.h.b16 %v6750
        %v6817 = vunpack.c.l.b16 %v6751
        %v6818 = vunpack.c.h.b16 %v6751
        %v6819 = vunpack.c.l.b16 %v6752
        %v6820 = vunpack.c.h.b16 %v6752
        %v6821 = vunpack.c.l.b16 %v6753
        %v6822 = vunpack.c.h.b16 %v6753
        %v6823 = vunpack.c.l.b16 %v6754
        %v6824 = vunpack.c.h.b16 %v6754
        %v6825 = vunpack.c.l.b16 %v6755
        %v6826 = vunpack.c.h.b16 %v6755
        %v6827 = vunpack.c.l.b16 %v6756
        %v6828 = vunpack.c.h.b16 %v6756
        %v6829 = vunpack.c.l.b16 %v6757
        %v6830 = vunpack.c.h.b16 %v6757
        %v6831 = vunpack.c.l.b16 %v6758
        %v6832 = vunpack.c.h.b16 %v6758
        %v6833 = vunpack.c.l.b16 %v6759
        %v6834 = vunpack.c.h.b16 %v6759
        %v6835 = vunpack.c.l.b16 %v6760
        %v6836 = vunpack.c.h.b16 %v6760
        %v6837 = vunpack.c.l.b16 %v6761
        %v6838 = vunpack.c.h.b16 %v6761
        %v6839 = vunpack.c.l.b16 %v6762
        %v6840 = vunpack.c.h.b16 %v6762
        %v6841 = vunpack.c.l.b16 %v6763
        %v6842 = vunpack.c.h.b16 %v6763
        %v6843 = vunpack.c.l.b16 %v6764
        %v6844 = vunpack.c.h.b16 %v6764
        %v6845 = vunpack.c.l.b16 %v6765
        %v6846 = vunpack.c.h.b16 %v6765
        %v6847 = vunpack.c.l.b16 %v6766
        %v6848 = vunpack.c.h.b16 %v6766
        %v6849 = vunpack.c.l.b16 %v6767
        %v6850 = vunpack.c.h.b16 %v6767
        %v6851 = vunpack.c.l.b16 %v6768
        %v6852 = vunpack.c.h.b16 %v6768
        %v6853 = vunpack.c.l.b16 %v6769
        %v6854 = vunpack.c.h.b16 %v6769
        %v6855 = vunpack.c.l.b16 %v6770
        %v6856 = vunpack.c.h.b16 %v6770
        %v6857 = vunpack.c.l.b16 %v6771
        %v6858 = vunpack.c.h.b16 %v6771
        %v6859 = vunpack.c.l.b16 %v6772
        %v6860 = vunpack.c.h.b16 %v6772
        %v6861 = vunpack.c.l.b16 %v6773
        %v6862 = vunpack.c.h.b16 %v6773
        %v6863 = vunpack.c.l.b16 %v6774
        %v6864 = vunpack.c.h.b16 %v6774
        %v6865 = vunpack.c.l.b16 %v6775
        %v6866 = vunpack.c.h.b16 %v6775
        %v6867 = vunpack.c.l.b16 %v6776
        %v6868 = vunpack.c.h.b16 %v6776
        %v6869 = vunpack.c.l.b16 %v6777
        %v6870 = vunpack.c.h.b16 %v6777
        %v6871 = vunpack.c.l.b16 %v6778
        %v6872 = vunpack.c.h.b16 %v6778
        %v6873 = vunpack.c.l.b16 %v6779
        %v6874 = vunpack.c.h.b16 %v6779
        %v6875 = vunpack.c.l.b16 %v6780
        %v6876 = vunpack.c.h.b16 %v6780
        %v6877 = vpack.c.b16 %v6817, %v6813
        %v6878 = vpack.c.b16 %v6818, %v6814
        %v6879 = vpack.c.b16 %v6819, %v6815
        %v6880 = vpack.c.b16 %v6820, %v6816
        %v6881 = vpack.c.b16 %v6825, %v6821
        %v6882 = vpack.c.b16 %v6826, %v6822
        %v6883 = vpack.c.b16 %v6827, %v6823
        %v6884 = vpack.c.b16 %v6828, %v6824
        %v6885 = vpack.c.b16 %v6833, %v6829
        %v6886 = vpack.c.b16 %v6834, %v6830
        %v6887 = vpack.c.b16 %v6835, %v6831
        %v6888 = vpack.c.b16 %v6836, %v6832
        %v6889 = vpack.c.b16 %v6841, %v6837
        %v6890 = vpack.c.b16 %v6842, %v6838
        %v6891 = vpack.c.b16 %v6843, %v6839
        %v6892 = vpack.c.b16 %v6844, %v6840
        %v6893 = vpack.c.b16 %v6849, %v6845
        %v6894 = vpack.c.b16 %v6850, %v6846
        %v6895 = vpack.c.b16 %v6851, %v6847
        %v6896 = vpack.c.b16 %v6852, %v6848
        %v6897 = vpack.c.b16 %v6857, %v6853
        %v6898 = vpack.c.b16 %v6858, %v6854
        %v6899 = vpack.c.b16 %v6859, %v6855
        %v6900 = vpack.c.b16 %v6860, %v6856
        %v6901 = vpack.c.b16 %v6865, %v6861
        %v6902 = vpack.c.b16 %v6866, %v6862
        %v6903 = vpack.c.b16 %v6867, %v6863
        %v6904 = vpack.c.b16 %v6868, %v6864
        %v6905 = vpack.c.b16 %v6873, %v6869
        %v6906 = vpack.c.b16 %v6874, %v6870
        %v6907 = vpack.c.b16 %v6875, %v6871
        %v6908 = vpack.c.b16 %v6876, %v6872
        %6941 = vmatprep.subr.bf16.mxu0 %v6906
        %6942 = vmatpush1.bf16.msra.mxu0 %v6905
        %6943 = vmatprep.subr.bf16.mxu0 %v6902
        %6944 = vmatpush1.bf16.msra.mxu0 %v6901
        %6945 = vmatprep.subr.bf16.mxu0 %v6898
        %6946 = vmatpush1.bf16.msra.mxu0 %v6897
        %6947 = vmatprep.subr.bf16.mxu0 %v6894
        %6948 = vmatpush1.bf16.msra.mxu0 %v6893
        %6949 = vmatprep.subr.bf16.mxu0 %v6890
        %6950 = vmatpush1.bf16.msra.mxu0 %v6889
        %6951 = vmatprep.subr.bf16.mxu0 %v6886
        %6952 = vmatpush1.bf16.msra.mxu0 %v6885
        %6953 = vmatprep.subr.bf16.mxu0 %v6882
        %6954 = vmatpush1.bf16.msra.mxu0 %v6881
        %6955 = vmatprep.subr.bf16.mxu0 %v6878
        %6956 = vmatpush1.bf16.msra.mxu0 %v6877
        %6957 = vmatprep.subr.bf16.mxu0 0
        %6958 = vmatpush2.bf16.msra.mxu0 0
        %6959 = vmatprep.subr.bf16.mxu0 0
        %6960 = vmatpush2.bf16.msra.mxu0 0
        %6961 = vmatprep.subr.bf16.mxu0 0
        %6962 = vmatpush2.bf16.msra.mxu0 0
        %6963 = vmatprep.subr.bf16.mxu0 0
        %6964 = vmatpush2.bf16.msra.mxu0 0
        %6965 = vmatprep.subr.bf16.mxu0 0
        %6966 = vmatpush2.bf16.msra.mxu0 0
        %6967 = vmatprep.subr.bf16.mxu0 0
        %6968 = vmatpush2.bf16.msra.mxu0 0
        %6969 = vmatprep.subr.bf16.mxu0 0
        %6970 = vmatpush2.bf16.msra.mxu0 0
        %6971 = vmatprep.subr.bf16.mxu0 0
        %6972 = vmatpush2.bf16.msra.mxu0 0
        %6973 = vmatprep.mubr.bf16.mxu0 0
        %6974 = vmatmul.mubr.bf16.gmra.mxu0 %v6748
        %v6975 = vpop.f32.mrf.mxu0
        %v6976 = vadd.f32 0.0, %v6975
        %v6977 = vpop.f32.mrf.mxu0
        %v6978 = vadd.f32 0.0, %v6977
        %v6979 = vpop.f32.mrf.mxu0
        %v6980 = vpop.f32.mrf.mxu0
        %6981 = vdwg.mxu0
        %6982 = vmatprep.subr.bf16.mxu0 %v6908
        %6983 = vmatpush1.bf16.msra.mxu0 %v6907
        %6984 = vmatprep.subr.bf16.mxu0 %v6904
        %6985 = vmatpush1.bf16.msra.mxu0 %v6903
        %6986 = vmatprep.subr.bf16.mxu0 %v6900
        %6987 = vmatpush1.bf16.msra.mxu0 %v6899
        %6988 = vmatprep.subr.bf16.mxu0 %v6896
        %6989 = vmatpush1.bf16.msra.mxu0 %v6895
        %6990 = vmatprep.subr.bf16.mxu0 %v6892
        %6991 = vmatpush1.bf16.msra.mxu0 %v6891
        %6992 = vmatprep.subr.bf16.mxu0 %v6888
        %6993 = vmatpush1.bf16.msra.mxu0 %v6887
        %6994 = vmatprep.subr.bf16.mxu0 %v6884
        %6995 = vmatpush1.bf16.msra.mxu0 %v6883
        %6996 = vmatprep.subr.bf16.mxu0 %v6880
        %6997 = vmatpush1.bf16.msra.mxu0 %v6879
        %6998 = vmatprep.subr.bf16.mxu0 0
        %6999 = vmatpush2.bf16.msra.mxu0 0
        %7000 = vmatprep.subr.bf16.mxu0 0
        %7001 = vmatpush2.bf16.msra.mxu0 0
        %7002 = vmatprep.subr.bf16.mxu0 0
        %7003 = vmatpush2.bf16.msra.mxu0 0
        %7004 = vmatprep.subr.bf16.mxu0 0
        %7005 = vmatpush2.bf16.msra.mxu0 0
        %7006 = vmatprep.subr.bf16.mxu0 0
        %7007 = vmatpush2.bf16.msra.mxu0 0
        %7008 = vmatprep.subr.bf16.mxu0 0
        %7009 = vmatpush2.bf16.msra.mxu0 0
        %7010 = vmatprep.subr.bf16.mxu0 0
        %7011 = vmatpush2.bf16.msra.mxu0 0
        %7012 = vmatprep.subr.bf16.mxu0 0
        %7013 = vmatpush2.bf16.msra.mxu0 0
        %7014 = vmatprep.mubr.bf16.mxu0 0
        %7015 = vmatmul.mubr.bf16.gmra.mxu0 %v6748
        %v7016 = vpop.f32.mrf.mxu0
        %v7017 = vadd.f32 0.0, %v7016
        %v7018 = vpop.f32.mrf.mxu0
        %v7019 = vadd.f32 0.0, %v7018
        %v7020 = vpop.f32.mrf.mxu0
        %v7021 = vpop.f32.mrf.mxu0
        %7022 = vdwg.mxu0
        %v7023 = vadd.f32 %v6744, %v6976
        %v7024 = vadd.f32 %v6745, %v6978
        %v7025 = vadd.f32 %v6746, %v7017
        %v7026 = vadd.f32 %v6747, %v7019
        %v7027 = vxor.u32 %v7023, 2147483648
        %v7028 = vmul.f32 %v7027, 1.442695
        %v7029 = vpow.pop %v7028
        %v7030 = vadd.f32 %v7029, 1.0
        %v7031 = vrcp.pop %v7030
        %v7032 = vmul.f32 1.0, %v7031
        %v7033 = vxor.u32 %v7024, 2147483648
        %v7034 = vmul.f32 %v7033, 1.442695
        %v7035 = vpow.pop %v7034
        %v7036 = vadd.f32 %v7035, 1.0
        %v7037 = vrcp.pop %v7036
        %v7038 = vmul.f32 1.0, %v7037
        %v7039 = vtanh.pop %v7025
        %v7040 = vxor.u32 %v7026, 2147483648
        %v7041 = vmul.f32 %v7040, 1.442695
        %v7042 = vpow.pop %v7041
        %v7043 = vadd.f32 %v7042, 1.0
        %v7044 = vrcp.pop %v7043
        %v7045 = vmul.f32 1.0, %v7044
        %v7046 = vmul.f32 %v7038, %v6742
        %v7047 = vmul.f32 %v7032, %v7039
        %v7048 = vadd.f32 %v7046, %v7047
        %v7049 = vtanh.pop %v7048
        %v7050 = vmul.f32 %v7045, %v7049
        %v7051 = vsel %vm6740, 1, 0
        %7052 = vset.pattern.permute.xlu0 0
        %7053 = vperm.xlu0 %7052, %v7051
        %v7054 = vpop.permute.xlu0 %7053
        %vm7055 = vcmp.eq.s32.totalorder %v7054, 1
        %v7056 = vsel %vm7055, %v7050, %v6741
        %v7057 = vsel %vm7055, %v7048, %v6742
        %7058 = vst [vmem:[#allocation2] sm:$0xff] %v7056
        %7059 = vst [vmem:[#allocation3] sm:$0xff] %v7057
        %v7060 = vld [vmem:[%s696] sm:$0xff]
        %v7061 = vld [vmem:[%s698] sm:$0xff]
        %v7062 = vpack.c.bf16 %v7056, %v7056
        %v7063 = vld [vmem:[#allocation9] sm:$0xff]
        %v7064 = vld [vmem:[#allocation9 + $0x8] sm:$0xff]
        %v7065 = vld [vmem:[#allocation9 + $0x10] sm:$0xff]
        %v7066 = vld [vmem:[#allocation9 + $0x18] sm:$0xff]
        %v7067 = vld [vmem:[#allocation9 + $0x20] sm:$0xff]
        %v7068 = vld [vmem:[#allocation9 + $0x28] sm:$0xff]
        %v7069 = vld [vmem:[#allocation9 + $0x30] sm:$0xff]
        %v7070 = vld [vmem:[#allocation9 + $0x38] sm:$0xff]
        %v7071 = vld [vmem:[#allocation9 + $0x40] sm:$0xff]
        %v7072 = vld [vmem:[#allocation9 + $0x48] sm:$0xff]
        %v7073 = vld [vmem:[#allocation9 + $0x50] sm:$0xff]
        %v7074 = vld [vmem:[#allocation9 + $0x58] sm:$0xff]
        %v7075 = vld [vmem:[#allocation9 + $0x60] sm:$0xff]
        %v7076 = vld [vmem:[#allocation9 + $0x68] sm:$0xff]
        %v7077 = vld [vmem:[#allocation9 + $0x70] sm:$0xff]
        %v7078 = vld [vmem:[#allocation9 + $0x78] sm:$0xff]
        %v7079 = vld [vmem:[#allocation9 + $0x80] sm:$0xff]
        %v7080 = vld [vmem:[#allocation9 + $0x88] sm:$0xff]
        %v7081 = vld [vmem:[#allocation9 + $0x90] sm:$0xff]
        %v7082 = vld [vmem:[#allocation9 + $0x98] sm:$0xff]
        %v7083 = vld [vmem:[#allocation9 + $0xa0] sm:$0xff]
        %v7084 = vld [vmem:[#allocation9 + $0xa8] sm:$0xff]
        %v7085 = vld [vmem:[#allocation9 + $0xb0] sm:$0xff]
        %v7086 = vld [vmem:[#allocation9 + $0xb8] sm:$0xff]
        %v7087 = vld [vmem:[#allocation9 + $0xc0] sm:$0xff]
        %v7088 = vld [vmem:[#allocation9 + $0xc8] sm:$0xff]
        %v7089 = vld [vmem:[#allocation9 + $0xd0] sm:$0xff]
        %v7090 = vld [vmem:[#allocation9 + $0xd8] sm:$0xff]
        %v7091 = vld [vmem:[#allocation9 + $0xe0] sm:$0xff]
        %v7092 = vld [vmem:[#allocation9 + $0xe8] sm:$0xff]
        %v7093 = vld [vmem:[#allocation9 + $0xf0] sm:$0xff]
        %v7094 = vld [vmem:[#allocation9 + $0xf8] sm:$0xff]
        %v7095 = vpack.c.bf16 %v7060, %v7060
        %v7096 = vld [vmem:[#allocation10] sm:$0xff]
        %v7097 = vld [vmem:[#allocation10 + $0x8] sm:$0xff]
        %v7098 = vld [vmem:[#allocation10 + $0x10] sm:$0xff]
        %v7099 = vld [vmem:[#allocation10 + $0x18] sm:$0xff]
        %v7100 = vld [vmem:[#allocation10 + $0x20] sm:$0xff]
        %v7101 = vld [vmem:[#allocation10 + $0x28] sm:$0xff]
        %v7102 = vld [vmem:[#allocation10 + $0x30] sm:$0xff]
        %v7103 = vld [vmem:[#allocation10 + $0x38] sm:$0xff]
        %v7104 = vld [vmem:[#allocation10 + $0x40] sm:$0xff]
        %v7105 = vld [vmem:[#allocation10 + $0x48] sm:$0xff]
        %v7106 = vld [vmem:[#allocation10 + $0x50] sm:$0xff]
        %v7107 = vld [vmem:[#allocation10 + $0x58] sm:$0xff]
        %v7108 = vld [vmem:[#allocation10 + $0x60] sm:$0xff]
        %v7109 = vld [vmem:[#allocation10 + $0x68] sm:$0xff]
        %v7110 = vld [vmem:[#allocation10 + $0x70] sm:$0xff]
        %v7111 = vld [vmem:[#allocation10 + $0x78] sm:$0xff]
        %v7112 = vld [vmem:[#allocation10 + $0x80] sm:$0xff]
        %v7113 = vld [vmem:[#allocation10 + $0x88] sm:$0xff]
        %v7114 = vld [vmem:[#allocation10 + $0x90] sm:$0xff]
        %v7115 = vld [vmem:[#allocation10 + $0x98] sm:$0xff]
        %v7116 = vld [vmem:[#allocation10 + $0xa0] sm:$0xff]
        %v7117 = vld [vmem:[#allocation10 + $0xa8] sm:$0xff]
        %v7118 = vld [vmem:[#allocation10 + $0xb0] sm:$0xff]
        %v7119 = vld [vmem:[#allocation10 + $0xb8] sm:$0xff]
        %v7120 = vld [vmem:[#allocation10 + $0xc0] sm:$0xff]
        %v7121 = vld [vmem:[#allocation10 + $0xc8] sm:$0xff]
        %v7122 = vld [vmem:[#allocation10 + $0xd0] sm:$0xff]
        %v7123 = vld [vmem:[#allocation10 + $0xd8] sm:$0xff]
        %v7124 = vld [vmem:[#allocation10 + $0xe0] sm:$0xff]
        %v7125 = vld [vmem:[#allocation10 + $0xe8] sm:$0xff]
        %v7126 = vld [vmem:[#allocation10 + $0xf0] sm:$0xff]
        %v7127 = vld [vmem:[#allocation10 + $0xf8] sm:$0xff]
        %v7160 = vunpack.c.l.b16 %v7096
        %v7161 = vunpack.c.h.b16 %v7096
        %v7162 = vunpack.c.l.b16 %v7097
        %v7163 = vunpack.c.h.b16 %v7097
        %v7164 = vunpack.c.l.b16 %v7098
        %v7165 = vunpack.c.h.b16 %v7098
        %v7166 = vunpack.c.l.b16 %v7099
        %v7167 = vunpack.c.h.b16 %v7099
        %v7168 = vunpack.c.l.b16 %v7100
        %v7169 = vunpack.c.h.b16 %v7100
        %v7170 = vunpack.c.l.b16 %v7101
        %v7171 = vunpack.c.h.b16 %v7101
        %v7172 = vunpack.c.l.b16 %v7102
        %v7173 = vunpack.c.h.b16 %v7102
        %v7174 = vunpack.c.l.b16 %v7103
        %v7175 = vunpack.c.h.b16 %v7103
        %v7176 = vunpack.c.l.b16 %v7104
        %v7177 = vunpack.c.h.b16 %v7104
        %v7178 = vunpack.c.l.b16 %v7105
        %v7179 = vunpack.c.h.b16 %v7105
        %v7180 = vunpack.c.l.b16 %v7106
        %v7181 = vunpack.c.h.b16 %v7106
        %v7182 = vunpack.c.l.b16 %v7107
        %v7183 = vunpack.c.h.b16 %v7107
        %v7184 = vunpack.c.l.b16 %v7108
        %v7185 = vunpack.c.h.b16 %v7108
        %v7186 = vunpack.c.l.b16 %v7109
        %v7187 = vunpack.c.h.b16 %v7109
        %v7188 = vunpack.c.l.b16 %v7110
        %v7189 = vunpack.c.h.b16 %v7110
        %v7190 = vunpack.c.l.b16 %v7111
        %v7191 = vunpack.c.h.b16 %v7111
        %v7192 = vunpack.c.l.b16 %v7112
        %v7193 = vunpack.c.h.b16 %v7112
        %v7194 = vunpack.c.l.b16 %v7113
        %v7195 = vunpack.c.h.b16 %v7113
        %v7196 = vunpack.c.l.b16 %v7114
        %v7197 = vunpack.c.h.b16 %v7114
        %v7198 = vunpack.c.l.b16 %v7115
        %v7199 = vunpack.c.h.b16 %v7115
        %v7200 = vunpack.c.l.b16 %v7116
        %v7201 = vunpack.c.h.b16 %v7116
        %v7202 = vunpack.c.l.b16 %v7117
        %v7203 = vunpack.c.h.b16 %v7117
        %v7204 = vunpack.c.l.b16 %v7118
        %v7205 = vunpack.c.h.b16 %v7118
        %v7206 = vunpack.c.l.b16 %v7119
        %v7207 = vunpack.c.h.b16 %v7119
        %v7208 = vunpack.c.l.b16 %v7120
        %v7209 = vunpack.c.h.b16 %v7120
        %v7210 = vunpack.c.l.b16 %v7121
        %v7211 = vunpack.c.h.b16 %v7121
        %v7212 = vunpack.c.l.b16 %v7122
        %v7213 = vunpack.c.h.b16 %v7122
        %v7214 = vunpack.c.l.b16 %v7123
        %v7215 = vunpack.c.h.b16 %v7123
        %v7216 = vunpack.c.l.b16 %v7124
        %v7217 = vunpack.c.h.b16 %v7124
        %v7218 = vunpack.c.l.b16 %v7125
        %v7219 = vunpack.c.h.b16 %v7125
        %v7220 = vunpack.c.l.b16 %v7126
        %v7221 = vunpack.c.h.b16 %v7126
        %v7222 = vunpack.c.l.b16 %v7127
        %v7223 = vunpack.c.h.b16 %v7127
        %v7224 = vpack.c.b16 %v7164, %v7160
        %v7225 = vpack.c.b16 %v7165, %v7161
        %v7226 = vpack.c.b16 %v7166, %v7162
        %v7227 = vpack.c.b16 %v7167, %v7163
        %v7228 = vpack.c.b16 %v7172, %v7168
        %v7229 = vpack.c.b16 %v7173, %v7169
        %v7230 = vpack.c.b16 %v7174, %v7170
        %v7231 = vpack.c.b16 %v7175, %v7171
        %v7232 = vpack.c.b16 %v7180, %v7176
        %v7233 = vpack.c.b16 %v7181, %v7177
        %v7234 = vpack.c.b16 %v7182, %v7178
        %v7235 = vpack.c.b16 %v7183, %v7179
        %v7236 = vpack.c.b16 %v7188, %v7184
        %v7237 = vpack.c.b16 %v7189, %v7185
        %v7238 = vpack.c.b16 %v7190, %v7186
        %v7239 = vpack.c.b16 %v7191, %v7187
        %v7240 = vpack.c.b16 %v7196, %v7192
        %v7241 = vpack.c.b16 %v7197, %v7193
        %v7242 = vpack.c.b16 %v7198, %v7194
        %v7243 = vpack.c.b16 %v7199, %v7195
        %v7244 = vpack.c.b16 %v7204, %v7200
        %v7245 = vpack.c.b16 %v7205, %v7201
        %v7246 = vpack.c.b16 %v7206, %v7202
        %v7247 = vpack.c.b16 %v7207, %v7203
        %v7248 = vpack.c.b16 %v7212, %v7208
        %v7249 = vpack.c.b16 %v7213, %v7209
        %v7250 = vpack.c.b16 %v7214, %v7210
        %v7251 = vpack.c.b16 %v7215, %v7211
        %v7252 = vpack.c.b16 %v7220, %v7216
        %v7253 = vpack.c.b16 %v7221, %v7217
        %v7254 = vpack.c.b16 %v7222, %v7218
        %v7255 = vpack.c.b16 %v7223, %v7219
        %7288 = vmatprep.subr.bf16.mxu0 %v7253
        %7289 = vmatpush1.bf16.msra.mxu0 %v7252
        %7290 = vmatprep.subr.bf16.mxu0 %v7249
        %7291 = vmatpush1.bf16.msra.mxu0 %v7248
        %7292 = vmatprep.subr.bf16.mxu0 %v7245
        %7293 = vmatpush1.bf16.msra.mxu0 %v7244
        %7294 = vmatprep.subr.bf16.mxu0 %v7241
        %7295 = vmatpush1.bf16.msra.mxu0 %v7240
        %7296 = vmatprep.subr.bf16.mxu0 %v7237
        %7297 = vmatpush1.bf16.msra.mxu0 %v7236
        %7298 = vmatprep.subr.bf16.mxu0 %v7233
        %7299 = vmatpush1.bf16.msra.mxu0 %v7232
        %7300 = vmatprep.subr.bf16.mxu0 %v7229
        %7301 = vmatpush1.bf16.msra.mxu0 %v7228
        %7302 = vmatprep.subr.bf16.mxu0 %v7225
        %7303 = vmatpush1.bf16.msra.mxu0 %v7224
        %7304 = vmatprep.subr.bf16.mxu0 0
        %7305 = vmatpush2.bf16.msra.mxu0 0
        %7306 = vmatprep.subr.bf16.mxu0 0
        %7307 = vmatpush2.bf16.msra.mxu0 0
        %7308 = vmatprep.subr.bf16.mxu0 0
        %7309 = vmatpush2.bf16.msra.mxu0 0
        %7310 = vmatprep.subr.bf16.mxu0 0
        %7311 = vmatpush2.bf16.msra.mxu0 0
        %7312 = vmatprep.subr.bf16.mxu0 0
        %7313 = vmatpush2.bf16.msra.mxu0 0
        %7314 = vmatprep.subr.bf16.mxu0 0
        %7315 = vmatpush2.bf16.msra.mxu0 0
        %7316 = vmatprep.subr.bf16.mxu0 0
        %7317 = vmatpush2.bf16.msra.mxu0 0
        %7318 = vmatprep.subr.bf16.mxu0 0
        %7319 = vmatpush2.bf16.msra.mxu0 0
        %7320 = vmatprep.mubr.bf16.mxu0 0
        %7321 = vmatmul.mubr.bf16.gmra.mxu0 %v7095
        %v7322 = vpop.f32.mrf.mxu0
        %v7323 = vadd.f32 0.0, %v7322
        %v7324 = vpop.f32.mrf.mxu0
        %v7325 = vadd.f32 0.0, %v7324
        %v7326 = vpop.f32.mrf.mxu0
        %v7327 = vpop.f32.mrf.mxu0
        %7328 = vdwg.mxu0
        %7329 = vmatprep.subr.bf16.mxu0 %v7255
        %7330 = vmatpush1.bf16.msra.mxu0 %v7254
        %7331 = vmatprep.subr.bf16.mxu0 %v7251
        %7332 = vmatpush1.bf16.msra.mxu0 %v7250
        %7333 = vmatprep.subr.bf16.mxu0 %v7247
        %7334 = vmatpush1.bf16.msra.mxu0 %v7246
        %7335 = vmatprep.subr.bf16.mxu0 %v7243
        %7336 = vmatpush1.bf16.msra.mxu0 %v7242
        %7337 = vmatprep.subr.bf16.mxu0 %v7239
        %7338 = vmatpush1.bf16.msra.mxu0 %v7238
        %7339 = vmatprep.subr.bf16.mxu0 %v7235
        %7340 = vmatpush1.bf16.msra.mxu0 %v7234
        %7341 = vmatprep.subr.bf16.mxu0 %v7231
        %7342 = vmatpush1.bf16.msra.mxu0 %v7230
        %7343 = vmatprep.subr.bf16.mxu0 %v7227
        %7344 = vmatpush1.bf16.msra.mxu0 %v7226
        %7345 = vmatprep.subr.bf16.mxu0 0
        %7346 = vmatpush2.bf16.msra.mxu0 0
        %7347 = vmatprep.subr.bf16.mxu0 0
        %7348 = vmatpush2.bf16.msra.mxu0 0
        %7349 = vmatprep.subr.bf16.mxu0 0
        %7350 = vmatpush2.bf16.msra.mxu0 0
        %7351 = vmatprep.subr.bf16.mxu0 0
        %7352 = vmatpush2.bf16.msra.mxu0 0
        %7353 = vmatprep.subr.bf16.mxu0 0
        %7354 = vmatpush2.bf16.msra.mxu0 0
        %7355 = vmatprep.subr.bf16.mxu0 0
        %7356 = vmatpush2.bf16.msra.mxu0 0
        %7357 = vmatprep.subr.bf16.mxu0 0
        %7358 = vmatpush2.bf16.msra.mxu0 0
        %7359 = vmatprep.subr.bf16.mxu0 0
        %7360 = vmatpush2.bf16.msra.mxu0 0
        %7361 = vmatprep.mubr.bf16.mxu0 0
        %7362 = vmatmul.mubr.bf16.gmra.mxu0 %v7095
        %v7363 = vpop.f32.mrf.mxu0
        %v7364 = vadd.f32 0.0, %v7363
        %v7365 = vpop.f32.mrf.mxu0
        %v7366 = vadd.f32 0.0, %v7365
        %v7367 = vpop.f32.mrf.mxu0
        %v7368 = vpop.f32.mrf.mxu0
        %7369 = vdwg.mxu0
        %v7402 = vunpack.c.l.b16 %v7063
        %v7403 = vunpack.c.h.b16 %v7063
        %v7404 = vunpack.c.l.b16 %v7064
        %v7405 = vunpack.c.h.b16 %v7064
        %v7406 = vunpack.c.l.b16 %v7065
        %v7407 = vunpack.c.h.b16 %v7065
        %v7408 = vunpack.c.l.b16 %v7066
        %v7409 = vunpack.c.h.b16 %v7066
        %v7410 = vunpack.c.l.b16 %v7067
        %v7411 = vunpack.c.h.b16 %v7067
        %v7412 = vunpack.c.l.b16 %v7068
        %v7413 = vunpack.c.h.b16 %v7068
        %v7414 = vunpack.c.l.b16 %v7069
        %v7415 = vunpack.c.h.b16 %v7069
        %v7416 = vunpack.c.l.b16 %v7070
        %v7417 = vunpack.c.h.b16 %v7070
        %v7418 = vunpack.c.l.b16 %v7071
        %v7419 = vunpack.c.h.b16 %v7071
        %v7420 = vunpack.c.l.b16 %v7072
        %v7421 = vunpack.c.h.b16 %v7072
        %v7422 = vunpack.c.l.b16 %v7073
        %v7423 = vunpack.c.h.b16 %v7073
        %v7424 = vunpack.c.l.b16 %v7074
        %v7425 = vunpack.c.h.b16 %v7074
        %v7426 = vunpack.c.l.b16 %v7075
        %v7427 = vunpack.c.h.b16 %v7075
        %v7428 = vunpack.c.l.b16 %v7076
        %v7429 = vunpack.c.h.b16 %v7076
        %v7430 = vunpack.c.l.b16 %v7077
        %v7431 = vunpack.c.h.b16 %v7077
        %v7432 = vunpack.c.l.b16 %v7078
        %v7433 = vunpack.c.h.b16 %v7078
        %v7434 = vunpack.c.l.b16 %v7079
        %v7435 = vunpack.c.h.b16 %v7079
        %v7436 = vunpack.c.l.b16 %v7080
        %v7437 = vunpack.c.h.b16 %v7080
        %v7438 = vunpack.c.l.b16 %v7081
        %v7439 = vunpack.c.h.b16 %v7081
        %v7440 = vunpack.c.l.b16 %v7082
        %v7441 = vunpack.c.h.b16 %v7082
        %v7442 = vunpack.c.l.b16 %v7083
        %v7443 = vunpack.c.h.b16 %v7083
        %v7444 = vunpack.c.l.b16 %v7084
        %v7445 = vunpack.c.h.b16 %v7084
        %v7446 = vunpack.c.l.b16 %v7085
        %v7447 = vunpack.c.h.b16 %v7085
        %v7448 = vunpack.c.l.b16 %v7086
        %v7449 = vunpack.c.h.b16 %v7086
        %v7450 = vunpack.c.l.b16 %v7087
        %v7451 = vunpack.c.h.b16 %v7087
        %v7452 = vunpack.c.l.b16 %v7088
        %v7453 = vunpack.c.h.b16 %v7088
        %v7454 = vunpack.c.l.b16 %v7089
        %v7455 = vunpack.c.h.b16 %v7089
        %v7456 = vunpack.c.l.b16 %v7090
        %v7457 = vunpack.c.h.b16 %v7090
        %v7458 = vunpack.c.l.b16 %v7091
        %v7459 = vunpack.c.h.b16 %v7091
        %v7460 = vunpack.c.l.b16 %v7092
        %v7461 = vunpack.c.h.b16 %v7092
        %v7462 = vunpack.c.l.b16 %v7093
        %v7463 = vunpack.c.h.b16 %v7093
        %v7464 = vunpack.c.l.b16 %v7094
        %v7465 = vunpack.c.h.b16 %v7094
        %v7466 = vpack.c.b16 %v7406, %v7402
        %v7467 = vpack.c.b16 %v7407, %v7403
        %v7468 = vpack.c.b16 %v7408, %v7404
        %v7469 = vpack.c.b16 %v7409, %v7405
        %v7470 = vpack.c.b16 %v7414, %v7410
        %v7471 = vpack.c.b16 %v7415, %v7411
        %v7472 = vpack.c.b16 %v7416, %v7412
        %v7473 = vpack.c.b16 %v7417, %v7413
        %v7474 = vpack.c.b16 %v7422, %v7418
        %v7475 = vpack.c.b16 %v7423, %v7419
        %v7476 = vpack.c.b16 %v7424, %v7420
        %v7477 = vpack.c.b16 %v7425, %v7421
        %v7478 = vpack.c.b16 %v7430, %v7426
        %v7479 = vpack.c.b16 %v7431, %v7427
        %v7480 = vpack.c.b16 %v7432, %v7428
        %v7481 = vpack.c.b16 %v7433, %v7429
        %v7482 = vpack.c.b16 %v7438, %v7434
        %v7483 = vpack.c.b16 %v7439, %v7435
        %v7484 = vpack.c.b16 %v7440, %v7436
        %v7485 = vpack.c.b16 %v7441, %v7437
        %v7486 = vpack.c.b16 %v7446, %v7442
        %v7487 = vpack.c.b16 %v7447, %v7443
        %v7488 = vpack.c.b16 %v7448, %v7444
        %v7489 = vpack.c.b16 %v7449, %v7445
        %v7490 = vpack.c.b16 %v7454, %v7450
        %v7491 = vpack.c.b16 %v7455, %v7451
        %v7492 = vpack.c.b16 %v7456, %v7452
        %v7493 = vpack.c.b16 %v7457, %v7453
        %v7494 = vpack.c.b16 %v7462, %v7458
        %v7495 = vpack.c.b16 %v7463, %v7459
        %v7496 = vpack.c.b16 %v7464, %v7460
        %v7497 = vpack.c.b16 %v7465, %v7461
        %7530 = vmatprep.subr.bf16.mxu0 %v7495
        %7531 = vmatpush1.bf16.msra.mxu0 %v7494
        %7532 = vmatprep.subr.bf16.mxu0 %v7491
        %7533 = vmatpush1.bf16.msra.mxu0 %v7490
        %7534 = vmatprep.subr.bf16.mxu0 %v7487
        %7535 = vmatpush1.bf16.msra.mxu0 %v7486
        %7536 = vmatprep.subr.bf16.mxu0 %v7483
        %7537 = vmatpush1.bf16.msra.mxu0 %v7482
        %7538 = vmatprep.subr.bf16.mxu0 %v7479
        %7539 = vmatpush1.bf16.msra.mxu0 %v7478
        %7540 = vmatprep.subr.bf16.mxu0 %v7475
        %7541 = vmatpush1.bf16.msra.mxu0 %v7474
        %7542 = vmatprep.subr.bf16.mxu0 %v7471
        %7543 = vmatpush1.bf16.msra.mxu0 %v7470
        %7544 = vmatprep.subr.bf16.mxu0 %v7467
        %7545 = vmatpush1.bf16.msra.mxu0 %v7466
        %7546 = vmatprep.subr.bf16.mxu0 0
        %7547 = vmatpush2.bf16.msra.mxu0 0
        %7548 = vmatprep.subr.bf16.mxu0 0
        %7549 = vmatpush2.bf16.msra.mxu0 0
        %7550 = vmatprep.subr.bf16.mxu0 0
        %7551 = vmatpush2.bf16.msra.mxu0 0
        %7552 = vmatprep.subr.bf16.mxu0 0
        %7553 = vmatpush2.bf16.msra.mxu0 0
        %7554 = vmatprep.subr.bf16.mxu0 0
        %7555 = vmatpush2.bf16.msra.mxu0 0
        %7556 = vmatprep.subr.bf16.mxu0 0
        %7557 = vmatpush2.bf16.msra.mxu0 0
        %7558 = vmatprep.subr.bf16.mxu0 0
        %7559 = vmatpush2.bf16.msra.mxu0 0
        %7560 = vmatprep.subr.bf16.mxu0 0
        %7561 = vmatpush2.bf16.msra.mxu0 0
        %7562 = vmatprep.mubr.bf16.mxu0 0
        %7563 = vmatmul.mubr.bf16.gmra.mxu0 %v7062
        %v7564 = vpop.f32.mrf.mxu0
        %v7565 = vadd.f32 %v7323, %v7564
        %v7566 = vpop.f32.mrf.mxu0
        %v7567 = vadd.f32 %v7325, %v7566
        %v7568 = vpop.f32.mrf.mxu0
        %v7569 = vpop.f32.mrf.mxu0
        %7570 = vdwg.mxu0
        %7571 = vmatprep.subr.bf16.mxu0 %v7497
        %7572 = vmatpush1.bf16.msra.mxu0 %v7496
        %7573 = vmatprep.subr.bf16.mxu0 %v7493
        %7574 = vmatpush1.bf16.msra.mxu0 %v7492
        %7575 = vmatprep.subr.bf16.mxu0 %v7489
        %7576 = vmatpush1.bf16.msra.mxu0 %v7488
        %7577 = vmatprep.subr.bf16.mxu0 %v7485
        %7578 = vmatpush1.bf16.msra.mxu0 %v7484
        %7579 = vmatprep.subr.bf16.mxu0 %v7481
        %7580 = vmatpush1.bf16.msra.mxu0 %v7480
        %7581 = vmatprep.subr.bf16.mxu0 %v7477
        %7582 = vmatpush1.bf16.msra.mxu0 %v7476
        %7583 = vmatprep.subr.bf16.mxu0 %v7473
        %7584 = vmatpush1.bf16.msra.mxu0 %v7472
        %7585 = vmatprep.subr.bf16.mxu0 %v7469
        %7586 = vmatpush1.bf16.msra.mxu0 %v7468
        %7587 = vmatprep.subr.bf16.mxu0 0
        %7588 = vmatpush2.bf16.msra.mxu0 0
        %7589 = vmatprep.subr.bf16.mxu0 0
        %7590 = vmatpush2.bf16.msra.mxu0 0
        %7591 = vmatprep.subr.bf16.mxu0 0
        %7592 = vmatpush2.bf16.msra.mxu0 0
        %7593 = vmatprep.subr.bf16.mxu0 0
        %7594 = vmatpush2.bf16.msra.mxu0 0
        %7595 = vmatprep.subr.bf16.mxu0 0
        %7596 = vmatpush2.bf16.msra.mxu0 0
        %7597 = vmatprep.subr.bf16.mxu0 0
        %7598 = vmatpush2.bf16.msra.mxu0 0
        %7599 = vmatprep.subr.bf16.mxu0 0
        %7600 = vmatpush2.bf16.msra.mxu0 0
        %7601 = vmatprep.subr.bf16.mxu0 0
        %7602 = vmatpush2.bf16.msra.mxu0 0
        %7603 = vmatprep.mubr.bf16.mxu0 0
        %7604 = vmatmul.mubr.bf16.gmra.mxu0 %v7062
        %v7605 = vpop.f32.mrf.mxu0
        %v7606 = vadd.f32 %v7364, %v7605
        %v7607 = vpop.f32.mrf.mxu0
        %v7608 = vadd.f32 %v7366, %v7607
        %v7609 = vpop.f32.mrf.mxu0
        %v7610 = vpop.f32.mrf.mxu0
        %7611 = vdwg.mxu0
        %v7612 = vadd.f32 %v7565, %v358
        %v7613 = vadd.f32 %v7567, %v362
        %v7614 = vadd.f32 %v7606, %v366
        %v7615 = vadd.f32 %v7608, %v370
        %v7616 = vxor.u32 %v7612, 2147483648
        %v7617 = vmul.f32 %v7616, 1.442695
        %v7618 = vpow.pop %v7617
        %v7619 = vadd.f32 %v7618, 1.0
        %v7620 = vrcp.pop %v7619
        %v7621 = vmul.f32 1.0, %v7620
        %v7622 = vxor.u32 %v7613, 2147483648
        %v7623 = vmul.f32 %v7622, 1.442695
        %v7624 = vpow.pop %v7623
        %v7625 = vadd.f32 %v7624, 1.0
        %v7626 = vrcp.pop %v7625
        %v7627 = vmul.f32 1.0, %v7626
        %v7628 = vtanh.pop %v7614
        %v7629 = vxor.u32 %v7615, 2147483648
        %v7630 = vmul.f32 %v7629, 1.442695
        %v7631 = vpow.pop %v7630
        %v7632 = vadd.f32 %v7631, 1.0
        %v7633 = vrcp.pop %v7632
        %v7634 = vmul.f32 1.0, %v7633
        %v7635 = vmul.f32 %v7627, %v7061
        %v7636 = vmul.f32 %v7621, %v7628
        %v7637 = vadd.f32 %v7635, %v7636
        %v7638 = vtanh.pop %v7637
        %v7639 = vmul.f32 %v7634, %v7638
        %v7640 = vsel %vm7055, %v7639, %v7060
        %v7641 = vsel %vm7055, %v7637, %v7061
        %7642 = vst [vmem:[%s696] sm:$0xff] %v7640
        %7643 = vst [vmem:[%s698] sm:$0xff] %v7641
        %v7644 = vsel %vm7055, %v7639, 0.0
        %s7645 = scalar_lea.vmem %s338, 56 [#allocation12]
        %7646 = vst [vmem:[%s7645] sm:$0xff] %v7644
        %p7647 = scmp.eq.s32.totalorder %s28, 1
        // Predicated region
        $region65: #{tpu_custom_call.1} parent=43 // pred_check
          %p7648 = pneg %p7647
        $region66: #{tpu_custom_call.1} parent=43 // pred_check_branch
          %7650 = sbr.rel (%p7648) target = $region68
        $region67: #{tpu_custom_call.1} parent=43 // pred_region
          %v7651 = vld [vmem:[#allocation2] sm:$0xff]
          %v7652 = vld [vmem:[#allocation2 + $0x8] sm:$0xff]
          %7653 = vst [vmem:[#allocation13] sm:$0xff] %v7651
          %7654 = vst [vmem:[#allocation13 + $0x8] sm:$0xff] %v7652
        $region68: #{tpu_custom_call.1} parent=43 // pred_fallthru
          _
        %s7655 = sand.u32 %s167, 1
        %s7656 = scalar_lea.sflag [#allocation6], %s7655
        %s7657 = sand.u32 %s167, 1
        %s7658 = smul.addr %s7657, 64
        %s7659 = scalar_lea.vmem [#allocation12], %s7658
        // Predicated region
        $region69: #{tpu_custom_call.1} parent=43 // pred_check
          %p7660 = pneg %p177
        $region70: #{tpu_custom_call.1} parent=43 // pred_check_branch
          %7662 = sbr.rel (%p7660) target = $region72
        $region71: #{tpu_custom_call.1} parent=43 // pred_region
          %s7663 = smul.u32 8, %s28
          %s7665 = ssub.s32 1024, 1024
          %7666 = vsyncadd %s7656, %s7665
          %s7667 = smul.addr %s7663, 128
          %s7668 = scalar_lea.hbm %s6, %s7667
          %s7669 = sshll.u32 %s7659, 4
          %s7670 = int_to_ptr.vmem [resolvable:$true] %s7669
          %7675 = dma.vmem_to_hbm [thread:$0]  %s7670, 1024, %s7668, %s7656, 128, 128, 8
        $region72: #{tpu_custom_call.1} parent=43 // pred_fallthru
          _
        // Predicated region
        $region73: #{tpu_custom_call.1} parent=43 // pred_check
          %p7676 = pneg %p198
        $region74: #{tpu_custom_call.1} parent=43 // pred_check_branch
          %7678 = sbr.rel (%p7676) target = $region76
        $region75: #{tpu_custom_call.1} parent=43 // pred_region
          %s7680 = ssub.s32 256, 256
          %7681 = vsyncadd [#allocation14], %s7680
          %s7682 = sshll.u32 [#allocation13], 4
          %s7683 = int_to_ptr.vmem [resolvable:$true] %s7682
          %7688 = dma.vmem_to_hbm [thread:$0]  %s7683, 256, %s7, [#allocation14], 128, 128, 8
        $region76: #{tpu_custom_call.1} parent=43 // pred_fallthru
          _
        // Predicated region
        $region77: #{tpu_custom_call.1} parent=43 // pred_check
          %p7689 = pneg %p198
        $region78: #{tpu_custom_call.1} parent=43 // pred_check_branch
          %7691 = sbr.rel (%p7689) target = $region80
        $region79: #{tpu_custom_call.1} parent=43 // pred_region
          %7692 = dma.done [#allocation14], 256
        $region80: #{tpu_custom_call.1} parent=43 // pred_fallthru
          _
      $region44: #{tpu_custom_call.1} parent=5 // pred_fallthru
        _
      %p7693 = scmp.le.s32.totalorder 2, %s23
      // Predicated region
      $region81: #{tpu_custom_call.1} parent=5 // pred_check
        %p7694 = pneg %p7693
      $region82: #{tpu_custom_call.1} parent=5 // pred_check_branch
        %7696 = sbr.rel (%p7694) target = $region84
      $region83: #{tpu_custom_call.1} parent=5 // pred_region
        %s7697 = ssub.s32 %s23, 2
        // Predicated region
        $region85: #{tpu_custom_call.1} parent=83 // pred_check
          %p7698 = pneg %p183
        $region86: #{tpu_custom_call.1} parent=83 // pred_check_branch
          %7700 = sbr.rel (%p7698) target = $region88
        $region87: #{tpu_custom_call.1} parent=83 // pred_region
          %s7701 = sand.u32 %s168, 1
          %s7702 = scalar_lea.sflag [#allocation6], %s7701
          %s7703 = sand.u32 %s168, 1
          %s7704 = smul.addr %s7703, 64
          %s7705 = scalar_lea.vmem [#allocation12], %s7704
          %7706 = dma.done %s7702, 1024
        $region88: #{tpu_custom_call.1} parent=83 // pred_fallthru
          _
      $region84: #{tpu_custom_call.1} parent=5 // pred_fallthru
        _
    $region6: #{tpu_custom_call.1} parent=1 // loop_footer
      %s27 = sadd.s32 1, %s23
    $region7: #{tpu_custom_call.1} parent=1 // loop_footer_branch
      %22 = sbr.rel target = $region3
    $region8: #{tpu_custom_call.1} parent=1 // loop_exit
      _
    %7707 = vsyncpa [#allocation5], 1
    %s7708 = scalar_lea.sflag [#allocation5], 1
    %7709 = vsyncpa %s7708, 1
    %7710 = vsyncpa [#allocation8], 1
    %7711 = vsyncpa [#allocation11], 1
    %7712 = vsyncpa [#allocation6], 1
    %s7713 = scalar_lea.sflag [#allocation6], 1
    %7714 = vsyncpa %s7713, 1
    %7715 = vsyncpa [#allocation14], 1

</llo_original>
